<compile_context>
chip_gen: v6e
topology: v6e:2x2x1
jax: 0.10.0
libtpu: 0.0.40
codegen_flags: <defaults>
</compile_context>

<pallas_src>
import functools

import jax
import jax.numpy as jnp
from jax.experimental import pallas as pl
from jax.experimental.pallas import tpu as pltpu


def _round_up(v, m):
    return (v + m - 1) // m * m


def _basic_block_kernel(x_ref, w1_ref, b1_ref, w2_ref, b2_ref, out_ref,
                        pad_scr, patches_scr, *, H, W, C):
    """Fused BasicBlock for one image: conv1+bn1+relu -> conv2+bn2+add+relu.

    x_ref:         (1, H, W, C)   bf16  channel-padded input (also the residual)
    w1_ref/w2_ref: (9*C, C)       bf16  im2col weight matrices (BN scale folded in)
    b1_ref/b2_ref: (1, C)         f32   folded BN biases
    out_ref:       (1, H, W, C)   f32
    pad_scr:       (H+2, W+2, C)  bf16  VMEM zero-padded activation (reused by both convs)
    patches_scr:   (H*W, 9*C)     bf16  VMEM im2col strip
    """
    HW = H * W

    def conv_bn(w_ref, b_ref):
        # Build im2col strip: tap k = dy*3+dx occupies lane columns [k*C, (k+1)*C).
        for dy in range(3):
            for dx in range(3):
                k = dy * 3 + dx
                patch = pad_scr[dy:dy + H, dx:dx + W, :].reshape(HW, C)
                patches_scr[:, k * C:(k + 1) * C] = patch
        acc = jnp.dot(patches_scr[...], w_ref[...],
                      preferred_element_type=jnp.float32)
        return acc + b_ref[...]                       # (HW, C) f32

    # ---- conv1 + bn1 + relu (intermediate never leaves VMEM) ----
    pad_scr[...] = jnp.zeros(pad_scr.shape, dtype=pad_scr.dtype)   # zero halo
    pad_scr[1:H + 1, 1:W + 1, :] = x_ref[0]
    y1 = jnp.maximum(conv_bn(w1_ref, b1_ref), 0.0)

    # ---- conv2 + bn2 + residual + relu ----
    # Reuse the same padded scratch; border is still zero.
    pad_scr[1:H + 1, 1:W + 1, :] = y1.reshape(H, W, C).astype(pad_scr.dtype)
    y2 = conv_bn(w2_ref, b2_ref)
    y2 = y2 + x_ref[0].reshape(HW, C).astype(jnp.float32)   # residual = block input
    out_ref[0] = jnp.maximum(y2, 0.0).reshape(H, W, C).astype(out_ref.dtype)


def _fold_bn(gamma, beta, mean, var, eps=1e-5):
    scale = gamma / jnp.sqrt(var + eps)
    bias = beta - mean * scale
    return scale, bias


def _prep_conv_weights(w, scale, cpad):
    """[Cout, Cin, 3, 3] conv weight -> (9*cpad, cpad) bf16 im2col matrix with the
    BN scale folded into the output channels. Row k*cpad+c = weight of tap k
    (k = dy*3+dx), input channel c."""
    cout, cin = w.shape[0], w.shape[1]
    w = w * scale[:, None, None, None]                       # fold BN scale (f32)
    taps = jnp.transpose(w, (2, 3, 1, 0)).reshape(9, cin, cout)
    taps = jnp.pad(taps, ((0, 0), (0, cpad - cin), (0, cpad - cout)))
    return taps.reshape(9 * cpad, cpad).astype(jnp.bfloat16)


def basic_block_forward(x_nchw, params):
    """Pallas BasicBlock forward. x_nchw: [N, C, H, W] (PyTorch layout), f32."""
    N, C, H, W = x_nchw.shape
    cpad = _round_up(max(C, 128), 128)   # lane-dense channel dimension

    # NCHW -> NHWC, channel-pad to cpad, bf16 (halves HBM traffic, MXU bf16 path).
    x = jnp.transpose(x_nchw, (0, 2, 3, 1))
    x = jnp.pad(x, ((0, 0), (0, 0), (0, 0), (0, cpad - C))).astype(jnp.bfloat16)

    s1, b1 = _fold_bn(*params["bn1"])
    s2, b2 = _fold_bn(*params["bn2"])
    w1 = _prep_conv_weights(params["w1"], s1, cpad)
    w2 = _prep_conv_weights(params["w2"], s2, cpad)
    b1 = jnp.pad(b1, (0, cpad - C)).reshape(1, cpad).astype(jnp.float32)
    b2 = jnp.pad(b2, (0, cpad - C)).reshape(1, cpad).astype(jnp.float32)

    kernel = functools.partial(_basic_block_kernel, H=H, W=W, C=cpad)

    flops = 2 * 2 * N * H * W * 9 * cpad * cpad          # two 3x3 convs
    bytes_accessed = (x.size * 2 + N * H * W * cpad * 4
                      + w1.size * 2 + w2.size * 2 + b1.size * 4 + b2.size * 4)

    out = pl.pallas_call(
        kernel,
        out_shape=jax.ShapeDtypeStruct((N, H, W, cpad), jnp.float32),
        grid_spec=pltpu.PrefetchScalarGridSpec(
            num_scalar_prefetch=0,
            grid=(N,),
            in_specs=[
                pl.BlockSpec((1, H, W, cpad), lambda n: (n, 0, 0, 0)),
                pl.BlockSpec((9 * cpad, cpad), lambda n: (0, 0)),
                pl.BlockSpec((1, cpad), lambda n: (0, 0)),
                pl.BlockSpec((9 * cpad, cpad), lambda n: (0, 0)),
                pl.BlockSpec((1, cpad), lambda n: (0, 0)),
            ],
            out_specs=pl.BlockSpec((1, H, W, cpad), lambda n: (n, 0, 0, 0)),
            scratch_shapes=[
                pltpu.VMEM((H + 2, W + 2, cpad), jnp.bfloat16),   # padded activation
                pltpu.VMEM((H * W, 9 * cpad), jnp.bfloat16),      # im2col strip
            ],
        ),
        compiler_params=pltpu.CompilerParams(
            dimension_semantics=("parallel",),
            vmem_limit_bytes=32 * 1024 * 1024),
        cost_estimate=pl.CostEstimate(
            flops=flops, transcendentals=0, bytes_accessed=bytes_accessed),
    )(x, w1, b1, w2, b2)

    out = out[..., :C]                     # drop channel padding
    return jnp.transpose(out, (0, 3, 1, 2))  # back to NCHW


def _reference_forward(x_nchw, params):
    """Pure-JAX reference mirroring the kernel's bf16 MXU inputs / f32 epilogue."""
    x = jnp.transpose(x_nchw, (0, 2, 3, 1)).astype(jnp.bfloat16)

    def conv(inp, w, scale):
        w = (w * scale[:, None, None, None]).astype(jnp.bfloat16)
        w_hwio = jnp.transpose(w, (2, 3, 1, 0))
        return jax.lax.conv_general_dilated(
            inp, w_hwio, window_strides=(1, 1), padding="SAME",
            dimension_numbers=("NHWC", "HWIO", "NHWC"),
            preferred_element_type=jnp.float32)

    s1, b1 = _fold_bn(*params["bn1"])
    s2, b2 = _fold_bn(*params["bn2"])
    y1 = jnp.maximum(conv(x, params["w1"], s1) + b1, 0.0).astype(jnp.bfloat16)
    y2 = conv(y1, params["w2"], s2) + b2 + x.astype(jnp.float32)
    y2 = jnp.maximum(y2, 0.0)
    return jnp.transpose(y2, (0, 3, 1, 2))


if __name__ == "__main__":
    N, C, H, W = 2, 4, 16, 16          # in_features == out_features, stride=1
    key = jax.random.PRNGKey(0)
    kx, kw1, kw2, kg1, kb1, km1, kv1, kg2, kb2, km2, kv2 = jax.random.split(key, 11)

    x = jax.random.normal(kx, (N, C, H, W), jnp.float32)
    params = {
        "w1": jax.random.normal(kw1, (C, C, 3, 3), jnp.float32) * 0.1,
        "w2": jax.random.normal(kw2, (C, C, 3, 3), jnp.float32) * 0.1,
        "bn1": (1.0 + 0.1 * jax.random.normal(kg1, (C,), jnp.float32),   # gamma
                0.1 * jax.random.normal(kb1, (C,), jnp.float32),          # beta
                0.1 * jax.random.normal(km1, (C,), jnp.float32),          # running_mean
                1.0 + 0.1 * jax.random.uniform(kv1, (C,), jnp.float32)),  # running_var
        "bn2": (1.0 + 0.1 * jax.random.normal(kg2, (C,), jnp.float32),
                0.1 * jax.random.normal(kb2, (C,), jnp.float32),
                0.1 * jax.random.normal(km2, (C,), jnp.float32),
                1.0 + 0.1 * jax.random.uniform(kv2, (C,), jnp.float32)),
    }

    out = jax.block_until_ready(basic_block_forward(x, params))
    ref = jax.block_until_ready(_reference_forward(x, params))
    assert out.shape == (N, C, H, W)
    assert jnp.allclose(out, ref, rtol=1e-2, atol=1e-2), \
        float(jnp.max(jnp.abs(out - ref)))
    print("KERNEL_OK")
</pallas_src>

<mosaic_0001>
module attributes {stable_mosaic.version = 11 : i64} {
  func.func @_basic_block_kernel(%arg0: i32, %arg1: memref<1x16x16x128xbf16, #tpu.memory_space<vmem>>, %arg2: memref<1152x128xbf16, #tpu.memory_space<vmem>>, %arg3: memref<1x128xf32, #tpu.memory_space<vmem>>, %arg4: memref<1152x128xbf16, #tpu.memory_space<vmem>>, %arg5: memref<1x128xf32, #tpu.memory_space<vmem>>, %arg6: memref<1x16x16x128xf32, #tpu.memory_space<vmem>>, %arg7: memref<18x18x128xbf16, #tpu.memory_space<vmem>>, %arg8: memref<256x1152xbf16, #tpu.memory_space<vmem>>) attributes {dimension_semantics = [#tpu.dimension_semantics<parallel>], iteration_bounds = array<i64: 2>, scalar_prefetch = 0 : i64, scratch_operands = 2 : i64, tpu.core_type = #tpu.core_type<tc>, window_params = [{transform_indices = @transform_0, window_bounds = array<i64: 1, 16, 16, 128>}, {pipeline_mode = #tpu.pipeline_mode<synchronous>, transform_indices = @transform_1, window_bounds = array<i64: 1152, 128>}, {pipeline_mode = #tpu.pipeline_mode<synchronous>, transform_indices = @transform_2, window_bounds = array<i64: 1, 128>}, {pipeline_mode = #tpu.pipeline_mode<synchronous>, transform_indices = @transform_3, window_bounds = array<i64: 1152, 128>}, {pipeline_mode = #tpu.pipeline_mode<synchronous>, transform_indices = @transform_4, window_bounds = array<i64: 1, 128>}, {transform_indices = @transform_5, window_bounds = array<i64: 1, 16, 16, 128>}]} {
    %cst = arith.constant 0.000000e+00 : bf16
    %0 = vector.broadcast %cst : bf16 to vector<18x18x128xbf16>
    %c0 = arith.constant 0 : index
    %c0_0 = arith.constant 0 : index
    %c0_1 = arith.constant 0 : index
    %1 = vector.load %arg7[%c0, %c0_0, %c0_1] : memref<18x18x128xbf16, #tpu.memory_space<vmem>>, vector<18x18x128xbf16>
    tpu.vector_store %arg7[%c0, %c0_0, %c0_1], %0 {strides = array<i32>} : memref<18x18x128xbf16, #tpu.memory_space<vmem>>, vector<18x18x128xbf16>,
    %c0_2 = arith.constant 0 : index
    %c0_3 = arith.constant 0 : index
    %c0_4 = arith.constant 0 : index
    %c0_5 = arith.constant 0 : index
    %2 = vector.load %arg1[%c0_2, %c0_3, %c0_4, %c0_5] : memref<1x16x16x128xbf16, #tpu.memory_space<vmem>>, vector<1x16x16x128xbf16>
    %3 = vector.shape_cast %2 : vector<1x16x16x128xbf16> to vector<16x16x128xbf16>
    %c1 = arith.constant 1 : index
    %c1_6 = arith.constant 1 : index
    %c0_7 = arith.constant 0 : index
    %4 = vector.load %arg7[%c1, %c1_6, %c0_7] : memref<18x18x128xbf16, #tpu.memory_space<vmem>>, vector<16x16x128xbf16>
    tpu.vector_store %arg7[%c1, %c1_6, %c0_7], %3 {strides = array<i32>} : memref<18x18x128xbf16, #tpu.memory_space<vmem>>, vector<16x16x128xbf16>,
    %c0_8 = arith.constant 0 : index
    %c0_9 = arith.constant 0 : index
    %c0_10 = arith.constant 0 : index
    %5 = vector.load %arg7[%c0_8, %c0_9, %c0_10] : memref<18x18x128xbf16, #tpu.memory_space<vmem>>, vector<16x16x128xbf16>
    %6 = vector.shape_cast %5 : vector<16x16x128xbf16> to vector<256x128xbf16>
    %c0_11 = arith.constant 0 : index
    %c0_12 = arith.constant 0 : index
    %7 = vector.load %arg8[%c0_11, %c0_12] : memref<256x1152xbf16, #tpu.memory_space<vmem>>, vector<256x128xbf16>
    tpu.vector_store %arg8[%c0_11, %c0_12], %6 {strides = array<i32>} : memref<256x1152xbf16, #tpu.memory_space<vmem>>, vector<256x128xbf16>,
    %c0_13 = arith.constant 0 : index
    %c1_14 = arith.constant 1 : index
    %c0_15 = arith.constant 0 : index
    %8 = vector.load %arg7[%c0_13, %c1_14, %c0_15] : memref<18x18x128xbf16, #tpu.memory_space<vmem>>, vector<16x16x128xbf16>
    %9 = vector.shape_cast %8 : vector<16x16x128xbf16> to vector<256x128xbf16>
    %c0_16 = arith.constant 0 : index
    %c128 = arith.constant 128 : index
    %10 = vector.load %arg8[%c0_16, %c128] : memref<256x1152xbf16, #tpu.memory_space<vmem>>, vector<256x128xbf16>
    tpu.vector_store %arg8[%c0_16, %c128], %9 {strides = array<i32>} : memref<256x1152xbf16, #tpu.memory_space<vmem>>, vector<256x128xbf16>,
    %c0_17 = arith.constant 0 : index
    %c2 = arith.constant 2 : index
    %c0_18 = arith.constant 0 : index
    %11 = vector.load %arg7[%c0_17, %c2, %c0_18] : memref<18x18x128xbf16, #tpu.memory_space<vmem>>, vector<16x16x128xbf16>
    %12 = vector.shape_cast %11 : vector<16x16x128xbf16> to vector<256x128xbf16>
    %c0_19 = arith.constant 0 : index
    %c256 = arith.constant 256 : index
    %13 = vector.load %arg8[%c0_19, %c256] : memref<256x1152xbf16, #tpu.memory_space<vmem>>, vector<256x128xbf16>
    tpu.vector_store %arg8[%c0_19, %c256], %12 {strides = array<i32>} : memref<256x1152xbf16, #tpu.memory_space<vmem>>, vector<256x128xbf16>,
    %c1_20 = arith.constant 1 : index
    %c0_21 = arith.constant 0 : index
    %c0_22 = arith.constant 0 : index
    %14 = vector.load %arg7[%c1_20, %c0_21, %c0_22] : memref<18x18x128xbf16, #tpu.memory_space<vmem>>, vector<16x16x128xbf16>
    %15 = vector.shape_cast %14 : vector<16x16x128xbf16> to vector<256x128xbf16>
    %c0_23 = arith.constant 0 : index
    %c384 = arith.constant 384 : index
    %16 = vector.load %arg8[%c0_23, %c384] : memref<256x1152xbf16, #tpu.memory_space<vmem>>, vector<256x128xbf16>
    tpu.vector_store %arg8[%c0_23, %c384], %15 {strides = array<i32>} : memref<256x1152xbf16, #tpu.memory_space<vmem>>, vector<256x128xbf16>,
    %c1_24 = arith.constant 1 : index
    %c1_25 = arith.constant 1 : index
    %c0_26 = arith.constant 0 : index
    %17 = vector.load %arg7[%c1_24, %c1_25, %c0_26] : memref<18x18x128xbf16, #tpu.memory_space<vmem>>, vector<16x16x128xbf16>
    %18 = vector.shape_cast %17 : vector<16x16x128xbf16> to vector<256x128xbf16>
    %c0_27 = arith.constant 0 : index
    %c512 = arith.constant 512 : index
    %19 = vector.load %arg8[%c0_27, %c512] : memref<256x1152xbf16, #tpu.memory_space<vmem>>, vector<256x128xbf16>
    tpu.vector_store %arg8[%c0_27, %c512], %18 {strides = array<i32>} : memref<256x1152xbf16, #tpu.memory_space<vmem>>, vector<256x128xbf16>,
    %c1_28 = arith.constant 1 : index
    %c2_29 = arith.constant 2 : index
    %c0_30 = arith.constant 0 : index
    %20 = vector.load %arg7[%c1_28, %c2_29, %c0_30] : memref<18x18x128xbf16, #tpu.memory_space<vmem>>, vector<16x16x128xbf16>
    %21 = vector.shape_cast %20 : vector<16x16x128xbf16> to vector<256x128xbf16>
    %c0_31 = arith.constant 0 : index
    %c640 = arith.constant 640 : index
    %22 = vector.load %arg8[%c0_31, %c640] : memref<256x1152xbf16, #tpu.memory_space<vmem>>, vector<256x128xbf16>
    tpu.vector_store %arg8[%c0_31, %c640], %21 {strides = array<i32>} : memref<256x1152xbf16, #tpu.memory_space<vmem>>, vector<256x128xbf16>,
    %c2_32 = arith.constant 2 : index
    %c0_33 = arith.constant 0 : index
    %c0_34 = arith.constant 0 : index
    %23 = vector.load %arg7[%c2_32, %c0_33, %c0_34] : memref<18x18x128xbf16, #tpu.memory_space<vmem>>, vector<16x16x128xbf16>
    %24 = vector.shape_cast %23 : vector<16x16x128xbf16> to vector<256x128xbf16>
    %c0_35 = arith.constant 0 : index
    %c768 = arith.constant 768 : index
    %25 = vector.load %arg8[%c0_35, %c768] : memref<256x1152xbf16, #tpu.memory_space<vmem>>, vector<256x128xbf16>
    tpu.vector_store %arg8[%c0_35, %c768], %24 {strides = array<i32>} : memref<256x1152xbf16, #tpu.memory_space<vmem>>, vector<256x128xbf16>,
    %c2_36 = arith.constant 2 : index
    %c1_37 = arith.constant 1 : index
    %c0_38 = arith.constant 0 : index
    %26 = vector.load %arg7[%c2_36, %c1_37, %c0_38] : memref<18x18x128xbf16, #tpu.memory_space<vmem>>, vector<16x16x128xbf16>
    %27 = vector.shape_cast %26 : vector<16x16x128xbf16> to vector<256x128xbf16>
    %c0_39 = arith.constant 0 : index
    %c896 = arith.constant 896 : index
    %28 = vector.load %arg8[%c0_39, %c896] : memref<256x1152xbf16, #tpu.memory_space<vmem>>, vector<256x128xbf16>
    tpu.vector_store %arg8[%c0_39, %c896], %27 {strides = array<i32>} : memref<256x1152xbf16, #tpu.memory_space<vmem>>, vector<256x128xbf16>,
    %c2_40 = arith.constant 2 : index
    %c2_41 = arith.constant 2 : index
    %c0_42 = arith.constant 0 : index
    %29 = vector.load %arg7[%c2_40, %c2_41, %c0_42] : memref<18x18x128xbf16, #tpu.memory_space<vmem>>, vector<16x16x128xbf16>
    %30 = vector.shape_cast %29 : vector<16x16x128xbf16> to vector<256x128xbf16>
    %c0_43 = arith.constant 0 : index
    %c1024 = arith.constant 1024 : index
    %31 = vector.load %arg8[%c0_43, %c1024] : memref<256x1152xbf16, #tpu.memory_space<vmem>>, vector<256x128xbf16>
    tpu.vector_store %arg8[%c0_43, %c1024], %30 {strides = array<i32>} : memref<256x1152xbf16, #tpu.memory_space<vmem>>, vector<256x128xbf16>,
    %c0_44 = arith.constant 0 : index
    %c0_45 = arith.constant 0 : index
    %32 = vector.load %arg8[%c0_44, %c0_45] : memref<256x1152xbf16, #tpu.memory_space<vmem>>, vector<256x1152xbf16>
    %c0_46 = arith.constant 0 : index
    %c0_47 = arith.constant 0 : index
    %33 = vector.load %arg2[%c0_46, %c0_47] : memref<1152x128xbf16, #tpu.memory_space<vmem>>, vector<1152x128xbf16>
    %cst_48 = arith.constant dense<0.000000e+00> : vector<256x128xf32>
    %34 = tpu.matmul %32, %33, %cst_48 {dimension_numbers = #tpu.dot_dimension_numbers<[1], [0], [0], [1], [0, 0, 1, 1], [], []>} : vector<256x1152xbf16>, vector<1152x128xbf16>, vector<256x128xf32> -> vector<256x128xf32>
    %c0_49 = arith.constant 0 : index
    %c0_50 = arith.constant 0 : index
    %35 = vector.load %arg3[%c0_49, %c0_50] : memref<1x128xf32, #tpu.memory_space<vmem>>, vector<1x128xf32>
    %36 = vector.broadcast %35 : vector<1x128xf32> to vector<256x128xf32>
    %37 = arith.addf %34, %36 : vector<256x128xf32>
    %cst_51 = arith.constant 0.000000e+00 : f32
    %38 = vector.broadcast %cst_51 : f32 to vector<256x128xf32>
    %39 = arith.maximumf %37, %38 : vector<256x128xf32>
    %40 = vector.shape_cast %39 : vector<256x128xf32> to vector<16x16x128xf32>
    %41 = arith.truncf %40 : vector<16x16x128xf32> to vector<16x16x128xbf16>
    %c1_52 = arith.constant 1 : index
    %c1_53 = arith.constant 1 : index
    %c0_54 = arith.constant 0 : index
    %42 = vector.load %arg7[%c1_52, %c1_53, %c0_54] : memref<18x18x128xbf16, #tpu.memory_space<vmem>>, vector<16x16x128xbf16>
    tpu.vector_store %arg7[%c1_52, %c1_53, %c0_54], %41 {strides = array<i32>} : memref<18x18x128xbf16, #tpu.memory_space<vmem>>, vector<16x16x128xbf16>,
    %c0_55 = arith.constant 0 : index
    %c0_56 = arith.constant 0 : index
    %c0_57 = arith.constant 0 : index
    %43 = vector.load %arg7[%c0_55, %c0_56, %c0_57] : memref<18x18x128xbf16, #tpu.memory_space<vmem>>, vector<16x16x128xbf16>
    %44 = vector.shape_cast %43 : vector<16x16x128xbf16> to vector<256x128xbf16>
    %c0_58 = arith.constant 0 : index
    %c0_59 = arith.constant 0 : index
    %45 = vector.load %arg8[%c0_58, %c0_59] : memref<256x1152xbf16, #tpu.memory_space<vmem>>, vector<256x128xbf16>
    tpu.vector_store %arg8[%c0_58, %c0_59], %44 {strides = array<i32>} : memref<256x1152xbf16, #tpu.memory_space<vmem>>, vector<256x128xbf16>,
    %c0_60 = arith.constant 0 : index
    %c1_61 = arith.constant 1 : index
    %c0_62 = arith.constant 0 : index
    %46 = vector.load %arg7[%c0_60, %c1_61, %c0_62] : memref<18x18x128xbf16, #tpu.memory_space<vmem>>, vector<16x16x128xbf16>
    %47 = vector.shape_cast %46 : vector<16x16x128xbf16> to vector<256x128xbf16>
    %c0_63 = arith.constant 0 : index
    %c128_64 = arith.constant 128 : index
    %48 = vector.load %arg8[%c0_63, %c128_64] : memref<256x1152xbf16, #tpu.memory_space<vmem>>, vector<256x128xbf16>
    tpu.vector_store %arg8[%c0_63, %c128_64], %47 {strides = array<i32>} : memref<256x1152xbf16, #tpu.memory_space<vmem>>, vector<256x128xbf16>,
    %c0_65 = arith.constant 0 : index
    %c2_66 = arith.constant 2 : index
    %c0_67 = arith.constant 0 : index
    %49 = vector.load %arg7[%c0_65, %c2_66, %c0_67] : memref<18x18x128xbf16, #tpu.memory_space<vmem>>, vector<16x16x128xbf16>
    %50 = vector.shape_cast %49 : vector<16x16x128xbf16> to vector<256x128xbf16>
    %c0_68 = arith.constant 0 : index
    %c256_69 = arith.constant 256 : index
    %51 = vector.load %arg8[%c0_68, %c256_69] : memref<256x1152xbf16, #tpu.memory_space<vmem>>, vector<256x128xbf16>
    tpu.vector_store %arg8[%c0_68, %c256_69], %50 {strides = array<i32>} : memref<256x1152xbf16, #tpu.memory_space<vmem>>, vector<256x128xbf16>,
    %c1_70 = arith.constant 1 : index
    %c0_71 = arith.constant 0 : index
    %c0_72 = arith.constant 0 : index
    %52 = vector.load %arg7[%c1_70, %c0_71, %c0_72] : memref<18x18x128xbf16, #tpu.memory_space<vmem>>, vector<16x16x128xbf16>
    %53 = vector.shape_cast %52 : vector<16x16x128xbf16> to vector<256x128xbf16>
    %c0_73 = arith.constant 0 : index
    %c384_74 = arith.constant 384 : index
    %54 = vector.load %arg8[%c0_73, %c384_74] : memref<256x1152xbf16, #tpu.memory_space<vmem>>, vector<256x128xbf16>
    tpu.vector_store %arg8[%c0_73, %c384_74], %53 {strides = array<i32>} : memref<256x1152xbf16, #tpu.memory_space<vmem>>, vector<256x128xbf16>,
    %c1_75 = arith.constant 1 : index
    %c1_76 = arith.constant 1 : index
    %c0_77 = arith.constant 0 : index
    %55 = vector.load %arg7[%c1_75, %c1_76, %c0_77] : memref<18x18x128xbf16, #tpu.memory_space<vmem>>, vector<16x16x128xbf16>
    %56 = vector.shape_cast %55 : vector<16x16x128xbf16> to vector<256x128xbf16>
    %c0_78 = arith.constant 0 : index
    %c512_79 = arith.constant 512 : index
    %57 = vector.load %arg8[%c0_78, %c512_79] : memref<256x1152xbf16, #tpu.memory_space<vmem>>, vector<256x128xbf16>
    tpu.vector_store %arg8[%c0_78, %c512_79], %56 {strides = array<i32>} : memref<256x1152xbf16, #tpu.memory_space<vmem>>, vector<256x128xbf16>,
    %c1_80 = arith.constant 1 : index
    %c2_81 = arith.constant 2 : index
    %c0_82 = arith.constant 0 : index
    %58 = vector.load %arg7[%c1_80, %c2_81, %c0_82] : memref<18x18x128xbf16, #tpu.memory_space<vmem>>, vector<16x16x128xbf16>
    %59 = vector.shape_cast %58 : vector<16x16x128xbf16> to vector<256x128xbf16>
    %c0_83 = arith.constant 0 : index
    %c640_84 = arith.constant 640 : index
    %60 = vector.load %arg8[%c0_83, %c640_84] : memref<256x1152xbf16, #tpu.memory_space<vmem>>, vector<256x128xbf16>
    tpu.vector_store %arg8[%c0_83, %c640_84], %59 {strides = array<i32>} : memref<256x1152xbf16, #tpu.memory_space<vmem>>, vector<256x128xbf16>,
    %c2_85 = arith.constant 2 : index
    %c0_86 = arith.constant 0 : index
    %c0_87 = arith.constant 0 : index
    %61 = vector.load %arg7[%c2_85, %c0_86, %c0_87] : memref<18x18x128xbf16, #tpu.memory_space<vmem>>, vector<16x16x128xbf16>
    %62 = vector.shape_cast %61 : vector<16x16x128xbf16> to vector<256x128xbf16>
    %c0_88 = arith.constant 0 : index
    %c768_89 = arith.constant 768 : index
    %63 = vector.load %arg8[%c0_88, %c768_89] : memref<256x1152xbf16, #tpu.memory_space<vmem>>, vector<256x128xbf16>
    tpu.vector_store %arg8[%c0_88, %c768_89], %62 {strides = array<i32>} : memref<256x1152xbf16, #tpu.memory_space<vmem>>, vector<256x128xbf16>,
    %c2_90 = arith.constant 2 : index
    %c1_91 = arith.constant 1 : index
    %c0_92 = arith.constant 0 : index
    %64 = vector.load %arg7[%c2_90, %c1_91, %c0_92] : memref<18x18x128xbf16, #tpu.memory_space<vmem>>, vector<16x16x128xbf16>
    %65 = vector.shape_cast %64 : vector<16x16x128xbf16> to vector<256x128xbf16>
    %c0_93 = arith.constant 0 : index
    %c896_94 = arith.constant 896 : index
    %66 = vector.load %arg8[%c0_93, %c896_94] : memref<256x1152xbf16, #tpu.memory_space<vmem>>, vector<256x128xbf16>
    tpu.vector_store %arg8[%c0_93, %c896_94], %65 {strides = array<i32>} : memref<256x1152xbf16, #tpu.memory_space<vmem>>, vector<256x128xbf16>,
    %c2_95 = arith.constant 2 : index
    %c2_96 = arith.constant 2 : index
    %c0_97 = arith.constant 0 : index
    %67 = vector.load %arg7[%c2_95, %c2_96, %c0_97] : memref<18x18x128xbf16, #tpu.memory_space<vmem>>, vector<16x16x128xbf16>
    %68 = vector.shape_cast %67 : vector<16x16x128xbf16> to vector<256x128xbf16>
    %c0_98 = arith.constant 0 : index
    %c1024_99 = arith.constant 1024 : index
    %69 = vector.load %arg8[%c0_98, %c1024_99] : memref<256x1152xbf16, #tpu.memory_space<vmem>>, vector<256x128xbf16>
    tpu.vector_store %arg8[%c0_98, %c1024_99], %68 {strides = array<i32>} : memref<256x1152xbf16, #tpu.memory_space<vmem>>, vector<256x128xbf16>,
    %c0_100 = arith.constant 0 : index
    %c0_101 = arith.constant 0 : index
    %70 = vector.load %arg8[%c0_100, %c0_101] : memref<256x1152xbf16, #tpu.memory_space<vmem>>, vector<256x1152xbf16>
    %c0_102 = arith.constant 0 : index
    %c0_103 = arith.constant 0 : index
    %71 = vector.load %arg4[%c0_102, %c0_103] : memref<1152x128xbf16, #tpu.memory_space<vmem>>, vector<1152x128xbf16>
    %cst_104 = arith.constant dense<0.000000e+00> : vector<256x128xf32>
    %72 = tpu.matmul %70, %71, %cst_104 {dimension_numbers = #tpu.dot_dimension_numbers<[1], [0], [0], [1], [0, 0, 1, 1], [], []>} : vector<256x1152xbf16>, vector<1152x128xbf16>, vector<256x128xf32> -> vector<256x128xf32>
    %c0_105 = arith.constant 0 : index
    %c0_106 = arith.constant 0 : index
    %73 = vector.load %arg5[%c0_105, %c0_106] : memref<1x128xf32, #tpu.memory_space<vmem>>, vector<1x128xf32>
    %74 = vector.broadcast %73 : vector<1x128xf32> to vector<256x128xf32>
    %75 = arith.addf %72, %74 : vector<256x128xf32>
    %c0_107 = arith.constant 0 : index
    %c0_108 = arith.constant 0 : index
    %c0_109 = arith.constant 0 : index
    %c0_110 = arith.constant 0 : index
    %76 = vector.load %arg1[%c0_107, %c0_108, %c0_109, %c0_110] : memref<1x16x16x128xbf16, #tpu.memory_space<vmem>>, vector<1x16x16x128xbf16>
    %77 = vector.shape_cast %76 : vector<1x16x16x128xbf16> to vector<16x16x128xbf16>
    %78 = vector.shape_cast %77 : vector<16x16x128xbf16> to vector<256x128xbf16>
    %79 = arith.extf %78 : vector<256x128xbf16> to vector<256x128xf32>
    %80 = arith.addf %75, %79 : vector<256x128xf32>
    %cst_111 = arith.constant 0.000000e+00 : f32
    %81 = vector.broadcast %cst_111 : f32 to vector<256x128xf32>
    %82 = arith.maximumf %80, %81 : vector<256x128xf32>
    %83 = vector.shape_cast %82 : vector<256x128xf32> to vector<16x16x128xf32>
    %c0_112 = arith.constant 0 : index
    %c0_113 = arith.constant 0 : index
    %c0_114 = arith.constant 0 : index
    %c0_115 = arith.constant 0 : index
    %84 = vector.load %arg6[%c0_112, %c0_113, %c0_114, %c0_115] : memref<1x16x16x128xf32, #tpu.memory_space<vmem>>, vector<1x16x16x128xf32>
    %85 = vector.shape_cast %84 : vector<1x16x16x128xf32> to vector<16x16x128xf32>
    %86 = vector.shape_cast %83 : vector<16x16x128xf32> to vector<1x16x16x128xf32>
    tpu.vector_store %arg6[%c0_112, %c0_113, %c0_114, %c0_115], %86 {strides = array<i32>} : memref<1x16x16x128xf32, #tpu.memory_space<vmem>>, vector<1x16x16x128xf32>,
    return
  }
  func.func @transform_0(%arg0: i32) -> (i32, i32, i32, i32) {
    %c0_i32 = arith.constant 0 : i32
    %c0_i32_0 = arith.constant 0 : i32
    %c0_i32_1 = arith.constant 0 : i32
    %c0_i32_2 = arith.constant 0 : i32
    return %arg0, %c0_i32, %c0_i32_0, %c0_i32_1 : i32, i32, i32, i32
  }
  func.func @transform_1(%arg0: i32) -> (i32, i32) {
    %c0_i32 = arith.constant 0 : i32
    %c0_i32_0 = arith.constant 0 : i32
    %c0_i32_1 = arith.constant 0 : i32
    return %c0_i32, %c0_i32_0 : i32, i32
  }
  func.func @transform_2(%arg0: i32) -> (i32, i32) {
    %c0_i32 = arith.constant 0 : i32
    %c0_i32_0 = arith.constant 0 : i32
    %c0_i32_1 = arith.constant 0 : i32
    return %c0_i32, %c0_i32_0 : i32, i32
  }
  func.func @transform_3(%arg0: i32) -> (i32, i32) {
    %c0_i32 = arith.constant 0 : i32
    %c0_i32_0 = arith.constant 0 : i32
    %c0_i32_1 = arith.constant 0 : i32
    return %c0_i32, %c0_i32_0 : i32, i32
  }
  func.func @transform_4(%arg0: i32) -> (i32, i32) {
    %c0_i32 = arith.constant 0 : i32
    %c0_i32_0 = arith.constant 0 : i32
    %c0_i32_1 = arith.constant 0 : i32
    return %c0_i32, %c0_i32_0 : i32, i32
  }
  func.func @transform_5(%arg0: i32) -> (i32, i32, i32, i32) {
    %c0_i32 = arith.constant 0 : i32
    %c0_i32_0 = arith.constant 0 : i32
    %c0_i32_1 = arith.constant 0 : i32
    %c0_i32_2 = arith.constant 0 : i32
    return %arg0, %c0_i32, %c0_i32_0, %c0_i32_1 : i32, i32, i32, i32
  }
}

</mosaic_0001>

<llo_original>
// kernel: tpu_custom_call.1
$region0: #{tpu_custom_call.1}
  #allocation0 [shape = 'u32[]', space=smem, size = 0x4, offset = 0x4, fixed_abs, tag = 'smem constant byte address 0x4 - core index']
  #allocation1 [shape = 'u32[144,128]{1,0:T(1,128)}', space=vmem, size = 0x12000, scoped, tag = 'internal scratch']
  #allocation2 [shape = 'bf16[18,18,128]{2,1,0:T(8,128)(2,1)}', space=vmem, size = 0x1b000, scoped, tag = 'scratch operand']
  #allocation3 [shape = 'bf16[256,1152]{1,0:T(8,128)(2,1)}', space=vmem, size = 0x90000, scoped, tag = 'scratch operand']
  %s0 = inlined_call_operand.hbm [shape: bf16[2,16,16,128], index: 0, kind: input, shape index: {}]
  %s1 = inlined_call_operand.hbm [shape: bf16[1152,128], index: 1, kind: input, shape index: {}]
  %s2 = inlined_call_operand.vmem [shape: f32[1,128], index: 2, kind: input, shape index: {}]
  %s3 = inlined_call_operand.hbm [shape: bf16[1152,128], index: 3, kind: input, shape index: {}]
  %s4 = inlined_call_operand.vmem [shape: f32[1,128], index: 4, kind: input, shape index: {}]
  %s5 = inlined_call_operand.hbm [shape: f32[2,16,16,128], index: 5, kind: output, shape index: {}]
  %s6 = sld [smem:[#allocation0]]
  $region65: #{tpu_custom_call.1} parent=0
    _
  %s8 = ssub.s32 1, %s6
  %s9 = scalar_select 0, %s8, %s6
  $region1: #{tpu_custom_call.1} parent=0
    #allocation4 [shape = 'u8[131072]{0}', space=vmem, size = 0x20000, scoped, tag = 'input window, operand 0']
    #allocation5 [shape = 's32[2]{0}', space=sflag, size = 0x8, scoped, tag = 'scoped memory for tpu_custom_call.1']
    #allocation6 [shape = 's32[2]{0}', space=sflag, size = 0x8, scoped, tag = 'scoped memory for tpu_custom_call.1']
    #allocation7 [shape = 'u8[294912]{0}', space=vmem, size = 0x48000, scoped, tag = 'input window, operand 1, single buffered']
    #allocation8 [shape = 's32[1]{0}', space=sflag, size = 0x4, scoped, tag = 'scoped memory for tpu_custom_call.1']
    #allocation9 [shape = 'u8[294912]{0}', space=vmem, size = 0x48000, scoped, tag = 'input window, operand 3, single buffered']
    #allocation10 [shape = 'u8[262144]{0}', space=vmem, size = 0x40000, scoped, tag = 'output window, operand 0']
    %10 = vsyncpa [#allocation5], 0
    %s11 = scalar_lea.sflag [#allocation5], 1
    %12 = vsyncpa %s11, 0
    %13 = vsyncpa [#allocation8], 0
    %14 = vsyncpa [#allocation6], 0
    %s15 = scalar_lea.sflag [#allocation6], 1
    %16 = vsyncpa %s15, 0
    loop: start=0, step=1, limit=4
    $region2: #{tpu_custom_call.1} parent=1 // loop_pre_header
      _
    $region3: #{tpu_custom_call.1} parent=1 // loop_header
      %s18 = sphi 0, %s22
      %p19 = scmp.ge.s32.totalorder %s18, 4
      %s28 = sphi 0, %s30
      %s31 = sphi 0, %s28
      %s32 = sphi 0, %s31
      %s48 = sphi 0, %s32
      %s52 = sphi 0, %s52
      %s54 = sphi 0, %s52
      %s55 = sphi 0, %s54
      %s69 = sphi 0, %s55
      %s73 = sphi 0, %s73
      %s75 = sphi 0, %s73
      %s76 = sphi 0, %s75
      %s90 = sphi 0, %s76
      %s94 = sphi 0, %s94
      %s96 = sphi 0, %s94
      %s97 = sphi 0, %s96
      %s111 = sphi 0, %s97
      %s115 = sphi 0, %s115
      %s117 = sphi 0, %s115
      %s118 = sphi 0, %s117
      %s132 = sphi 0, %s118
      %s138 = sphi 0, %s140
      %s141 = sphi 0, %s138
      %s142 = sphi 0, %s141
      %s158 = sphi 0, %s142
    $region4: #{tpu_custom_call.1} parent=1 // loop_header_branch
      %21 = sbr.rel (%p19) target = $region8
    $region5: #{tpu_custom_call.1} parent=1 // loop_body
      %s23 = ssub.s32 %s18, 1
      %s24 = ssub.s32 %s18, 2
      %s25 = sadd.s32 %s18, 1
      %s26 = ssub.s32 %s18, %s25
      %p27 = scmp.eq.s32.totalorder %s26, 0
      %s29 = sadd.s32 %s28, 1
      %s30 = scalar_select %p27, %s28, %s29
      %p33 = pneg %p27
      %p34 = scmp.eq.s32.totalorder %s18, 1
      %p35 = por %p33, %p34
      %p36 = scmp.ne.s32.totalorder %s28, %s31
      %p37 = scmp.eq.s32.totalorder %s18, 0
      %p38 = por %p36, %p37
      %p39 = scmp.ne.s32.totalorder %s28, %s31
      %p40 = scmp.eq.s32.totalorder %s23, 1
      %p41 = por %p39, %p40
      %p42 = scmp.ne.s32.totalorder %s31, %s32
      %p43 = scmp.eq.s32.totalorder %s23, 0
      %p44 = por %p42, %p43
      %p45 = scmp.ne.s32.totalorder %s31, %s32
      %p46 = scmp.eq.s32.totalorder %s24, 1
      %p47 = por %p45, %p46
      %p49 = scmp.ne.s32.totalorder %s32, %s48
      %p50 = scmp.eq.s32.totalorder %s24, 0
      %p51 = por %p49, %p50
      %s53 = sadd.s32 %s52, 1
      %p56 = scmp.eq.s32.totalorder %s18, 1
      %p57 = scmp.ne.s32.totalorder %s52, %s54
      %p58 = scmp.eq.s32.totalorder %s18, 0
      %p59 = por %p57, %p58
      %p60 = scmp.ne.s32.totalorder %s52, %s54
      %p61 = scmp.eq.s32.totalorder %s23, 1
      %p62 = por %p60, %p61
      %p63 = scmp.ne.s32.totalorder %s54, %s55
      %p64 = scmp.eq.s32.totalorder %s23, 0
      %p65 = por %p63, %p64
      %p66 = scmp.ne.s32.totalorder %s54, %s55
      %p67 = scmp.eq.s32.totalorder %s24, 1
      %p68 = por %p66, %p67
      %p70 = scmp.ne.s32.totalorder %s55, %s69
      %p71 = scmp.eq.s32.totalorder %s24, 0
      %p72 = por %p70, %p71
      %s74 = sadd.s32 %s73, 1
      %p77 = scmp.eq.s32.totalorder %s18, 1
      %p78 = scmp.ne.s32.totalorder %s73, %s75
      %p79 = scmp.eq.s32.totalorder %s18, 0
      %p80 = por %p78, %p79
      %p81 = scmp.ne.s32.totalorder %s73, %s75
      %p82 = scmp.eq.s32.totalorder %s23, 1
      %p83 = por %p81, %p82
      %p84 = scmp.ne.s32.totalorder %s75, %s76
      %p85 = scmp.eq.s32.totalorder %s23, 0
      %p86 = por %p84, %p85
      %p87 = scmp.ne.s32.totalorder %s75, %s76
      %p88 = scmp.eq.s32.totalorder %s24, 1
      %p89 = por %p87, %p88
      %p91 = scmp.ne.s32.totalorder %s76, %s90
      %p92 = scmp.eq.s32.totalorder %s24, 0
      %p93 = por %p91, %p92
      %s95 = sadd.s32 %s94, 1
      %p98 = scmp.eq.s32.totalorder %s18, 1
      %p99 = scmp.ne.s32.totalorder %s94, %s96
      %p100 = scmp.eq.s32.totalorder %s18, 0
      %p101 = por %p99, %p100
      %p102 = scmp.ne.s32.totalorder %s94, %s96
      %p103 = scmp.eq.s32.totalorder %s23, 1
      %p104 = por %p102, %p103
      %p105 = scmp.ne.s32.totalorder %s96, %s97
      %p106 = scmp.eq.s32.totalorder %s23, 0
      %p107 = por %p105, %p106
      %p108 = scmp.ne.s32.totalorder %s96, %s97
      %p109 = scmp.eq.s32.totalorder %s24, 1
      %p110 = por %p108, %p109
      %p112 = scmp.ne.s32.totalorder %s97, %s111
      %p113 = scmp.eq.s32.totalorder %s24, 0
      %p114 = por %p112, %p113
      %s116 = sadd.s32 %s115, 1
      %p119 = scmp.eq.s32.totalorder %s18, 1
      %p120 = scmp.ne.s32.totalorder %s115, %s117
      %p121 = scmp.eq.s32.totalorder %s18, 0
      %p122 = por %p120, %p121
      %p123 = scmp.ne.s32.totalorder %s115, %s117
      %p124 = scmp.eq.s32.totalorder %s23, 1
      %p125 = por %p123, %p124
      %p126 = scmp.ne.s32.totalorder %s117, %s118
      %p127 = scmp.eq.s32.totalorder %s23, 0
      %p128 = por %p126, %p127
      %p129 = scmp.ne.s32.totalorder %s117, %s118
      %p130 = scmp.eq.s32.totalorder %s24, 1
      %p131 = por %p129, %p130
      %p133 = scmp.ne.s32.totalorder %s118, %s132
      %p134 = scmp.eq.s32.totalorder %s24, 0
      %p135 = por %p133, %p134
      %s136 = ssub.s32 %s18, %s25
      %p137 = scmp.eq.s32.totalorder %s136, 0
      %s139 = sadd.s32 %s138, 1
      %s140 = scalar_select %p137, %s138, %s139
      %p143 = pneg %p137
      %p144 = scmp.eq.s32.totalorder %s18, 1
      %p145 = por %p143, %p144
      %p146 = scmp.ne.s32.totalorder %s138, %s141
      %p147 = scmp.eq.s32.totalorder %s18, 0
      %p148 = por %p146, %p147
      %p149 = scmp.ne.s32.totalorder %s138, %s141
      %p150 = scmp.eq.s32.totalorder %s23, 1
      %p151 = por %p149, %p150
      %p152 = scmp.ne.s32.totalorder %s141, %s142
      %p153 = scmp.eq.s32.totalorder %s23, 0
      %p154 = por %p152, %p153
      %p155 = scmp.ne.s32.totalorder %s141, %s142
      %p156 = scmp.eq.s32.totalorder %s24, 1
      %p157 = por %p155, %p156
      %p159 = scmp.ne.s32.totalorder %s142, %s158
      %p160 = scmp.eq.s32.totalorder %s24, 0
      %p161 = por %p159, %p160
      %p162 = scmp.le.s32.totalorder 1, %s18
      %p163 = scmp.lt.s32.totalorder %s18, 3
      %p164 = pnand %p162, %p163
      %p165 = pneg %p164
      // Predicated region
      $region9: #{tpu_custom_call.1} parent=5 // pred_check
        _
      $region10: #{tpu_custom_call.1} parent=5 // pred_check_branch
        %167 = sbr.rel (%p164) target = $region12
      $region11: #{tpu_custom_call.1} parent=5 // pred_region
        %s168 = ssub.s32 %s18, 1
        // Predicated region
        $region13: #{tpu_custom_call.1} parent=11 // pred_check
          %p169 = pneg %p65
        $region14: #{tpu_custom_call.1} parent=11 // pred_check_branch
          %171 = sbr.rel (%p169) target = $region16
        $region15: #{tpu_custom_call.1} parent=11 // pred_region
          %s173 = ssub.s32 9216, 9216
          %174 = vsyncadd [#allocation8], %s173
          %s175 = sshll.u32 [#allocation7], 4
          %s176 = int_to_ptr.vmem [resolvable:$true] %s175
          %181 = dma.hbm_to_vmem [thread:$0]  %s1, 9216, %s176, [#allocation8], 64, 64, 4
        $region16: #{tpu_custom_call.1} parent=11 // pred_fallthru
          _
        // Predicated region
        $region17: #{tpu_custom_call.1} parent=11 // pred_check
          %p182 = pneg %p86
        $region18: #{tpu_custom_call.1} parent=11 // pred_check_branch
          %184 = sbr.rel (%p182) target = $region20
        $region19: #{tpu_custom_call.1} parent=11 // pred_region
          _
        $region20: #{tpu_custom_call.1} parent=11 // pred_fallthru
          _
        // Predicated region
        $region21: #{tpu_custom_call.1} parent=11 // pred_check
          %p185 = pneg %p107
        $region22: #{tpu_custom_call.1} parent=11 // pred_check_branch
          %187 = sbr.rel (%p185) target = $region24
        $region23: #{tpu_custom_call.1} parent=11 // pred_region
          %s189 = ssub.s32 9216, 9216
          %190 = vsyncadd [#allocation8], %s189
          %s191 = sshll.u32 [#allocation9], 4
          %s192 = int_to_ptr.vmem [resolvable:$true] %s191
          %197 = dma.hbm_to_vmem [thread:$0]  %s3, 9216, %s192, [#allocation8], 64, 64, 4
        $region24: #{tpu_custom_call.1} parent=11 // pred_fallthru
          _
        // Predicated region
        $region25: #{tpu_custom_call.1} parent=11 // pred_check
          %p198 = pneg %p128
        $region26: #{tpu_custom_call.1} parent=11 // pred_check_branch
          %200 = sbr.rel (%p198) target = $region28
        $region27: #{tpu_custom_call.1} parent=11 // pred_region
          _
        $region28: #{tpu_custom_call.1} parent=11 // pred_fallthru
          _
      $region12: #{tpu_custom_call.1} parent=5 // pred_fallthru
        _
      %p201 = scmp.lt.s32.totalorder %s18, 2
      // Predicated region
      $region29: #{tpu_custom_call.1} parent=5 // pred_check
        %p202 = pneg %p201
      $region30: #{tpu_custom_call.1} parent=5 // pred_check_branch
        %204 = sbr.rel (%p202) target = $region32
      $region31: #{tpu_custom_call.1} parent=5 // pred_region
        // Predicated region
        $region33: #{tpu_custom_call.1} parent=31 // pred_check
          %p205 = pneg %p38
        $region34: #{tpu_custom_call.1} parent=31 // pred_check_branch
          %207 = sbr.rel (%p205) target = $region36
        $region35: #{tpu_custom_call.1} parent=31 // pred_region
          %s208 = sand.u32 %s28, 1
          %s209 = scalar_lea.sflag [#allocation5], %s208
          %s210 = sand.u32 %s28, 1
          %s211 = smul.addr %s210, 128
          %s212 = scalar_lea.vmem [#allocation4], %s211
          %s214 = ssub.s32 2048, 2048
          %215 = vsyncadd %s209, %s214
          %s216 = smul.addr %s18, 32
          %s217 = smul.addr %s216, 64
          %s218 = scalar_lea.hbm %s0, %s217
          %s219 = sshll.u32 %s212, 4
          %s220 = int_to_ptr.vmem [resolvable:$true] %s219
          %225 = dma.hbm_to_vmem [thread:$0]  %s218, 2048, %s220, %s209, 64, 64, 4
        $region36: #{tpu_custom_call.1} parent=31 // pred_fallthru
          _
      $region32: #{tpu_custom_call.1} parent=5 // pred_fallthru
        _
      %p226 = scmp.le.s32.totalorder 1, %s18
      %p227 = scmp.lt.s32.totalorder %s18, 3
      %p228 = pnand %p226, %p227
      %p229 = pneg %p228
      // Predicated region
      $region37: #{tpu_custom_call.1} parent=5 // pred_check
        _
      $region38: #{tpu_custom_call.1} parent=5 // pred_check_branch
        %231 = sbr.rel (%p228) target = $region40
      $region39: #{tpu_custom_call.1} parent=5 // pred_region
        %s232 = ssub.s32 %s18, 1
        %s233 = sand.u32 %s31, 1
        %s234 = scalar_lea.sflag [#allocation5], %s233
        %s235 = sand.u32 %s31, 1
        %s236 = smul.addr %s235, 128
        %s237 = scalar_lea.vmem [#allocation4], %s236
        // Predicated region
        $region41: #{tpu_custom_call.1} parent=39 // pred_check
          %p238 = pneg %p44
        $region42: #{tpu_custom_call.1} parent=39 // pred_check_branch
          %240 = sbr.rel (%p238) target = $region44
        $region43: #{tpu_custom_call.1} parent=39 // pred_region
          %241 = dma.done %s234, 2048
        $region44: #{tpu_custom_call.1} parent=39 // pred_fallthru
          _
        // Predicated region
        $region45: #{tpu_custom_call.1} parent=39 // pred_check
          %p242 = pneg %p65
        $region46: #{tpu_custom_call.1} parent=39 // pred_check_branch
          %244 = sbr.rel (%p242) target = $region48
        $region47: #{tpu_custom_call.1} parent=39 // pred_region
          %245 = dma.done [#allocation8], 9216
        $region48: #{tpu_custom_call.1} parent=39 // pred_fallthru
          _
        // Predicated region
        $region49: #{tpu_custom_call.1} parent=39 // pred_check
          %p246 = pneg %p107
        $region50: #{tpu_custom_call.1} parent=39 // pred_check_branch
          %248 = sbr.rel (%p246) target = $region52
        $region51: #{tpu_custom_call.1} parent=39 // pred_region
          %249 = dma.done [#allocation8], 9216
        $region52: #{tpu_custom_call.1} parent=39 // pred_fallthru
          _
        %s250 = sand.u32 %s31, 1
        %s251 = scalar_lea.sflag [#allocation5], %s250
        %s252 = sand.u32 %s31, 1
        %s253 = smul.addr %s252, 128
        %s254 = scalar_lea.vmem [#allocation4], %s253
        %p255 = pneg %p44
        %p256 = pneg %p41
        %p257 = pneg %p65
        %p258 = pneg %p62
        %p259 = pneg %p86
        %p260 = pneg %p83
        %p261 = pneg %p107
        %p262 = pneg %p104
        %p263 = pneg %p128
        %p264 = pneg %p125
        %p265 = pneg %p154
        %p266 = pneg %p151
        %s267 = sand.u32 %s141, 1
        %s268 = scalar_lea.sflag [#allocation6], %s267
        %s269 = sand.u32 %s141, 1
        %s270 = smul.addr %s269, 256
        %s271 = scalar_lea.vmem [#allocation10], %s270
        %273 = vst [vmem:[#allocation2] sm:$0xf] 0
        %274 = vst [vmem:[#allocation2 + $0x4] sm:$0xf] 0
        %275 = vst [vmem:[#allocation2 + $0x8] sm:$0x1] 0
        %276 = vst [vmem:[#allocation2 + $0xc] sm:$0xf] 0
        %277 = vst [vmem:[#allocation2 + $0x10] sm:$0xf] 0
        %278 = vst [vmem:[#allocation2 + $0x14] sm:$0x1] 0
        %279 = vst [vmem:[#allocation2 + $0x18] sm:$0xf] 0
        %280 = vst [vmem:[#allocation2 + $0x1c] sm:$0xf] 0
        %281 = vst [vmem:[#allocation2 + $0x20] sm:$0x1] 0
        %282 = vst [vmem:[#allocation2 + $0x24] sm:$0xf] 0
        %283 = vst [vmem:[#allocation2 + $0x28] sm:$0xf] 0
        %284 = vst [vmem:[#allocation2 + $0x2c] sm:$0x1] 0
        %285 = vst [vmem:[#allocation2 + $0x30] sm:$0xf] 0
        %286 = vst [vmem:[#allocation2 + $0x34] sm:$0xf] 0
        %287 = vst [vmem:[#allocation2 + $0x38] sm:$0x1] 0
        %288 = vst [vmem:[#allocation2 + $0x3c] sm:$0xf] 0
        %289 = vst [vmem:[#allocation2 + $0x40] sm:$0xf] 0
        %290 = vst [vmem:[#allocation2 + $0x44] sm:$0x1] 0
        %291 = vst [vmem:[#allocation2 + $0x48] sm:$0xf] 0
        %292 = vst [vmem:[#allocation2 + $0x4c] sm:$0xf] 0
        %293 = vst [vmem:[#allocation2 + $0x50] sm:$0x1] 0
        %294 = vst [vmem:[#allocation2 + $0x54] sm:$0xf] 0
        %295 = vst [vmem:[#allocation2 + $0x58] sm:$0xf] 0
        %296 = vst [vmem:[#allocation2 + $0x5c] sm:$0x1] 0
        %297 = vst [vmem:[#allocation2 + $0x60] sm:$0xf] 0
        %298 = vst [vmem:[#allocation2 + $0x64] sm:$0xf] 0
        %299 = vst [vmem:[#allocation2 + $0x68] sm:$0x1] 0
        %300 = vst [vmem:[#allocation2 + $0x6c] sm:$0xf] 0
        %301 = vst [vmem:[#allocation2 + $0x70] sm:$0xf] 0
        %302 = vst [vmem:[#allocation2 + $0x74] sm:$0x1] 0
        %303 = vst [vmem:[#allocation2 + $0x78] sm:$0xf] 0
        %304 = vst [vmem:[#allocation2 + $0x7c] sm:$0xf] 0
        %305 = vst [vmem:[#allocation2 + $0x80] sm:$0x1] 0
        %306 = vst [vmem:[#allocation2 + $0x84] sm:$0xf] 0
        %307 = vst [vmem:[#allocation2 + $0x88] sm:$0xf] 0
        %308 = vst [vmem:[#allocation2 + $0x8c] sm:$0x1] 0
        %309 = vst [vmem:[#allocation2 + $0x90] sm:$0xf] 0
        %310 = vst [vmem:[#allocation2 + $0x94] sm:$0xf] 0
        %311 = vst [vmem:[#allocation2 + $0x98] sm:$0x1] 0
        %312 = vst [vmem:[#allocation2 + $0x9c] sm:$0xf] 0
        %313 = vst [vmem:[#allocation2 + $0xa0] sm:$0xf] 0
        %314 = vst [vmem:[#allocation2 + $0xa4] sm:$0x1] 0
        %315 = vst [vmem:[#allocation2 + $0xa8] sm:$0xf] 0
        %316 = vst [vmem:[#allocation2 + $0xac] sm:$0xf] 0
        %317 = vst [vmem:[#allocation2 + $0xb0] sm:$0x1] 0
        %318 = vst [vmem:[#allocation2 + $0xb4] sm:$0xf] 0
        %319 = vst [vmem:[#allocation2 + $0xb8] sm:$0xf] 0
        %320 = vst [vmem:[#allocation2 + $0xbc] sm:$0x1] 0
        %321 = vst [vmem:[#allocation2 + $0xc0] sm:$0xf] 0
        %322 = vst [vmem:[#allocation2 + $0xc4] sm:$0xf] 0
        %323 = vst [vmem:[#allocation2 + $0xc8] sm:$0x1] 0
        %324 = vst [vmem:[#allocation2 + $0xcc] sm:$0xf] 0
        %325 = vst [vmem:[#allocation2 + $0xd0] sm:$0xf] 0
        %326 = vst [vmem:[#allocation2 + $0xd4] sm:$0x1] 0
        %v327 = vld [vmem:[%s237] sm:$0xf]
        %v328 = vld [vmem:[%s237 + $0x4] sm:$0xf]
        %v329 = vld [vmem:[%s237 + $0x8] sm:$0xf]
        %v330 = vld [vmem:[%s237 + $0xc] sm:$0xf]
        %v331 = vld [vmem:[%s237 + $0x10] sm:$0xf]
        %v332 = vld [vmem:[%s237 + $0x14] sm:$0xf]
        %v333 = vld [vmem:[%s237 + $0x18] sm:$0xf]
        %v334 = vld [vmem:[%s237 + $0x1c] sm:$0xf]
        %v335 = vld [vmem:[%s237 + $0x20] sm:$0xf]
        %v336 = vld [vmem:[%s237 + $0x24] sm:$0xf]
        %v337 = vld [vmem:[%s237 + $0x28] sm:$0xf]
        %v338 = vld [vmem:[%s237 + $0x2c] sm:$0xf]
        %v339 = vld [vmem:[%s237 + $0x30] sm:$0xf]
        %v340 = vld [vmem:[%s237 + $0x34] sm:$0xf]
        %v341 = vld [vmem:[%s237 + $0x38] sm:$0xf]
        %v342 = vld [vmem:[%s237 + $0x3c] sm:$0xf]
        %v343 = vld [vmem:[%s237 + $0x40] sm:$0xf]
        %v344 = vld [vmem:[%s237 + $0x44] sm:$0xf]
        %v345 = vld [vmem:[%s237 + $0x48] sm:$0xf]
        %v346 = vld [vmem:[%s237 + $0x4c] sm:$0xf]
        %v347 = vld [vmem:[%s237 + $0x50] sm:$0xf]
        %v348 = vld [vmem:[%s237 + $0x54] sm:$0xf]
        %v349 = vld [vmem:[%s237 + $0x58] sm:$0xf]
        %v350 = vld [vmem:[%s237 + $0x5c] sm:$0xf]
        %v351 = vld [vmem:[%s237 + $0x60] sm:$0xf]
        %v352 = vld [vmem:[%s237 + $0x64] sm:$0xf]
        %v353 = vld [vmem:[%s237 + $0x68] sm:$0xf]
        %v354 = vld [vmem:[%s237 + $0x6c] sm:$0xf]
        %v355 = vld [vmem:[%s237 + $0x70] sm:$0xf]
        %v356 = vld [vmem:[%s237 + $0x74] sm:$0xf]
        %v357 = vld [vmem:[%s237 + $0x78] sm:$0xf]
        %v358 = vld [vmem:[%s237 + $0x7c] sm:$0xf]
        %vm359 = vsmask.f32 256
        %vm360 = vsmask.f32 4368
        %vm361 = vmor %vm359, %vm360
        %v363 = vshrl.u32 %v327, 16
        %v365 = vrot.slane %v363, 7
        %v366 = vshll.u32 %v327, 16
        %v368 = vor.u32 %v365, %v366
        %v369 = vrot.slane %v365, 4
        %v371 = vshrl.u32 %v328, 16
        %v373 = vrot.slane %v371, 7
        %v374 = vshll.u32 %v328, 16
        %v376 = vor.u32 %v373, %v374
        %v377 = vsel %vm361, %v369, %v376
        %v378 = vrot.slane %v373, 4
        %v380 = vshrl.u32 %v329, 16
        %v382 = vrot.slane %v380, 7
        %v383 = vshll.u32 %v329, 16
        %v385 = vor.u32 %v382, %v383
        %v386 = vrot.slane %v382, 4
        %v388 = vshrl.u32 %v330, 16
        %v390 = vrot.slane %v388, 7
        %v391 = vshll.u32 %v330, 16
        %v393 = vor.u32 %v390, %v391
        %v394 = vsel %vm361, %v386, %v393
        %v395 = vrot.slane %v390, 4
        %v397 = vshrl.u32 %v331, 16
        %v399 = vrot.slane %v397, 7
        %v400 = vshll.u32 %v331, 16
        %v402 = vor.u32 %v399, %v400
        %v403 = vrot.slane %v399, 4
        %v405 = vshrl.u32 %v332, 16
        %v407 = vrot.slane %v405, 7
        %v408 = vshll.u32 %v332, 16
        %v410 = vor.u32 %v407, %v408
        %v411 = vsel %vm361, %v403, %v410
        %v412 = vrot.slane %v407, 4
        %v414 = vshrl.u32 %v333, 16
        %v416 = vrot.slane %v414, 7
        %v417 = vshll.u32 %v333, 16
        %v419 = vor.u32 %v416, %v417
        %v420 = vrot.slane %v416, 4
        %v422 = vshrl.u32 %v334, 16
        %v424 = vrot.slane %v422, 7
        %v425 = vshll.u32 %v334, 16
        %v427 = vor.u32 %v424, %v425
        %v428 = vsel %vm361, %v420, %v427
        %v429 = vrot.slane %v424, 4
        %v431 = vshrl.u32 %v335, 16
        %v433 = vrot.slane %v431, 7
        %v434 = vshll.u32 %v335, 16
        %v436 = vor.u32 %v433, %v434
        %v437 = vrot.slane %v433, 4
        %v439 = vshrl.u32 %v336, 16
        %v441 = vrot.slane %v439, 7
        %v442 = vshll.u32 %v336, 16
        %v444 = vor.u32 %v441, %v442
        %v445 = vsel %vm361, %v437, %v444
        %v446 = vrot.slane %v441, 4
        %v448 = vshrl.u32 %v337, 16
        %v450 = vrot.slane %v448, 7
        %v451 = vshll.u32 %v337, 16
        %v453 = vor.u32 %v450, %v451
        %v454 = vrot.slane %v450, 4
        %v456 = vshrl.u32 %v338, 16
        %v458 = vrot.slane %v456, 7
        %v459 = vshll.u32 %v338, 16
        %v461 = vor.u32 %v458, %v459
        %v462 = vsel %vm361, %v454, %v461
        %v463 = vrot.slane %v458, 4
        %v465 = vshrl.u32 %v339, 16
        %v467 = vrot.slane %v465, 7
        %v468 = vshll.u32 %v339, 16
        %v470 = vor.u32 %v467, %v468
        %v471 = vrot.slane %v467, 4
        %v473 = vshrl.u32 %v340, 16
        %v475 = vrot.slane %v473, 7
        %v476 = vshll.u32 %v340, 16
        %v478 = vor.u32 %v475, %v476
        %v479 = vsel %vm361, %v471, %v478
        %v480 = vrot.slane %v475, 4
        %v482 = vshrl.u32 %v341, 16
        %v484 = vrot.slane %v482, 7
        %v485 = vshll.u32 %v341, 16
        %v487 = vor.u32 %v484, %v485
        %v488 = vrot.slane %v484, 4
        %v490 = vshrl.u32 %v342, 16
        %v492 = vrot.slane %v490, 7
        %v493 = vshll.u32 %v342, 16
        %v495 = vor.u32 %v492, %v493
        %v496 = vsel %vm361, %v488, %v495
        %v497 = vrot.slane %v492, 4
        %v499 = vshrl.u32 %v343, 16
        %v501 = vrot.slane %v499, 7
        %v502 = vshll.u32 %v343, 16
        %v504 = vor.u32 %v501, %v502
        %v505 = vrot.slane %v501, 4
        %v507 = vshrl.u32 %v344, 16
        %v509 = vrot.slane %v507, 7
        %v510 = vshll.u32 %v344, 16
        %v512 = vor.u32 %v509, %v510
        %v513 = vsel %vm361, %v505, %v512
        %v514 = vrot.slane %v509, 4
        %v516 = vshrl.u32 %v345, 16
        %v518 = vrot.slane %v516, 7
        %v519 = vshll.u32 %v345, 16
        %v521 = vor.u32 %v518, %v519
        %v522 = vrot.slane %v518, 4
        %v524 = vshrl.u32 %v346, 16
        %v526 = vrot.slane %v524, 7
        %v527 = vshll.u32 %v346, 16
        %v529 = vor.u32 %v526, %v527
        %v530 = vsel %vm361, %v522, %v529
        %v531 = vrot.slane %v526, 4
        %v533 = vshrl.u32 %v347, 16
        %v535 = vrot.slane %v533, 7
        %v536 = vshll.u32 %v347, 16
        %v538 = vor.u32 %v535, %v536
        %v539 = vrot.slane %v535, 4
        %v541 = vshrl.u32 %v348, 16
        %v543 = vrot.slane %v541, 7
        %v544 = vshll.u32 %v348, 16
        %v546 = vor.u32 %v543, %v544
        %v547 = vsel %vm361, %v539, %v546
        %v548 = vrot.slane %v543, 4
        %v550 = vshrl.u32 %v349, 16
        %v552 = vrot.slane %v550, 7
        %v553 = vshll.u32 %v349, 16
        %v555 = vor.u32 %v552, %v553
        %v556 = vrot.slane %v552, 4
        %v558 = vshrl.u32 %v350, 16
        %v560 = vrot.slane %v558, 7
        %v561 = vshll.u32 %v350, 16
        %v563 = vor.u32 %v560, %v561
        %v564 = vsel %vm361, %v556, %v563
        %v565 = vrot.slane %v560, 4
        %v567 = vshrl.u32 %v351, 16
        %v569 = vrot.slane %v567, 7
        %v570 = vshll.u32 %v351, 16
        %v572 = vor.u32 %v569, %v570
        %v573 = vrot.slane %v569, 4
        %v575 = vshrl.u32 %v352, 16
        %v577 = vrot.slane %v575, 7
        %v578 = vshll.u32 %v352, 16
        %v580 = vor.u32 %v577, %v578
        %v581 = vsel %vm361, %v573, %v580
        %v582 = vrot.slane %v577, 4
        %v584 = vshrl.u32 %v353, 16
        %v586 = vrot.slane %v584, 7
        %v587 = vshll.u32 %v353, 16
        %v589 = vor.u32 %v586, %v587
        %v590 = vrot.slane %v586, 4
        %v592 = vshrl.u32 %v354, 16
        %v594 = vrot.slane %v592, 7
        %v595 = vshll.u32 %v354, 16
        %v597 = vor.u32 %v594, %v595
        %v598 = vsel %vm361, %v590, %v597
        %v599 = vrot.slane %v594, 4
        %v601 = vshrl.u32 %v355, 16
        %v603 = vrot.slane %v601, 7
        %v604 = vshll.u32 %v355, 16
        %v606 = vor.u32 %v603, %v604
        %v607 = vrot.slane %v603, 4
        %v609 = vshrl.u32 %v356, 16
        %v611 = vrot.slane %v609, 7
        %v612 = vshll.u32 %v356, 16
        %v614 = vor.u32 %v611, %v612
        %v615 = vsel %vm361, %v607, %v614
        %v616 = vrot.slane %v611, 4
        %v618 = vshrl.u32 %v357, 16
        %v620 = vrot.slane %v618, 7
        %v621 = vshll.u32 %v357, 16
        %v623 = vor.u32 %v620, %v621
        %v624 = vrot.slane %v620, 4
        %v626 = vshrl.u32 %v358, 16
        %v628 = vrot.slane %v626, 7
        %v629 = vshll.u32 %v358, 16
        %v631 = vor.u32 %v628, %v629
        %v632 = vsel %vm361, %v624, %v631
        %v633 = vrot.slane %v628, 4
        %s682 = scalar_lea.vmem [#allocation2], 12
        %vm683 = vcmask 1043456
        %vm684 = vsmask.f32 7938
        %vm685 = vmand %vm683, %vm684
        %v686 = vld [vmem:[%s682] sm:$0xf]
        %v687 = vsel %vm685, %v368, %v686
        %688 = vst [vmem:[%s682] sm:$0xf] %v687
        %689 = vst [vmem:[%s682 + $0x4] sm:$0xf] %v377
        %vm690 = vcmask 1040384
        %vm691 = vmand %vm690, %vm359
        %v692 = vld [vmem:[%s682 + $0x8] sm:$0x1]
        %v693 = vsel %vm691, %v378, %v692
        %694 = vst [vmem:[%s682 + $0x8] sm:$0x1] %v693
        %v695 = vld [vmem:[%s682 + $0xc] sm:$0xf]
        %v696 = vsel %vm685, %v385, %v695
        %697 = vst [vmem:[%s682 + $0xc] sm:$0xf] %v696
        %698 = vst [vmem:[%s682 + $0x10] sm:$0xf] %v394
        %v699 = vld [vmem:[%s682 + $0x14] sm:$0x1]
        %v700 = vsel %vm691, %v395, %v699
        %701 = vst [vmem:[%s682 + $0x14] sm:$0x1] %v700
        %v702 = vld [vmem:[%s682 + $0x18] sm:$0xf]
        %v703 = vsel %vm685, %v402, %v702
        %704 = vst [vmem:[%s682 + $0x18] sm:$0xf] %v703
        %705 = vst [vmem:[%s682 + $0x1c] sm:$0xf] %v411
        %v706 = vld [vmem:[%s682 + $0x20] sm:$0x1]
        %v707 = vsel %vm691, %v412, %v706
        %708 = vst [vmem:[%s682 + $0x20] sm:$0x1] %v707
        %v709 = vld [vmem:[%s682 + $0x24] sm:$0xf]
        %v710 = vsel %vm685, %v419, %v709
        %711 = vst [vmem:[%s682 + $0x24] sm:$0xf] %v710
        %712 = vst [vmem:[%s682 + $0x28] sm:$0xf] %v428
        %v713 = vld [vmem:[%s682 + $0x2c] sm:$0x1]
        %v714 = vsel %vm691, %v429, %v713
        %715 = vst [vmem:[%s682 + $0x2c] sm:$0x1] %v714
        %v716 = vld [vmem:[%s682 + $0x30] sm:$0xf]
        %v717 = vsel %vm685, %v436, %v716
        %718 = vst [vmem:[%s682 + $0x30] sm:$0xf] %v717
        %719 = vst [vmem:[%s682 + $0x34] sm:$0xf] %v445
        %v720 = vld [vmem:[%s682 + $0x38] sm:$0x1]
        %v721 = vsel %vm691, %v446, %v720
        %722 = vst [vmem:[%s682 + $0x38] sm:$0x1] %v721
        %v723 = vld [vmem:[%s682 + $0x3c] sm:$0xf]
        %v724 = vsel %vm685, %v453, %v723
        %725 = vst [vmem:[%s682 + $0x3c] sm:$0xf] %v724
        %726 = vst [vmem:[%s682 + $0x40] sm:$0xf] %v462
        %v727 = vld [vmem:[%s682 + $0x44] sm:$0x1]
        %v728 = vsel %vm691, %v463, %v727
        %729 = vst [vmem:[%s682 + $0x44] sm:$0x1] %v728
        %v730 = vld [vmem:[%s682 + $0x48] sm:$0xf]
        %v731 = vsel %vm685, %v470, %v730
        %732 = vst [vmem:[%s682 + $0x48] sm:$0xf] %v731
        %733 = vst [vmem:[%s682 + $0x4c] sm:$0xf] %v479
        %v734 = vld [vmem:[%s682 + $0x50] sm:$0x1]
        %v735 = vsel %vm691, %v480, %v734
        %736 = vst [vmem:[%s682 + $0x50] sm:$0x1] %v735
        %v737 = vld [vmem:[%s682 + $0x54] sm:$0xf]
        %v738 = vsel %vm685, %v487, %v737
        %739 = vst [vmem:[%s682 + $0x54] sm:$0xf] %v738
        %740 = vst [vmem:[%s682 + $0x58] sm:$0xf] %v496
        %v741 = vld [vmem:[%s682 + $0x5c] sm:$0x1]
        %v742 = vsel %vm691, %v497, %v741
        %743 = vst [vmem:[%s682 + $0x5c] sm:$0x1] %v742
        %v744 = vld [vmem:[%s682 + $0x60] sm:$0xf]
        %v745 = vsel %vm685, %v504, %v744
        %746 = vst [vmem:[%s682 + $0x60] sm:$0xf] %v745
        %747 = vst [vmem:[%s682 + $0x64] sm:$0xf] %v513
        %v748 = vld [vmem:[%s682 + $0x68] sm:$0x1]
        %v749 = vsel %vm691, %v514, %v748
        %750 = vst [vmem:[%s682 + $0x68] sm:$0x1] %v749
        %v751 = vld [vmem:[%s682 + $0x6c] sm:$0xf]
        %v752 = vsel %vm685, %v521, %v751
        %753 = vst [vmem:[%s682 + $0x6c] sm:$0xf] %v752
        %754 = vst [vmem:[%s682 + $0x70] sm:$0xf] %v530
        %v755 = vld [vmem:[%s682 + $0x74] sm:$0x1]
        %v756 = vsel %vm691, %v531, %v755
        %757 = vst [vmem:[%s682 + $0x74] sm:$0x1] %v756
        %v758 = vld [vmem:[%s682 + $0x78] sm:$0xf]
        %v759 = vsel %vm685, %v538, %v758
        %760 = vst [vmem:[%s682 + $0x78] sm:$0xf] %v759
        %761 = vst [vmem:[%s682 + $0x7c] sm:$0xf] %v547
        %v762 = vld [vmem:[%s682 + $0x80] sm:$0x1]
        %v763 = vsel %vm691, %v548, %v762
        %764 = vst [vmem:[%s682 + $0x80] sm:$0x1] %v763
        %v765 = vld [vmem:[%s682 + $0x84] sm:$0xf]
        %v766 = vsel %vm685, %v555, %v765
        %767 = vst [vmem:[%s682 + $0x84] sm:$0xf] %v766
        %768 = vst [vmem:[%s682 + $0x88] sm:$0xf] %v564
        %v769 = vld [vmem:[%s682 + $0x8c] sm:$0x1]
        %v770 = vsel %vm691, %v565, %v769
        %771 = vst [vmem:[%s682 + $0x8c] sm:$0x1] %v770
        %v772 = vld [vmem:[%s682 + $0x90] sm:$0xf]
        %v773 = vsel %vm685, %v572, %v772
        %774 = vst [vmem:[%s682 + $0x90] sm:$0xf] %v773
        %775 = vst [vmem:[%s682 + $0x94] sm:$0xf] %v581
        %v776 = vld [vmem:[%s682 + $0x98] sm:$0x1]
        %v777 = vsel %vm691, %v582, %v776
        %778 = vst [vmem:[%s682 + $0x98] sm:$0x1] %v777
        %v779 = vld [vmem:[%s682 + $0x9c] sm:$0xf]
        %v780 = vsel %vm685, %v589, %v779
        %781 = vst [vmem:[%s682 + $0x9c] sm:$0xf] %v780
        %782 = vst [vmem:[%s682 + $0xa0] sm:$0xf] %v598
        %v783 = vld [vmem:[%s682 + $0xa4] sm:$0x1]
        %v784 = vsel %vm691, %v599, %v783
        %785 = vst [vmem:[%s682 + $0xa4] sm:$0x1] %v784
        %v786 = vld [vmem:[%s682 + $0xa8] sm:$0xf]
        %v787 = vsel %vm685, %v606, %v786
        %788 = vst [vmem:[%s682 + $0xa8] sm:$0xf] %v787
        %789 = vst [vmem:[%s682 + $0xac] sm:$0xf] %v615
        %v790 = vld [vmem:[%s682 + $0xb0] sm:$0x1]
        %v791 = vsel %vm691, %v616, %v790
        %792 = vst [vmem:[%s682 + $0xb0] sm:$0x1] %v791
        %v793 = vld [vmem:[%s682 + $0xb4] sm:$0xf]
        %v794 = vsel %vm685, %v623, %v793
        %795 = vst [vmem:[%s682 + $0xb4] sm:$0xf] %v794
        %796 = vst [vmem:[%s682 + $0xb8] sm:$0xf] %v632
        %v797 = vld [vmem:[%s682 + $0xbc] sm:$0x1]
        %v798 = vsel %vm691, %v633, %v797
        %799 = vst [vmem:[%s682 + $0xbc] sm:$0x1] %v798
        %v800 = vld [vmem:[#allocation2] sm:$0xf]
        %v801 = vld [vmem:[#allocation2 + $0x4] sm:$0xf]
        %v802 = vld [vmem:[#allocation2 + $0xc] sm:$0xf]
        %v803 = vld [vmem:[#allocation2 + $0x10] sm:$0xf]
        %v804 = vld [vmem:[#allocation2 + $0x18] sm:$0xf]
        %v805 = vld [vmem:[#allocation2 + $0x1c] sm:$0xf]
        %v806 = vld [vmem:[#allocation2 + $0x24] sm:$0xf]
        %v807 = vld [vmem:[#allocation2 + $0x28] sm:$0xf]
        %v808 = vld [vmem:[#allocation2 + $0x30] sm:$0xf]
        %v809 = vld [vmem:[#allocation2 + $0x34] sm:$0xf]
        %v810 = vld [vmem:[#allocation2 + $0x3c] sm:$0xf]
        %v811 = vld [vmem:[#allocation2 + $0x40] sm:$0xf]
        %v812 = vld [vmem:[#allocation2 + $0x48] sm:$0xf]
        %v813 = vld [vmem:[#allocation2 + $0x4c] sm:$0xf]
        %v814 = vld [vmem:[#allocation2 + $0x54] sm:$0xf]
        %v815 = vld [vmem:[#allocation2 + $0x58] sm:$0xf]
        %v816 = vld [vmem:[#allocation2 + $0x60] sm:$0xf]
        %v817 = vld [vmem:[#allocation2 + $0x64] sm:$0xf]
        %v818 = vld [vmem:[#allocation2 + $0x6c] sm:$0xf]
        %v819 = vld [vmem:[#allocation2 + $0x70] sm:$0xf]
        %v820 = vld [vmem:[#allocation2 + $0x78] sm:$0xf]
        %v821 = vld [vmem:[#allocation2 + $0x7c] sm:$0xf]
        %v822 = vld [vmem:[#allocation2 + $0x84] sm:$0xf]
        %v823 = vld [vmem:[#allocation2 + $0x88] sm:$0xf]
        %v824 = vld [vmem:[#allocation2 + $0x90] sm:$0xf]
        %v825 = vld [vmem:[#allocation2 + $0x94] sm:$0xf]
        %v826 = vld [vmem:[#allocation2 + $0x9c] sm:$0xf]
        %v827 = vld [vmem:[#allocation2 + $0xa0] sm:$0xf]
        %v828 = vld [vmem:[#allocation2 + $0xa8] sm:$0xf]
        %v829 = vld [vmem:[#allocation2 + $0xac] sm:$0xf]
        %v830 = vld [vmem:[#allocation2 + $0xb4] sm:$0xf]
        %v831 = vld [vmem:[#allocation2 + $0xb8] sm:$0xf]
        %832 = vst [vmem:[#allocation3] sm:$0xf] %v800
        %833 = vst [vmem:[#allocation3 + $0x24] sm:$0xf] %v801
        %834 = vst [vmem:[#allocation3 + $0x48] sm:$0xf] %v802
        %835 = vst [vmem:[#allocation3 + $0x6c] sm:$0xf] %v803
        %836 = vst [vmem:[#allocation3 + $0x90] sm:$0xf] %v804
        %837 = vst [vmem:[#allocation3 + $0xb4] sm:$0xf] %v805
        %838 = vst [vmem:[#allocation3 + $0xd8] sm:$0xf] %v806
        %839 = vst [vmem:[#allocation3 + $0xfc] sm:$0xf] %v807
        %840 = vst [vmem:[#allocation3 + $0x120] sm:$0xf] %v808
        %841 = vst [vmem:[#allocation3 + $0x144] sm:$0xf] %v809
        %842 = vst [vmem:[#allocation3 + $0x168] sm:$0xf] %v810
        %843 = vst [vmem:[#allocation3 + $0x18c] sm:$0xf] %v811
        %844 = vst [vmem:[#allocation3 + $0x1b0] sm:$0xf] %v812
        %845 = vst [vmem:[#allocation3 + $0x1d4] sm:$0xf] %v813
        %846 = vst [vmem:[#allocation3 + $0x1f8] sm:$0xf] %v814
        %847 = vst [vmem:[#allocation3 + $0x21c] sm:$0xf] %v815
        %848 = vst [vmem:[#allocation3 + $0x240] sm:$0xf] %v816
        %849 = vst [vmem:[#allocation3 + $0x264] sm:$0xf] %v817
        %850 = vst [vmem:[#allocation3 + $0x288] sm:$0xf] %v818
        %851 = vst [vmem:[#allocation3 + $0x2ac] sm:$0xf] %v819
        %852 = vst [vmem:[#allocation3 + $0x2d0] sm:$0xf] %v820
        %853 = vst [vmem:[#allocation3 + $0x2f4] sm:$0xf] %v821
        %854 = vst [vmem:[#allocation3 + $0x318] sm:$0xf] %v822
        %855 = vst [vmem:[#allocation3 + $0x33c] sm:$0xf] %v823
        %856 = vst [vmem:[#allocation3 + $0x360] sm:$0xf] %v824
        %857 = vst [vmem:[#allocation3 + $0x384] sm:$0xf] %v825
        %858 = vst [vmem:[#allocation3 + $0x3a8] sm:$0xf] %v826
        %859 = vst [vmem:[#allocation3 + $0x3cc] sm:$0xf] %v827
        %860 = vst [vmem:[#allocation3 + $0x3f0] sm:$0xf] %v828
        %861 = vst [vmem:[#allocation3 + $0x414] sm:$0xf] %v829
        %862 = vst [vmem:[#allocation3 + $0x438] sm:$0xf] %v830
        %863 = vst [vmem:[#allocation3 + $0x45c] sm:$0xf] %v831
        %v864 = vld [vmem:[#allocation2] sm:$0xf]
        %v865 = vld [vmem:[#allocation2 + $0x4] sm:$0xf]
        %v866 = vld [vmem:[#allocation2 + $0x8] sm:$0x1]
        %v867 = vld [vmem:[#allocation2 + $0xc] sm:$0xf]
        %v868 = vld [vmem:[#allocation2 + $0x10] sm:$0xf]
        %v869 = vld [vmem:[#allocation2 + $0x14] sm:$0x1]
        %v870 = vld [vmem:[#allocation2 + $0x18] sm:$0xf]
        %v871 = vld [vmem:[#allocation2 + $0x1c] sm:$0xf]
        %v872 = vld [vmem:[#allocation2 + $0x20] sm:$0x1]
        %v873 = vld [vmem:[#allocation2 + $0x24] sm:$0xf]
        %v874 = vld [vmem:[#allocation2 + $0x28] sm:$0xf]
        %v875 = vld [vmem:[#allocation2 + $0x2c] sm:$0x1]
        %v876 = vld [vmem:[#allocation2 + $0x30] sm:$0xf]
        %v877 = vld [vmem:[#allocation2 + $0x34] sm:$0xf]
        %v878 = vld [vmem:[#allocation2 + $0x38] sm:$0x1]
        %v879 = vld [vmem:[#allocation2 + $0x3c] sm:$0xf]
        %v880 = vld [vmem:[#allocation2 + $0x40] sm:$0xf]
        %v881 = vld [vmem:[#allocation2 + $0x44] sm:$0x1]
        %v882 = vld [vmem:[#allocation2 + $0x48] sm:$0xf]
        %v883 = vld [vmem:[#allocation2 + $0x4c] sm:$0xf]
        %v884 = vld [vmem:[#allocation2 + $0x50] sm:$0x1]
        %v885 = vld [vmem:[#allocation2 + $0x54] sm:$0xf]
        %v886 = vld [vmem:[#allocation2 + $0x58] sm:$0xf]
        %v887 = vld [vmem:[#allocation2 + $0x5c] sm:$0x1]
        %v888 = vld [vmem:[#allocation2 + $0x60] sm:$0xf]
        %v889 = vld [vmem:[#allocation2 + $0x64] sm:$0xf]
        %v890 = vld [vmem:[#allocation2 + $0x68] sm:$0x1]
        %v891 = vld [vmem:[#allocation2 + $0x6c] sm:$0xf]
        %v892 = vld [vmem:[#allocation2 + $0x70] sm:$0xf]
        %v893 = vld [vmem:[#allocation2 + $0x74] sm:$0x1]
        %v894 = vld [vmem:[#allocation2 + $0x78] sm:$0xf]
        %v895 = vld [vmem:[#allocation2 + $0x7c] sm:$0xf]
        %v896 = vld [vmem:[#allocation2 + $0x80] sm:$0x1]
        %v897 = vld [vmem:[#allocation2 + $0x84] sm:$0xf]
        %v898 = vld [vmem:[#allocation2 + $0x88] sm:$0xf]
        %v899 = vld [vmem:[#allocation2 + $0x8c] sm:$0x1]
        %v900 = vld [vmem:[#allocation2 + $0x90] sm:$0xf]
        %v901 = vld [vmem:[#allocation2 + $0x94] sm:$0xf]
        %v902 = vld [vmem:[#allocation2 + $0x98] sm:$0x1]
        %v903 = vld [vmem:[#allocation2 + $0x9c] sm:$0xf]
        %v904 = vld [vmem:[#allocation2 + $0xa0] sm:$0xf]
        %v905 = vld [vmem:[#allocation2 + $0xa4] sm:$0x1]
        %v906 = vld [vmem:[#allocation2 + $0xa8] sm:$0xf]
        %v907 = vld [vmem:[#allocation2 + $0xac] sm:$0xf]
        %v908 = vld [vmem:[#allocation2 + $0xb0] sm:$0x1]
        %v909 = vld [vmem:[#allocation2 + $0xb4] sm:$0xf]
        %v910 = vld [vmem:[#allocation2 + $0xb8] sm:$0xf]
        %v911 = vld [vmem:[#allocation2 + $0xbc] sm:$0x1]
        %vm912 = vsmask.f32 3328
        %vm913 = vsmask.f32 7440
        %vm914 = vmor %vm912, %vm913
        %v916 = vshrl.u32 %v864, 16
        %v918 = vrot.slane %v916, 4
        %v919 = vshll.u32 %v864, 16
        %v921 = vrot.slane %v919, 5
        %v922 = vor.u32 %v918, %v921
        %v923 = vrot.slane %v922, 4
        %v925 = vshll.u32 %v865, 16
        %v927 = vrot.slane %v925, 5
        %v928 = vsel %vm914, %v923, %v927
        %v929 = vshrl.u32 %v865, 16
        %v931 = vrot.slane %v929, 4
        %v932 = vor.u32 %v931, %v927
        %v933 = vrot.slane %v932, 4
        %v935 = vshll.u32 %v866, 16
        %v937 = vrot.slane %v935, 5
        %v938 = vsel %vm914, %v933, %v937
        %v940 = vshrl.u32 %v867, 16
        %v942 = vrot.slane %v940, 4
        %v943 = vshll.u32 %v867, 16
        %v945 = vrot.slane %v943, 5
        %v946 = vor.u32 %v942, %v945
        %v947 = vrot.slane %v946, 4
        %v949 = vshll.u32 %v868, 16
        %v951 = vrot.slane %v949, 5
        %v952 = vsel %vm914, %v947, %v951
        %v953 = vshrl.u32 %v868, 16
        %v955 = vrot.slane %v953, 4
        %v956 = vor.u32 %v955, %v951
        %v957 = vrot.slane %v956, 4
        %v959 = vshll.u32 %v869, 16
        %v961 = vrot.slane %v959, 5
        %v962 = vsel %vm914, %v957, %v961
        %v964 = vshrl.u32 %v870, 16
        %v966 = vrot.slane %v964, 4
        %v967 = vshll.u32 %v870, 16
        %v969 = vrot.slane %v967, 5
        %v970 = vor.u32 %v966, %v969
        %v971 = vrot.slane %v970, 4
        %v973 = vshll.u32 %v871, 16
        %v975 = vrot.slane %v973, 5
        %v976 = vsel %vm914, %v971, %v975
        %v977 = vshrl.u32 %v871, 16
        %v979 = vrot.slane %v977, 4
        %v980 = vor.u32 %v979, %v975
        %v981 = vrot.slane %v980, 4
        %v983 = vshll.u32 %v872, 16
        %v985 = vrot.slane %v983, 5
        %v986 = vsel %vm914, %v981, %v985
        %v988 = vshrl.u32 %v873, 16
        %v990 = vrot.slane %v988, 4
        %v991 = vshll.u32 %v873, 16
        %v993 = vrot.slane %v991, 5
        %v994 = vor.u32 %v990, %v993
        %v995 = vrot.slane %v994, 4
        %v997 = vshll.u32 %v874, 16
        %v999 = vrot.slane %v997, 5
        %v1000 = vsel %vm914, %v995, %v999
        %v1001 = vshrl.u32 %v874, 16
        %v1003 = vrot.slane %v1001, 4
        %v1004 = vor.u32 %v1003, %v999
        %v1005 = vrot.slane %v1004, 4
        %v1007 = vshll.u32 %v875, 16
        %v1009 = vrot.slane %v1007, 5
        %v1010 = vsel %vm914, %v1005, %v1009
        %v1012 = vshrl.u32 %v876, 16
        %v1014 = vrot.slane %v1012, 4
        %v1015 = vshll.u32 %v876, 16
        %v1017 = vrot.slane %v1015, 5
        %v1018 = vor.u32 %v1014, %v1017
        %v1019 = vrot.slane %v1018, 4
        %v1021 = vshll.u32 %v877, 16
        %v1023 = vrot.slane %v1021, 5
        %v1024 = vsel %vm914, %v1019, %v1023
        %v1025 = vshrl.u32 %v877, 16
        %v1027 = vrot.slane %v1025, 4
        %v1028 = vor.u32 %v1027, %v1023
        %v1029 = vrot.slane %v1028, 4
        %v1031 = vshll.u32 %v878, 16
        %v1033 = vrot.slane %v1031, 5
        %v1034 = vsel %vm914, %v1029, %v1033
        %v1036 = vshrl.u32 %v879, 16
        %v1038 = vrot.slane %v1036, 4
        %v1039 = vshll.u32 %v879, 16
        %v1041 = vrot.slane %v1039, 5
        %v1042 = vor.u32 %v1038, %v1041
        %v1043 = vrot.slane %v1042, 4
        %v1045 = vshll.u32 %v880, 16
        %v1047 = vrot.slane %v1045, 5
        %v1048 = vsel %vm914, %v1043, %v1047
        %v1049 = vshrl.u32 %v880, 16
        %v1051 = vrot.slane %v1049, 4
        %v1052 = vor.u32 %v1051, %v1047
        %v1053 = vrot.slane %v1052, 4
        %v1055 = vshll.u32 %v881, 16
        %v1057 = vrot.slane %v1055, 5
        %v1058 = vsel %vm914, %v1053, %v1057
        %v1060 = vshrl.u32 %v882, 16
        %v1062 = vrot.slane %v1060, 4
        %v1063 = vshll.u32 %v882, 16
        %v1065 = vrot.slane %v1063, 5
        %v1066 = vor.u32 %v1062, %v1065
        %v1067 = vrot.slane %v1066, 4
        %v1069 = vshll.u32 %v883, 16
        %v1071 = vrot.slane %v1069, 5
        %v1072 = vsel %vm914, %v1067, %v1071
        %v1073 = vshrl.u32 %v883, 16
        %v1075 = vrot.slane %v1073, 4
        %v1076 = vor.u32 %v1075, %v1071
        %v1077 = vrot.slane %v1076, 4
        %v1079 = vshll.u32 %v884, 16
        %v1081 = vrot.slane %v1079, 5
        %v1082 = vsel %vm914, %v1077, %v1081
        %v1084 = vshrl.u32 %v885, 16
        %v1086 = vrot.slane %v1084, 4
        %v1087 = vshll.u32 %v885, 16
        %v1089 = vrot.slane %v1087, 5
        %v1090 = vor.u32 %v1086, %v1089
        %v1091 = vrot.slane %v1090, 4
        %v1093 = vshll.u32 %v886, 16
        %v1095 = vrot.slane %v1093, 5
        %v1096 = vsel %vm914, %v1091, %v1095
        %v1097 = vshrl.u32 %v886, 16
        %v1099 = vrot.slane %v1097, 4
        %v1100 = vor.u32 %v1099, %v1095
        %v1101 = vrot.slane %v1100, 4
        %v1103 = vshll.u32 %v887, 16
        %v1105 = vrot.slane %v1103, 5
        %v1106 = vsel %vm914, %v1101, %v1105
        %v1108 = vshrl.u32 %v888, 16
        %v1110 = vrot.slane %v1108, 4
        %v1111 = vshll.u32 %v888, 16
        %v1113 = vrot.slane %v1111, 5
        %v1114 = vor.u32 %v1110, %v1113
        %v1115 = vrot.slane %v1114, 4
        %v1117 = vshll.u32 %v889, 16
        %v1119 = vrot.slane %v1117, 5
        %v1120 = vsel %vm914, %v1115, %v1119
        %v1121 = vshrl.u32 %v889, 16
        %v1123 = vrot.slane %v1121, 4
        %v1124 = vor.u32 %v1123, %v1119
        %v1125 = vrot.slane %v1124, 4
        %v1127 = vshll.u32 %v890, 16
        %v1129 = vrot.slane %v1127, 5
        %v1130 = vsel %vm914, %v1125, %v1129
        %v1132 = vshrl.u32 %v891, 16
        %v1134 = vrot.slane %v1132, 4
        %v1135 = vshll.u32 %v891, 16
        %v1137 = vrot.slane %v1135, 5
        %v1138 = vor.u32 %v1134, %v1137
        %v1139 = vrot.slane %v1138, 4
        %v1141 = vshll.u32 %v892, 16
        %v1143 = vrot.slane %v1141, 5
        %v1144 = vsel %vm914, %v1139, %v1143
        %v1145 = vshrl.u32 %v892, 16
        %v1147 = vrot.slane %v1145, 4
        %v1148 = vor.u32 %v1147, %v1143
        %v1149 = vrot.slane %v1148, 4
        %v1151 = vshll.u32 %v893, 16
        %v1153 = vrot.slane %v1151, 5
        %v1154 = vsel %vm914, %v1149, %v1153
        %v1156 = vshrl.u32 %v894, 16
        %v1158 = vrot.slane %v1156, 4
        %v1159 = vshll.u32 %v894, 16
        %v1161 = vrot.slane %v1159, 5
        %v1162 = vor.u32 %v1158, %v1161
        %v1163 = vrot.slane %v1162, 4
        %v1165 = vshll.u32 %v895, 16
        %v1167 = vrot.slane %v1165, 5
        %v1168 = vsel %vm914, %v1163, %v1167
        %v1169 = vshrl.u32 %v895, 16
        %v1171 = vrot.slane %v1169, 4
        %v1172 = vor.u32 %v1171, %v1167
        %v1173 = vrot.slane %v1172, 4
        %v1175 = vshll.u32 %v896, 16
        %v1177 = vrot.slane %v1175, 5
        %v1178 = vsel %vm914, %v1173, %v1177
        %v1180 = vshrl.u32 %v897, 16
        %v1182 = vrot.slane %v1180, 4
        %v1183 = vshll.u32 %v897, 16
        %v1185 = vrot.slane %v1183, 5
        %v1186 = vor.u32 %v1182, %v1185
        %v1187 = vrot.slane %v1186, 4
        %v1189 = vshll.u32 %v898, 16
        %v1191 = vrot.slane %v1189, 5
        %v1192 = vsel %vm914, %v1187, %v1191
        %v1193 = vshrl.u32 %v898, 16
        %v1195 = vrot.slane %v1193, 4
        %v1196 = vor.u32 %v1195, %v1191
        %v1197 = vrot.slane %v1196, 4
        %v1199 = vshll.u32 %v899, 16
        %v1201 = vrot.slane %v1199, 5
        %v1202 = vsel %vm914, %v1197, %v1201
        %v1204 = vshrl.u32 %v900, 16
        %v1206 = vrot.slane %v1204, 4
        %v1207 = vshll.u32 %v900, 16
        %v1209 = vrot.slane %v1207, 5
        %v1210 = vor.u32 %v1206, %v1209
        %v1211 = vrot.slane %v1210, 4
        %v1213 = vshll.u32 %v901, 16
        %v1215 = vrot.slane %v1213, 5
        %v1216 = vsel %vm914, %v1211, %v1215
        %v1217 = vshrl.u32 %v901, 16
        %v1219 = vrot.slane %v1217, 4
        %v1220 = vor.u32 %v1219, %v1215
        %v1221 = vrot.slane %v1220, 4
        %v1223 = vshll.u32 %v902, 16
        %v1225 = vrot.slane %v1223, 5
        %v1226 = vsel %vm914, %v1221, %v1225
        %v1228 = vshrl.u32 %v903, 16
        %v1230 = vrot.slane %v1228, 4
        %v1231 = vshll.u32 %v903, 16
        %v1233 = vrot.slane %v1231, 5
        %v1234 = vor.u32 %v1230, %v1233
        %v1235 = vrot.slane %v1234, 4
        %v1237 = vshll.u32 %v904, 16
        %v1239 = vrot.slane %v1237, 5
        %v1240 = vsel %vm914, %v1235, %v1239
        %v1241 = vshrl.u32 %v904, 16
        %v1243 = vrot.slane %v1241, 4
        %v1244 = vor.u32 %v1243, %v1239
        %v1245 = vrot.slane %v1244, 4
        %v1247 = vshll.u32 %v905, 16
        %v1249 = vrot.slane %v1247, 5
        %v1250 = vsel %vm914, %v1245, %v1249
        %v1252 = vshrl.u32 %v906, 16
        %v1254 = vrot.slane %v1252, 4
        %v1255 = vshll.u32 %v906, 16
        %v1257 = vrot.slane %v1255, 5
        %v1258 = vor.u32 %v1254, %v1257
        %v1259 = vrot.slane %v1258, 4
        %v1261 = vshll.u32 %v907, 16
        %v1263 = vrot.slane %v1261, 5
        %v1264 = vsel %vm914, %v1259, %v1263
        %v1265 = vshrl.u32 %v907, 16
        %v1267 = vrot.slane %v1265, 4
        %v1268 = vor.u32 %v1267, %v1263
        %v1269 = vrot.slane %v1268, 4
        %v1271 = vshll.u32 %v908, 16
        %v1273 = vrot.slane %v1271, 5
        %v1274 = vsel %vm914, %v1269, %v1273
        %v1276 = vshrl.u32 %v909, 16
        %v1278 = vrot.slane %v1276, 4
        %v1279 = vshll.u32 %v909, 16
        %v1281 = vrot.slane %v1279, 5
        %v1282 = vor.u32 %v1278, %v1281
        %v1283 = vrot.slane %v1282, 4
        %v1285 = vshll.u32 %v910, 16
        %v1287 = vrot.slane %v1285, 5
        %v1288 = vsel %vm914, %v1283, %v1287
        %v1289 = vshrl.u32 %v910, 16
        %v1291 = vrot.slane %v1289, 4
        %v1292 = vor.u32 %v1291, %v1287
        %v1293 = vrot.slane %v1292, 4
        %v1295 = vshll.u32 %v911, 16
        %v1297 = vrot.slane %v1295, 5
        %v1298 = vsel %vm914, %v1293, %v1297
        %1331 = vst [vmem:[#allocation3 + $0x4] sm:$0xf] %v928
        %1332 = vst [vmem:[#allocation3 + $0x28] sm:$0xf] %v938
        %1333 = vst [vmem:[#allocation3 + $0x4c] sm:$0xf] %v952
        %1334 = vst [vmem:[#allocation3 + $0x70] sm:$0xf] %v962
        %1335 = vst [vmem:[#allocation3 + $0x94] sm:$0xf] %v976
        %1336 = vst [vmem:[#allocation3 + $0xb8] sm:$0xf] %v986
        %1337 = vst [vmem:[#allocation3 + $0xdc] sm:$0xf] %v1000
        %1338 = vst [vmem:[#allocation3 + $0x100] sm:$0xf] %v1010
        %1339 = vst [vmem:[#allocation3 + $0x124] sm:$0xf] %v1024
        %1340 = vst [vmem:[#allocation3 + $0x148] sm:$0xf] %v1034
        %1341 = vst [vmem:[#allocation3 + $0x16c] sm:$0xf] %v1048
        %1342 = vst [vmem:[#allocation3 + $0x190] sm:$0xf] %v1058
        %1343 = vst [vmem:[#allocation3 + $0x1b4] sm:$0xf] %v1072
        %1344 = vst [vmem:[#allocation3 + $0x1d8] sm:$0xf] %v1082
        %1345 = vst [vmem:[#allocation3 + $0x1fc] sm:$0xf] %v1096
        %1346 = vst [vmem:[#allocation3 + $0x220] sm:$0xf] %v1106
        %1347 = vst [vmem:[#allocation3 + $0x244] sm:$0xf] %v1120
        %1348 = vst [vmem:[#allocation3 + $0x268] sm:$0xf] %v1130
        %1349 = vst [vmem:[#allocation3 + $0x28c] sm:$0xf] %v1144
        %1350 = vst [vmem:[#allocation3 + $0x2b0] sm:$0xf] %v1154
        %1351 = vst [vmem:[#allocation3 + $0x2d4] sm:$0xf] %v1168
        %1352 = vst [vmem:[#allocation3 + $0x2f8] sm:$0xf] %v1178
        %1353 = vst [vmem:[#allocation3 + $0x31c] sm:$0xf] %v1192
        %1354 = vst [vmem:[#allocation3 + $0x340] sm:$0xf] %v1202
        %1355 = vst [vmem:[#allocation3 + $0x364] sm:$0xf] %v1216
        %1356 = vst [vmem:[#allocation3 + $0x388] sm:$0xf] %v1226
        %1357 = vst [vmem:[#allocation3 + $0x3ac] sm:$0xf] %v1240
        %1358 = vst [vmem:[#allocation3 + $0x3d0] sm:$0xf] %v1250
        %1359 = vst [vmem:[#allocation3 + $0x3f4] sm:$0xf] %v1264
        %1360 = vst [vmem:[#allocation3 + $0x418] sm:$0xf] %v1274
        %1361 = vst [vmem:[#allocation3 + $0x43c] sm:$0xf] %v1288
        %1362 = vst [vmem:[#allocation3 + $0x460] sm:$0xf] %v1298
        %v1363 = vld [vmem:[#allocation2] sm:$0xe]
        %v1364 = vld [vmem:[#allocation2 + $0x4] sm:$0xf]
        %v1365 = vld [vmem:[#allocation2 + $0x8] sm:$0x1]
        %v1366 = vld [vmem:[#allocation2 + $0xc] sm:$0xe]
        %v1367 = vld [vmem:[#allocation2 + $0x10] sm:$0xf]
        %v1368 = vld [vmem:[#allocation2 + $0x14] sm:$0x1]
        %v1369 = vld [vmem:[#allocation2 + $0x18] sm:$0xe]
        %v1370 = vld [vmem:[#allocation2 + $0x1c] sm:$0xf]
        %v1371 = vld [vmem:[#allocation2 + $0x20] sm:$0x1]
        %v1372 = vld [vmem:[#allocation2 + $0x24] sm:$0xe]
        %v1373 = vld [vmem:[#allocation2 + $0x28] sm:$0xf]
        %v1374 = vld [vmem:[#allocation2 + $0x2c] sm:$0x1]
        %v1375 = vld [vmem:[#allocation2 + $0x30] sm:$0xe]
        %v1376 = vld [vmem:[#allocation2 + $0x34] sm:$0xf]
        %v1377 = vld [vmem:[#allocation2 + $0x38] sm:$0x1]
        %v1378 = vld [vmem:[#allocation2 + $0x3c] sm:$0xe]
        %v1379 = vld [vmem:[#allocation2 + $0x40] sm:$0xf]
        %v1380 = vld [vmem:[#allocation2 + $0x44] sm:$0x1]
        %v1381 = vld [vmem:[#allocation2 + $0x48] sm:$0xe]
        %v1382 = vld [vmem:[#allocation2 + $0x4c] sm:$0xf]
        %v1383 = vld [vmem:[#allocation2 + $0x50] sm:$0x1]
        %v1384 = vld [vmem:[#allocation2 + $0x54] sm:$0xe]
        %v1385 = vld [vmem:[#allocation2 + $0x58] sm:$0xf]
        %v1386 = vld [vmem:[#allocation2 + $0x5c] sm:$0x1]
        %v1387 = vld [vmem:[#allocation2 + $0x60] sm:$0xe]
        %v1388 = vld [vmem:[#allocation2 + $0x64] sm:$0xf]
        %v1389 = vld [vmem:[#allocation2 + $0x68] sm:$0x1]
        %v1390 = vld [vmem:[#allocation2 + $0x6c] sm:$0xe]
        %v1391 = vld [vmem:[#allocation2 + $0x70] sm:$0xf]
        %v1392 = vld [vmem:[#allocation2 + $0x74] sm:$0x1]
        %v1393 = vld [vmem:[#allocation2 + $0x78] sm:$0xe]
        %v1394 = vld [vmem:[#allocation2 + $0x7c] sm:$0xf]
        %v1395 = vld [vmem:[#allocation2 + $0x80] sm:$0x1]
        %v1396 = vld [vmem:[#allocation2 + $0x84] sm:$0xe]
        %v1397 = vld [vmem:[#allocation2 + $0x88] sm:$0xf]
        %v1398 = vld [vmem:[#allocation2 + $0x8c] sm:$0x1]
        %v1399 = vld [vmem:[#allocation2 + $0x90] sm:$0xe]
        %v1400 = vld [vmem:[#allocation2 + $0x94] sm:$0xf]
        %v1401 = vld [vmem:[#allocation2 + $0x98] sm:$0x1]
        %v1402 = vld [vmem:[#allocation2 + $0x9c] sm:$0xe]
        %v1403 = vld [vmem:[#allocation2 + $0xa0] sm:$0xf]
        %v1404 = vld [vmem:[#allocation2 + $0xa4] sm:$0x1]
        %v1405 = vld [vmem:[#allocation2 + $0xa8] sm:$0xe]
        %v1406 = vld [vmem:[#allocation2 + $0xac] sm:$0xf]
        %v1407 = vld [vmem:[#allocation2 + $0xb0] sm:$0x1]
        %v1408 = vld [vmem:[#allocation2 + $0xb4] sm:$0xe]
        %v1409 = vld [vmem:[#allocation2 + $0xb8] sm:$0xf]
        %v1410 = vld [vmem:[#allocation2 + $0xbc] sm:$0x1]
        %vm1459 = vcmask 1042432
        %vm1460 = vcmask 1046532
        %vm1461 = vmor %vm1459, %vm1460
        %v1462 = vrot.slane %v1363, 5
        %v1463 = vrot.slane %v1462, 4
        %v1464 = vrot.slane %v1364, 5
        %v1465 = vsel %vm1461, %v1463, %v1464
        %v1466 = vrot.slane %v1464, 4
        %v1467 = vrot.slane %v1365, 5
        %v1468 = vsel %vm1461, %v1466, %v1467
        %v1469 = vrot.slane %v1366, 5
        %v1470 = vrot.slane %v1469, 4
        %v1471 = vrot.slane %v1367, 5
        %v1472 = vsel %vm1461, %v1470, %v1471
        %v1473 = vrot.slane %v1471, 4
        %v1474 = vrot.slane %v1368, 5
        %v1475 = vsel %vm1461, %v1473, %v1474
        %v1476 = vrot.slane %v1369, 5
        %v1477 = vrot.slane %v1476, 4
        %v1478 = vrot.slane %v1370, 5
        %v1479 = vsel %vm1461, %v1477, %v1478
        %v1480 = vrot.slane %v1478, 4
        %v1481 = vrot.slane %v1371, 5
        %v1482 = vsel %vm1461, %v1480, %v1481
        %v1483 = vrot.slane %v1372, 5
        %v1484 = vrot.slane %v1483, 4
        %v1485 = vrot.slane %v1373, 5
        %v1486 = vsel %vm1461, %v1484, %v1485
        %v1487 = vrot.slane %v1485, 4
        %v1488 = vrot.slane %v1374, 5
        %v1489 = vsel %vm1461, %v1487, %v1488
        %v1490 = vrot.slane %v1375, 5
        %v1491 = vrot.slane %v1490, 4
        %v1492 = vrot.slane %v1376, 5
        %v1493 = vsel %vm1461, %v1491, %v1492
        %v1494 = vrot.slane %v1492, 4
        %v1495 = vrot.slane %v1377, 5
        %v1496 = vsel %vm1461, %v1494, %v1495
        %v1497 = vrot.slane %v1378, 5
        %v1498 = vrot.slane %v1497, 4
        %v1499 = vrot.slane %v1379, 5
        %v1500 = vsel %vm1461, %v1498, %v1499
        %v1501 = vrot.slane %v1499, 4
        %v1502 = vrot.slane %v1380, 5
        %v1503 = vsel %vm1461, %v1501, %v1502
        %v1504 = vrot.slane %v1381, 5
        %v1505 = vrot.slane %v1504, 4
        %v1506 = vrot.slane %v1382, 5
        %v1507 = vsel %vm1461, %v1505, %v1506
        %v1508 = vrot.slane %v1506, 4
        %v1509 = vrot.slane %v1383, 5
        %v1510 = vsel %vm1461, %v1508, %v1509
        %v1511 = vrot.slane %v1384, 5
        %v1512 = vrot.slane %v1511, 4
        %v1513 = vrot.slane %v1385, 5
        %v1514 = vsel %vm1461, %v1512, %v1513
        %v1515 = vrot.slane %v1513, 4
        %v1516 = vrot.slane %v1386, 5
        %v1517 = vsel %vm1461, %v1515, %v1516
        %v1518 = vrot.slane %v1387, 5
        %v1519 = vrot.slane %v1518, 4
        %v1520 = vrot.slane %v1388, 5
        %v1521 = vsel %vm1461, %v1519, %v1520
        %v1522 = vrot.slane %v1520, 4
        %v1523 = vrot.slane %v1389, 5
        %v1524 = vsel %vm1461, %v1522, %v1523
        %v1525 = vrot.slane %v1390, 5
        %v1526 = vrot.slane %v1525, 4
        %v1527 = vrot.slane %v1391, 5
        %v1528 = vsel %vm1461, %v1526, %v1527
        %v1529 = vrot.slane %v1527, 4
        %v1530 = vrot.slane %v1392, 5
        %v1531 = vsel %vm1461, %v1529, %v1530
        %v1532 = vrot.slane %v1393, 5
        %v1533 = vrot.slane %v1532, 4
        %v1534 = vrot.slane %v1394, 5
        %v1535 = vsel %vm1461, %v1533, %v1534
        %v1536 = vrot.slane %v1534, 4
        %v1537 = vrot.slane %v1395, 5
        %v1538 = vsel %vm1461, %v1536, %v1537
        %v1539 = vrot.slane %v1396, 5
        %v1540 = vrot.slane %v1539, 4
        %v1541 = vrot.slane %v1397, 5
        %v1542 = vsel %vm1461, %v1540, %v1541
        %v1543 = vrot.slane %v1541, 4
        %v1544 = vrot.slane %v1398, 5
        %v1545 = vsel %vm1461, %v1543, %v1544
        %v1546 = vrot.slane %v1399, 5
        %v1547 = vrot.slane %v1546, 4
        %v1548 = vrot.slane %v1400, 5
        %v1549 = vsel %vm1461, %v1547, %v1548
        %v1550 = vrot.slane %v1548, 4
        %v1551 = vrot.slane %v1401, 5
        %v1552 = vsel %vm1461, %v1550, %v1551
        %v1553 = vrot.slane %v1402, 5
        %v1554 = vrot.slane %v1553, 4
        %v1555 = vrot.slane %v1403, 5
        %v1556 = vsel %vm1461, %v1554, %v1555
        %v1557 = vrot.slane %v1555, 4
        %v1558 = vrot.slane %v1404, 5
        %v1559 = vsel %vm1461, %v1557, %v1558
        %v1560 = vrot.slane %v1405, 5
        %v1561 = vrot.slane %v1560, 4
        %v1562 = vrot.slane %v1406, 5
        %v1563 = vsel %vm1461, %v1561, %v1562
        %v1564 = vrot.slane %v1562, 4
        %v1565 = vrot.slane %v1407, 5
        %v1566 = vsel %vm1461, %v1564, %v1565
        %v1567 = vrot.slane %v1408, 5
        %v1568 = vrot.slane %v1567, 4
        %v1569 = vrot.slane %v1409, 5
        %v1570 = vsel %vm1461, %v1568, %v1569
        %v1571 = vrot.slane %v1569, 4
        %v1572 = vrot.slane %v1410, 5
        %v1573 = vsel %vm1461, %v1571, %v1572
        %1606 = vst [vmem:[#allocation3 + $0x8] sm:$0xf] %v1465
        %1607 = vst [vmem:[#allocation3 + $0x2c] sm:$0xf] %v1468
        %1608 = vst [vmem:[#allocation3 + $0x50] sm:$0xf] %v1472
        %1609 = vst [vmem:[#allocation3 + $0x74] sm:$0xf] %v1475
        %1610 = vst [vmem:[#allocation3 + $0x98] sm:$0xf] %v1479
        %1611 = vst [vmem:[#allocation3 + $0xbc] sm:$0xf] %v1482
        %1612 = vst [vmem:[#allocation3 + $0xe0] sm:$0xf] %v1486
        %1613 = vst [vmem:[#allocation3 + $0x104] sm:$0xf] %v1489
        %1614 = vst [vmem:[#allocation3 + $0x128] sm:$0xf] %v1493
        %1615 = vst [vmem:[#allocation3 + $0x14c] sm:$0xf] %v1496
        %1616 = vst [vmem:[#allocation3 + $0x170] sm:$0xf] %v1500
        %1617 = vst [vmem:[#allocation3 + $0x194] sm:$0xf] %v1503
        %1618 = vst [vmem:[#allocation3 + $0x1b8] sm:$0xf] %v1507
        %1619 = vst [vmem:[#allocation3 + $0x1dc] sm:$0xf] %v1510
        %1620 = vst [vmem:[#allocation3 + $0x200] sm:$0xf] %v1514
        %1621 = vst [vmem:[#allocation3 + $0x224] sm:$0xf] %v1517
        %1622 = vst [vmem:[#allocation3 + $0x248] sm:$0xf] %v1521
        %1623 = vst [vmem:[#allocation3 + $0x26c] sm:$0xf] %v1524
        %1624 = vst [vmem:[#allocation3 + $0x290] sm:$0xf] %v1528
        %1625 = vst [vmem:[#allocation3 + $0x2b4] sm:$0xf] %v1531
        %1626 = vst [vmem:[#allocation3 + $0x2d8] sm:$0xf] %v1535
        %1627 = vst [vmem:[#allocation3 + $0x2fc] sm:$0xf] %v1538
        %1628 = vst [vmem:[#allocation3 + $0x320] sm:$0xf] %v1542
        %1629 = vst [vmem:[#allocation3 + $0x344] sm:$0xf] %v1545
        %1630 = vst [vmem:[#allocation3 + $0x368] sm:$0xf] %v1549
        %1631 = vst [vmem:[#allocation3 + $0x38c] sm:$0xf] %v1552
        %1632 = vst [vmem:[#allocation3 + $0x3b0] sm:$0xf] %v1556
        %1633 = vst [vmem:[#allocation3 + $0x3d4] sm:$0xf] %v1559
        %1634 = vst [vmem:[#allocation3 + $0x3f8] sm:$0xf] %v1563
        %1635 = vst [vmem:[#allocation3 + $0x41c] sm:$0xf] %v1566
        %1636 = vst [vmem:[#allocation3 + $0x440] sm:$0xf] %v1570
        %1637 = vst [vmem:[#allocation3 + $0x464] sm:$0xf] %v1573
        %v1638 = vld [vmem:[%s682] sm:$0xf]
        %v1639 = vld [vmem:[%s682 + $0x4] sm:$0xf]
        %v1640 = vld [vmem:[%s682 + $0xc] sm:$0xf]
        %v1641 = vld [vmem:[%s682 + $0x10] sm:$0xf]
        %v1642 = vld [vmem:[%s682 + $0x18] sm:$0xf]
        %v1643 = vld [vmem:[%s682 + $0x1c] sm:$0xf]
        %v1644 = vld [vmem:[%s682 + $0x24] sm:$0xf]
        %v1645 = vld [vmem:[%s682 + $0x28] sm:$0xf]
        %v1646 = vld [vmem:[%s682 + $0x30] sm:$0xf]
        %v1647 = vld [vmem:[%s682 + $0x34] sm:$0xf]
        %v1648 = vld [vmem:[%s682 + $0x3c] sm:$0xf]
        %v1649 = vld [vmem:[%s682 + $0x40] sm:$0xf]
        %v1650 = vld [vmem:[%s682 + $0x48] sm:$0xf]
        %v1651 = vld [vmem:[%s682 + $0x4c] sm:$0xf]
        %v1652 = vld [vmem:[%s682 + $0x54] sm:$0xf]
        %v1653 = vld [vmem:[%s682 + $0x58] sm:$0xf]
        %v1654 = vld [vmem:[%s682 + $0x60] sm:$0xf]
        %v1655 = vld [vmem:[%s682 + $0x64] sm:$0xf]
        %v1656 = vld [vmem:[%s682 + $0x6c] sm:$0xf]
        %v1657 = vld [vmem:[%s682 + $0x70] sm:$0xf]
        %v1658 = vld [vmem:[%s682 + $0x78] sm:$0xf]
        %v1659 = vld [vmem:[%s682 + $0x7c] sm:$0xf]
        %v1660 = vld [vmem:[%s682 + $0x84] sm:$0xf]
        %v1661 = vld [vmem:[%s682 + $0x88] sm:$0xf]
        %v1662 = vld [vmem:[%s682 + $0x90] sm:$0xf]
        %v1663 = vld [vmem:[%s682 + $0x94] sm:$0xf]
        %v1664 = vld [vmem:[%s682 + $0x9c] sm:$0xf]
        %v1665 = vld [vmem:[%s682 + $0xa0] sm:$0xf]
        %v1666 = vld [vmem:[%s682 + $0xa8] sm:$0xf]
        %v1667 = vld [vmem:[%s682 + $0xac] sm:$0xf]
        %v1668 = vld [vmem:[%s682 + $0xb4] sm:$0xf]
        %v1669 = vld [vmem:[%s682 + $0xb8] sm:$0xf]
        %1670 = vst [vmem:[#allocation3 + $0xc] sm:$0xf] %v1638
        %1671 = vst [vmem:[#allocation3 + $0x30] sm:$0xf] %v1639
        %1672 = vst [vmem:[#allocation3 + $0x54] sm:$0xf] %v1640
        %1673 = vst [vmem:[#allocation3 + $0x78] sm:$0xf] %v1641
        %1674 = vst [vmem:[#allocation3 + $0x9c] sm:$0xf] %v1642
        %1675 = vst [vmem:[#allocation3 + $0xc0] sm:$0xf] %v1643
        %1676 = vst [vmem:[#allocation3 + $0xe4] sm:$0xf] %v1644
        %1677 = vst [vmem:[#allocation3 + $0x108] sm:$0xf] %v1645
        %1678 = vst [vmem:[#allocation3 + $0x12c] sm:$0xf] %v1646
        %1679 = vst [vmem:[#allocation3 + $0x150] sm:$0xf] %v1647
        %1680 = vst [vmem:[#allocation3 + $0x174] sm:$0xf] %v1648
        %1681 = vst [vmem:[#allocation3 + $0x198] sm:$0xf] %v1649
        %1682 = vst [vmem:[#allocation3 + $0x1bc] sm:$0xf] %v1650
        %1683 = vst [vmem:[#allocation3 + $0x1e0] sm:$0xf] %v1651
        %1684 = vst [vmem:[#allocation3 + $0x204] sm:$0xf] %v1652
        %1685 = vst [vmem:[#allocation3 + $0x228] sm:$0xf] %v1653
        %1686 = vst [vmem:[#allocation3 + $0x24c] sm:$0xf] %v1654
        %1687 = vst [vmem:[#allocation3 + $0x270] sm:$0xf] %v1655
        %1688 = vst [vmem:[#allocation3 + $0x294] sm:$0xf] %v1656
        %1689 = vst [vmem:[#allocation3 + $0x2b8] sm:$0xf] %v1657
        %1690 = vst [vmem:[#allocation3 + $0x2dc] sm:$0xf] %v1658
        %1691 = vst [vmem:[#allocation3 + $0x300] sm:$0xf] %v1659
        %1692 = vst [vmem:[#allocation3 + $0x324] sm:$0xf] %v1660
        %1693 = vst [vmem:[#allocation3 + $0x348] sm:$0xf] %v1661
        %1694 = vst [vmem:[#allocation3 + $0x36c] sm:$0xf] %v1662
        %1695 = vst [vmem:[#allocation3 + $0x390] sm:$0xf] %v1663
        %1696 = vst [vmem:[#allocation3 + $0x3b4] sm:$0xf] %v1664
        %1697 = vst [vmem:[#allocation3 + $0x3d8] sm:$0xf] %v1665
        %1698 = vst [vmem:[#allocation3 + $0x3fc] sm:$0xf] %v1666
        %1699 = vst [vmem:[#allocation3 + $0x420] sm:$0xf] %v1667
        %1700 = vst [vmem:[#allocation3 + $0x444] sm:$0xf] %v1668
        %1701 = vst [vmem:[#allocation3 + $0x468] sm:$0xf] %v1669
        %v1702 = vld [vmem:[%s682] sm:$0xf]
        %v1703 = vld [vmem:[%s682 + $0x4] sm:$0xf]
        %v1704 = vld [vmem:[%s682 + $0x8] sm:$0x1]
        %v1705 = vld [vmem:[%s682 + $0xc] sm:$0xf]
        %v1706 = vld [vmem:[%s682 + $0x10] sm:$0xf]
        %v1707 = vld [vmem:[%s682 + $0x14] sm:$0x1]
        %v1708 = vld [vmem:[%s682 + $0x18] sm:$0xf]
        %v1709 = vld [vmem:[%s682 + $0x1c] sm:$0xf]
        %v1710 = vld [vmem:[%s682 + $0x20] sm:$0x1]
        %v1711 = vld [vmem:[%s682 + $0x24] sm:$0xf]
        %v1712 = vld [vmem:[%s682 + $0x28] sm:$0xf]
        %v1713 = vld [vmem:[%s682 + $0x2c] sm:$0x1]
        %v1714 = vld [vmem:[%s682 + $0x30] sm:$0xf]
        %v1715 = vld [vmem:[%s682 + $0x34] sm:$0xf]
        %v1716 = vld [vmem:[%s682 + $0x38] sm:$0x1]
        %v1717 = vld [vmem:[%s682 + $0x3c] sm:$0xf]
        %v1718 = vld [vmem:[%s682 + $0x40] sm:$0xf]
        %v1719 = vld [vmem:[%s682 + $0x44] sm:$0x1]
        %v1720 = vld [vmem:[%s682 + $0x48] sm:$0xf]
        %v1721 = vld [vmem:[%s682 + $0x4c] sm:$0xf]
        %v1722 = vld [vmem:[%s682 + $0x50] sm:$0x1]
        %v1723 = vld [vmem:[%s682 + $0x54] sm:$0xf]
        %v1724 = vld [vmem:[%s682 + $0x58] sm:$0xf]
        %v1725 = vld [vmem:[%s682 + $0x5c] sm:$0x1]
        %v1726 = vld [vmem:[%s682 + $0x60] sm:$0xf]
        %v1727 = vld [vmem:[%s682 + $0x64] sm:$0xf]
        %v1728 = vld [vmem:[%s682 + $0x68] sm:$0x1]
        %v1729 = vld [vmem:[%s682 + $0x6c] sm:$0xf]
        %v1730 = vld [vmem:[%s682 + $0x70] sm:$0xf]
        %v1731 = vld [vmem:[%s682 + $0x74] sm:$0x1]
        %v1732 = vld [vmem:[%s682 + $0x78] sm:$0xf]
        %v1733 = vld [vmem:[%s682 + $0x7c] sm:$0xf]
        %v1734 = vld [vmem:[%s682 + $0x80] sm:$0x1]
        %v1735 = vld [vmem:[%s682 + $0x84] sm:$0xf]
        %v1736 = vld [vmem:[%s682 + $0x88] sm:$0xf]
        %v1737 = vld [vmem:[%s682 + $0x8c] sm:$0x1]
        %v1738 = vld [vmem:[%s682 + $0x90] sm:$0xf]
        %v1739 = vld [vmem:[%s682 + $0x94] sm:$0xf]
        %v1740 = vld [vmem:[%s682 + $0x98] sm:$0x1]
        %v1741 = vld [vmem:[%s682 + $0x9c] sm:$0xf]
        %v1742 = vld [vmem:[%s682 + $0xa0] sm:$0xf]
        %v1743 = vld [vmem:[%s682 + $0xa4] sm:$0x1]
        %v1744 = vld [vmem:[%s682 + $0xa8] sm:$0xf]
        %v1745 = vld [vmem:[%s682 + $0xac] sm:$0xf]
        %v1746 = vld [vmem:[%s682 + $0xb0] sm:$0x1]
        %v1747 = vld [vmem:[%s682 + $0xb4] sm:$0xf]
        %v1748 = vld [vmem:[%s682 + $0xb8] sm:$0xf]
        %v1749 = vld [vmem:[%s682 + $0xbc] sm:$0x1]
        %v1751 = vshrl.u32 %v1702, 16
        %v1753 = vrot.slane %v1751, 4
        %v1754 = vshll.u32 %v1702, 16
        %v1756 = vrot.slane %v1754, 5
        %v1757 = vor.u32 %v1753, %v1756
        %v1758 = vrot.slane %v1757, 4
        %v1760 = vshll.u32 %v1703, 16
        %v1762 = vrot.slane %v1760, 5
        %v1763 = vsel %vm914, %v1758, %v1762
        %v1764 = vshrl.u32 %v1703, 16
        %v1766 = vrot.slane %v1764, 4
        %v1767 = vor.u32 %v1766, %v1762
        %v1768 = vrot.slane %v1767, 4
        %v1770 = vshll.u32 %v1704, 16
        %v1772 = vrot.slane %v1770, 5
        %v1773 = vsel %vm914, %v1768, %v1772
        %v1775 = vshrl.u32 %v1705, 16
        %v1777 = vrot.slane %v1775, 4
        %v1778 = vshll.u32 %v1705, 16
        %v1780 = vrot.slane %v1778, 5
        %v1781 = vor.u32 %v1777, %v1780
        %v1782 = vrot.slane %v1781, 4
        %v1784 = vshll.u32 %v1706, 16
        %v1786 = vrot.slane %v1784, 5
        %v1787 = vsel %vm914, %v1782, %v1786
        %v1788 = vshrl.u32 %v1706, 16
        %v1790 = vrot.slane %v1788, 4
        %v1791 = vor.u32 %v1790, %v1786
        %v1792 = vrot.slane %v1791, 4
        %v1794 = vshll.u32 %v1707, 16
        %v1796 = vrot.slane %v1794, 5
        %v1797 = vsel %vm914, %v1792, %v1796
        %v1799 = vshrl.u32 %v1708, 16
        %v1801 = vrot.slane %v1799, 4
        %v1802 = vshll.u32 %v1708, 16
        %v1804 = vrot.slane %v1802, 5
        %v1805 = vor.u32 %v1801, %v1804
        %v1806 = vrot.slane %v1805, 4
        %v1808 = vshll.u32 %v1709, 16
        %v1810 = vrot.slane %v1808, 5
        %v1811 = vsel %vm914, %v1806, %v1810
        %v1812 = vshrl.u32 %v1709, 16
        %v1814 = vrot.slane %v1812, 4
        %v1815 = vor.u32 %v1814, %v1810
        %v1816 = vrot.slane %v1815, 4
        %v1818 = vshll.u32 %v1710, 16
        %v1820 = vrot.slane %v1818, 5
        %v1821 = vsel %vm914, %v1816, %v1820
        %v1823 = vshrl.u32 %v1711, 16
        %v1825 = vrot.slane %v1823, 4
        %v1826 = vshll.u32 %v1711, 16
        %v1828 = vrot.slane %v1826, 5
        %v1829 = vor.u32 %v1825, %v1828
        %v1830 = vrot.slane %v1829, 4
        %v1832 = vshll.u32 %v1712, 16
        %v1834 = vrot.slane %v1832, 5
        %v1835 = vsel %vm914, %v1830, %v1834
        %v1836 = vshrl.u32 %v1712, 16
        %v1838 = vrot.slane %v1836, 4
        %v1839 = vor.u32 %v1838, %v1834
        %v1840 = vrot.slane %v1839, 4
        %v1842 = vshll.u32 %v1713, 16
        %v1844 = vrot.slane %v1842, 5
        %v1845 = vsel %vm914, %v1840, %v1844
        %v1847 = vshrl.u32 %v1714, 16
        %v1849 = vrot.slane %v1847, 4
        %v1850 = vshll.u32 %v1714, 16
        %v1852 = vrot.slane %v1850, 5
        %v1853 = vor.u32 %v1849, %v1852
        %v1854 = vrot.slane %v1853, 4
        %v1856 = vshll.u32 %v1715, 16
        %v1858 = vrot.slane %v1856, 5
        %v1859 = vsel %vm914, %v1854, %v1858
        %v1860 = vshrl.u32 %v1715, 16
        %v1862 = vrot.slane %v1860, 4
        %v1863 = vor.u32 %v1862, %v1858
        %v1864 = vrot.slane %v1863, 4
        %v1866 = vshll.u32 %v1716, 16
        %v1868 = vrot.slane %v1866, 5
        %v1869 = vsel %vm914, %v1864, %v1868
        %v1871 = vshrl.u32 %v1717, 16
        %v1873 = vrot.slane %v1871, 4
        %v1874 = vshll.u32 %v1717, 16
        %v1876 = vrot.slane %v1874, 5
        %v1877 = vor.u32 %v1873, %v1876
        %v1878 = vrot.slane %v1877, 4
        %v1880 = vshll.u32 %v1718, 16
        %v1882 = vrot.slane %v1880, 5
        %v1883 = vsel %vm914, %v1878, %v1882
        %v1884 = vshrl.u32 %v1718, 16
        %v1886 = vrot.slane %v1884, 4
        %v1887 = vor.u32 %v1886, %v1882
        %v1888 = vrot.slane %v1887, 4
        %v1890 = vshll.u32 %v1719, 16
        %v1892 = vrot.slane %v1890, 5
        %v1893 = vsel %vm914, %v1888, %v1892
        %v1895 = vshrl.u32 %v1720, 16
        %v1897 = vrot.slane %v1895, 4
        %v1898 = vshll.u32 %v1720, 16
        %v1900 = vrot.slane %v1898, 5
        %v1901 = vor.u32 %v1897, %v1900
        %v1902 = vrot.slane %v1901, 4
        %v1904 = vshll.u32 %v1721, 16
        %v1906 = vrot.slane %v1904, 5
        %v1907 = vsel %vm914, %v1902, %v1906
        %v1908 = vshrl.u32 %v1721, 16
        %v1910 = vrot.slane %v1908, 4
        %v1911 = vor.u32 %v1910, %v1906
        %v1912 = vrot.slane %v1911, 4
        %v1914 = vshll.u32 %v1722, 16
        %v1916 = vrot.slane %v1914, 5
        %v1917 = vsel %vm914, %v1912, %v1916
        %v1919 = vshrl.u32 %v1723, 16
        %v1921 = vrot.slane %v1919, 4
        %v1922 = vshll.u32 %v1723, 16
        %v1924 = vrot.slane %v1922, 5
        %v1925 = vor.u32 %v1921, %v1924
        %v1926 = vrot.slane %v1925, 4
        %v1928 = vshll.u32 %v1724, 16
        %v1930 = vrot.slane %v1928, 5
        %v1931 = vsel %vm914, %v1926, %v1930
        %v1932 = vshrl.u32 %v1724, 16
        %v1934 = vrot.slane %v1932, 4
        %v1935 = vor.u32 %v1934, %v1930
        %v1936 = vrot.slane %v1935, 4
        %v1938 = vshll.u32 %v1725, 16
        %v1940 = vrot.slane %v1938, 5
        %v1941 = vsel %vm914, %v1936, %v1940
        %v1943 = vshrl.u32 %v1726, 16
        %v1945 = vrot.slane %v1943, 4
        %v1946 = vshll.u32 %v1726, 16
        %v1948 = vrot.slane %v1946, 5
        %v1949 = vor.u32 %v1945, %v1948
        %v1950 = vrot.slane %v1949, 4
        %v1952 = vshll.u32 %v1727, 16
        %v1954 = vrot.slane %v1952, 5
        %v1955 = vsel %vm914, %v1950, %v1954
        %v1956 = vshrl.u32 %v1727, 16
        %v1958 = vrot.slane %v1956, 4
        %v1959 = vor.u32 %v1958, %v1954
        %v1960 = vrot.slane %v1959, 4
        %v1962 = vshll.u32 %v1728, 16
        %v1964 = vrot.slane %v1962, 5
        %v1965 = vsel %vm914, %v1960, %v1964
        %v1967 = vshrl.u32 %v1729, 16
        %v1969 = vrot.slane %v1967, 4
        %v1970 = vshll.u32 %v1729, 16
        %v1972 = vrot.slane %v1970, 5
        %v1973 = vor.u32 %v1969, %v1972
        %v1974 = vrot.slane %v1973, 4
        %v1976 = vshll.u32 %v1730, 16
        %v1978 = vrot.slane %v1976, 5
        %v1979 = vsel %vm914, %v1974, %v1978
        %v1980 = vshrl.u32 %v1730, 16
        %v1982 = vrot.slane %v1980, 4
        %v1983 = vor.u32 %v1982, %v1978
        %v1984 = vrot.slane %v1983, 4
        %v1986 = vshll.u32 %v1731, 16
        %v1988 = vrot.slane %v1986, 5
        %v1989 = vsel %vm914, %v1984, %v1988
        %v1991 = vshrl.u32 %v1732, 16
        %v1993 = vrot.slane %v1991, 4
        %v1994 = vshll.u32 %v1732, 16
        %v1996 = vrot.slane %v1994, 5
        %v1997 = vor.u32 %v1993, %v1996
        %v1998 = vrot.slane %v1997, 4
        %v2000 = vshll.u32 %v1733, 16
        %v2002 = vrot.slane %v2000, 5
        %v2003 = vsel %vm914, %v1998, %v2002
        %v2004 = vshrl.u32 %v1733, 16
        %v2006 = vrot.slane %v2004, 4
        %v2007 = vor.u32 %v2006, %v2002
        %v2008 = vrot.slane %v2007, 4
        %v2010 = vshll.u32 %v1734, 16
        %v2012 = vrot.slane %v2010, 5
        %v2013 = vsel %vm914, %v2008, %v2012
        %v2015 = vshrl.u32 %v1735, 16
        %v2017 = vrot.slane %v2015, 4
        %v2018 = vshll.u32 %v1735, 16
        %v2020 = vrot.slane %v2018, 5
        %v2021 = vor.u32 %v2017, %v2020
        %v2022 = vrot.slane %v2021, 4
        %v2024 = vshll.u32 %v1736, 16
        %v2026 = vrot.slane %v2024, 5
        %v2027 = vsel %vm914, %v2022, %v2026
        %v2028 = vshrl.u32 %v1736, 16
        %v2030 = vrot.slane %v2028, 4
        %v2031 = vor.u32 %v2030, %v2026
        %v2032 = vrot.slane %v2031, 4
        %v2034 = vshll.u32 %v1737, 16
        %v2036 = vrot.slane %v2034, 5
        %v2037 = vsel %vm914, %v2032, %v2036
        %v2039 = vshrl.u32 %v1738, 16
        %v2041 = vrot.slane %v2039, 4
        %v2042 = vshll.u32 %v1738, 16
        %v2044 = vrot.slane %v2042, 5
        %v2045 = vor.u32 %v2041, %v2044
        %v2046 = vrot.slane %v2045, 4
        %v2048 = vshll.u32 %v1739, 16
        %v2050 = vrot.slane %v2048, 5
        %v2051 = vsel %vm914, %v2046, %v2050
        %v2052 = vshrl.u32 %v1739, 16
        %v2054 = vrot.slane %v2052, 4
        %v2055 = vor.u32 %v2054, %v2050
        %v2056 = vrot.slane %v2055, 4
        %v2058 = vshll.u32 %v1740, 16
        %v2060 = vrot.slane %v2058, 5
        %v2061 = vsel %vm914, %v2056, %v2060
        %v2063 = vshrl.u32 %v1741, 16
        %v2065 = vrot.slane %v2063, 4
        %v2066 = vshll.u32 %v1741, 16
        %v2068 = vrot.slane %v2066, 5
        %v2069 = vor.u32 %v2065, %v2068
        %v2070 = vrot.slane %v2069, 4
        %v2072 = vshll.u32 %v1742, 16
        %v2074 = vrot.slane %v2072, 5
        %v2075 = vsel %vm914, %v2070, %v2074
        %v2076 = vshrl.u32 %v1742, 16
        %v2078 = vrot.slane %v2076, 4
        %v2079 = vor.u32 %v2078, %v2074
        %v2080 = vrot.slane %v2079, 4
        %v2082 = vshll.u32 %v1743, 16
        %v2084 = vrot.slane %v2082, 5
        %v2085 = vsel %vm914, %v2080, %v2084
        %v2087 = vshrl.u32 %v1744, 16
        %v2089 = vrot.slane %v2087, 4
        %v2090 = vshll.u32 %v1744, 16
        %v2092 = vrot.slane %v2090, 5
        %v2093 = vor.u32 %v2089, %v2092
        %v2094 = vrot.slane %v2093, 4
        %v2096 = vshll.u32 %v1745, 16
        %v2098 = vrot.slane %v2096, 5
        %v2099 = vsel %vm914, %v2094, %v2098
        %v2100 = vshrl.u32 %v1745, 16
        %v2102 = vrot.slane %v2100, 4
        %v2103 = vor.u32 %v2102, %v2098
        %v2104 = vrot.slane %v2103, 4
        %v2106 = vshll.u32 %v1746, 16
        %v2108 = vrot.slane %v2106, 5
        %v2109 = vsel %vm914, %v2104, %v2108
        %v2111 = vshrl.u32 %v1747, 16
        %v2113 = vrot.slane %v2111, 4
        %v2114 = vshll.u32 %v1747, 16
        %v2116 = vrot.slane %v2114, 5
        %v2117 = vor.u32 %v2113, %v2116
        %v2118 = vrot.slane %v2117, 4
        %v2120 = vshll.u32 %v1748, 16
        %v2122 = vrot.slane %v2120, 5
        %v2123 = vsel %vm914, %v2118, %v2122
        %v2124 = vshrl.u32 %v1748, 16
        %v2126 = vrot.slane %v2124, 4
        %v2127 = vor.u32 %v2126, %v2122
        %v2128 = vrot.slane %v2127, 4
        %v2130 = vshll.u32 %v1749, 16
        %v2132 = vrot.slane %v2130, 5
        %v2133 = vsel %vm914, %v2128, %v2132
        %2166 = vst [vmem:[#allocation3 + $0x10] sm:$0xf] %v1763
        %2167 = vst [vmem:[#allocation3 + $0x34] sm:$0xf] %v1773
        %2168 = vst [vmem:[#allocation3 + $0x58] sm:$0xf] %v1787
        %2169 = vst [vmem:[#allocation3 + $0x7c] sm:$0xf] %v1797
        %2170 = vst [vmem:[#allocation3 + $0xa0] sm:$0xf] %v1811
        %2171 = vst [vmem:[#allocation3 + $0xc4] sm:$0xf] %v1821
        %2172 = vst [vmem:[#allocation3 + $0xe8] sm:$0xf] %v1835
        %2173 = vst [vmem:[#allocation3 + $0x10c] sm:$0xf] %v1845
        %2174 = vst [vmem:[#allocation3 + $0x130] sm:$0xf] %v1859
        %2175 = vst [vmem:[#allocation3 + $0x154] sm:$0xf] %v1869
        %2176 = vst [vmem:[#allocation3 + $0x178] sm:$0xf] %v1883
        %2177 = vst [vmem:[#allocation3 + $0x19c] sm:$0xf] %v1893
        %2178 = vst [vmem:[#allocation3 + $0x1c0] sm:$0xf] %v1907
        %2179 = vst [vmem:[#allocation3 + $0x1e4] sm:$0xf] %v1917
        %2180 = vst [vmem:[#allocation3 + $0x208] sm:$0xf] %v1931
        %2181 = vst [vmem:[#allocation3 + $0x22c] sm:$0xf] %v1941
        %2182 = vst [vmem:[#allocation3 + $0x250] sm:$0xf] %v1955
        %2183 = vst [vmem:[#allocation3 + $0x274] sm:$0xf] %v1965
        %2184 = vst [vmem:[#allocation3 + $0x298] sm:$0xf] %v1979
        %2185 = vst [vmem:[#allocation3 + $0x2bc] sm:$0xf] %v1989
        %2186 = vst [vmem:[#allocation3 + $0x2e0] sm:$0xf] %v2003
        %2187 = vst [vmem:[#allocation3 + $0x304] sm:$0xf] %v2013
        %2188 = vst [vmem:[#allocation3 + $0x328] sm:$0xf] %v2027
        %2189 = vst [vmem:[#allocation3 + $0x34c] sm:$0xf] %v2037
        %2190 = vst [vmem:[#allocation3 + $0x370] sm:$0xf] %v2051
        %2191 = vst [vmem:[#allocation3 + $0x394] sm:$0xf] %v2061
        %2192 = vst [vmem:[#allocation3 + $0x3b8] sm:$0xf] %v2075
        %2193 = vst [vmem:[#allocation3 + $0x3dc] sm:$0xf] %v2085
        %2194 = vst [vmem:[#allocation3 + $0x400] sm:$0xf] %v2099
        %2195 = vst [vmem:[#allocation3 + $0x424] sm:$0xf] %v2109
        %2196 = vst [vmem:[#allocation3 + $0x448] sm:$0xf] %v2123
        %2197 = vst [vmem:[#allocation3 + $0x46c] sm:$0xf] %v2133
        %v2198 = vld [vmem:[%s682] sm:$0xe]
        %v2199 = vld [vmem:[%s682 + $0x4] sm:$0xf]
        %v2200 = vld [vmem:[%s682 + $0x8] sm:$0x1]
        %v2201 = vld [vmem:[%s682 + $0xc] sm:$0xe]
        %v2202 = vld [vmem:[%s682 + $0x10] sm:$0xf]
        %v2203 = vld [vmem:[%s682 + $0x14] sm:$0x1]
        %v2204 = vld [vmem:[%s682 + $0x18] sm:$0xe]
        %v2205 = vld [vmem:[%s682 + $0x1c] sm:$0xf]
        %v2206 = vld [vmem:[%s682 + $0x20] sm:$0x1]
        %v2207 = vld [vmem:[%s682 + $0x24] sm:$0xe]
        %v2208 = vld [vmem:[%s682 + $0x28] sm:$0xf]
        %v2209 = vld [vmem:[%s682 + $0x2c] sm:$0x1]
        %v2210 = vld [vmem:[%s682 + $0x30] sm:$0xe]
        %v2211 = vld [vmem:[%s682 + $0x34] sm:$0xf]
        %v2212 = vld [vmem:[%s682 + $0x38] sm:$0x1]
        %v2213 = vld [vmem:[%s682 + $0x3c] sm:$0xe]
        %v2214 = vld [vmem:[%s682 + $0x40] sm:$0xf]
        %v2215 = vld [vmem:[%s682 + $0x44] sm:$0x1]
        %v2216 = vld [vmem:[%s682 + $0x48] sm:$0xe]
        %v2217 = vld [vmem:[%s682 + $0x4c] sm:$0xf]
        %v2218 = vld [vmem:[%s682 + $0x50] sm:$0x1]
        %v2219 = vld [vmem:[%s682 + $0x54] sm:$0xe]
        %v2220 = vld [vmem:[%s682 + $0x58] sm:$0xf]
        %v2221 = vld [vmem:[%s682 + $0x5c] sm:$0x1]
        %v2222 = vld [vmem:[%s682 + $0x60] sm:$0xe]
        %v2223 = vld [vmem:[%s682 + $0x64] sm:$0xf]
        %v2224 = vld [vmem:[%s682 + $0x68] sm:$0x1]
        %v2225 = vld [vmem:[%s682 + $0x6c] sm:$0xe]
        %v2226 = vld [vmem:[%s682 + $0x70] sm:$0xf]
        %v2227 = vld [vmem:[%s682 + $0x74] sm:$0x1]
        %v2228 = vld [vmem:[%s682 + $0x78] sm:$0xe]
        %v2229 = vld [vmem:[%s682 + $0x7c] sm:$0xf]
        %v2230 = vld [vmem:[%s682 + $0x80] sm:$0x1]
        %v2231 = vld [vmem:[%s682 + $0x84] sm:$0xe]
        %v2232 = vld [vmem:[%s682 + $0x88] sm:$0xf]
        %v2233 = vld [vmem:[%s682 + $0x8c] sm:$0x1]
        %v2234 = vld [vmem:[%s682 + $0x90] sm:$0xe]
        %v2235 = vld [vmem:[%s682 + $0x94] sm:$0xf]
        %v2236 = vld [vmem:[%s682 + $0x98] sm:$0x1]
        %v2237 = vld [vmem:[%s682 + $0x9c] sm:$0xe]
        %v2238 = vld [vmem:[%s682 + $0xa0] sm:$0xf]
        %v2239 = vld [vmem:[%s682 + $0xa4] sm:$0x1]
        %v2240 = vld [vmem:[%s682 + $0xa8] sm:$0xe]
        %v2241 = vld [vmem:[%s682 + $0xac] sm:$0xf]
        %v2242 = vld [vmem:[%s682 + $0xb0] sm:$0x1]
        %v2243 = vld [vmem:[%s682 + $0xb4] sm:$0xe]
        %v2244 = vld [vmem:[%s682 + $0xb8] sm:$0xf]
        %v2245 = vld [vmem:[%s682 + $0xbc] sm:$0x1]
        %v2294 = vrot.slane %v2198, 5
        %v2295 = vrot.slane %v2294, 4
        %v2296 = vrot.slane %v2199, 5
        %v2297 = vsel %vm1461, %v2295, %v2296
        %v2298 = vrot.slane %v2296, 4
        %v2299 = vrot.slane %v2200, 5
        %v2300 = vsel %vm1461, %v2298, %v2299
        %v2301 = vrot.slane %v2201, 5
        %v2302 = vrot.slane %v2301, 4
        %v2303 = vrot.slane %v2202, 5
        %v2304 = vsel %vm1461, %v2302, %v2303
        %v2305 = vrot.slane %v2303, 4
        %v2306 = vrot.slane %v2203, 5
        %v2307 = vsel %vm1461, %v2305, %v2306
        %v2308 = vrot.slane %v2204, 5
        %v2309 = vrot.slane %v2308, 4
        %v2310 = vrot.slane %v2205, 5
        %v2311 = vsel %vm1461, %v2309, %v2310
        %v2312 = vrot.slane %v2310, 4
        %v2313 = vrot.slane %v2206, 5
        %v2314 = vsel %vm1461, %v2312, %v2313
        %v2315 = vrot.slane %v2207, 5
        %v2316 = vrot.slane %v2315, 4
        %v2317 = vrot.slane %v2208, 5
        %v2318 = vsel %vm1461, %v2316, %v2317
        %v2319 = vrot.slane %v2317, 4
        %v2320 = vrot.slane %v2209, 5
        %v2321 = vsel %vm1461, %v2319, %v2320
        %v2322 = vrot.slane %v2210, 5
        %v2323 = vrot.slane %v2322, 4
        %v2324 = vrot.slane %v2211, 5
        %v2325 = vsel %vm1461, %v2323, %v2324
        %v2326 = vrot.slane %v2324, 4
        %v2327 = vrot.slane %v2212, 5
        %v2328 = vsel %vm1461, %v2326, %v2327
        %v2329 = vrot.slane %v2213, 5
        %v2330 = vrot.slane %v2329, 4
        %v2331 = vrot.slane %v2214, 5
        %v2332 = vsel %vm1461, %v2330, %v2331
        %v2333 = vrot.slane %v2331, 4
        %v2334 = vrot.slane %v2215, 5
        %v2335 = vsel %vm1461, %v2333, %v2334
        %v2336 = vrot.slane %v2216, 5
        %v2337 = vrot.slane %v2336, 4
        %v2338 = vrot.slane %v2217, 5
        %v2339 = vsel %vm1461, %v2337, %v2338
        %v2340 = vrot.slane %v2338, 4
        %v2341 = vrot.slane %v2218, 5
        %v2342 = vsel %vm1461, %v2340, %v2341
        %v2343 = vrot.slane %v2219, 5
        %v2344 = vrot.slane %v2343, 4
        %v2345 = vrot.slane %v2220, 5
        %v2346 = vsel %vm1461, %v2344, %v2345
        %v2347 = vrot.slane %v2345, 4
        %v2348 = vrot.slane %v2221, 5
        %v2349 = vsel %vm1461, %v2347, %v2348
        %v2350 = vrot.slane %v2222, 5
        %v2351 = vrot.slane %v2350, 4
        %v2352 = vrot.slane %v2223, 5
        %v2353 = vsel %vm1461, %v2351, %v2352
        %v2354 = vrot.slane %v2352, 4
        %v2355 = vrot.slane %v2224, 5
        %v2356 = vsel %vm1461, %v2354, %v2355
        %v2357 = vrot.slane %v2225, 5
        %v2358 = vrot.slane %v2357, 4
        %v2359 = vrot.slane %v2226, 5
        %v2360 = vsel %vm1461, %v2358, %v2359
        %v2361 = vrot.slane %v2359, 4
        %v2362 = vrot.slane %v2227, 5
        %v2363 = vsel %vm1461, %v2361, %v2362
        %v2364 = vrot.slane %v2228, 5
        %v2365 = vrot.slane %v2364, 4
        %v2366 = vrot.slane %v2229, 5
        %v2367 = vsel %vm1461, %v2365, %v2366
        %v2368 = vrot.slane %v2366, 4
        %v2369 = vrot.slane %v2230, 5
        %v2370 = vsel %vm1461, %v2368, %v2369
        %v2371 = vrot.slane %v2231, 5
        %v2372 = vrot.slane %v2371, 4
        %v2373 = vrot.slane %v2232, 5
        %v2374 = vsel %vm1461, %v2372, %v2373
        %v2375 = vrot.slane %v2373, 4
        %v2376 = vrot.slane %v2233, 5
        %v2377 = vsel %vm1461, %v2375, %v2376
        %v2378 = vrot.slane %v2234, 5
        %v2379 = vrot.slane %v2378, 4
        %v2380 = vrot.slane %v2235, 5
        %v2381 = vsel %vm1461, %v2379, %v2380
        %v2382 = vrot.slane %v2380, 4
        %v2383 = vrot.slane %v2236, 5
        %v2384 = vsel %vm1461, %v2382, %v2383
        %v2385 = vrot.slane %v2237, 5
        %v2386 = vrot.slane %v2385, 4
        %v2387 = vrot.slane %v2238, 5
        %v2388 = vsel %vm1461, %v2386, %v2387
        %v2389 = vrot.slane %v2387, 4
        %v2390 = vrot.slane %v2239, 5
        %v2391 = vsel %vm1461, %v2389, %v2390
        %v2392 = vrot.slane %v2240, 5
        %v2393 = vrot.slane %v2392, 4
        %v2394 = vrot.slane %v2241, 5
        %v2395 = vsel %vm1461, %v2393, %v2394
        %v2396 = vrot.slane %v2394, 4
        %v2397 = vrot.slane %v2242, 5
        %v2398 = vsel %vm1461, %v2396, %v2397
        %v2399 = vrot.slane %v2243, 5
        %v2400 = vrot.slane %v2399, 4
        %v2401 = vrot.slane %v2244, 5
        %v2402 = vsel %vm1461, %v2400, %v2401
        %v2403 = vrot.slane %v2401, 4
        %v2404 = vrot.slane %v2245, 5
        %v2405 = vsel %vm1461, %v2403, %v2404
        %2438 = vst [vmem:[#allocation3 + $0x14] sm:$0xf] %v2297
        %2439 = vst [vmem:[#allocation3 + $0x38] sm:$0xf] %v2300
        %2440 = vst [vmem:[#allocation3 + $0x5c] sm:$0xf] %v2304
        %2441 = vst [vmem:[#allocation3 + $0x80] sm:$0xf] %v2307
        %2442 = vst [vmem:[#allocation3 + $0xa4] sm:$0xf] %v2311
        %2443 = vst [vmem:[#allocation3 + $0xc8] sm:$0xf] %v2314
        %2444 = vst [vmem:[#allocation3 + $0xec] sm:$0xf] %v2318
        %2445 = vst [vmem:[#allocation3 + $0x110] sm:$0xf] %v2321
        %2446 = vst [vmem:[#allocation3 + $0x134] sm:$0xf] %v2325
        %2447 = vst [vmem:[#allocation3 + $0x158] sm:$0xf] %v2328
        %2448 = vst [vmem:[#allocation3 + $0x17c] sm:$0xf] %v2332
        %2449 = vst [vmem:[#allocation3 + $0x1a0] sm:$0xf] %v2335
        %2450 = vst [vmem:[#allocation3 + $0x1c4] sm:$0xf] %v2339
        %2451 = vst [vmem:[#allocation3 + $0x1e8] sm:$0xf] %v2342
        %2452 = vst [vmem:[#allocation3 + $0x20c] sm:$0xf] %v2346
        %2453 = vst [vmem:[#allocation3 + $0x230] sm:$0xf] %v2349
        %2454 = vst [vmem:[#allocation3 + $0x254] sm:$0xf] %v2353
        %2455 = vst [vmem:[#allocation3 + $0x278] sm:$0xf] %v2356
        %2456 = vst [vmem:[#allocation3 + $0x29c] sm:$0xf] %v2360
        %2457 = vst [vmem:[#allocation3 + $0x2c0] sm:$0xf] %v2363
        %2458 = vst [vmem:[#allocation3 + $0x2e4] sm:$0xf] %v2367
        %2459 = vst [vmem:[#allocation3 + $0x308] sm:$0xf] %v2370
        %2460 = vst [vmem:[#allocation3 + $0x32c] sm:$0xf] %v2374
        %2461 = vst [vmem:[#allocation3 + $0x350] sm:$0xf] %v2377
        %2462 = vst [vmem:[#allocation3 + $0x374] sm:$0xf] %v2381
        %2463 = vst [vmem:[#allocation3 + $0x398] sm:$0xf] %v2384
        %2464 = vst [vmem:[#allocation3 + $0x3bc] sm:$0xf] %v2388
        %2465 = vst [vmem:[#allocation3 + $0x3e0] sm:$0xf] %v2391
        %2466 = vst [vmem:[#allocation3 + $0x404] sm:$0xf] %v2395
        %2467 = vst [vmem:[#allocation3 + $0x428] sm:$0xf] %v2398
        %2468 = vst [vmem:[#allocation3 + $0x44c] sm:$0xf] %v2402
        %2469 = vst [vmem:[#allocation3 + $0x470] sm:$0xf] %v2405
        %s2470 = scalar_lea.vmem [#allocation2], 24
        %v2471 = vld [vmem:[%s2470] sm:$0xf]
        %v2472 = vld [vmem:[%s2470 + $0x4] sm:$0xf]
        %v2473 = vld [vmem:[%s2470 + $0xc] sm:$0xf]
        %v2474 = vld [vmem:[%s2470 + $0x10] sm:$0xf]
        %v2475 = vld [vmem:[%s2470 + $0x18] sm:$0xf]
        %v2476 = vld [vmem:[%s2470 + $0x1c] sm:$0xf]
        %v2477 = vld [vmem:[%s2470 + $0x24] sm:$0xf]
        %v2478 = vld [vmem:[%s2470 + $0x28] sm:$0xf]
        %v2479 = vld [vmem:[%s2470 + $0x30] sm:$0xf]
        %v2480 = vld [vmem:[%s2470 + $0x34] sm:$0xf]
        %v2481 = vld [vmem:[%s2470 + $0x3c] sm:$0xf]
        %v2482 = vld [vmem:[%s2470 + $0x40] sm:$0xf]
        %v2483 = vld [vmem:[%s2470 + $0x48] sm:$0xf]
        %v2484 = vld [vmem:[%s2470 + $0x4c] sm:$0xf]
        %v2485 = vld [vmem:[%s2470 + $0x54] sm:$0xf]
        %v2486 = vld [vmem:[%s2470 + $0x58] sm:$0xf]
        %v2487 = vld [vmem:[%s2470 + $0x60] sm:$0xf]
        %v2488 = vld [vmem:[%s2470 + $0x64] sm:$0xf]
        %v2489 = vld [vmem:[%s2470 + $0x6c] sm:$0xf]
        %v2490 = vld [vmem:[%s2470 + $0x70] sm:$0xf]
        %v2491 = vld [vmem:[%s2470 + $0x78] sm:$0xf]
        %v2492 = vld [vmem:[%s2470 + $0x7c] sm:$0xf]
        %v2493 = vld [vmem:[%s2470 + $0x84] sm:$0xf]
        %v2494 = vld [vmem:[%s2470 + $0x88] sm:$0xf]
        %v2495 = vld [vmem:[%s2470 + $0x90] sm:$0xf]
        %v2496 = vld [vmem:[%s2470 + $0x94] sm:$0xf]
        %v2497 = vld [vmem:[%s2470 + $0x9c] sm:$0xf]
        %v2498 = vld [vmem:[%s2470 + $0xa0] sm:$0xf]
        %v2499 = vld [vmem:[%s2470 + $0xa8] sm:$0xf]
        %v2500 = vld [vmem:[%s2470 + $0xac] sm:$0xf]
        %v2501 = vld [vmem:[%s2470 + $0xb4] sm:$0xf]
        %v2502 = vld [vmem:[%s2470 + $0xb8] sm:$0xf]
        %2503 = vst [vmem:[#allocation3 + $0x18] sm:$0xf] %v2471
        %2504 = vst [vmem:[#allocation3 + $0x3c] sm:$0xf] %v2472
        %2505 = vst [vmem:[#allocation3 + $0x60] sm:$0xf] %v2473
        %2506 = vst [vmem:[#allocation3 + $0x84] sm:$0xf] %v2474
        %2507 = vst [vmem:[#allocation3 + $0xa8] sm:$0xf] %v2475
        %2508 = vst [vmem:[#allocation3 + $0xcc] sm:$0xf] %v2476
        %2509 = vst [vmem:[#allocation3 + $0xf0] sm:$0xf] %v2477
        %2510 = vst [vmem:[#allocation3 + $0x114] sm:$0xf] %v2478
        %2511 = vst [vmem:[#allocation3 + $0x138] sm:$0xf] %v2479
        %2512 = vst [vmem:[#allocation3 + $0x15c] sm:$0xf] %v2480
        %2513 = vst [vmem:[#allocation3 + $0x180] sm:$0xf] %v2481
        %2514 = vst [vmem:[#allocation3 + $0x1a4] sm:$0xf] %v2482
        %2515 = vst [vmem:[#allocation3 + $0x1c8] sm:$0xf] %v2483
        %2516 = vst [vmem:[#allocation3 + $0x1ec] sm:$0xf] %v2484
        %2517 = vst [vmem:[#allocation3 + $0x210] sm:$0xf] %v2485
        %2518 = vst [vmem:[#allocation3 + $0x234] sm:$0xf] %v2486
        %2519 = vst [vmem:[#allocation3 + $0x258] sm:$0xf] %v2487
        %2520 = vst [vmem:[#allocation3 + $0x27c] sm:$0xf] %v2488
        %2521 = vst [vmem:[#allocation3 + $0x2a0] sm:$0xf] %v2489
        %2522 = vst [vmem:[#allocation3 + $0x2c4] sm:$0xf] %v2490
        %2523 = vst [vmem:[#allocation3 + $0x2e8] sm:$0xf] %v2491
        %2524 = vst [vmem:[#allocation3 + $0x30c] sm:$0xf] %v2492
        %2525 = vst [vmem:[#allocation3 + $0x330] sm:$0xf] %v2493
        %2526 = vst [vmem:[#allocation3 + $0x354] sm:$0xf] %v2494
        %2527 = vst [vmem:[#allocation3 + $0x378] sm:$0xf] %v2495
        %2528 = vst [vmem:[#allocation3 + $0x39c] sm:$0xf] %v2496
        %2529 = vst [vmem:[#allocation3 + $0x3c0] sm:$0xf] %v2497
        %2530 = vst [vmem:[#allocation3 + $0x3e4] sm:$0xf] %v2498
        %2531 = vst [vmem:[#allocation3 + $0x408] sm:$0xf] %v2499
        %2532 = vst [vmem:[#allocation3 + $0x42c] sm:$0xf] %v2500
        %2533 = vst [vmem:[#allocation3 + $0x450] sm:$0xf] %v2501
        %2534 = vst [vmem:[#allocation3 + $0x474] sm:$0xf] %v2502
        %v2535 = vld [vmem:[%s2470] sm:$0xf]
        %v2536 = vld [vmem:[%s2470 + $0x4] sm:$0xf]
        %v2537 = vld [vmem:[%s2470 + $0x8] sm:$0x1]
        %v2538 = vld [vmem:[%s2470 + $0xc] sm:$0xf]
        %v2539 = vld [vmem:[%s2470 + $0x10] sm:$0xf]
        %v2540 = vld [vmem:[%s2470 + $0x14] sm:$0x1]
        %v2541 = vld [vmem:[%s2470 + $0x18] sm:$0xf]
        %v2542 = vld [vmem:[%s2470 + $0x1c] sm:$0xf]
        %v2543 = vld [vmem:[%s2470 + $0x20] sm:$0x1]
        %v2544 = vld [vmem:[%s2470 + $0x24] sm:$0xf]
        %v2545 = vld [vmem:[%s2470 + $0x28] sm:$0xf]
        %v2546 = vld [vmem:[%s2470 + $0x2c] sm:$0x1]
        %v2547 = vld [vmem:[%s2470 + $0x30] sm:$0xf]
        %v2548 = vld [vmem:[%s2470 + $0x34] sm:$0xf]
        %v2549 = vld [vmem:[%s2470 + $0x38] sm:$0x1]
        %v2550 = vld [vmem:[%s2470 + $0x3c] sm:$0xf]
        %v2551 = vld [vmem:[%s2470 + $0x40] sm:$0xf]
        %v2552 = vld [vmem:[%s2470 + $0x44] sm:$0x1]
        %v2553 = vld [vmem:[%s2470 + $0x48] sm:$0xf]
        %v2554 = vld [vmem:[%s2470 + $0x4c] sm:$0xf]
        %v2555 = vld [vmem:[%s2470 + $0x50] sm:$0x1]
        %v2556 = vld [vmem:[%s2470 + $0x54] sm:$0xf]
        %v2557 = vld [vmem:[%s2470 + $0x58] sm:$0xf]
        %v2558 = vld [vmem:[%s2470 + $0x5c] sm:$0x1]
        %v2559 = vld [vmem:[%s2470 + $0x60] sm:$0xf]
        %v2560 = vld [vmem:[%s2470 + $0x64] sm:$0xf]
        %v2561 = vld [vmem:[%s2470 + $0x68] sm:$0x1]
        %v2562 = vld [vmem:[%s2470 + $0x6c] sm:$0xf]
        %v2563 = vld [vmem:[%s2470 + $0x70] sm:$0xf]
        %v2564 = vld [vmem:[%s2470 + $0x74] sm:$0x1]
        %v2565 = vld [vmem:[%s2470 + $0x78] sm:$0xf]
        %v2566 = vld [vmem:[%s2470 + $0x7c] sm:$0xf]
        %v2567 = vld [vmem:[%s2470 + $0x80] sm:$0x1]
        %v2568 = vld [vmem:[%s2470 + $0x84] sm:$0xf]
        %v2569 = vld [vmem:[%s2470 + $0x88] sm:$0xf]
        %v2570 = vld [vmem:[%s2470 + $0x8c] sm:$0x1]
        %v2571 = vld [vmem:[%s2470 + $0x90] sm:$0xf]
        %v2572 = vld [vmem:[%s2470 + $0x94] sm:$0xf]
        %v2573 = vld [vmem:[%s2470 + $0x98] sm:$0x1]
        %v2574 = vld [vmem:[%s2470 + $0x9c] sm:$0xf]
        %v2575 = vld [vmem:[%s2470 + $0xa0] sm:$0xf]
        %v2576 = vld [vmem:[%s2470 + $0xa4] sm:$0x1]
        %v2577 = vld [vmem:[%s2470 + $0xa8] sm:$0xf]
        %v2578 = vld [vmem:[%s2470 + $0xac] sm:$0xf]
        %v2579 = vld [vmem:[%s2470 + $0xb0] sm:$0x1]
        %v2580 = vld [vmem:[%s2470 + $0xb4] sm:$0xf]
        %v2581 = vld [vmem:[%s2470 + $0xb8] sm:$0xf]
        %v2582 = vld [vmem:[%s2470 + $0xbc] sm:$0x1]
        %v2584 = vshrl.u32 %v2535, 16
        %v2586 = vrot.slane %v2584, 4
        %v2587 = vshll.u32 %v2535, 16
        %v2589 = vrot.slane %v2587, 5
        %v2590 = vor.u32 %v2586, %v2589
        %v2591 = vrot.slane %v2590, 4
        %v2593 = vshll.u32 %v2536, 16
        %v2595 = vrot.slane %v2593, 5
        %v2596 = vsel %vm914, %v2591, %v2595
        %v2597 = vshrl.u32 %v2536, 16
        %v2599 = vrot.slane %v2597, 4
        %v2600 = vor.u32 %v2599, %v2595
        %v2601 = vrot.slane %v2600, 4
        %v2603 = vshll.u32 %v2537, 16
        %v2605 = vrot.slane %v2603, 5
        %v2606 = vsel %vm914, %v2601, %v2605
        %v2608 = vshrl.u32 %v2538, 16
        %v2610 = vrot.slane %v2608, 4
        %v2611 = vshll.u32 %v2538, 16
        %v2613 = vrot.slane %v2611, 5
        %v2614 = vor.u32 %v2610, %v2613
        %v2615 = vrot.slane %v2614, 4
        %v2617 = vshll.u32 %v2539, 16
        %v2619 = vrot.slane %v2617, 5
        %v2620 = vsel %vm914, %v2615, %v2619
        %v2621 = vshrl.u32 %v2539, 16
        %v2623 = vrot.slane %v2621, 4
        %v2624 = vor.u32 %v2623, %v2619
        %v2625 = vrot.slane %v2624, 4
        %v2627 = vshll.u32 %v2540, 16
        %v2629 = vrot.slane %v2627, 5
        %v2630 = vsel %vm914, %v2625, %v2629
        %v2632 = vshrl.u32 %v2541, 16
        %v2634 = vrot.slane %v2632, 4
        %v2635 = vshll.u32 %v2541, 16
        %v2637 = vrot.slane %v2635, 5
        %v2638 = vor.u32 %v2634, %v2637
        %v2639 = vrot.slane %v2638, 4
        %v2641 = vshll.u32 %v2542, 16
        %v2643 = vrot.slane %v2641, 5
        %v2644 = vsel %vm914, %v2639, %v2643
        %v2645 = vshrl.u32 %v2542, 16
        %v2647 = vrot.slane %v2645, 4
        %v2648 = vor.u32 %v2647, %v2643
        %v2649 = vrot.slane %v2648, 4
        %v2651 = vshll.u32 %v2543, 16
        %v2653 = vrot.slane %v2651, 5
        %v2654 = vsel %vm914, %v2649, %v2653
        %v2656 = vshrl.u32 %v2544, 16
        %v2658 = vrot.slane %v2656, 4
        %v2659 = vshll.u32 %v2544, 16
        %v2661 = vrot.slane %v2659, 5
        %v2662 = vor.u32 %v2658, %v2661
        %v2663 = vrot.slane %v2662, 4
        %v2665 = vshll.u32 %v2545, 16
        %v2667 = vrot.slane %v2665, 5
        %v2668 = vsel %vm914, %v2663, %v2667
        %v2669 = vshrl.u32 %v2545, 16
        %v2671 = vrot.slane %v2669, 4
        %v2672 = vor.u32 %v2671, %v2667
        %v2673 = vrot.slane %v2672, 4
        %v2675 = vshll.u32 %v2546, 16
        %v2677 = vrot.slane %v2675, 5
        %v2678 = vsel %vm914, %v2673, %v2677
        %v2680 = vshrl.u32 %v2547, 16
        %v2682 = vrot.slane %v2680, 4
        %v2683 = vshll.u32 %v2547, 16
        %v2685 = vrot.slane %v2683, 5
        %v2686 = vor.u32 %v2682, %v2685
        %v2687 = vrot.slane %v2686, 4
        %v2689 = vshll.u32 %v2548, 16
        %v2691 = vrot.slane %v2689, 5
        %v2692 = vsel %vm914, %v2687, %v2691
        %v2693 = vshrl.u32 %v2548, 16
        %v2695 = vrot.slane %v2693, 4
        %v2696 = vor.u32 %v2695, %v2691
        %v2697 = vrot.slane %v2696, 4
        %v2699 = vshll.u32 %v2549, 16
        %v2701 = vrot.slane %v2699, 5
        %v2702 = vsel %vm914, %v2697, %v2701
        %v2704 = vshrl.u32 %v2550, 16
        %v2706 = vrot.slane %v2704, 4
        %v2707 = vshll.u32 %v2550, 16
        %v2709 = vrot.slane %v2707, 5
        %v2710 = vor.u32 %v2706, %v2709
        %v2711 = vrot.slane %v2710, 4
        %v2713 = vshll.u32 %v2551, 16
        %v2715 = vrot.slane %v2713, 5
        %v2716 = vsel %vm914, %v2711, %v2715
        %v2717 = vshrl.u32 %v2551, 16
        %v2719 = vrot.slane %v2717, 4
        %v2720 = vor.u32 %v2719, %v2715
        %v2721 = vrot.slane %v2720, 4
        %v2723 = vshll.u32 %v2552, 16
        %v2725 = vrot.slane %v2723, 5
        %v2726 = vsel %vm914, %v2721, %v2725
        %v2728 = vshrl.u32 %v2553, 16
        %v2730 = vrot.slane %v2728, 4
        %v2731 = vshll.u32 %v2553, 16
        %v2733 = vrot.slane %v2731, 5
        %v2734 = vor.u32 %v2730, %v2733
        %v2735 = vrot.slane %v2734, 4
        %v2737 = vshll.u32 %v2554, 16
        %v2739 = vrot.slane %v2737, 5
        %v2740 = vsel %vm914, %v2735, %v2739
        %v2741 = vshrl.u32 %v2554, 16
        %v2743 = vrot.slane %v2741, 4
        %v2744 = vor.u32 %v2743, %v2739
        %v2745 = vrot.slane %v2744, 4
        %v2747 = vshll.u32 %v2555, 16
        %v2749 = vrot.slane %v2747, 5
        %v2750 = vsel %vm914, %v2745, %v2749
        %v2752 = vshrl.u32 %v2556, 16
        %v2754 = vrot.slane %v2752, 4
        %v2755 = vshll.u32 %v2556, 16
        %v2757 = vrot.slane %v2755, 5
        %v2758 = vor.u32 %v2754, %v2757
        %v2759 = vrot.slane %v2758, 4
        %v2761 = vshll.u32 %v2557, 16
        %v2763 = vrot.slane %v2761, 5
        %v2764 = vsel %vm914, %v2759, %v2763
        %v2765 = vshrl.u32 %v2557, 16
        %v2767 = vrot.slane %v2765, 4
        %v2768 = vor.u32 %v2767, %v2763
        %v2769 = vrot.slane %v2768, 4
        %v2771 = vshll.u32 %v2558, 16
        %v2773 = vrot.slane %v2771, 5
        %v2774 = vsel %vm914, %v2769, %v2773
        %v2776 = vshrl.u32 %v2559, 16
        %v2778 = vrot.slane %v2776, 4
        %v2779 = vshll.u32 %v2559, 16
        %v2781 = vrot.slane %v2779, 5
        %v2782 = vor.u32 %v2778, %v2781
        %v2783 = vrot.slane %v2782, 4
        %v2785 = vshll.u32 %v2560, 16
        %v2787 = vrot.slane %v2785, 5
        %v2788 = vsel %vm914, %v2783, %v2787
        %v2789 = vshrl.u32 %v2560, 16
        %v2791 = vrot.slane %v2789, 4
        %v2792 = vor.u32 %v2791, %v2787
        %v2793 = vrot.slane %v2792, 4
        %v2795 = vshll.u32 %v2561, 16
        %v2797 = vrot.slane %v2795, 5
        %v2798 = vsel %vm914, %v2793, %v2797
        %v2800 = vshrl.u32 %v2562, 16
        %v2802 = vrot.slane %v2800, 4
        %v2803 = vshll.u32 %v2562, 16
        %v2805 = vrot.slane %v2803, 5
        %v2806 = vor.u32 %v2802, %v2805
        %v2807 = vrot.slane %v2806, 4
        %v2809 = vshll.u32 %v2563, 16
        %v2811 = vrot.slane %v2809, 5
        %v2812 = vsel %vm914, %v2807, %v2811
        %v2813 = vshrl.u32 %v2563, 16
        %v2815 = vrot.slane %v2813, 4
        %v2816 = vor.u32 %v2815, %v2811
        %v2817 = vrot.slane %v2816, 4
        %v2819 = vshll.u32 %v2564, 16
        %v2821 = vrot.slane %v2819, 5
        %v2822 = vsel %vm914, %v2817, %v2821
        %v2824 = vshrl.u32 %v2565, 16
        %v2826 = vrot.slane %v2824, 4
        %v2827 = vshll.u32 %v2565, 16
        %v2829 = vrot.slane %v2827, 5
        %v2830 = vor.u32 %v2826, %v2829
        %v2831 = vrot.slane %v2830, 4
        %v2833 = vshll.u32 %v2566, 16
        %v2835 = vrot.slane %v2833, 5
        %v2836 = vsel %vm914, %v2831, %v2835
        %v2837 = vshrl.u32 %v2566, 16
        %v2839 = vrot.slane %v2837, 4
        %v2840 = vor.u32 %v2839, %v2835
        %v2841 = vrot.slane %v2840, 4
        %v2843 = vshll.u32 %v2567, 16
        %v2845 = vrot.slane %v2843, 5
        %v2846 = vsel %vm914, %v2841, %v2845
        %v2848 = vshrl.u32 %v2568, 16
        %v2850 = vrot.slane %v2848, 4
        %v2851 = vshll.u32 %v2568, 16
        %v2853 = vrot.slane %v2851, 5
        %v2854 = vor.u32 %v2850, %v2853
        %v2855 = vrot.slane %v2854, 4
        %v2857 = vshll.u32 %v2569, 16
        %v2859 = vrot.slane %v2857, 5
        %v2860 = vsel %vm914, %v2855, %v2859
        %v2861 = vshrl.u32 %v2569, 16
        %v2863 = vrot.slane %v2861, 4
        %v2864 = vor.u32 %v2863, %v2859
        %v2865 = vrot.slane %v2864, 4
        %v2867 = vshll.u32 %v2570, 16
        %v2869 = vrot.slane %v2867, 5
        %v2870 = vsel %vm914, %v2865, %v2869
        %v2872 = vshrl.u32 %v2571, 16
        %v2874 = vrot.slane %v2872, 4
        %v2875 = vshll.u32 %v2571, 16
        %v2877 = vrot.slane %v2875, 5
        %v2878 = vor.u32 %v2874, %v2877
        %v2879 = vrot.slane %v2878, 4
        %v2881 = vshll.u32 %v2572, 16
        %v2883 = vrot.slane %v2881, 5
        %v2884 = vsel %vm914, %v2879, %v2883
        %v2885 = vshrl.u32 %v2572, 16
        %v2887 = vrot.slane %v2885, 4
        %v2888 = vor.u32 %v2887, %v2883
        %v2889 = vrot.slane %v2888, 4
        %v2891 = vshll.u32 %v2573, 16
        %v2893 = vrot.slane %v2891, 5
        %v2894 = vsel %vm914, %v2889, %v2893
        %v2896 = vshrl.u32 %v2574, 16
        %v2898 = vrot.slane %v2896, 4
        %v2899 = vshll.u32 %v2574, 16
        %v2901 = vrot.slane %v2899, 5
        %v2902 = vor.u32 %v2898, %v2901
        %v2903 = vrot.slane %v2902, 4
        %v2905 = vshll.u32 %v2575, 16
        %v2907 = vrot.slane %v2905, 5
        %v2908 = vsel %vm914, %v2903, %v2907
        %v2909 = vshrl.u32 %v2575, 16
        %v2911 = vrot.slane %v2909, 4
        %v2912 = vor.u32 %v2911, %v2907
        %v2913 = vrot.slane %v2912, 4
        %v2915 = vshll.u32 %v2576, 16
        %v2917 = vrot.slane %v2915, 5
        %v2918 = vsel %vm914, %v2913, %v2917
        %v2920 = vshrl.u32 %v2577, 16
        %v2922 = vrot.slane %v2920, 4
        %v2923 = vshll.u32 %v2577, 16
        %v2925 = vrot.slane %v2923, 5
        %v2926 = vor.u32 %v2922, %v2925
        %v2927 = vrot.slane %v2926, 4
        %v2929 = vshll.u32 %v2578, 16
        %v2931 = vrot.slane %v2929, 5
        %v2932 = vsel %vm914, %v2927, %v2931
        %v2933 = vshrl.u32 %v2578, 16
        %v2935 = vrot.slane %v2933, 4
        %v2936 = vor.u32 %v2935, %v2931
        %v2937 = vrot.slane %v2936, 4
        %v2939 = vshll.u32 %v2579, 16
        %v2941 = vrot.slane %v2939, 5
        %v2942 = vsel %vm914, %v2937, %v2941
        %v2944 = vshrl.u32 %v2580, 16
        %v2946 = vrot.slane %v2944, 4
        %v2947 = vshll.u32 %v2580, 16
        %v2949 = vrot.slane %v2947, 5
        %v2950 = vor.u32 %v2946, %v2949
        %v2951 = vrot.slane %v2950, 4
        %v2953 = vshll.u32 %v2581, 16
        %v2955 = vrot.slane %v2953, 5
        %v2956 = vsel %vm914, %v2951, %v2955
        %v2957 = vshrl.u32 %v2581, 16
        %v2959 = vrot.slane %v2957, 4
        %v2960 = vor.u32 %v2959, %v2955
        %v2961 = vrot.slane %v2960, 4
        %v2963 = vshll.u32 %v2582, 16
        %v2965 = vrot.slane %v2963, 5
        %v2966 = vsel %vm914, %v2961, %v2965
        %2999 = vst [vmem:[#allocation3 + $0x1c] sm:$0xf] %v2596
        %3000 = vst [vmem:[#allocation3 + $0x40] sm:$0xf] %v2606
        %3001 = vst [vmem:[#allocation3 + $0x64] sm:$0xf] %v2620
        %3002 = vst [vmem:[#allocation3 + $0x88] sm:$0xf] %v2630
        %3003 = vst [vmem:[#allocation3 + $0xac] sm:$0xf] %v2644
        %3004 = vst [vmem:[#allocation3 + $0xd0] sm:$0xf] %v2654
        %3005 = vst [vmem:[#allocation3 + $0xf4] sm:$0xf] %v2668
        %3006 = vst [vmem:[#allocation3 + $0x118] sm:$0xf] %v2678
        %3007 = vst [vmem:[#allocation3 + $0x13c] sm:$0xf] %v2692
        %3008 = vst [vmem:[#allocation3 + $0x160] sm:$0xf] %v2702
        %3009 = vst [vmem:[#allocation3 + $0x184] sm:$0xf] %v2716
        %3010 = vst [vmem:[#allocation3 + $0x1a8] sm:$0xf] %v2726
        %3011 = vst [vmem:[#allocation3 + $0x1cc] sm:$0xf] %v2740
        %3012 = vst [vmem:[#allocation3 + $0x1f0] sm:$0xf] %v2750
        %3013 = vst [vmem:[#allocation3 + $0x214] sm:$0xf] %v2764
        %3014 = vst [vmem:[#allocation3 + $0x238] sm:$0xf] %v2774
        %3015 = vst [vmem:[#allocation3 + $0x25c] sm:$0xf] %v2788
        %3016 = vst [vmem:[#allocation3 + $0x280] sm:$0xf] %v2798
        %3017 = vst [vmem:[#allocation3 + $0x2a4] sm:$0xf] %v2812
        %3018 = vst [vmem:[#allocation3 + $0x2c8] sm:$0xf] %v2822
        %3019 = vst [vmem:[#allocation3 + $0x2ec] sm:$0xf] %v2836
        %3020 = vst [vmem:[#allocation3 + $0x310] sm:$0xf] %v2846
        %3021 = vst [vmem:[#allocation3 + $0x334] sm:$0xf] %v2860
        %3022 = vst [vmem:[#allocation3 + $0x358] sm:$0xf] %v2870
        %3023 = vst [vmem:[#allocation3 + $0x37c] sm:$0xf] %v2884
        %3024 = vst [vmem:[#allocation3 + $0x3a0] sm:$0xf] %v2894
        %3025 = vst [vmem:[#allocation3 + $0x3c4] sm:$0xf] %v2908
        %3026 = vst [vmem:[#allocation3 + $0x3e8] sm:$0xf] %v2918
        %3027 = vst [vmem:[#allocation3 + $0x40c] sm:$0xf] %v2932
        %3028 = vst [vmem:[#allocation3 + $0x430] sm:$0xf] %v2942
        %3029 = vst [vmem:[#allocation3 + $0x454] sm:$0xf] %v2956
        %3030 = vst [vmem:[#allocation3 + $0x478] sm:$0xf] %v2966
        %v3031 = vld [vmem:[%s2470] sm:$0xe]
        %v3032 = vld [vmem:[%s2470 + $0x4] sm:$0xf]
        %v3033 = vld [vmem:[%s2470 + $0x8] sm:$0x1]
        %v3034 = vld [vmem:[%s2470 + $0xc] sm:$0xe]
        %v3035 = vld [vmem:[%s2470 + $0x10] sm:$0xf]
        %v3036 = vld [vmem:[%s2470 + $0x14] sm:$0x1]
        %v3037 = vld [vmem:[%s2470 + $0x18] sm:$0xe]
        %v3038 = vld [vmem:[%s2470 + $0x1c] sm:$0xf]
        %v3039 = vld [vmem:[%s2470 + $0x20] sm:$0x1]
        %v3040 = vld [vmem:[%s2470 + $0x24] sm:$0xe]
        %v3041 = vld [vmem:[%s2470 + $0x28] sm:$0xf]
        %v3042 = vld [vmem:[%s2470 + $0x2c] sm:$0x1]
        %v3043 = vld [vmem:[%s2470 + $0x30] sm:$0xe]
        %v3044 = vld [vmem:[%s2470 + $0x34] sm:$0xf]
        %v3045 = vld [vmem:[%s2470 + $0x38] sm:$0x1]
        %v3046 = vld [vmem:[%s2470 + $0x3c] sm:$0xe]
        %v3047 = vld [vmem:[%s2470 + $0x40] sm:$0xf]
        %v3048 = vld [vmem:[%s2470 + $0x44] sm:$0x1]
        %v3049 = vld [vmem:[%s2470 + $0x48] sm:$0xe]
        %v3050 = vld [vmem:[%s2470 + $0x4c] sm:$0xf]
        %v3051 = vld [vmem:[%s2470 + $0x50] sm:$0x1]
        %v3052 = vld [vmem:[%s2470 + $0x54] sm:$0xe]
        %v3053 = vld [vmem:[%s2470 + $0x58] sm:$0xf]
        %v3054 = vld [vmem:[%s2470 + $0x5c] sm:$0x1]
        %v3055 = vld [vmem:[%s2470 + $0x60] sm:$0xe]
        %v3056 = vld [vmem:[%s2470 + $0x64] sm:$0xf]
        %v3057 = vld [vmem:[%s2470 + $0x68] sm:$0x1]
        %v3058 = vld [vmem:[%s2470 + $0x6c] sm:$0xe]
        %v3059 = vld [vmem:[%s2470 + $0x70] sm:$0xf]
        %v3060 = vld [vmem:[%s2470 + $0x74] sm:$0x1]
        %v3061 = vld [vmem:[%s2470 + $0x78] sm:$0xe]
        %v3062 = vld [vmem:[%s2470 + $0x7c] sm:$0xf]
        %v3063 = vld [vmem:[%s2470 + $0x80] sm:$0x1]
        %v3064 = vld [vmem:[%s2470 + $0x84] sm:$0xe]
        %v3065 = vld [vmem:[%s2470 + $0x88] sm:$0xf]
        %v3066 = vld [vmem:[%s2470 + $0x8c] sm:$0x1]
        %v3067 = vld [vmem:[%s2470 + $0x90] sm:$0xe]
        %v3068 = vld [vmem:[%s2470 + $0x94] sm:$0xf]
        %v3069 = vld [vmem:[%s2470 + $0x98] sm:$0x1]
        %v3070 = vld [vmem:[%s2470 + $0x9c] sm:$0xe]
        %v3071 = vld [vmem:[%s2470 + $0xa0] sm:$0xf]
        %v3072 = vld [vmem:[%s2470 + $0xa4] sm:$0x1]
        %v3073 = vld [vmem:[%s2470 + $0xa8] sm:$0xe]
        %v3074 = vld [vmem:[%s2470 + $0xac] sm:$0xf]
        %v3075 = vld [vmem:[%s2470 + $0xb0] sm:$0x1]
        %v3076 = vld [vmem:[%s2470 + $0xb4] sm:$0xe]
        %v3077 = vld [vmem:[%s2470 + $0xb8] sm:$0xf]
        %v3078 = vld [vmem:[%s2470 + $0xbc] sm:$0x1]
        %v3127 = vrot.slane %v3031, 5
        %v3128 = vrot.slane %v3127, 4
        %v3129 = vrot.slane %v3032, 5
        %v3130 = vsel %vm1461, %v3128, %v3129
        %v3131 = vrot.slane %v3129, 4
        %v3132 = vrot.slane %v3033, 5
        %v3133 = vsel %vm1461, %v3131, %v3132
        %v3134 = vrot.slane %v3034, 5
        %v3135 = vrot.slane %v3134, 4
        %v3136 = vrot.slane %v3035, 5
        %v3137 = vsel %vm1461, %v3135, %v3136
        %v3138 = vrot.slane %v3136, 4
        %v3139 = vrot.slane %v3036, 5
        %v3140 = vsel %vm1461, %v3138, %v3139
        %v3141 = vrot.slane %v3037, 5
        %v3142 = vrot.slane %v3141, 4
        %v3143 = vrot.slane %v3038, 5
        %v3144 = vsel %vm1461, %v3142, %v3143
        %v3145 = vrot.slane %v3143, 4
        %v3146 = vrot.slane %v3039, 5
        %v3147 = vsel %vm1461, %v3145, %v3146
        %v3148 = vrot.slane %v3040, 5
        %v3149 = vrot.slane %v3148, 4
        %v3150 = vrot.slane %v3041, 5
        %v3151 = vsel %vm1461, %v3149, %v3150
        %v3152 = vrot.slane %v3150, 4
        %v3153 = vrot.slane %v3042, 5
        %v3154 = vsel %vm1461, %v3152, %v3153
        %v3155 = vrot.slane %v3043, 5
        %v3156 = vrot.slane %v3155, 4
        %v3157 = vrot.slane %v3044, 5
        %v3158 = vsel %vm1461, %v3156, %v3157
        %v3159 = vrot.slane %v3157, 4
        %v3160 = vrot.slane %v3045, 5
        %v3161 = vsel %vm1461, %v3159, %v3160
        %v3162 = vrot.slane %v3046, 5
        %v3163 = vrot.slane %v3162, 4
        %v3164 = vrot.slane %v3047, 5
        %v3165 = vsel %vm1461, %v3163, %v3164
        %v3166 = vrot.slane %v3164, 4
        %v3167 = vrot.slane %v3048, 5
        %v3168 = vsel %vm1461, %v3166, %v3167
        %v3169 = vrot.slane %v3049, 5
        %v3170 = vrot.slane %v3169, 4
        %v3171 = vrot.slane %v3050, 5
        %v3172 = vsel %vm1461, %v3170, %v3171
        %v3173 = vrot.slane %v3171, 4
        %v3174 = vrot.slane %v3051, 5
        %v3175 = vsel %vm1461, %v3173, %v3174
        %v3176 = vrot.slane %v3052, 5
        %v3177 = vrot.slane %v3176, 4
        %v3178 = vrot.slane %v3053, 5
        %v3179 = vsel %vm1461, %v3177, %v3178
        %v3180 = vrot.slane %v3178, 4
        %v3181 = vrot.slane %v3054, 5
        %v3182 = vsel %vm1461, %v3180, %v3181
        %v3183 = vrot.slane %v3055, 5
        %v3184 = vrot.slane %v3183, 4
        %v3185 = vrot.slane %v3056, 5
        %v3186 = vsel %vm1461, %v3184, %v3185
        %v3187 = vrot.slane %v3185, 4
        %v3188 = vrot.slane %v3057, 5
        %v3189 = vsel %vm1461, %v3187, %v3188
        %v3190 = vrot.slane %v3058, 5
        %v3191 = vrot.slane %v3190, 4
        %v3192 = vrot.slane %v3059, 5
        %v3193 = vsel %vm1461, %v3191, %v3192
        %v3194 = vrot.slane %v3192, 4
        %v3195 = vrot.slane %v3060, 5
        %v3196 = vsel %vm1461, %v3194, %v3195
        %v3197 = vrot.slane %v3061, 5
        %v3198 = vrot.slane %v3197, 4
        %v3199 = vrot.slane %v3062, 5
        %v3200 = vsel %vm1461, %v3198, %v3199
        %v3201 = vrot.slane %v3199, 4
        %v3202 = vrot.slane %v3063, 5
        %v3203 = vsel %vm1461, %v3201, %v3202
        %v3204 = vrot.slane %v3064, 5
        %v3205 = vrot.slane %v3204, 4
        %v3206 = vrot.slane %v3065, 5
        %v3207 = vsel %vm1461, %v3205, %v3206
        %v3208 = vrot.slane %v3206, 4
        %v3209 = vrot.slane %v3066, 5
        %v3210 = vsel %vm1461, %v3208, %v3209
        %v3211 = vrot.slane %v3067, 5
        %v3212 = vrot.slane %v3211, 4
        %v3213 = vrot.slane %v3068, 5
        %v3214 = vsel %vm1461, %v3212, %v3213
        %v3215 = vrot.slane %v3213, 4
        %v3216 = vrot.slane %v3069, 5
        %v3217 = vsel %vm1461, %v3215, %v3216
        %v3218 = vrot.slane %v3070, 5
        %v3219 = vrot.slane %v3218, 4
        %v3220 = vrot.slane %v3071, 5
        %v3221 = vsel %vm1461, %v3219, %v3220
        %v3222 = vrot.slane %v3220, 4
        %v3223 = vrot.slane %v3072, 5
        %v3224 = vsel %vm1461, %v3222, %v3223
        %v3225 = vrot.slane %v3073, 5
        %v3226 = vrot.slane %v3225, 4
        %v3227 = vrot.slane %v3074, 5
        %v3228 = vsel %vm1461, %v3226, %v3227
        %v3229 = vrot.slane %v3227, 4
        %v3230 = vrot.slane %v3075, 5
        %v3231 = vsel %vm1461, %v3229, %v3230
        %v3232 = vrot.slane %v3076, 5
        %v3233 = vrot.slane %v3232, 4
        %v3234 = vrot.slane %v3077, 5
        %v3235 = vsel %vm1461, %v3233, %v3234
        %v3236 = vrot.slane %v3234, 4
        %v3237 = vrot.slane %v3078, 5
        %v3238 = vsel %vm1461, %v3236, %v3237
        %3271 = vst [vmem:[#allocation3 + $0x20] sm:$0xf] %v3130
        %3272 = vst [vmem:[#allocation3 + $0x44] sm:$0xf] %v3133
        %3273 = vst [vmem:[#allocation3 + $0x68] sm:$0xf] %v3137
        %3274 = vst [vmem:[#allocation3 + $0x8c] sm:$0xf] %v3140
        %3275 = vst [vmem:[#allocation3 + $0xb0] sm:$0xf] %v3144
        %3276 = vst [vmem:[#allocation3 + $0xd4] sm:$0xf] %v3147
        %3277 = vst [vmem:[#allocation3 + $0xf8] sm:$0xf] %v3151
        %3278 = vst [vmem:[#allocation3 + $0x11c] sm:$0xf] %v3154
        %3279 = vst [vmem:[#allocation3 + $0x140] sm:$0xf] %v3158
        %3280 = vst [vmem:[#allocation3 + $0x164] sm:$0xf] %v3161
        %3281 = vst [vmem:[#allocation3 + $0x188] sm:$0xf] %v3165
        %3282 = vst [vmem:[#allocation3 + $0x1ac] sm:$0xf] %v3168
        %3283 = vst [vmem:[#allocation3 + $0x1d0] sm:$0xf] %v3172
        %3284 = vst [vmem:[#allocation3 + $0x1f4] sm:$0xf] %v3175
        %3285 = vst [vmem:[#allocation3 + $0x218] sm:$0xf] %v3179
        %3286 = vst [vmem:[#allocation3 + $0x23c] sm:$0xf] %v3182
        %3287 = vst [vmem:[#allocation3 + $0x260] sm:$0xf] %v3186
        %3288 = vst [vmem:[#allocation3 + $0x284] sm:$0xf] %v3189
        %3289 = vst [vmem:[#allocation3 + $0x2a8] sm:$0xf] %v3193
        %3290 = vst [vmem:[#allocation3 + $0x2cc] sm:$0xf] %v3196
        %3291 = vst [vmem:[#allocation3 + $0x2f0] sm:$0xf] %v3200
        %3292 = vst [vmem:[#allocation3 + $0x314] sm:$0xf] %v3203
        %3293 = vst [vmem:[#allocation3 + $0x338] sm:$0xf] %v3207
        %3294 = vst [vmem:[#allocation3 + $0x35c] sm:$0xf] %v3210
        %3295 = vst [vmem:[#allocation3 + $0x380] sm:$0xf] %v3214
        %3296 = vst [vmem:[#allocation3 + $0x3a4] sm:$0xf] %v3217
        %3297 = vst [vmem:[#allocation3 + $0x3c8] sm:$0xf] %v3221
        %3298 = vst [vmem:[#allocation3 + $0x3ec] sm:$0xf] %v3224
        %3299 = vst [vmem:[#allocation3 + $0x410] sm:$0xf] %v3228
        %3300 = vst [vmem:[#allocation3 + $0x434] sm:$0xf] %v3231
        %3301 = vst [vmem:[#allocation3 + $0x458] sm:$0xf] %v3235
        %3302 = vst [vmem:[#allocation3 + $0x47c] sm:$0xf] %v3238
        %v3303 = vld [vmem:[#allocation3] sm:$0xff]
        %v3304 = vld [vmem:[#allocation3 + $0x8] sm:$0xff]
        %v3305 = vld [vmem:[#allocation3 + $0x10] sm:$0xff]
        %v3306 = vld [vmem:[#allocation3 + $0x18] sm:$0xff]
        %v3307 = vld [vmem:[#allocation3 + $0x20] sm:$0xf]
        %v3308 = vld [vmem:[#allocation3 + $0x24] sm:$0xff]
        %v3309 = vld [vmem:[#allocation3 + $0x2c] sm:$0xff]
        %v3310 = vld [vmem:[#allocation3 + $0x34] sm:$0xff]
        %v3311 = vld [vmem:[#allocation3 + $0x3c] sm:$0xff]
        %v3312 = vld [vmem:[#allocation3 + $0x44] sm:$0xf]
        %v3313 = vld [vmem:[#allocation3 + $0x48] sm:$0xff]
        %v3314 = vld [vmem:[#allocation3 + $0x50] sm:$0xff]
        %v3315 = vld [vmem:[#allocation3 + $0x58] sm:$0xff]
        %v3316 = vld [vmem:[#allocation3 + $0x60] sm:$0xff]
        %v3317 = vld [vmem:[#allocation3 + $0x68] sm:$0xf]
        %v3318 = vld [vmem:[#allocation3 + $0x6c] sm:$0xff]
        %v3319 = vld [vmem:[#allocation3 + $0x74] sm:$0xff]
        %v3320 = vld [vmem:[#allocation3 + $0x7c] sm:$0xff]
        %v3321 = vld [vmem:[#allocation3 + $0x84] sm:$0xff]
        %v3322 = vld [vmem:[#allocation3 + $0x8c] sm:$0xf]
        %v3323 = vld [vmem:[#allocation3 + $0x90] sm:$0xff]
        %v3324 = vld [vmem:[#allocation3 + $0x98] sm:$0xff]
        %v3325 = vld [vmem:[#allocation3 + $0xa0] sm:$0xff]
        %v3326 = vld [vmem:[#allocation3 + $0xa8] sm:$0xff]
        %v3327 = vld [vmem:[#allocation3 + $0xb0] sm:$0xf]
        %v3328 = vld [vmem:[#allocation3 + $0xb4] sm:$0xff]
        %v3329 = vld [vmem:[#allocation3 + $0xbc] sm:$0xff]
        %v3330 = vld [vmem:[#allocation3 + $0xc4] sm:$0xff]
        %v3331 = vld [vmem:[#allocation3 + $0xcc] sm:$0xff]
        %v3332 = vld [vmem:[#allocation3 + $0xd4] sm:$0xf]
        %v3333 = vld [vmem:[#allocation3 + $0xd8] sm:$0xff]
        %v3334 = vld [vmem:[#allocation3 + $0xe0] sm:$0xff]
        %v3335 = vld [vmem:[#allocation3 + $0xe8] sm:$0xff]
        %v3336 = vld [vmem:[#allocation3 + $0xf0] sm:$0xff]
        %v3337 = vld [vmem:[#allocation3 + $0xf8] sm:$0xf]
        %v3338 = vld [vmem:[#allocation3 + $0xfc] sm:$0xff]
        %v3339 = vld [vmem:[#allocation3 + $0x104] sm:$0xff]
        %v3340 = vld [vmem:[#allocation3 + $0x10c] sm:$0xff]
        %v3341 = vld [vmem:[#allocation3 + $0x114] sm:$0xff]
        %v3342 = vld [vmem:[#allocation3 + $0x11c] sm:$0xf]
        %v3343 = vld [vmem:[#allocation3 + $0x120] sm:$0xff]
        %v3344 = vld [vmem:[#allocation3 + $0x128] sm:$0xff]
        %v3345 = vld [vmem:[#allocation3 + $0x130] sm:$0xff]
        %v3346 = vld [vmem:[#allocation3 + $0x138] sm:$0xff]
        %v3347 = vld [vmem:[#allocation3 + $0x140] sm:$0xf]
        %v3348 = vld [vmem:[#allocation3 + $0x144] sm:$0xff]
        %v3349 = vld [vmem:[#allocation3 + $0x14c] sm:$0xff]
        %v3350 = vld [vmem:[#allocation3 + $0x154] sm:$0xff]
        %v3351 = vld [vmem:[#allocation3 + $0x15c] sm:$0xff]
        %v3352 = vld [vmem:[#allocation3 + $0x164] sm:$0xf]
        %v3353 = vld [vmem:[#allocation3 + $0x168] sm:$0xff]
        %v3354 = vld [vmem:[#allocation3 + $0x170] sm:$0xff]
        %v3355 = vld [vmem:[#allocation3 + $0x178] sm:$0xff]
        %v3356 = vld [vmem:[#allocation3 + $0x180] sm:$0xff]
        %v3357 = vld [vmem:[#allocation3 + $0x188] sm:$0xf]
        %v3358 = vld [vmem:[#allocation3 + $0x18c] sm:$0xff]
        %v3359 = vld [vmem:[#allocation3 + $0x194] sm:$0xff]
        %v3360 = vld [vmem:[#allocation3 + $0x19c] sm:$0xff]
        %v3361 = vld [vmem:[#allocation3 + $0x1a4] sm:$0xff]
        %v3362 = vld [vmem:[#allocation3 + $0x1ac] sm:$0xf]
        %v3363 = vld [vmem:[#allocation3 + $0x1b0] sm:$0xff]
        %v3364 = vld [vmem:[#allocation3 + $0x1b8] sm:$0xff]
        %v3365 = vld [vmem:[#allocation3 + $0x1c0] sm:$0xff]
        %v3366 = vld [vmem:[#allocation3 + $0x1c8] sm:$0xff]
        %v3367 = vld [vmem:[#allocation3 + $0x1d0] sm:$0xf]
        %v3368 = vld [vmem:[#allocation3 + $0x1d4] sm:$0xff]
        %v3369 = vld [vmem:[#allocation3 + $0x1dc] sm:$0xff]
        %v3370 = vld [vmem:[#allocation3 + $0x1e4] sm:$0xff]
        %v3371 = vld [vmem:[#allocation3 + $0x1ec] sm:$0xff]
        %v3372 = vld [vmem:[#allocation3 + $0x1f4] sm:$0xf]
        %v3373 = vld [vmem:[#allocation3 + $0x1f8] sm:$0xff]
        %v3374 = vld [vmem:[#allocation3 + $0x200] sm:$0xff]
        %v3375 = vld [vmem:[#allocation3 + $0x208] sm:$0xff]
        %v3376 = vld [vmem:[#allocation3 + $0x210] sm:$0xff]
        %v3377 = vld [vmem:[#allocation3 + $0x218] sm:$0xf]
        %v3378 = vld [vmem:[#allocation3 + $0x21c] sm:$0xff]
        %v3379 = vld [vmem:[#allocation3 + $0x224] sm:$0xff]
        %v3380 = vld [vmem:[#allocation3 + $0x22c] sm:$0xff]
        %v3381 = vld [vmem:[#allocation3 + $0x234] sm:$0xff]
        %v3382 = vld [vmem:[#allocation3 + $0x23c] sm:$0xf]
        %v3383 = vld [vmem:[#allocation3 + $0x240] sm:$0xff]
        %v3384 = vld [vmem:[#allocation3 + $0x248] sm:$0xff]
        %v3385 = vld [vmem:[#allocation3 + $0x250] sm:$0xff]
        %v3386 = vld [vmem:[#allocation3 + $0x258] sm:$0xff]
        %v3387 = vld [vmem:[#allocation3 + $0x260] sm:$0xf]
        %v3388 = vld [vmem:[#allocation3 + $0x264] sm:$0xff]
        %v3389 = vld [vmem:[#allocation3 + $0x26c] sm:$0xff]
        %v3390 = vld [vmem:[#allocation3 + $0x274] sm:$0xff]
        %v3391 = vld [vmem:[#allocation3 + $0x27c] sm:$0xff]
        %v3392 = vld [vmem:[#allocation3 + $0x284] sm:$0xf]
        %v3393 = vld [vmem:[#allocation3 + $0x288] sm:$0xff]
        %v3394 = vld [vmem:[#allocation3 + $0x290] sm:$0xff]
        %v3395 = vld [vmem:[#allocation3 + $0x298] sm:$0xff]
        %v3396 = vld [vmem:[#allocation3 + $0x2a0] sm:$0xff]
        %v3397 = vld [vmem:[#allocation3 + $0x2a8] sm:$0xf]
        %v3398 = vld [vmem:[#allocation3 + $0x2ac] sm:$0xff]
        %v3399 = vld [vmem:[#allocation3 + $0x2b4] sm:$0xff]
        %v3400 = vld [vmem:[#allocation3 + $0x2bc] sm:$0xff]
        %v3401 = vld [vmem:[#allocation3 + $0x2c4] sm:$0xff]
        %v3402 = vld [vmem:[#allocation3 + $0x2cc] sm:$0xf]
        %v3403 = vld [vmem:[#allocation3 + $0x2d0] sm:$0xff]
        %v3404 = vld [vmem:[#allocation3 + $0x2d8] sm:$0xff]
        %v3405 = vld [vmem:[#allocation3 + $0x2e0] sm:$0xff]
        %v3406 = vld [vmem:[#allocation3 + $0x2e8] sm:$0xff]
        %v3407 = vld [vmem:[#allocation3 + $0x2f0] sm:$0xf]
        %v3408 = vld [vmem:[#allocation3 + $0x2f4] sm:$0xff]
        %v3409 = vld [vmem:[#allocation3 + $0x2fc] sm:$0xff]
        %v3410 = vld [vmem:[#allocation3 + $0x304] sm:$0xff]
        %v3411 = vld [vmem:[#allocation3 + $0x30c] sm:$0xff]
        %v3412 = vld [vmem:[#allocation3 + $0x314] sm:$0xf]
        %v3413 = vld [vmem:[#allocation3 + $0x318] sm:$0xff]
        %v3414 = vld [vmem:[#allocation3 + $0x320] sm:$0xff]
        %v3415 = vld [vmem:[#allocation3 + $0x328] sm:$0xff]
        %v3416 = vld [vmem:[#allocation3 + $0x330] sm:$0xff]
        %v3417 = vld [vmem:[#allocation3 + $0x338] sm:$0xf]
        %v3418 = vld [vmem:[#allocation3 + $0x33c] sm:$0xff]
        %v3419 = vld [vmem:[#allocation3 + $0x344] sm:$0xff]
        %v3420 = vld [vmem:[#allocation3 + $0x34c] sm:$0xff]
        %v3421 = vld [vmem:[#allocation3 + $0x354] sm:$0xff]
        %v3422 = vld [vmem:[#allocation3 + $0x35c] sm:$0xf]
        %v3423 = vld [vmem:[#allocation3 + $0x360] sm:$0xff]
        %v3424 = vld [vmem:[#allocation3 + $0x368] sm:$0xff]
        %v3425 = vld [vmem:[#allocation3 + $0x370] sm:$0xff]
        %v3426 = vld [vmem:[#allocation3 + $0x378] sm:$0xff]
        %v3427 = vld [vmem:[#allocation3 + $0x380] sm:$0xf]
        %v3428 = vld [vmem:[#allocation3 + $0x384] sm:$0xff]
        %v3429 = vld [vmem:[#allocation3 + $0x38c] sm:$0xff]
        %v3430 = vld [vmem:[#allocation3 + $0x394] sm:$0xff]
        %v3431 = vld [vmem:[#allocation3 + $0x39c] sm:$0xff]
        %v3432 = vld [vmem:[#allocation3 + $0x3a4] sm:$0xf]
        %v3433 = vld [vmem:[#allocation3 + $0x3a8] sm:$0xff]
        %v3434 = vld [vmem:[#allocation3 + $0x3b0] sm:$0xff]
        %v3435 = vld [vmem:[#allocation3 + $0x3b8] sm:$0xff]
        %v3436 = vld [vmem:[#allocation3 + $0x3c0] sm:$0xff]
        %v3437 = vld [vmem:[#allocation3 + $0x3c8] sm:$0xf]
        %v3438 = vld [vmem:[#allocation3 + $0x3cc] sm:$0xff]
        %v3439 = vld [vmem:[#allocation3 + $0x3d4] sm:$0xff]
        %v3440 = vld [vmem:[#allocation3 + $0x3dc] sm:$0xff]
        %v3441 = vld [vmem:[#allocation3 + $0x3e4] sm:$0xff]
        %v3442 = vld [vmem:[#allocation3 + $0x3ec] sm:$0xf]
        %v3443 = vld [vmem:[#allocation3 + $0x3f0] sm:$0xff]
        %v3444 = vld [vmem:[#allocation3 + $0x3f8] sm:$0xff]
        %v3445 = vld [vmem:[#allocation3 + $0x400] sm:$0xff]
        %v3446 = vld [vmem:[#allocation3 + $0x408] sm:$0xff]
        %v3447 = vld [vmem:[#allocation3 + $0x410] sm:$0xf]
        %v3448 = vld [vmem:[#allocation3 + $0x414] sm:$0xff]
        %v3449 = vld [vmem:[#allocation3 + $0x41c] sm:$0xff]
        %v3450 = vld [vmem:[#allocation3 + $0x424] sm:$0xff]
        %v3451 = vld [vmem:[#allocation3 + $0x42c] sm:$0xff]
        %v3452 = vld [vmem:[#allocation3 + $0x434] sm:$0xf]
        %v3453 = vld [vmem:[#allocation3 + $0x438] sm:$0xff]
        %v3454 = vld [vmem:[#allocation3 + $0x440] sm:$0xff]
        %v3455 = vld [vmem:[#allocation3 + $0x448] sm:$0xff]
        %v3456 = vld [vmem:[#allocation3 + $0x450] sm:$0xff]
        %v3457 = vld [vmem:[#allocation3 + $0x458] sm:$0xf]
        %v3458 = vld [vmem:[#allocation3 + $0x45c] sm:$0xff]
        %v3459 = vld [vmem:[#allocation3 + $0x464] sm:$0xff]
        %v3460 = vld [vmem:[#allocation3 + $0x46c] sm:$0xff]
        %v3461 = vld [vmem:[#allocation3 + $0x474] sm:$0xff]
        %v3462 = vld [vmem:[#allocation3 + $0x47c] sm:$0xf]
        %v3463 = vld [vmem:[#allocation7] sm:$0xf]
        %v3464 = vld [vmem:[#allocation7 + $0x4] sm:$0xf]
        %v3465 = vld [vmem:[#allocation7 + $0x8] sm:$0xf]
        %v3466 = vld [vmem:[#allocation7 + $0xc] sm:$0xf]
        %v3467 = vld [vmem:[#allocation7 + $0x10] sm:$0xf]
        %v3468 = vld [vmem:[#allocation7 + $0x14] sm:$0xf]
        %v3469 = vld [vmem:[#allocation7 + $0x18] sm:$0xf]
        %v3470 = vld [vmem:[#allocation7 + $0x1c] sm:$0xf]
        %v3471 = vld [vmem:[#allocation7 + $0x20] sm:$0xf]
        %v3472 = vld [vmem:[#allocation7 + $0x24] sm:$0xf]
        %v3473 = vld [vmem:[#allocation7 + $0x28] sm:$0xf]
        %v3474 = vld [vmem:[#allocation7 + $0x2c] sm:$0xf]
        %v3475 = vld [vmem:[#allocation7 + $0x30] sm:$0xf]
        %v3476 = vld [vmem:[#allocation7 + $0x34] sm:$0xf]
        %v3477 = vld [vmem:[#allocation7 + $0x38] sm:$0xf]
        %v3478 = vld [vmem:[#allocation7 + $0x3c] sm:$0xf]
        %v3479 = vld [vmem:[#allocation7 + $0x40] sm:$0xf]
        %v3480 = vld [vmem:[#allocation7 + $0x44] sm:$0xf]
        %v3481 = vld [vmem:[#allocation7 + $0x48] sm:$0xf]
        %v3482 = vld [vmem:[#allocation7 + $0x4c] sm:$0xf]
        %v3483 = vld [vmem:[#allocation7 + $0x50] sm:$0xf]
        %v3484 = vld [vmem:[#allocation7 + $0x54] sm:$0xf]
        %v3485 = vld [vmem:[#allocation7 + $0x58] sm:$0xf]
        %v3486 = vld [vmem:[#allocation7 + $0x5c] sm:$0xf]
        %v3487 = vld [vmem:[#allocation7 + $0x60] sm:$0xf]
        %v3488 = vld [vmem:[#allocation7 + $0x64] sm:$0xf]
        %v3489 = vld [vmem:[#allocation7 + $0x68] sm:$0xf]
        %v3490 = vld [vmem:[#allocation7 + $0x6c] sm:$0xf]
        %v3491 = vld [vmem:[#allocation7 + $0x70] sm:$0xf]
        %v3492 = vld [vmem:[#allocation7 + $0x74] sm:$0xf]
        %v3493 = vld [vmem:[#allocation7 + $0x78] sm:$0xf]
        %v3494 = vld [vmem:[#allocation7 + $0x7c] sm:$0xf]
        %v3495 = vld [vmem:[#allocation7 + $0x80] sm:$0xf]
        %v3496 = vld [vmem:[#allocation7 + $0x84] sm:$0xf]
        %v3497 = vld [vmem:[#allocation7 + $0x88] sm:$0xf]
        %v3498 = vld [vmem:[#allocation7 + $0x8c] sm:$0xf]
        %v3499 = vld [vmem:[#allocation7 + $0x90] sm:$0xf]
        %v3500 = vld [vmem:[#allocation7 + $0x94] sm:$0xf]
        %v3501 = vld [vmem:[#allocation7 + $0x98] sm:$0xf]
        %v3502 = vld [vmem:[#allocation7 + $0x9c] sm:$0xf]
        %v3503 = vld [vmem:[#allocation7 + $0xa0] sm:$0xf]
        %v3504 = vld [vmem:[#allocation7 + $0xa4] sm:$0xf]
        %v3505 = vld [vmem:[#allocation7 + $0xa8] sm:$0xf]
        %v3506 = vld [vmem:[#allocation7 + $0xac] sm:$0xf]
        %v3507 = vld [vmem:[#allocation7 + $0xb0] sm:$0xf]
        %v3508 = vld [vmem:[#allocation7 + $0xb4] sm:$0xf]
        %v3509 = vld [vmem:[#allocation7 + $0xb8] sm:$0xf]
        %v3510 = vld [vmem:[#allocation7 + $0xbc] sm:$0xf]
        %v3511 = vld [vmem:[#allocation7 + $0xc0] sm:$0xf]
        %v3512 = vld [vmem:[#allocation7 + $0xc4] sm:$0xf]
        %v3513 = vld [vmem:[#allocation7 + $0xc8] sm:$0xf]
        %v3514 = vld [vmem:[#allocation7 + $0xcc] sm:$0xf]
        %v3515 = vld [vmem:[#allocation7 + $0xd0] sm:$0xf]
        %v3516 = vld [vmem:[#allocation7 + $0xd4] sm:$0xf]
        %v3517 = vld [vmem:[#allocation7 + $0xd8] sm:$0xf]
        %v3518 = vld [vmem:[#allocation7 + $0xdc] sm:$0xf]
        %v3519 = vld [vmem:[#allocation7 + $0xe0] sm:$0xf]
        %v3520 = vld [vmem:[#allocation7 + $0xe4] sm:$0xf]
        %v3521 = vld [vmem:[#allocation7 + $0xe8] sm:$0xf]
        %v3522 = vld [vmem:[#allocation7 + $0xec] sm:$0xf]
        %v3523 = vld [vmem:[#allocation7 + $0xf0] sm:$0xf]
        %v3524 = vld [vmem:[#allocation7 + $0xf4] sm:$0xf]
        %v3525 = vld [vmem:[#allocation7 + $0xf8] sm:$0xf]
        %v3526 = vld [vmem:[#allocation7 + $0xfc] sm:$0xf]
        %v3527 = vld [vmem:[#allocation7 + $0x100] sm:$0xf]
        %v3528 = vld [vmem:[#allocation7 + $0x104] sm:$0xf]
        %v3529 = vld [vmem:[#allocation7 + $0x108] sm:$0xf]
        %v3530 = vld [vmem:[#allocation7 + $0x10c] sm:$0xf]
        %v3531 = vld [vmem:[#allocation7 + $0x110] sm:$0xf]
        %v3532 = vld [vmem:[#allocation7 + $0x114] sm:$0xf]
        %v3533 = vld [vmem:[#allocation7 + $0x118] sm:$0xf]
        %v3534 = vld [vmem:[#allocation7 + $0x11c] sm:$0xf]
        %v3535 = vld [vmem:[#allocation7 + $0x120] sm:$0xf]
        %v3536 = vld [vmem:[#allocation7 + $0x124] sm:$0xf]
        %v3537 = vld [vmem:[#allocation7 + $0x128] sm:$0xf]
        %v3538 = vld [vmem:[#allocation7 + $0x12c] sm:$0xf]
        %v3539 = vld [vmem:[#allocation7 + $0x130] sm:$0xf]
        %v3540 = vld [vmem:[#allocation7 + $0x134] sm:$0xf]
        %v3541 = vld [vmem:[#allocation7 + $0x138] sm:$0xf]
        %v3542 = vld [vmem:[#allocation7 + $0x13c] sm:$0xf]
        %v3543 = vld [vmem:[#allocation7 + $0x140] sm:$0xf]
        %v3544 = vld [vmem:[#allocation7 + $0x144] sm:$0xf]
        %v3545 = vld [vmem:[#allocation7 + $0x148] sm:$0xf]
        %v3546 = vld [vmem:[#allocation7 + $0x14c] sm:$0xf]
        %v3547 = vld [vmem:[#allocation7 + $0x150] sm:$0xf]
        %v3548 = vld [vmem:[#allocation7 + $0x154] sm:$0xf]
        %v3549 = vld [vmem:[#allocation7 + $0x158] sm:$0xf]
        %v3550 = vld [vmem:[#allocation7 + $0x15c] sm:$0xf]
        %v3551 = vld [vmem:[#allocation7 + $0x160] sm:$0xf]
        %v3552 = vld [vmem:[#allocation7 + $0x164] sm:$0xf]
        %v3553 = vld [vmem:[#allocation7 + $0x168] sm:$0xf]
        %v3554 = vld [vmem:[#allocation7 + $0x16c] sm:$0xf]
        %v3555 = vld [vmem:[#allocation7 + $0x170] sm:$0xf]
        %v3556 = vld [vmem:[#allocation7 + $0x174] sm:$0xf]
        %v3557 = vld [vmem:[#allocation7 + $0x178] sm:$0xf]
        %v3558 = vld [vmem:[#allocation7 + $0x17c] sm:$0xf]
        %v3559 = vld [vmem:[#allocation7 + $0x180] sm:$0xf]
        %v3560 = vld [vmem:[#allocation7 + $0x184] sm:$0xf]
        %v3561 = vld [vmem:[#allocation7 + $0x188] sm:$0xf]
        %v3562 = vld [vmem:[#allocation7 + $0x18c] sm:$0xf]
        %v3563 = vld [vmem:[#allocation7 + $0x190] sm:$0xf]
        %v3564 = vld [vmem:[#allocation7 + $0x194] sm:$0xf]
        %v3565 = vld [vmem:[#allocation7 + $0x198] sm:$0xf]
        %v3566 = vld [vmem:[#allocation7 + $0x19c] sm:$0xf]
        %v3567 = vld [vmem:[#allocation7 + $0x1a0] sm:$0xf]
        %v3568 = vld [vmem:[#allocation7 + $0x1a4] sm:$0xf]
        %v3569 = vld [vmem:[#allocation7 + $0x1a8] sm:$0xf]
        %v3570 = vld [vmem:[#allocation7 + $0x1ac] sm:$0xf]
        %v3571 = vld [vmem:[#allocation7 + $0x1b0] sm:$0xf]
        %v3572 = vld [vmem:[#allocation7 + $0x1b4] sm:$0xf]
        %v3573 = vld [vmem:[#allocation7 + $0x1b8] sm:$0xf]
        %v3574 = vld [vmem:[#allocation7 + $0x1bc] sm:$0xf]
        %v3575 = vld [vmem:[#allocation7 + $0x1c0] sm:$0xf]
        %v3576 = vld [vmem:[#allocation7 + $0x1c4] sm:$0xf]
        %v3577 = vld [vmem:[#allocation7 + $0x1c8] sm:$0xf]
        %v3578 = vld [vmem:[#allocation7 + $0x1cc] sm:$0xf]
        %v3579 = vld [vmem:[#allocation7 + $0x1d0] sm:$0xf]
        %v3580 = vld [vmem:[#allocation7 + $0x1d4] sm:$0xf]
        %v3581 = vld [vmem:[#allocation7 + $0x1d8] sm:$0xf]
        %v3582 = vld [vmem:[#allocation7 + $0x1dc] sm:$0xf]
        %v3583 = vld [vmem:[#allocation7 + $0x1e0] sm:$0xf]
        %v3584 = vld [vmem:[#allocation7 + $0x1e4] sm:$0xf]
        %v3585 = vld [vmem:[#allocation7 + $0x1e8] sm:$0xf]
        %v3586 = vld [vmem:[#allocation7 + $0x1ec] sm:$0xf]
        %v3587 = vld [vmem:[#allocation7 + $0x1f0] sm:$0xf]
        %v3588 = vld [vmem:[#allocation7 + $0x1f4] sm:$0xf]
        %v3589 = vld [vmem:[#allocation7 + $0x1f8] sm:$0xf]
        %v3590 = vld [vmem:[#allocation7 + $0x1fc] sm:$0xf]
        %v3591 = vld [vmem:[#allocation7 + $0x200] sm:$0xf]
        %v3592 = vld [vmem:[#allocation7 + $0x204] sm:$0xf]
        %v3593 = vld [vmem:[#allocation7 + $0x208] sm:$0xf]
        %v3594 = vld [vmem:[#allocation7 + $0x20c] sm:$0xf]
        %v3595 = vld [vmem:[#allocation7 + $0x210] sm:$0xf]
        %v3596 = vld [vmem:[#allocation7 + $0x214] sm:$0xf]
        %v3597 = vld [vmem:[#allocation7 + $0x218] sm:$0xf]
        %v3598 = vld [vmem:[#allocation7 + $0x21c] sm:$0xf]
        %v3599 = vld [vmem:[#allocation7 + $0x220] sm:$0xf]
        %v3600 = vld [vmem:[#allocation7 + $0x224] sm:$0xf]
        %v3601 = vld [vmem:[#allocation7 + $0x228] sm:$0xf]
        %v3602 = vld [vmem:[#allocation7 + $0x22c] sm:$0xf]
        %v3603 = vld [vmem:[#allocation7 + $0x230] sm:$0xf]
        %v3604 = vld [vmem:[#allocation7 + $0x234] sm:$0xf]
        %v3605 = vld [vmem:[#allocation7 + $0x238] sm:$0xf]
        %v3606 = vld [vmem:[#allocation7 + $0x23c] sm:$0xf]
        %v3607 = vld [vmem:[%s2] sm:$0x1]
        %v3609 = vlaneseq
        %v3610 = vshrl.u32 %v3609, 7
        %v3611 = vsub.s32 0, %v3610
        %v3612 = vrot.slane %v3607, %v3611
        %v3774 = vunpack.c.l.b16 %v3303
        %v3775 = vunpack.c.h.b16 %v3303
        %v3776 = vunpack.c.l.b16 %v3304
        %v3777 = vunpack.c.h.b16 %v3304
        %v3778 = vunpack.c.l.b16 %v3305
        %v3779 = vunpack.c.h.b16 %v3305
        %v3780 = vunpack.c.l.b16 %v3306
        %v3781 = vunpack.c.h.b16 %v3306
        %v3782 = vunpack.c.l.b16 %v3307
        %v3783 = vunpack.c.l.b16 %v3308
        %v3784 = vunpack.c.h.b16 %v3308
        %v3785 = vunpack.c.l.b16 %v3309
        %v3786 = vunpack.c.h.b16 %v3309
        %v3787 = vunpack.c.l.b16 %v3310
        %v3788 = vunpack.c.h.b16 %v3310
        %v3789 = vunpack.c.l.b16 %v3311
        %v3790 = vunpack.c.h.b16 %v3311
        %v3791 = vunpack.c.l.b16 %v3312
        %v3792 = vunpack.c.l.b16 %v3313
        %v3793 = vunpack.c.h.b16 %v3313
        %v3794 = vunpack.c.l.b16 %v3314
        %v3795 = vunpack.c.h.b16 %v3314
        %v3796 = vunpack.c.l.b16 %v3315
        %v3797 = vunpack.c.h.b16 %v3315
        %v3798 = vunpack.c.l.b16 %v3316
        %v3799 = vunpack.c.h.b16 %v3316
        %v3800 = vunpack.c.l.b16 %v3317
        %v3801 = vunpack.c.l.b16 %v3318
        %v3802 = vunpack.c.h.b16 %v3318
        %v3803 = vunpack.c.l.b16 %v3319
        %v3804 = vunpack.c.h.b16 %v3319
        %v3805 = vunpack.c.l.b16 %v3320
        %v3806 = vunpack.c.h.b16 %v3320
        %v3807 = vunpack.c.l.b16 %v3321
        %v3808 = vunpack.c.h.b16 %v3321
        %v3809 = vunpack.c.l.b16 %v3322
        %v3810 = vunpack.c.l.b16 %v3323
        %v3811 = vunpack.c.h.b16 %v3323
        %v3812 = vunpack.c.l.b16 %v3324
        %v3813 = vunpack.c.h.b16 %v3324
        %v3814 = vunpack.c.l.b16 %v3325
        %v3815 = vunpack.c.h.b16 %v3325
        %v3816 = vunpack.c.l.b16 %v3326
        %v3817 = vunpack.c.h.b16 %v3326
        %v3818 = vunpack.c.l.b16 %v3327
        %v3819 = vunpack.c.l.b16 %v3328
        %v3820 = vunpack.c.h.b16 %v3328
        %v3821 = vunpack.c.l.b16 %v3329
        %v3822 = vunpack.c.h.b16 %v3329
        %v3823 = vunpack.c.l.b16 %v3330
        %v3824 = vunpack.c.h.b16 %v3330
        %v3825 = vunpack.c.l.b16 %v3331
        %v3826 = vunpack.c.h.b16 %v3331
        %v3827 = vunpack.c.l.b16 %v3332
        %v3828 = vunpack.c.l.b16 %v3333
        %v3829 = vunpack.c.h.b16 %v3333
        %v3830 = vunpack.c.l.b16 %v3334
        %v3831 = vunpack.c.h.b16 %v3334
        %v3832 = vunpack.c.l.b16 %v3335
        %v3833 = vunpack.c.h.b16 %v3335
        %v3834 = vunpack.c.l.b16 %v3336
        %v3835 = vunpack.c.h.b16 %v3336
        %v3836 = vunpack.c.l.b16 %v3337
        %v3837 = vunpack.c.l.b16 %v3338
        %v3838 = vunpack.c.h.b16 %v3338
        %v3839 = vunpack.c.l.b16 %v3339
        %v3840 = vunpack.c.h.b16 %v3339
        %v3841 = vunpack.c.l.b16 %v3340
        %v3842 = vunpack.c.h.b16 %v3340
        %v3843 = vunpack.c.l.b16 %v3341
        %v3844 = vunpack.c.h.b16 %v3341
        %v3845 = vunpack.c.l.b16 %v3342
        %v3846 = vunpack.c.l.b16 %v3343
        %v3847 = vunpack.c.h.b16 %v3343
        %v3848 = vunpack.c.l.b16 %v3344
        %v3849 = vunpack.c.h.b16 %v3344
        %v3850 = vunpack.c.l.b16 %v3345
        %v3851 = vunpack.c.h.b16 %v3345
        %v3852 = vunpack.c.l.b16 %v3346
        %v3853 = vunpack.c.h.b16 %v3346
        %v3854 = vunpack.c.l.b16 %v3347
        %v3855 = vunpack.c.l.b16 %v3348
        %v3856 = vunpack.c.h.b16 %v3348
        %v3857 = vunpack.c.l.b16 %v3349
        %v3858 = vunpack.c.h.b16 %v3349
        %v3859 = vunpack.c.l.b16 %v3350
        %v3860 = vunpack.c.h.b16 %v3350
        %v3861 = vunpack.c.l.b16 %v3351
        %v3862 = vunpack.c.h.b16 %v3351
        %v3863 = vunpack.c.l.b16 %v3352
        %v3864 = vunpack.c.l.b16 %v3353
        %v3865 = vunpack.c.h.b16 %v3353
        %v3866 = vunpack.c.l.b16 %v3354
        %v3867 = vunpack.c.h.b16 %v3354
        %v3868 = vunpack.c.l.b16 %v3355
        %v3869 = vunpack.c.h.b16 %v3355
        %v3870 = vunpack.c.l.b16 %v3356
        %v3871 = vunpack.c.h.b16 %v3356
        %v3872 = vunpack.c.l.b16 %v3357
        %v3873 = vunpack.c.l.b16 %v3358
        %v3874 = vunpack.c.h.b16 %v3358
        %v3875 = vunpack.c.l.b16 %v3359
        %v3876 = vunpack.c.h.b16 %v3359
        %v3877 = vunpack.c.l.b16 %v3360
        %v3878 = vunpack.c.h.b16 %v3360
        %v3879 = vunpack.c.l.b16 %v3361
        %v3880 = vunpack.c.h.b16 %v3361
        %v3881 = vunpack.c.l.b16 %v3362
        %v3882 = vunpack.c.l.b16 %v3363
        %v3883 = vunpack.c.h.b16 %v3363
        %v3884 = vunpack.c.l.b16 %v3364
        %v3885 = vunpack.c.h.b16 %v3364
        %v3886 = vunpack.c.l.b16 %v3365
        %v3887 = vunpack.c.h.b16 %v3365
        %v3888 = vunpack.c.l.b16 %v3366
        %v3889 = vunpack.c.h.b16 %v3366
        %v3890 = vunpack.c.l.b16 %v3367
        %v3891 = vunpack.c.l.b16 %v3368
        %v3892 = vunpack.c.h.b16 %v3368
        %v3893 = vunpack.c.l.b16 %v3369
        %v3894 = vunpack.c.h.b16 %v3369
        %v3895 = vunpack.c.l.b16 %v3370
        %v3896 = vunpack.c.h.b16 %v3370
        %v3897 = vunpack.c.l.b16 %v3371
        %v3898 = vunpack.c.h.b16 %v3371
        %v3899 = vunpack.c.l.b16 %v3372
        %v3900 = vunpack.c.l.b16 %v3373
        %v3901 = vunpack.c.h.b16 %v3373
        %v3902 = vunpack.c.l.b16 %v3374
        %v3903 = vunpack.c.h.b16 %v3374
        %v3904 = vunpack.c.l.b16 %v3375
        %v3905 = vunpack.c.h.b16 %v3375
        %v3906 = vunpack.c.l.b16 %v3376
        %v3907 = vunpack.c.h.b16 %v3376
        %v3908 = vunpack.c.l.b16 %v3377
        %v3909 = vunpack.c.l.b16 %v3378
        %v3910 = vunpack.c.h.b16 %v3378
        %v3911 = vunpack.c.l.b16 %v3379
        %v3912 = vunpack.c.h.b16 %v3379
        %v3913 = vunpack.c.l.b16 %v3380
        %v3914 = vunpack.c.h.b16 %v3380
        %v3915 = vunpack.c.l.b16 %v3381
        %v3916 = vunpack.c.h.b16 %v3381
        %v3917 = vunpack.c.l.b16 %v3382
        %v3918 = vunpack.c.l.b16 %v3383
        %v3919 = vunpack.c.h.b16 %v3383
        %v3920 = vunpack.c.l.b16 %v3384
        %v3921 = vunpack.c.h.b16 %v3384
        %v3922 = vunpack.c.l.b16 %v3385
        %v3923 = vunpack.c.h.b16 %v3385
        %v3924 = vunpack.c.l.b16 %v3386
        %v3925 = vunpack.c.h.b16 %v3386
        %v3926 = vunpack.c.l.b16 %v3387
        %v3927 = vunpack.c.l.b16 %v3388
        %v3928 = vunpack.c.h.b16 %v3388
        %v3929 = vunpack.c.l.b16 %v3389
        %v3930 = vunpack.c.h.b16 %v3389
        %v3931 = vunpack.c.l.b16 %v3390
        %v3932 = vunpack.c.h.b16 %v3390
        %v3933 = vunpack.c.l.b16 %v3391
        %v3934 = vunpack.c.h.b16 %v3391
        %v3935 = vunpack.c.l.b16 %v3392
        %v3936 = vunpack.c.l.b16 %v3393
        %v3937 = vunpack.c.h.b16 %v3393
        %v3938 = vunpack.c.l.b16 %v3394
        %v3939 = vunpack.c.h.b16 %v3394
        %v3940 = vunpack.c.l.b16 %v3395
        %v3941 = vunpack.c.h.b16 %v3395
        %v3942 = vunpack.c.l.b16 %v3396
        %v3943 = vunpack.c.h.b16 %v3396
        %v3944 = vunpack.c.l.b16 %v3397
        %v3945 = vunpack.c.l.b16 %v3398
        %v3946 = vunpack.c.h.b16 %v3398
        %v3947 = vunpack.c.l.b16 %v3399
        %v3948 = vunpack.c.h.b16 %v3399
        %v3949 = vunpack.c.l.b16 %v3400
        %v3950 = vunpack.c.h.b16 %v3400
        %v3951 = vunpack.c.l.b16 %v3401
        %v3952 = vunpack.c.h.b16 %v3401
        %v3953 = vunpack.c.l.b16 %v3402
        %v3954 = vunpack.c.l.b16 %v3403
        %v3955 = vunpack.c.h.b16 %v3403
        %v3956 = vunpack.c.l.b16 %v3404
        %v3957 = vunpack.c.h.b16 %v3404
        %v3958 = vunpack.c.l.b16 %v3405
        %v3959 = vunpack.c.h.b16 %v3405
        %v3960 = vunpack.c.l.b16 %v3406
        %v3961 = vunpack.c.h.b16 %v3406
        %v3962 = vunpack.c.l.b16 %v3407
        %v3963 = vunpack.c.l.b16 %v3408
        %v3964 = vunpack.c.h.b16 %v3408
        %v3965 = vunpack.c.l.b16 %v3409
        %v3966 = vunpack.c.h.b16 %v3409
        %v3967 = vunpack.c.l.b16 %v3410
        %v3968 = vunpack.c.h.b16 %v3410
        %v3969 = vunpack.c.l.b16 %v3411
        %v3970 = vunpack.c.h.b16 %v3411
        %v3971 = vunpack.c.l.b16 %v3412
        %v3972 = vunpack.c.l.b16 %v3413
        %v3973 = vunpack.c.h.b16 %v3413
        %v3974 = vunpack.c.l.b16 %v3414
        %v3975 = vunpack.c.h.b16 %v3414
        %v3976 = vunpack.c.l.b16 %v3415
        %v3977 = vunpack.c.h.b16 %v3415
        %v3978 = vunpack.c.l.b16 %v3416
        %v3979 = vunpack.c.h.b16 %v3416
        %v3980 = vunpack.c.l.b16 %v3417
        %v3981 = vunpack.c.l.b16 %v3418
        %v3982 = vunpack.c.h.b16 %v3418
        %v3983 = vunpack.c.l.b16 %v3419
        %v3984 = vunpack.c.h.b16 %v3419
        %v3985 = vunpack.c.l.b16 %v3420
        %v3986 = vunpack.c.h.b16 %v3420
        %v3987 = vunpack.c.l.b16 %v3421
        %v3988 = vunpack.c.h.b16 %v3421
        %v3989 = vunpack.c.l.b16 %v3422
        %v3990 = vunpack.c.l.b16 %v3423
        %v3991 = vunpack.c.h.b16 %v3423
        %v3992 = vunpack.c.l.b16 %v3424
        %v3993 = vunpack.c.h.b16 %v3424
        %v3994 = vunpack.c.l.b16 %v3425
        %v3995 = vunpack.c.h.b16 %v3425
        %v3996 = vunpack.c.l.b16 %v3426
        %v3997 = vunpack.c.h.b16 %v3426
        %v3998 = vunpack.c.l.b16 %v3427
        %v3999 = vunpack.c.l.b16 %v3428
        %v4000 = vunpack.c.h.b16 %v3428
        %v4001 = vunpack.c.l.b16 %v3429
        %v4002 = vunpack.c.h.b16 %v3429
        %v4003 = vunpack.c.l.b16 %v3430
        %v4004 = vunpack.c.h.b16 %v3430
        %v4005 = vunpack.c.l.b16 %v3431
        %v4006 = vunpack.c.h.b16 %v3431
        %v4007 = vunpack.c.l.b16 %v3432
        %v4008 = vunpack.c.l.b16 %v3433
        %v4009 = vunpack.c.h.b16 %v3433
        %v4010 = vunpack.c.l.b16 %v3434
        %v4011 = vunpack.c.h.b16 %v3434
        %v4012 = vunpack.c.l.b16 %v3435
        %v4013 = vunpack.c.h.b16 %v3435
        %v4014 = vunpack.c.l.b16 %v3436
        %v4015 = vunpack.c.h.b16 %v3436
        %v4016 = vunpack.c.l.b16 %v3437
        %v4017 = vunpack.c.l.b16 %v3438
        %v4018 = vunpack.c.h.b16 %v3438
        %v4019 = vunpack.c.l.b16 %v3439
        %v4020 = vunpack.c.h.b16 %v3439
        %v4021 = vunpack.c.l.b16 %v3440
        %v4022 = vunpack.c.h.b16 %v3440
        %v4023 = vunpack.c.l.b16 %v3441
        %v4024 = vunpack.c.h.b16 %v3441
        %v4025 = vunpack.c.l.b16 %v3442
        %v4026 = vunpack.c.l.b16 %v3443
        %v4027 = vunpack.c.h.b16 %v3443
        %v4028 = vunpack.c.l.b16 %v3444
        %v4029 = vunpack.c.h.b16 %v3444
        %v4030 = vunpack.c.l.b16 %v3445
        %v4031 = vunpack.c.h.b16 %v3445
        %v4032 = vunpack.c.l.b16 %v3446
        %v4033 = vunpack.c.h.b16 %v3446
        %v4034 = vunpack.c.l.b16 %v3447
        %v4035 = vunpack.c.l.b16 %v3448
        %v4036 = vunpack.c.h.b16 %v3448
        %v4037 = vunpack.c.l.b16 %v3449
        %v4038 = vunpack.c.h.b16 %v3449
        %v4039 = vunpack.c.l.b16 %v3450
        %v4040 = vunpack.c.h.b16 %v3450
        %v4041 = vunpack.c.l.b16 %v3451
        %v4042 = vunpack.c.h.b16 %v3451
        %v4043 = vunpack.c.l.b16 %v3452
        %v4044 = vunpack.c.l.b16 %v3453
        %v4045 = vunpack.c.h.b16 %v3453
        %v4046 = vunpack.c.l.b16 %v3454
        %v4047 = vunpack.c.h.b16 %v3454
        %v4048 = vunpack.c.l.b16 %v3455
        %v4049 = vunpack.c.h.b16 %v3455
        %v4050 = vunpack.c.l.b16 %v3456
        %v4051 = vunpack.c.h.b16 %v3456
        %v4052 = vunpack.c.l.b16 %v3457
        %v4053 = vunpack.c.l.b16 %v3458
        %v4054 = vunpack.c.h.b16 %v3458
        %v4055 = vunpack.c.l.b16 %v3459
        %v4056 = vunpack.c.h.b16 %v3459
        %v4057 = vunpack.c.l.b16 %v3460
        %v4058 = vunpack.c.h.b16 %v3460
        %v4059 = vunpack.c.l.b16 %v3461
        %v4060 = vunpack.c.h.b16 %v3461
        %v4061 = vunpack.c.l.b16 %v3462
        %v4062 = vpack.c.b16 %v3783, %v3774
        %v4063 = vpack.c.b16 %v3784, %v3775
        %v4064 = vpack.c.b16 %v3785, %v3776
        %v4065 = vpack.c.b16 %v3786, %v3777
        %v4066 = vpack.c.b16 %v3787, %v3778
        %v4067 = vpack.c.b16 %v3788, %v3779
        %v4068 = vpack.c.b16 %v3789, %v3780
        %v4069 = vpack.c.b16 %v3790, %v3781
        %v4070 = vpack.c.b16 %v3791, %v3782
        %v4071 = vpack.c.b16 %v3801, %v3792
        %v4072 = vpack.c.b16 %v3802, %v3793
        %v4073 = vpack.c.b16 %v3803, %v3794
        %v4074 = vpack.c.b16 %v3804, %v3795
        %v4075 = vpack.c.b16 %v3805, %v3796
        %v4076 = vpack.c.b16 %v3806, %v3797
        %v4077 = vpack.c.b16 %v3807, %v3798
        %v4078 = vpack.c.b16 %v3808, %v3799
        %v4079 = vpack.c.b16 %v3809, %v3800
        %v4080 = vpack.c.b16 %v3819, %v3810
        %v4081 = vpack.c.b16 %v3820, %v3811
        %v4082 = vpack.c.b16 %v3821, %v3812
        %v4083 = vpack.c.b16 %v3822, %v3813
        %v4084 = vpack.c.b16 %v3823, %v3814
        %v4085 = vpack.c.b16 %v3824, %v3815
        %v4086 = vpack.c.b16 %v3825, %v3816
        %v4087 = vpack.c.b16 %v3826, %v3817
        %v4088 = vpack.c.b16 %v3827, %v3818
        %v4089 = vpack.c.b16 %v3837, %v3828
        %v4090 = vpack.c.b16 %v3838, %v3829
        %v4091 = vpack.c.b16 %v3839, %v3830
        %v4092 = vpack.c.b16 %v3840, %v3831
        %v4093 = vpack.c.b16 %v3841, %v3832
        %v4094 = vpack.c.b16 %v3842, %v3833
        %v4095 = vpack.c.b16 %v3843, %v3834
        %v4096 = vpack.c.b16 %v3844, %v3835
        %v4097 = vpack.c.b16 %v3845, %v3836
        %v4098 = vpack.c.b16 %v3855, %v3846
        %v4099 = vpack.c.b16 %v3856, %v3847
        %v4100 = vpack.c.b16 %v3857, %v3848
        %v4101 = vpack.c.b16 %v3858, %v3849
        %v4102 = vpack.c.b16 %v3859, %v3850
        %v4103 = vpack.c.b16 %v3860, %v3851
        %v4104 = vpack.c.b16 %v3861, %v3852
        %v4105 = vpack.c.b16 %v3862, %v3853
        %v4106 = vpack.c.b16 %v3863, %v3854
        %v4107 = vpack.c.b16 %v3873, %v3864
        %v4108 = vpack.c.b16 %v3874, %v3865
        %v4109 = vpack.c.b16 %v3875, %v3866
        %v4110 = vpack.c.b16 %v3876, %v3867
        %v4111 = vpack.c.b16 %v3877, %v3868
        %v4112 = vpack.c.b16 %v3878, %v3869
        %v4113 = vpack.c.b16 %v3879, %v3870
        %v4114 = vpack.c.b16 %v3880, %v3871
        %v4115 = vpack.c.b16 %v3881, %v3872
        %v4116 = vpack.c.b16 %v3891, %v3882
        %v4117 = vpack.c.b16 %v3892, %v3883
        %v4118 = vpack.c.b16 %v3893, %v3884
        %v4119 = vpack.c.b16 %v3894, %v3885
        %v4120 = vpack.c.b16 %v3895, %v3886
        %v4121 = vpack.c.b16 %v3896, %v3887
        %v4122 = vpack.c.b16 %v3897, %v3888
        %v4123 = vpack.c.b16 %v3898, %v3889
        %v4124 = vpack.c.b16 %v3899, %v3890
        %v4125 = vpack.c.b16 %v3909, %v3900
        %v4126 = vpack.c.b16 %v3910, %v3901
        %v4127 = vpack.c.b16 %v3911, %v3902
        %v4128 = vpack.c.b16 %v3912, %v3903
        %v4129 = vpack.c.b16 %v3913, %v3904
        %v4130 = vpack.c.b16 %v3914, %v3905
        %v4131 = vpack.c.b16 %v3915, %v3906
        %v4132 = vpack.c.b16 %v3916, %v3907
        %v4133 = vpack.c.b16 %v3917, %v3908
        %v4134 = vpack.c.b16 %v3927, %v3918
        %v4135 = vpack.c.b16 %v3928, %v3919
        %v4136 = vpack.c.b16 %v3929, %v3920
        %v4137 = vpack.c.b16 %v3930, %v3921
        %v4138 = vpack.c.b16 %v3931, %v3922
        %v4139 = vpack.c.b16 %v3932, %v3923
        %v4140 = vpack.c.b16 %v3933, %v3924
        %v4141 = vpack.c.b16 %v3934, %v3925
        %v4142 = vpack.c.b16 %v3935, %v3926
        %v4143 = vpack.c.b16 %v3945, %v3936
        %v4144 = vpack.c.b16 %v3946, %v3937
        %v4145 = vpack.c.b16 %v3947, %v3938
        %v4146 = vpack.c.b16 %v3948, %v3939
        %v4147 = vpack.c.b16 %v3949, %v3940
        %v4148 = vpack.c.b16 %v3950, %v3941
        %v4149 = vpack.c.b16 %v3951, %v3942
        %v4150 = vpack.c.b16 %v3952, %v3943
        %v4151 = vpack.c.b16 %v3953, %v3944
        %v4152 = vpack.c.b16 %v3963, %v3954
        %v4153 = vpack.c.b16 %v3964, %v3955
        %v4154 = vpack.c.b16 %v3965, %v3956
        %v4155 = vpack.c.b16 %v3966, %v3957
        %v4156 = vpack.c.b16 %v3967, %v3958
        %v4157 = vpack.c.b16 %v3968, %v3959
        %v4158 = vpack.c.b16 %v3969, %v3960
        %v4159 = vpack.c.b16 %v3970, %v3961
        %v4160 = vpack.c.b16 %v3971, %v3962
        %v4161 = vpack.c.b16 %v3981, %v3972
        %v4162 = vpack.c.b16 %v3982, %v3973
        %v4163 = vpack.c.b16 %v3983, %v3974
        %v4164 = vpack.c.b16 %v3984, %v3975
        %v4165 = vpack.c.b16 %v3985, %v3976
        %v4166 = vpack.c.b16 %v3986, %v3977
        %v4167 = vpack.c.b16 %v3987, %v3978
        %v4168 = vpack.c.b16 %v3988, %v3979
        %v4169 = vpack.c.b16 %v3989, %v3980
        %v4170 = vpack.c.b16 %v3999, %v3990
        %v4171 = vpack.c.b16 %v4000, %v3991
        %v4172 = vpack.c.b16 %v4001, %v3992
        %v4173 = vpack.c.b16 %v4002, %v3993
        %v4174 = vpack.c.b16 %v4003, %v3994
        %v4175 = vpack.c.b16 %v4004, %v3995
        %v4176 = vpack.c.b16 %v4005, %v3996
        %v4177 = vpack.c.b16 %v4006, %v3997
        %v4178 = vpack.c.b16 %v4007, %v3998
        %v4179 = vpack.c.b16 %v4017, %v4008
        %v4180 = vpack.c.b16 %v4018, %v4009
        %v4181 = vpack.c.b16 %v4019, %v4010
        %v4182 = vpack.c.b16 %v4020, %v4011
        %v4183 = vpack.c.b16 %v4021, %v4012
        %v4184 = vpack.c.b16 %v4022, %v4013
        %v4185 = vpack.c.b16 %v4023, %v4014
        %v4186 = vpack.c.b16 %v4024, %v4015
        %v4187 = vpack.c.b16 %v4025, %v4016
        %v4188 = vpack.c.b16 %v4035, %v4026
        %v4189 = vpack.c.b16 %v4036, %v4027
        %v4190 = vpack.c.b16 %v4037, %v4028
        %v4191 = vpack.c.b16 %v4038, %v4029
        %v4192 = vpack.c.b16 %v4039, %v4030
        %v4193 = vpack.c.b16 %v4040, %v4031
        %v4194 = vpack.c.b16 %v4041, %v4032
        %v4195 = vpack.c.b16 %v4042, %v4033
        %v4196 = vpack.c.b16 %v4043, %v4034
        %v4197 = vpack.c.b16 %v4053, %v4044
        %v4198 = vpack.c.b16 %v4054, %v4045
        %v4199 = vpack.c.b16 %v4055, %v4046
        %v4200 = vpack.c.b16 %v4056, %v4047
        %v4201 = vpack.c.b16 %v4057, %v4048
        %v4202 = vpack.c.b16 %v4058, %v4049
        %v4203 = vpack.c.b16 %v4059, %v4050
        %v4204 = vpack.c.b16 %v4060, %v4051
        %v4205 = vpack.c.b16 %v4061, %v4052
        %v4494 = vunpack.c.l.b16 %v3463
        %v4495 = vunpack.c.l.b16 %v3464
        %v4496 = vunpack.c.l.b16 %v3465
        %v4497 = vunpack.c.l.b16 %v3466
        %v4498 = vunpack.c.l.b16 %v3467
        %v4499 = vunpack.c.l.b16 %v3468
        %v4500 = vunpack.c.l.b16 %v3469
        %v4501 = vunpack.c.l.b16 %v3470
        %v4502 = vunpack.c.l.b16 %v3471
        %v4503 = vunpack.c.l.b16 %v3472
        %v4504 = vunpack.c.l.b16 %v3473
        %v4505 = vunpack.c.l.b16 %v3474
        %v4506 = vunpack.c.l.b16 %v3475
        %v4507 = vunpack.c.l.b16 %v3476
        %v4508 = vunpack.c.l.b16 %v3477
        %v4509 = vunpack.c.l.b16 %v3478
        %v4510 = vunpack.c.l.b16 %v3479
        %v4511 = vunpack.c.l.b16 %v3480
        %v4512 = vunpack.c.l.b16 %v3481
        %v4513 = vunpack.c.l.b16 %v3482
        %v4514 = vunpack.c.l.b16 %v3483
        %v4515 = vunpack.c.l.b16 %v3484
        %v4516 = vunpack.c.l.b16 %v3485
        %v4517 = vunpack.c.l.b16 %v3486
        %v4518 = vunpack.c.l.b16 %v3487
        %v4519 = vunpack.c.l.b16 %v3488
        %v4520 = vunpack.c.l.b16 %v3489
        %v4521 = vunpack.c.l.b16 %v3490
        %v4522 = vunpack.c.l.b16 %v3491
        %v4523 = vunpack.c.l.b16 %v3492
        %v4524 = vunpack.c.l.b16 %v3493
        %v4525 = vunpack.c.l.b16 %v3494
        %v4526 = vunpack.c.l.b16 %v3495
        %v4527 = vunpack.c.l.b16 %v3496
        %v4528 = vunpack.c.l.b16 %v3497
        %v4529 = vunpack.c.l.b16 %v3498
        %v4530 = vunpack.c.l.b16 %v3499
        %v4531 = vunpack.c.l.b16 %v3500
        %v4532 = vunpack.c.l.b16 %v3501
        %v4533 = vunpack.c.l.b16 %v3502
        %v4534 = vunpack.c.l.b16 %v3503
        %v4535 = vunpack.c.l.b16 %v3504
        %v4536 = vunpack.c.l.b16 %v3505
        %v4537 = vunpack.c.l.b16 %v3506
        %v4538 = vunpack.c.l.b16 %v3507
        %v4539 = vunpack.c.l.b16 %v3508
        %v4540 = vunpack.c.l.b16 %v3509
        %v4541 = vunpack.c.l.b16 %v3510
        %v4542 = vunpack.c.l.b16 %v3511
        %v4543 = vunpack.c.l.b16 %v3512
        %v4544 = vunpack.c.l.b16 %v3513
        %v4545 = vunpack.c.l.b16 %v3514
        %v4546 = vunpack.c.l.b16 %v3515
        %v4547 = vunpack.c.l.b16 %v3516
        %v4548 = vunpack.c.l.b16 %v3517
        %v4549 = vunpack.c.l.b16 %v3518
        %v4550 = vunpack.c.l.b16 %v3519
        %v4551 = vunpack.c.l.b16 %v3520
        %v4552 = vunpack.c.l.b16 %v3521
        %v4553 = vunpack.c.l.b16 %v3522
        %v4554 = vunpack.c.l.b16 %v3523
        %v4555 = vunpack.c.l.b16 %v3524
        %v4556 = vunpack.c.l.b16 %v3525
        %v4557 = vunpack.c.l.b16 %v3526
        %v4558 = vunpack.c.l.b16 %v3527
        %v4559 = vunpack.c.l.b16 %v3528
        %v4560 = vunpack.c.l.b16 %v3529
        %v4561 = vunpack.c.l.b16 %v3530
        %v4562 = vunpack.c.l.b16 %v3531
        %v4563 = vunpack.c.l.b16 %v3532
        %v4564 = vunpack.c.l.b16 %v3533
        %v4565 = vunpack.c.l.b16 %v3534
        %v4566 = vunpack.c.l.b16 %v3535
        %v4567 = vunpack.c.l.b16 %v3536
        %v4568 = vunpack.c.l.b16 %v3537
        %v4569 = vunpack.c.l.b16 %v3538
        %v4570 = vunpack.c.l.b16 %v3539
        %v4571 = vunpack.c.l.b16 %v3540
        %v4572 = vunpack.c.l.b16 %v3541
        %v4573 = vunpack.c.l.b16 %v3542
        %v4574 = vunpack.c.l.b16 %v3543
        %v4575 = vunpack.c.l.b16 %v3544
        %v4576 = vunpack.c.l.b16 %v3545
        %v4577 = vunpack.c.l.b16 %v3546
        %v4578 = vunpack.c.l.b16 %v3547
        %v4579 = vunpack.c.l.b16 %v3548
        %v4580 = vunpack.c.l.b16 %v3549
        %v4581 = vunpack.c.l.b16 %v3550
        %v4582 = vunpack.c.l.b16 %v3551
        %v4583 = vunpack.c.l.b16 %v3552
        %v4584 = vunpack.c.l.b16 %v3553
        %v4585 = vunpack.c.l.b16 %v3554
        %v4586 = vunpack.c.l.b16 %v3555
        %v4587 = vunpack.c.l.b16 %v3556
        %v4588 = vunpack.c.l.b16 %v3557
        %v4589 = vunpack.c.l.b16 %v3558
        %v4590 = vunpack.c.l.b16 %v3559
        %v4591 = vunpack.c.l.b16 %v3560
        %v4592 = vunpack.c.l.b16 %v3561
        %v4593 = vunpack.c.l.b16 %v3562
        %v4594 = vunpack.c.l.b16 %v3563
        %v4595 = vunpack.c.l.b16 %v3564
        %v4596 = vunpack.c.l.b16 %v3565
        %v4597 = vunpack.c.l.b16 %v3566
        %v4598 = vunpack.c.l.b16 %v3567
        %v4599 = vunpack.c.l.b16 %v3568
        %v4600 = vunpack.c.l.b16 %v3569
        %v4601 = vunpack.c.l.b16 %v3570
        %v4602 = vunpack.c.l.b16 %v3571
        %v4603 = vunpack.c.l.b16 %v3572
        %v4604 = vunpack.c.l.b16 %v3573
        %v4605 = vunpack.c.l.b16 %v3574
        %v4606 = vunpack.c.l.b16 %v3575
        %v4607 = vunpack.c.l.b16 %v3576
        %v4608 = vunpack.c.l.b16 %v3577
        %v4609 = vunpack.c.l.b16 %v3578
        %v4610 = vunpack.c.l.b16 %v3579
        %v4611 = vunpack.c.l.b16 %v3580
        %v4612 = vunpack.c.l.b16 %v3581
        %v4613 = vunpack.c.l.b16 %v3582
        %v4614 = vunpack.c.l.b16 %v3583
        %v4615 = vunpack.c.l.b16 %v3584
        %v4616 = vunpack.c.l.b16 %v3585
        %v4617 = vunpack.c.l.b16 %v3586
        %v4618 = vunpack.c.l.b16 %v3587
        %v4619 = vunpack.c.l.b16 %v3588
        %v4620 = vunpack.c.l.b16 %v3589
        %v4621 = vunpack.c.l.b16 %v3590
        %v4622 = vunpack.c.l.b16 %v3591
        %v4623 = vunpack.c.l.b16 %v3592
        %v4624 = vunpack.c.l.b16 %v3593
        %v4625 = vunpack.c.l.b16 %v3594
        %v4626 = vunpack.c.l.b16 %v3595
        %v4627 = vunpack.c.l.b16 %v3596
        %v4628 = vunpack.c.l.b16 %v3597
        %v4629 = vunpack.c.l.b16 %v3598
        %v4630 = vunpack.c.l.b16 %v3599
        %v4631 = vunpack.c.l.b16 %v3600
        %v4632 = vunpack.c.l.b16 %v3601
        %v4633 = vunpack.c.l.b16 %v3602
        %v4634 = vunpack.c.l.b16 %v3603
        %v4635 = vunpack.c.l.b16 %v3604
        %v4636 = vunpack.c.l.b16 %v3605
        %v4637 = vunpack.c.l.b16 %v3606
        %v4638 = vpack.c.b16 %v4495, %v4494
        %v4639 = vpack.c.b16 %v4497, %v4496
        %v4640 = vpack.c.b16 %v4499, %v4498
        %v4641 = vpack.c.b16 %v4501, %v4500
        %v4642 = vpack.c.b16 %v4503, %v4502
        %v4643 = vpack.c.b16 %v4505, %v4504
        %v4644 = vpack.c.b16 %v4507, %v4506
        %v4645 = vpack.c.b16 %v4509, %v4508
        %v4646 = vpack.c.b16 %v4511, %v4510
        %v4647 = vpack.c.b16 %v4513, %v4512
        %v4648 = vpack.c.b16 %v4515, %v4514
        %v4649 = vpack.c.b16 %v4517, %v4516
        %v4650 = vpack.c.b16 %v4519, %v4518
        %v4651 = vpack.c.b16 %v4521, %v4520
        %v4652 = vpack.c.b16 %v4523, %v4522
        %v4653 = vpack.c.b16 %v4525, %v4524
        %v4654 = vpack.c.b16 %v4527, %v4526
        %v4655 = vpack.c.b16 %v4529, %v4528
        %v4656 = vpack.c.b16 %v4531, %v4530
        %v4657 = vpack.c.b16 %v4533, %v4532
        %v4658 = vpack.c.b16 %v4535, %v4534
        %v4659 = vpack.c.b16 %v4537, %v4536
        %v4660 = vpack.c.b16 %v4539, %v4538
        %v4661 = vpack.c.b16 %v4541, %v4540
        %v4662 = vpack.c.b16 %v4543, %v4542
        %v4663 = vpack.c.b16 %v4545, %v4544
        %v4664 = vpack.c.b16 %v4547, %v4546
        %v4665 = vpack.c.b16 %v4549, %v4548
        %v4666 = vpack.c.b16 %v4551, %v4550
        %v4667 = vpack.c.b16 %v4553, %v4552
        %v4668 = vpack.c.b16 %v4555, %v4554
        %v4669 = vpack.c.b16 %v4557, %v4556
        %v4670 = vpack.c.b16 %v4559, %v4558
        %v4671 = vpack.c.b16 %v4561, %v4560
        %v4672 = vpack.c.b16 %v4563, %v4562
        %v4673 = vpack.c.b16 %v4565, %v4564
        %v4674 = vpack.c.b16 %v4567, %v4566
        %v4675 = vpack.c.b16 %v4569, %v4568
        %v4676 = vpack.c.b16 %v4571, %v4570
        %v4677 = vpack.c.b16 %v4573, %v4572
        %v4678 = vpack.c.b16 %v4575, %v4574
        %v4679 = vpack.c.b16 %v4577, %v4576
        %v4680 = vpack.c.b16 %v4579, %v4578
        %v4681 = vpack.c.b16 %v4581, %v4580
        %v4682 = vpack.c.b16 %v4583, %v4582
        %v4683 = vpack.c.b16 %v4585, %v4584
        %v4684 = vpack.c.b16 %v4587, %v4586
        %v4685 = vpack.c.b16 %v4589, %v4588
        %v4686 = vpack.c.b16 %v4591, %v4590
        %v4687 = vpack.c.b16 %v4593, %v4592
        %v4688 = vpack.c.b16 %v4595, %v4594
        %v4689 = vpack.c.b16 %v4597, %v4596
        %v4690 = vpack.c.b16 %v4599, %v4598
        %v4691 = vpack.c.b16 %v4601, %v4600
        %v4692 = vpack.c.b16 %v4603, %v4602
        %v4693 = vpack.c.b16 %v4605, %v4604
        %v4694 = vpack.c.b16 %v4607, %v4606
        %v4695 = vpack.c.b16 %v4609, %v4608
        %v4696 = vpack.c.b16 %v4611, %v4610
        %v4697 = vpack.c.b16 %v4613, %v4612
        %v4698 = vpack.c.b16 %v4615, %v4614
        %v4699 = vpack.c.b16 %v4617, %v4616
        %v4700 = vpack.c.b16 %v4619, %v4618
        %v4701 = vpack.c.b16 %v4621, %v4620
        %v4702 = vpack.c.b16 %v4623, %v4622
        %v4703 = vpack.c.b16 %v4625, %v4624
        %v4704 = vpack.c.b16 %v4627, %v4626
        %v4705 = vpack.c.b16 %v4629, %v4628
        %v4706 = vpack.c.b16 %v4631, %v4630
        %v4707 = vpack.c.b16 %v4633, %v4632
        %v4708 = vpack.c.b16 %v4635, %v4634
        %v4709 = vpack.c.b16 %v4637, %v4636
        %4782 = vmatprep.subr.bf16.mxu0 0
        %4783 = vmatpush1.bf16.msra.mxu0 %v4645
        %4784 = vmatprep.subr.bf16.mxu0 0
        %4785 = vmatpush1.bf16.msra.mxu0 %v4644
        %4786 = vmatprep.subr.bf16.mxu0 0
        %4787 = vmatpush1.bf16.msra.mxu0 %v4643
        %4788 = vmatprep.subr.bf16.mxu0 0
        %4789 = vmatpush1.bf16.msra.mxu0 %v4642
        %4790 = vmatprep.subr.bf16.mxu0 0
        %4791 = vmatpush1.bf16.msra.mxu0 %v4641
        %4792 = vmatprep.subr.bf16.mxu0 0
        %4793 = vmatpush1.bf16.msra.mxu0 %v4640
        %4794 = vmatprep.subr.bf16.mxu0 0
        %4795 = vmatpush1.bf16.msra.mxu0 %v4639
        %4796 = vmatprep.subr.bf16.mxu0 0
        %4797 = vmatpush1.bf16.msra.mxu0 %v4638
        %4798 = vmatprep.subr.bf16.mxu0 0
        %4799 = vmatpush2.bf16.msra.mxu0 %v4653
        %4800 = vmatprep.subr.bf16.mxu0 0
        %4801 = vmatpush2.bf16.msra.mxu0 %v4652
        %4802 = vmatprep.subr.bf16.mxu0 0
        %4803 = vmatpush2.bf16.msra.mxu0 %v4651
        %4804 = vmatprep.subr.bf16.mxu0 0
        %4805 = vmatpush2.bf16.msra.mxu0 %v4650
        %4806 = vmatprep.subr.bf16.mxu0 0
        %4807 = vmatpush2.bf16.msra.mxu0 %v4649
        %4808 = vmatprep.subr.bf16.mxu0 0
        %4809 = vmatpush2.bf16.msra.mxu0 %v4648
        %4810 = vmatprep.subr.bf16.mxu0 0
        %4811 = vmatpush2.bf16.msra.mxu0 %v4647
        %4812 = vmatprep.subr.bf16.mxu0 0
        %4813 = vmatpush2.bf16.msra.mxu0 %v4646
        %4814 = vmatprep.mubr.bf16.mxu0 %v4063
        %4815 = vmatmul.mubr.bf16.gmra.mxu0 %v4062
        %v4816 = vpop.f32.mrf.mxu0
        %v4817 = vadd.f32 %v3612, %v4816
        %v4818 = vpop.f32.mrf.mxu0
        %v4819 = vpop.f32.mrf.mxu0
        %v4820 = vadd.f32 %v3612, %v4819
        %v4821 = vpop.f32.mrf.mxu0
        %4822 = vmatprep.mubr.bf16.mxu0 %v4072
        %4823 = vmatmul.mubr.bf16.gmra.mxu0 %v4071
        %v4824 = vpop.f32.mrf.mxu0
        %v4825 = vadd.f32 %v3612, %v4824
        %v4826 = vpop.f32.mrf.mxu0
        %v4827 = vpop.f32.mrf.mxu0
        %v4828 = vadd.f32 %v3612, %v4827
        %v4829 = vpop.f32.mrf.mxu0
        %4830 = vmatprep.mubr.bf16.mxu0 %v4081
        %4831 = vmatmul.mubr.bf16.gmra.mxu0 %v4080
        %v4832 = vpop.f32.mrf.mxu0
        %v4833 = vadd.f32 %v3612, %v4832
        %v4834 = vpop.f32.mrf.mxu0
        %v4835 = vpop.f32.mrf.mxu0
        %v4836 = vadd.f32 %v3612, %v4835
        %v4837 = vpop.f32.mrf.mxu0
        %4838 = vmatprep.mubr.bf16.mxu0 %v4090
        %4839 = vmatmul.mubr.bf16.gmra.mxu0 %v4089
        %v4840 = vpop.f32.mrf.mxu0
        %v4841 = vadd.f32 %v3612, %v4840
        %v4842 = vpop.f32.mrf.mxu0
        %v4843 = vpop.f32.mrf.mxu0
        %v4844 = vadd.f32 %v3612, %v4843
        %v4845 = vpop.f32.mrf.mxu0
        %4846 = vmatprep.mubr.bf16.mxu0 %v4099
        %4847 = vmatmul.mubr.bf16.gmra.mxu0 %v4098
        %v4848 = vpop.f32.mrf.mxu0
        %v4849 = vadd.f32 %v3612, %v4848
        %v4850 = vpop.f32.mrf.mxu0
        %v4851 = vpop.f32.mrf.mxu0
        %v4852 = vadd.f32 %v3612, %v4851
        %v4853 = vpop.f32.mrf.mxu0
        %4854 = vmatprep.mubr.bf16.mxu0 %v4108
        %4855 = vmatmul.mubr.bf16.gmra.mxu0 %v4107
        %v4856 = vpop.f32.mrf.mxu0
        %v4857 = vadd.f32 %v3612, %v4856
        %v4858 = vpop.f32.mrf.mxu0
        %v4859 = vpop.f32.mrf.mxu0
        %v4860 = vadd.f32 %v3612, %v4859
        %v4861 = vpop.f32.mrf.mxu0
        %4862 = vmatprep.mubr.bf16.mxu0 %v4117
        %4863 = vmatmul.mubr.bf16.gmra.mxu0 %v4116
        %v4864 = vpop.f32.mrf.mxu0
        %v4865 = vadd.f32 %v3612, %v4864
        %v4866 = vpop.f32.mrf.mxu0
        %v4867 = vpop.f32.mrf.mxu0
        %v4868 = vadd.f32 %v3612, %v4867
        %v4869 = vpop.f32.mrf.mxu0
        %4870 = vmatprep.mubr.bf16.mxu0 %v4126
        %4871 = vmatmul.mubr.bf16.gmra.mxu0 %v4125
        %v4872 = vpop.f32.mrf.mxu0
        %v4873 = vadd.f32 %v3612, %v4872
        %v4874 = vpop.f32.mrf.mxu0
        %v4875 = vpop.f32.mrf.mxu0
        %v4876 = vadd.f32 %v3612, %v4875
        %v4877 = vpop.f32.mrf.mxu0
        %4878 = vmatprep.mubr.bf16.mxu0 %v4135
        %4879 = vmatmul.mubr.bf16.gmra.mxu0 %v4134
        %v4880 = vpop.f32.mrf.mxu0
        %v4881 = vadd.f32 %v3612, %v4880
        %v4882 = vpop.f32.mrf.mxu0
        %v4883 = vpop.f32.mrf.mxu0
        %v4884 = vadd.f32 %v3612, %v4883
        %v4885 = vpop.f32.mrf.mxu0
        %4886 = vmatprep.mubr.bf16.mxu0 %v4144
        %4887 = vmatmul.mubr.bf16.gmra.mxu0 %v4143
        %v4888 = vpop.f32.mrf.mxu0
        %v4889 = vadd.f32 %v3612, %v4888
        %v4890 = vpop.f32.mrf.mxu0
        %v4891 = vpop.f32.mrf.mxu0
        %v4892 = vadd.f32 %v3612, %v4891
        %v4893 = vpop.f32.mrf.mxu0
        %4894 = vmatprep.mubr.bf16.mxu0 %v4153
        %4895 = vmatmul.mubr.bf16.gmra.mxu0 %v4152
        %v4896 = vpop.f32.mrf.mxu0
        %v4897 = vadd.f32 %v3612, %v4896
        %v4898 = vpop.f32.mrf.mxu0
        %v4899 = vpop.f32.mrf.mxu0
        %v4900 = vadd.f32 %v3612, %v4899
        %v4901 = vpop.f32.mrf.mxu0
        %4902 = vmatprep.mubr.bf16.mxu0 %v4162
        %4903 = vmatmul.mubr.bf16.gmra.mxu0 %v4161
        %v4904 = vpop.f32.mrf.mxu0
        %v4905 = vadd.f32 %v3612, %v4904
        %v4906 = vpop.f32.mrf.mxu0
        %v4907 = vpop.f32.mrf.mxu0
        %v4908 = vadd.f32 %v3612, %v4907
        %v4909 = vpop.f32.mrf.mxu0
        %4910 = vmatprep.mubr.bf16.mxu0 %v4171
        %4911 = vmatmul.mubr.bf16.gmra.mxu0 %v4170
        %v4912 = vpop.f32.mrf.mxu0
        %v4913 = vadd.f32 %v3612, %v4912
        %v4914 = vpop.f32.mrf.mxu0
        %v4915 = vpop.f32.mrf.mxu0
        %v4916 = vadd.f32 %v3612, %v4915
        %v4917 = vpop.f32.mrf.mxu0
        %4918 = vmatprep.mubr.bf16.mxu0 %v4180
        %4919 = vmatmul.mubr.bf16.gmra.mxu0 %v4179
        %v4920 = vpop.f32.mrf.mxu0
        %v4921 = vadd.f32 %v3612, %v4920
        %v4922 = vpop.f32.mrf.mxu0
        %v4923 = vpop.f32.mrf.mxu0
        %v4924 = vadd.f32 %v3612, %v4923
        %v4925 = vpop.f32.mrf.mxu0
        %4926 = vmatprep.mubr.bf16.mxu0 %v4189
        %4927 = vmatmul.mubr.bf16.gmra.mxu0 %v4188
        %v4928 = vpop.f32.mrf.mxu0
        %v4929 = vadd.f32 %v3612, %v4928
        %v4930 = vpop.f32.mrf.mxu0
        %v4931 = vpop.f32.mrf.mxu0
        %v4932 = vadd.f32 %v3612, %v4931
        %v4933 = vpop.f32.mrf.mxu0
        %4934 = vmatprep.mubr.bf16.mxu0 %v4198
        %4935 = vmatmul.mubr.bf16.gmra.mxu0 %v4197
        %v4936 = vpop.f32.mrf.mxu0
        %v4937 = vadd.f32 %v3612, %v4936
        %v4938 = vpop.f32.mrf.mxu0
        %v4939 = vpop.f32.mrf.mxu0
        %v4940 = vadd.f32 %v3612, %v4939
        %v4941 = vpop.f32.mrf.mxu0
        %4942 = vdwg.mxu0
        %4943 = vmatprep.subr.bf16.mxu0 0
        %4944 = vmatpush1.bf16.msra.mxu0 %v4661
        %4945 = vmatprep.subr.bf16.mxu0 0
        %4946 = vmatpush1.bf16.msra.mxu0 %v4660
        %4947 = vmatprep.subr.bf16.mxu0 0
        %4948 = vmatpush1.bf16.msra.mxu0 %v4659
        %4949 = vmatprep.subr.bf16.mxu0 0
        %4950 = vmatpush1.bf16.msra.mxu0 %v4658
        %4951 = vmatprep.subr.bf16.mxu0 0
        %4952 = vmatpush1.bf16.msra.mxu0 %v4657
        %4953 = vmatprep.subr.bf16.mxu0 0
        %4954 = vmatpush1.bf16.msra.mxu0 %v4656
        %4955 = vmatprep.subr.bf16.mxu0 0
        %4956 = vmatpush1.bf16.msra.mxu0 %v4655
        %4957 = vmatprep.subr.bf16.mxu0 0
        %4958 = vmatpush1.bf16.msra.mxu0 %v4654
        %4959 = vmatprep.subr.bf16.mxu0 0
        %4960 = vmatpush2.bf16.msra.mxu0 %v4669
        %4961 = vmatprep.subr.bf16.mxu0 0
        %4962 = vmatpush2.bf16.msra.mxu0 %v4668
        %4963 = vmatprep.subr.bf16.mxu0 0
        %4964 = vmatpush2.bf16.msra.mxu0 %v4667
        %4965 = vmatprep.subr.bf16.mxu0 0
        %4966 = vmatpush2.bf16.msra.mxu0 %v4666
        %4967 = vmatprep.subr.bf16.mxu0 0
        %4968 = vmatpush2.bf16.msra.mxu0 %v4665
        %4969 = vmatprep.subr.bf16.mxu0 0
        %4970 = vmatpush2.bf16.msra.mxu0 %v4664
        %4971 = vmatprep.subr.bf16.mxu0 0
        %4972 = vmatpush2.bf16.msra.mxu0 %v4663
        %4973 = vmatprep.subr.bf16.mxu0 0
        %4974 = vmatpush2.bf16.msra.mxu0 %v4662
        %4975 = vmatprep.mubr.bf16.mxu0 %v4065
        %4976 = vmatmul.mubr.bf16.gmra.mxu0 %v4064
        %v4977 = vpop.f32.mrf.mxu0
        %v4978 = vadd.f32 %v4817, %v4977
        %v4979 = vpop.f32.mrf.mxu0
        %v4980 = vpop.f32.mrf.mxu0
        %v4981 = vadd.f32 %v4820, %v4980
        %v4982 = vpop.f32.mrf.mxu0
        %4983 = vmatprep.mubr.bf16.mxu0 %v4074
        %4984 = vmatmul.mubr.bf16.gmra.mxu0 %v4073
        %v4985 = vpop.f32.mrf.mxu0
        %v4986 = vadd.f32 %v4825, %v4985
        %v4987 = vpop.f32.mrf.mxu0
        %v4988 = vpop.f32.mrf.mxu0
        %v4989 = vadd.f32 %v4828, %v4988
        %v4990 = vpop.f32.mrf.mxu0
        %4991 = vmatprep.mubr.bf16.mxu0 %v4083
        %4992 = vmatmul.mubr.bf16.gmra.mxu0 %v4082
        %v4993 = vpop.f32.mrf.mxu0
        %v4994 = vadd.f32 %v4833, %v4993
        %v4995 = vpop.f32.mrf.mxu0
        %v4996 = vpop.f32.mrf.mxu0
        %v4997 = vadd.f32 %v4836, %v4996
        %v4998 = vpop.f32.mrf.mxu0
        %4999 = vmatprep.mubr.bf16.mxu0 %v4092
        %5000 = vmatmul.mubr.bf16.gmra.mxu0 %v4091
        %v5001 = vpop.f32.mrf.mxu0
        %v5002 = vadd.f32 %v4841, %v5001
        %v5003 = vpop.f32.mrf.mxu0
        %v5004 = vpop.f32.mrf.mxu0
        %v5005 = vadd.f32 %v4844, %v5004
        %v5006 = vpop.f32.mrf.mxu0
        %5007 = vmatprep.mubr.bf16.mxu0 %v4101
        %5008 = vmatmul.mubr.bf16.gmra.mxu0 %v4100
        %v5009 = vpop.f32.mrf.mxu0
        %v5010 = vadd.f32 %v4849, %v5009
        %v5011 = vpop.f32.mrf.mxu0
        %v5012 = vpop.f32.mrf.mxu0
        %v5013 = vadd.f32 %v4852, %v5012
        %v5014 = vpop.f32.mrf.mxu0
        %5015 = vmatprep.mubr.bf16.mxu0 %v4110
        %5016 = vmatmul.mubr.bf16.gmra.mxu0 %v4109
        %v5017 = vpop.f32.mrf.mxu0
        %v5018 = vadd.f32 %v4857, %v5017
        %v5019 = vpop.f32.mrf.mxu0
        %v5020 = vpop.f32.mrf.mxu0
        %v5021 = vadd.f32 %v4860, %v5020
        %v5022 = vpop.f32.mrf.mxu0
        %5023 = vmatprep.mubr.bf16.mxu0 %v4119
        %5024 = vmatmul.mubr.bf16.gmra.mxu0 %v4118
        %v5025 = vpop.f32.mrf.mxu0
        %v5026 = vadd.f32 %v4865, %v5025
        %v5027 = vpop.f32.mrf.mxu0
        %v5028 = vpop.f32.mrf.mxu0
        %v5029 = vadd.f32 %v4868, %v5028
        %v5030 = vpop.f32.mrf.mxu0
        %5031 = vmatprep.mubr.bf16.mxu0 %v4128
        %5032 = vmatmul.mubr.bf16.gmra.mxu0 %v4127
        %v5033 = vpop.f32.mrf.mxu0
        %v5034 = vadd.f32 %v4873, %v5033
        %v5035 = vpop.f32.mrf.mxu0
        %v5036 = vpop.f32.mrf.mxu0
        %v5037 = vadd.f32 %v4876, %v5036
        %v5038 = vpop.f32.mrf.mxu0
        %5039 = vmatprep.mubr.bf16.mxu0 %v4137
        %5040 = vmatmul.mubr.bf16.gmra.mxu0 %v4136
        %v5041 = vpop.f32.mrf.mxu0
        %v5042 = vadd.f32 %v4881, %v5041
        %v5043 = vpop.f32.mrf.mxu0
        %v5044 = vpop.f32.mrf.mxu0
        %v5045 = vadd.f32 %v4884, %v5044
        %v5046 = vpop.f32.mrf.mxu0
        %5047 = vmatprep.mubr.bf16.mxu0 %v4146
        %5048 = vmatmul.mubr.bf16.gmra.mxu0 %v4145
        %v5049 = vpop.f32.mrf.mxu0
        %v5050 = vadd.f32 %v4889, %v5049
        %v5051 = vpop.f32.mrf.mxu0
        %v5052 = vpop.f32.mrf.mxu0
        %v5053 = vadd.f32 %v4892, %v5052
        %v5054 = vpop.f32.mrf.mxu0
        %5055 = vmatprep.mubr.bf16.mxu0 %v4155
        %5056 = vmatmul.mubr.bf16.gmra.mxu0 %v4154
        %v5057 = vpop.f32.mrf.mxu0
        %v5058 = vadd.f32 %v4897, %v5057
        %v5059 = vpop.f32.mrf.mxu0
        %v5060 = vpop.f32.mrf.mxu0
        %v5061 = vadd.f32 %v4900, %v5060
        %v5062 = vpop.f32.mrf.mxu0
        %5063 = vmatprep.mubr.bf16.mxu0 %v4164
        %5064 = vmatmul.mubr.bf16.gmra.mxu0 %v4163
        %v5065 = vpop.f32.mrf.mxu0
        %v5066 = vadd.f32 %v4905, %v5065
        %v5067 = vpop.f32.mrf.mxu0
        %v5068 = vpop.f32.mrf.mxu0
        %v5069 = vadd.f32 %v4908, %v5068
        %v5070 = vpop.f32.mrf.mxu0
        %5071 = vmatprep.mubr.bf16.mxu0 %v4173
        %5072 = vmatmul.mubr.bf16.gmra.mxu0 %v4172
        %v5073 = vpop.f32.mrf.mxu0
        %v5074 = vadd.f32 %v4913, %v5073
        %v5075 = vpop.f32.mrf.mxu0
        %v5076 = vpop.f32.mrf.mxu0
        %v5077 = vadd.f32 %v4916, %v5076
        %v5078 = vpop.f32.mrf.mxu0
        %5079 = vmatprep.mubr.bf16.mxu0 %v4182
        %5080 = vmatmul.mubr.bf16.gmra.mxu0 %v4181
        %v5081 = vpop.f32.mrf.mxu0
        %v5082 = vadd.f32 %v4921, %v5081
        %v5083 = vpop.f32.mrf.mxu0
        %v5084 = vpop.f32.mrf.mxu0
        %v5085 = vadd.f32 %v4924, %v5084
        %v5086 = vpop.f32.mrf.mxu0
        %5087 = vmatprep.mubr.bf16.mxu0 %v4191
        %5088 = vmatmul.mubr.bf16.gmra.mxu0 %v4190
        %v5089 = vpop.f32.mrf.mxu0
        %v5090 = vadd.f32 %v4929, %v5089
        %v5091 = vpop.f32.mrf.mxu0
        %v5092 = vpop.f32.mrf.mxu0
        %v5093 = vadd.f32 %v4932, %v5092
        %v5094 = vpop.f32.mrf.mxu0
        %5095 = vmatprep.mubr.bf16.mxu0 %v4200
        %5096 = vmatmul.mubr.bf16.gmra.mxu0 %v4199
        %v5097 = vpop.f32.mrf.mxu0
        %v5098 = vadd.f32 %v4937, %v5097
        %v5099 = vpop.f32.mrf.mxu0
        %v5100 = vpop.f32.mrf.mxu0
        %v5101 = vadd.f32 %v4940, %v5100
        %v5102 = vpop.f32.mrf.mxu0
        %5103 = vdwg.mxu0
        %5104 = vmatprep.subr.bf16.mxu0 0
        %5105 = vmatpush1.bf16.msra.mxu0 %v4677
        %5106 = vmatprep.subr.bf16.mxu0 0
        %5107 = vmatpush1.bf16.msra.mxu0 %v4676
        %5108 = vmatprep.subr.bf16.mxu0 0
        %5109 = vmatpush1.bf16.msra.mxu0 %v4675
        %5110 = vmatprep.subr.bf16.mxu0 0
        %5111 = vmatpush1.bf16.msra.mxu0 %v4674
        %5112 = vmatprep.subr.bf16.mxu0 0
        %5113 = vmatpush1.bf16.msra.mxu0 %v4673
        %5114 = vmatprep.subr.bf16.mxu0 0
        %5115 = vmatpush1.bf16.msra.mxu0 %v4672
        %5116 = vmatprep.subr.bf16.mxu0 0
        %5117 = vmatpush1.bf16.msra.mxu0 %v4671
        %5118 = vmatprep.subr.bf16.mxu0 0
        %5119 = vmatpush1.bf16.msra.mxu0 %v4670
        %5120 = vmatprep.subr.bf16.mxu0 0
        %5121 = vmatpush2.bf16.msra.mxu0 %v4685
        %5122 = vmatprep.subr.bf16.mxu0 0
        %5123 = vmatpush2.bf16.msra.mxu0 %v4684
        %5124 = vmatprep.subr.bf16.mxu0 0
        %5125 = vmatpush2.bf16.msra.mxu0 %v4683
        %5126 = vmatprep.subr.bf16.mxu0 0
        %5127 = vmatpush2.bf16.msra.mxu0 %v4682
        %5128 = vmatprep.subr.bf16.mxu0 0
        %5129 = vmatpush2.bf16.msra.mxu0 %v4681
        %5130 = vmatprep.subr.bf16.mxu0 0
        %5131 = vmatpush2.bf16.msra.mxu0 %v4680
        %5132 = vmatprep.subr.bf16.mxu0 0
        %5133 = vmatpush2.bf16.msra.mxu0 %v4679
        %5134 = vmatprep.subr.bf16.mxu0 0
        %5135 = vmatpush2.bf16.msra.mxu0 %v4678
        %5136 = vmatprep.mubr.bf16.mxu0 %v4067
        %5137 = vmatmul.mubr.bf16.gmra.mxu0 %v4066
        %v5138 = vpop.f32.mrf.mxu0
        %v5139 = vadd.f32 %v4978, %v5138
        %v5140 = vpop.f32.mrf.mxu0
        %v5141 = vpop.f32.mrf.mxu0
        %v5142 = vadd.f32 %v4981, %v5141
        %v5143 = vpop.f32.mrf.mxu0
        %5144 = vmatprep.mubr.bf16.mxu0 %v4076
        %5145 = vmatmul.mubr.bf16.gmra.mxu0 %v4075
        %v5146 = vpop.f32.mrf.mxu0
        %v5147 = vadd.f32 %v4986, %v5146
        %v5148 = vpop.f32.mrf.mxu0
        %v5149 = vpop.f32.mrf.mxu0
        %v5150 = vadd.f32 %v4989, %v5149
        %v5151 = vpop.f32.mrf.mxu0
        %5152 = vmatprep.mubr.bf16.mxu0 %v4085
        %5153 = vmatmul.mubr.bf16.gmra.mxu0 %v4084
        %v5154 = vpop.f32.mrf.mxu0
        %v5155 = vadd.f32 %v4994, %v5154
        %v5156 = vpop.f32.mrf.mxu0
        %v5157 = vpop.f32.mrf.mxu0
        %v5158 = vadd.f32 %v4997, %v5157
        %v5159 = vpop.f32.mrf.mxu0
        %5160 = vmatprep.mubr.bf16.mxu0 %v4094
        %5161 = vmatmul.mubr.bf16.gmra.mxu0 %v4093
        %v5162 = vpop.f32.mrf.mxu0
        %v5163 = vadd.f32 %v5002, %v5162
        %v5164 = vpop.f32.mrf.mxu0
        %v5165 = vpop.f32.mrf.mxu0
        %v5166 = vadd.f32 %v5005, %v5165
        %v5167 = vpop.f32.mrf.mxu0
        %5168 = vmatprep.mubr.bf16.mxu0 %v4103
        %5169 = vmatmul.mubr.bf16.gmra.mxu0 %v4102
        %v5170 = vpop.f32.mrf.mxu0
        %v5171 = vadd.f32 %v5010, %v5170
        %v5172 = vpop.f32.mrf.mxu0
        %v5173 = vpop.f32.mrf.mxu0
        %v5174 = vadd.f32 %v5013, %v5173
        %v5175 = vpop.f32.mrf.mxu0
        %5176 = vmatprep.mubr.bf16.mxu0 %v4112
        %5177 = vmatmul.mubr.bf16.gmra.mxu0 %v4111
        %v5178 = vpop.f32.mrf.mxu0
        %v5179 = vadd.f32 %v5018, %v5178
        %v5180 = vpop.f32.mrf.mxu0
        %v5181 = vpop.f32.mrf.mxu0
        %v5182 = vadd.f32 %v5021, %v5181
        %v5183 = vpop.f32.mrf.mxu0
        %5184 = vmatprep.mubr.bf16.mxu0 %v4121
        %5185 = vmatmul.mubr.bf16.gmra.mxu0 %v4120
        %v5186 = vpop.f32.mrf.mxu0
        %v5187 = vadd.f32 %v5026, %v5186
        %v5188 = vpop.f32.mrf.mxu0
        %v5189 = vpop.f32.mrf.mxu0
        %v5190 = vadd.f32 %v5029, %v5189
        %v5191 = vpop.f32.mrf.mxu0
        %5192 = vmatprep.mubr.bf16.mxu0 %v4130
        %5193 = vmatmul.mubr.bf16.gmra.mxu0 %v4129
        %v5194 = vpop.f32.mrf.mxu0
        %v5195 = vadd.f32 %v5034, %v5194
        %v5196 = vpop.f32.mrf.mxu0
        %v5197 = vpop.f32.mrf.mxu0
        %v5198 = vadd.f32 %v5037, %v5197
        %v5199 = vpop.f32.mrf.mxu0
        %5200 = vmatprep.mubr.bf16.mxu0 %v4139
        %5201 = vmatmul.mubr.bf16.gmra.mxu0 %v4138
        %v5202 = vpop.f32.mrf.mxu0
        %v5203 = vadd.f32 %v5042, %v5202
        %v5204 = vpop.f32.mrf.mxu0
        %v5205 = vpop.f32.mrf.mxu0
        %v5206 = vadd.f32 %v5045, %v5205
        %v5207 = vpop.f32.mrf.mxu0
        %5208 = vmatprep.mubr.bf16.mxu0 %v4148
        %5209 = vmatmul.mubr.bf16.gmra.mxu0 %v4147
        %v5210 = vpop.f32.mrf.mxu0
        %v5211 = vadd.f32 %v5050, %v5210
        %v5212 = vpop.f32.mrf.mxu0
        %v5213 = vpop.f32.mrf.mxu0
        %v5214 = vadd.f32 %v5053, %v5213
        %v5215 = vpop.f32.mrf.mxu0
        %5216 = vmatprep.mubr.bf16.mxu0 %v4157
        %5217 = vmatmul.mubr.bf16.gmra.mxu0 %v4156
        %v5218 = vpop.f32.mrf.mxu0
        %v5219 = vadd.f32 %v5058, %v5218
        %v5220 = vpop.f32.mrf.mxu0
        %v5221 = vpop.f32.mrf.mxu0
        %v5222 = vadd.f32 %v5061, %v5221
        %v5223 = vpop.f32.mrf.mxu0
        %5224 = vmatprep.mubr.bf16.mxu0 %v4166
        %5225 = vmatmul.mubr.bf16.gmra.mxu0 %v4165
        %v5226 = vpop.f32.mrf.mxu0
        %v5227 = vadd.f32 %v5066, %v5226
        %v5228 = vpop.f32.mrf.mxu0
        %v5229 = vpop.f32.mrf.mxu0
        %v5230 = vadd.f32 %v5069, %v5229
        %v5231 = vpop.f32.mrf.mxu0
        %5232 = vmatprep.mubr.bf16.mxu0 %v4175
        %5233 = vmatmul.mubr.bf16.gmra.mxu0 %v4174
        %v5234 = vpop.f32.mrf.mxu0
        %v5235 = vadd.f32 %v5074, %v5234
        %v5236 = vpop.f32.mrf.mxu0
        %v5237 = vpop.f32.mrf.mxu0
        %v5238 = vadd.f32 %v5077, %v5237
        %v5239 = vpop.f32.mrf.mxu0
        %5240 = vmatprep.mubr.bf16.mxu0 %v4184
        %5241 = vmatmul.mubr.bf16.gmra.mxu0 %v4183
        %v5242 = vpop.f32.mrf.mxu0
        %v5243 = vadd.f32 %v5082, %v5242
        %v5244 = vpop.f32.mrf.mxu0
        %v5245 = vpop.f32.mrf.mxu0
        %v5246 = vadd.f32 %v5085, %v5245
        %v5247 = vpop.f32.mrf.mxu0
        %5248 = vmatprep.mubr.bf16.mxu0 %v4193
        %5249 = vmatmul.mubr.bf16.gmra.mxu0 %v4192
        %v5250 = vpop.f32.mrf.mxu0
        %v5251 = vadd.f32 %v5090, %v5250
        %v5252 = vpop.f32.mrf.mxu0
        %v5253 = vpop.f32.mrf.mxu0
        %v5254 = vadd.f32 %v5093, %v5253
        %v5255 = vpop.f32.mrf.mxu0
        %5256 = vmatprep.mubr.bf16.mxu0 %v4202
        %5257 = vmatmul.mubr.bf16.gmra.mxu0 %v4201
        %v5258 = vpop.f32.mrf.mxu0
        %v5259 = vadd.f32 %v5098, %v5258
        %v5260 = vpop.f32.mrf.mxu0
        %v5261 = vpop.f32.mrf.mxu0
        %v5262 = vadd.f32 %v5101, %v5261
        %v5263 = vpop.f32.mrf.mxu0
        %5264 = vdwg.mxu0
        %5265 = vmatprep.subr.bf16.mxu0 0
        %5266 = vmatpush1.bf16.msra.mxu0 %v4693
        %5267 = vmatprep.subr.bf16.mxu0 0
        %5268 = vmatpush1.bf16.msra.mxu0 %v4692
        %5269 = vmatprep.subr.bf16.mxu0 0
        %5270 = vmatpush1.bf16.msra.mxu0 %v4691
        %5271 = vmatprep.subr.bf16.mxu0 0
        %5272 = vmatpush1.bf16.msra.mxu0 %v4690
        %5273 = vmatprep.subr.bf16.mxu0 0
        %5274 = vmatpush1.bf16.msra.mxu0 %v4689
        %5275 = vmatprep.subr.bf16.mxu0 0
        %5276 = vmatpush1.bf16.msra.mxu0 %v4688
        %5277 = vmatprep.subr.bf16.mxu0 0
        %5278 = vmatpush1.bf16.msra.mxu0 %v4687
        %5279 = vmatprep.subr.bf16.mxu0 0
        %5280 = vmatpush1.bf16.msra.mxu0 %v4686
        %5281 = vmatprep.subr.bf16.mxu0 0
        %5282 = vmatpush2.bf16.msra.mxu0 %v4701
        %5283 = vmatprep.subr.bf16.mxu0 0
        %5284 = vmatpush2.bf16.msra.mxu0 %v4700
        %5285 = vmatprep.subr.bf16.mxu0 0
        %5286 = vmatpush2.bf16.msra.mxu0 %v4699
        %5287 = vmatprep.subr.bf16.mxu0 0
        %5288 = vmatpush2.bf16.msra.mxu0 %v4698
        %5289 = vmatprep.subr.bf16.mxu0 0
        %5290 = vmatpush2.bf16.msra.mxu0 %v4697
        %5291 = vmatprep.subr.bf16.mxu0 0
        %5292 = vmatpush2.bf16.msra.mxu0 %v4696
        %5293 = vmatprep.subr.bf16.mxu0 0
        %5294 = vmatpush2.bf16.msra.mxu0 %v4695
        %5295 = vmatprep.subr.bf16.mxu0 0
        %5296 = vmatpush2.bf16.msra.mxu0 %v4694
        %5297 = vmatprep.mubr.bf16.mxu0 %v4069
        %5298 = vmatmul.mubr.bf16.gmra.mxu0 %v4068
        %v5299 = vpop.f32.mrf.mxu0
        %v5300 = vadd.f32 %v5139, %v5299
        %v5301 = vpop.f32.mrf.mxu0
        %v5302 = vpop.f32.mrf.mxu0
        %v5303 = vadd.f32 %v5142, %v5302
        %v5304 = vpop.f32.mrf.mxu0
        %5305 = vmatprep.mubr.bf16.mxu0 %v4078
        %5306 = vmatmul.mubr.bf16.gmra.mxu0 %v4077
        %v5307 = vpop.f32.mrf.mxu0
        %v5308 = vadd.f32 %v5147, %v5307
        %v5309 = vpop.f32.mrf.mxu0
        %v5310 = vpop.f32.mrf.mxu0
        %v5311 = vadd.f32 %v5150, %v5310
        %v5312 = vpop.f32.mrf.mxu0
        %5313 = vmatprep.mubr.bf16.mxu0 %v4087
        %5314 = vmatmul.mubr.bf16.gmra.mxu0 %v4086
        %v5315 = vpop.f32.mrf.mxu0
        %v5316 = vadd.f32 %v5155, %v5315
        %v5317 = vpop.f32.mrf.mxu0
        %v5318 = vpop.f32.mrf.mxu0
        %v5319 = vadd.f32 %v5158, %v5318
        %v5320 = vpop.f32.mrf.mxu0
        %5321 = vmatprep.mubr.bf16.mxu0 %v4096
        %5322 = vmatmul.mubr.bf16.gmra.mxu0 %v4095
        %v5323 = vpop.f32.mrf.mxu0
        %v5324 = vadd.f32 %v5163, %v5323
        %v5325 = vpop.f32.mrf.mxu0
        %v5326 = vpop.f32.mrf.mxu0
        %v5327 = vadd.f32 %v5166, %v5326
        %v5328 = vpop.f32.mrf.mxu0
        %5329 = vmatprep.mubr.bf16.mxu0 %v4105
        %5330 = vmatmul.mubr.bf16.gmra.mxu0 %v4104
        %v5331 = vpop.f32.mrf.mxu0
        %v5332 = vadd.f32 %v5171, %v5331
        %v5333 = vpop.f32.mrf.mxu0
        %v5334 = vpop.f32.mrf.mxu0
        %v5335 = vadd.f32 %v5174, %v5334
        %v5336 = vpop.f32.mrf.mxu0
        %5337 = vmatprep.mubr.bf16.mxu0 %v4114
        %5338 = vmatmul.mubr.bf16.gmra.mxu0 %v4113
        %v5339 = vpop.f32.mrf.mxu0
        %v5340 = vadd.f32 %v5179, %v5339
        %v5341 = vpop.f32.mrf.mxu0
        %v5342 = vpop.f32.mrf.mxu0
        %v5343 = vadd.f32 %v5182, %v5342
        %v5344 = vpop.f32.mrf.mxu0
        %5345 = vmatprep.mubr.bf16.mxu0 %v4123
        %5346 = vmatmul.mubr.bf16.gmra.mxu0 %v4122
        %v5347 = vpop.f32.mrf.mxu0
        %v5348 = vadd.f32 %v5187, %v5347
        %v5349 = vpop.f32.mrf.mxu0
        %v5350 = vpop.f32.mrf.mxu0
        %v5351 = vadd.f32 %v5190, %v5350
        %v5352 = vpop.f32.mrf.mxu0
        %5353 = vmatprep.mubr.bf16.mxu0 %v4132
        %5354 = vmatmul.mubr.bf16.gmra.mxu0 %v4131
        %v5355 = vpop.f32.mrf.mxu0
        %v5356 = vadd.f32 %v5195, %v5355
        %v5357 = vpop.f32.mrf.mxu0
        %v5358 = vpop.f32.mrf.mxu0
        %v5359 = vadd.f32 %v5198, %v5358
        %v5360 = vpop.f32.mrf.mxu0
        %5361 = vmatprep.mubr.bf16.mxu0 %v4141
        %5362 = vmatmul.mubr.bf16.gmra.mxu0 %v4140
        %v5363 = vpop.f32.mrf.mxu0
        %v5364 = vadd.f32 %v5203, %v5363
        %v5365 = vpop.f32.mrf.mxu0
        %v5366 = vpop.f32.mrf.mxu0
        %v5367 = vadd.f32 %v5206, %v5366
        %v5368 = vpop.f32.mrf.mxu0
        %5369 = vmatprep.mubr.bf16.mxu0 %v4150
        %5370 = vmatmul.mubr.bf16.gmra.mxu0 %v4149
        %v5371 = vpop.f32.mrf.mxu0
        %v5372 = vadd.f32 %v5211, %v5371
        %v5373 = vpop.f32.mrf.mxu0
        %v5374 = vpop.f32.mrf.mxu0
        %v5375 = vadd.f32 %v5214, %v5374
        %v5376 = vpop.f32.mrf.mxu0
        %5377 = vmatprep.mubr.bf16.mxu0 %v4159
        %5378 = vmatmul.mubr.bf16.gmra.mxu0 %v4158
        %v5379 = vpop.f32.mrf.mxu0
        %v5380 = vadd.f32 %v5219, %v5379
        %v5381 = vpop.f32.mrf.mxu0
        %v5382 = vpop.f32.mrf.mxu0
        %v5383 = vadd.f32 %v5222, %v5382
        %v5384 = vpop.f32.mrf.mxu0
        %5385 = vmatprep.mubr.bf16.mxu0 %v4168
        %5386 = vmatmul.mubr.bf16.gmra.mxu0 %v4167
        %v5387 = vpop.f32.mrf.mxu0
        %v5388 = vadd.f32 %v5227, %v5387
        %v5389 = vpop.f32.mrf.mxu0
        %v5390 = vpop.f32.mrf.mxu0
        %v5391 = vadd.f32 %v5230, %v5390
        %v5392 = vpop.f32.mrf.mxu0
        %5393 = vmatprep.mubr.bf16.mxu0 %v4177
        %5394 = vmatmul.mubr.bf16.gmra.mxu0 %v4176
        %v5395 = vpop.f32.mrf.mxu0
        %v5396 = vadd.f32 %v5235, %v5395
        %v5397 = vpop.f32.mrf.mxu0
        %v5398 = vpop.f32.mrf.mxu0
        %v5399 = vadd.f32 %v5238, %v5398
        %v5400 = vpop.f32.mrf.mxu0
        %5401 = vmatprep.mubr.bf16.mxu0 %v4186
        %5402 = vmatmul.mubr.bf16.gmra.mxu0 %v4185
        %v5403 = vpop.f32.mrf.mxu0
        %v5404 = vadd.f32 %v5243, %v5403
        %v5405 = vpop.f32.mrf.mxu0
        %v5406 = vpop.f32.mrf.mxu0
        %v5407 = vadd.f32 %v5246, %v5406
        %v5408 = vpop.f32.mrf.mxu0
        %5409 = vmatprep.mubr.bf16.mxu0 %v4195
        %5410 = vmatmul.mubr.bf16.gmra.mxu0 %v4194
        %v5411 = vpop.f32.mrf.mxu0
        %v5412 = vadd.f32 %v5251, %v5411
        %v5413 = vpop.f32.mrf.mxu0
        %v5414 = vpop.f32.mrf.mxu0
        %v5415 = vadd.f32 %v5254, %v5414
        %v5416 = vpop.f32.mrf.mxu0
        %5417 = vmatprep.mubr.bf16.mxu0 %v4204
        %5418 = vmatmul.mubr.bf16.gmra.mxu0 %v4203
        %v5419 = vpop.f32.mrf.mxu0
        %v5420 = vadd.f32 %v5259, %v5419
        %v5421 = vpop.f32.mrf.mxu0
        %v5422 = vpop.f32.mrf.mxu0
        %v5423 = vadd.f32 %v5262, %v5422
        %v5424 = vpop.f32.mrf.mxu0
        %5425 = vdwg.mxu0
        %5426 = vmatprep.subr.bf16.mxu0 0
        %5427 = vmatpush1.bf16.msra.mxu0 %v4709
        %5428 = vmatprep.subr.bf16.mxu0 0
        %5429 = vmatpush1.bf16.msra.mxu0 %v4708
        %5430 = vmatprep.subr.bf16.mxu0 0
        %5431 = vmatpush1.bf16.msra.mxu0 %v4707
        %5432 = vmatprep.subr.bf16.mxu0 0
        %5433 = vmatpush1.bf16.msra.mxu0 %v4706
        %5434 = vmatprep.subr.bf16.mxu0 0
        %5435 = vmatpush1.bf16.msra.mxu0 %v4705
        %5436 = vmatprep.subr.bf16.mxu0 0
        %5437 = vmatpush1.bf16.msra.mxu0 %v4704
        %5438 = vmatprep.subr.bf16.mxu0 0
        %5439 = vmatpush1.bf16.msra.mxu0 %v4703
        %5440 = vmatprep.subr.bf16.mxu0 0
        %5441 = vmatpush1.bf16.msra.mxu0 %v4702
        %5442 = vmatprep.subr.bf16.mxu0 0
        %5443 = vmatpush2.bf16.msra.mxu0 0
        %5444 = vmatprep.subr.bf16.mxu0 0
        %5445 = vmatpush2.bf16.msra.mxu0 0
        %5446 = vmatprep.subr.bf16.mxu0 0
        %5447 = vmatpush2.bf16.msra.mxu0 0
        %5448 = vmatprep.subr.bf16.mxu0 0
        %5449 = vmatpush2.bf16.msra.mxu0 0
        %5450 = vmatprep.subr.bf16.mxu0 0
        %5451 = vmatpush2.bf16.msra.mxu0 0
        %5452 = vmatprep.subr.bf16.mxu0 0
        %5453 = vmatpush2.bf16.msra.mxu0 0
        %5454 = vmatprep.subr.bf16.mxu0 0
        %5455 = vmatpush2.bf16.msra.mxu0 0
        %5456 = vmatprep.subr.bf16.mxu0 0
        %5457 = vmatpush2.bf16.msra.mxu0 0
        %5458 = vmatprep.mubr.bf16.mxu0 0
        %5459 = vmatmul.mubr.bf16.gmra.mxu0 %v4070
        %v5460 = vpop.f32.mrf.mxu0
        %v5461 = vadd.f32 %v5300, %v5460
        %v5462 = vpop.f32.mrf.mxu0
        %v5463 = vpop.f32.mrf.mxu0
        %v5464 = vadd.f32 %v5303, %v5463
        %v5465 = vpop.f32.mrf.mxu0
        %5466 = vmatprep.mubr.bf16.mxu0 0
        %5467 = vmatmul.mubr.bf16.gmra.mxu0 %v4079
        %v5468 = vpop.f32.mrf.mxu0
        %v5469 = vadd.f32 %v5308, %v5468
        %v5470 = vpop.f32.mrf.mxu0
        %v5471 = vpop.f32.mrf.mxu0
        %v5472 = vadd.f32 %v5311, %v5471
        %v5473 = vpop.f32.mrf.mxu0
        %5474 = vmatprep.mubr.bf16.mxu0 0
        %5475 = vmatmul.mubr.bf16.gmra.mxu0 %v4088
        %v5476 = vpop.f32.mrf.mxu0
        %v5477 = vadd.f32 %v5316, %v5476
        %v5478 = vpop.f32.mrf.mxu0
        %v5479 = vpop.f32.mrf.mxu0
        %v5480 = vadd.f32 %v5319, %v5479
        %v5481 = vpop.f32.mrf.mxu0
        %5482 = vmatprep.mubr.bf16.mxu0 0
        %5483 = vmatmul.mubr.bf16.gmra.mxu0 %v4097
        %v5484 = vpop.f32.mrf.mxu0
        %v5485 = vadd.f32 %v5324, %v5484
        %v5486 = vpop.f32.mrf.mxu0
        %v5487 = vpop.f32.mrf.mxu0
        %v5488 = vadd.f32 %v5327, %v5487
        %v5489 = vpop.f32.mrf.mxu0
        %5490 = vmatprep.mubr.bf16.mxu0 0
        %5491 = vmatmul.mubr.bf16.gmra.mxu0 %v4106
        %v5492 = vpop.f32.mrf.mxu0
        %v5493 = vadd.f32 %v5332, %v5492
        %v5494 = vpop.f32.mrf.mxu0
        %v5495 = vpop.f32.mrf.mxu0
        %v5496 = vadd.f32 %v5335, %v5495
        %v5497 = vpop.f32.mrf.mxu0
        %5498 = vmatprep.mubr.bf16.mxu0 0
        %5499 = vmatmul.mubr.bf16.gmra.mxu0 %v4115
        %v5500 = vpop.f32.mrf.mxu0
        %v5501 = vadd.f32 %v5340, %v5500
        %v5502 = vpop.f32.mrf.mxu0
        %v5503 = vpop.f32.mrf.mxu0
        %v5504 = vadd.f32 %v5343, %v5503
        %v5505 = vpop.f32.mrf.mxu0
        %5506 = vmatprep.mubr.bf16.mxu0 0
        %5507 = vmatmul.mubr.bf16.gmra.mxu0 %v4124
        %v5508 = vpop.f32.mrf.mxu0
        %v5509 = vadd.f32 %v5348, %v5508
        %v5510 = vpop.f32.mrf.mxu0
        %v5511 = vpop.f32.mrf.mxu0
        %v5512 = vadd.f32 %v5351, %v5511
        %v5513 = vpop.f32.mrf.mxu0
        %5514 = vmatprep.mubr.bf16.mxu0 0
        %5515 = vmatmul.mubr.bf16.gmra.mxu0 %v4133
        %v5516 = vpop.f32.mrf.mxu0
        %v5517 = vadd.f32 %v5356, %v5516
        %v5518 = vpop.f32.mrf.mxu0
        %v5519 = vpop.f32.mrf.mxu0
        %v5520 = vadd.f32 %v5359, %v5519
        %v5521 = vpop.f32.mrf.mxu0
        %5522 = vmatprep.mubr.bf16.mxu0 0
        %5523 = vmatmul.mubr.bf16.gmra.mxu0 %v4142
        %v5524 = vpop.f32.mrf.mxu0
        %v5525 = vadd.f32 %v5364, %v5524
        %v5526 = vpop.f32.mrf.mxu0
        %v5527 = vpop.f32.mrf.mxu0
        %v5528 = vadd.f32 %v5367, %v5527
        %v5529 = vpop.f32.mrf.mxu0
        %5530 = vmatprep.mubr.bf16.mxu0 0
        %5531 = vmatmul.mubr.bf16.gmra.mxu0 %v4151
        %v5532 = vpop.f32.mrf.mxu0
        %v5533 = vadd.f32 %v5372, %v5532
        %v5534 = vpop.f32.mrf.mxu0
        %v5535 = vpop.f32.mrf.mxu0
        %v5536 = vadd.f32 %v5375, %v5535
        %v5537 = vpop.f32.mrf.mxu0
        %5538 = vmatprep.mubr.bf16.mxu0 0
        %5539 = vmatmul.mubr.bf16.gmra.mxu0 %v4160
        %v5540 = vpop.f32.mrf.mxu0
        %v5541 = vadd.f32 %v5380, %v5540
        %v5542 = vpop.f32.mrf.mxu0
        %v5543 = vpop.f32.mrf.mxu0
        %v5544 = vadd.f32 %v5383, %v5543
        %v5545 = vpop.f32.mrf.mxu0
        %5546 = vmatprep.mubr.bf16.mxu0 0
        %5547 = vmatmul.mubr.bf16.gmra.mxu0 %v4169
        %v5548 = vpop.f32.mrf.mxu0
        %v5549 = vadd.f32 %v5388, %v5548
        %v5550 = vpop.f32.mrf.mxu0
        %v5551 = vpop.f32.mrf.mxu0
        %v5552 = vadd.f32 %v5391, %v5551
        %v5553 = vpop.f32.mrf.mxu0
        %5554 = vmatprep.mubr.bf16.mxu0 0
        %5555 = vmatmul.mubr.bf16.gmra.mxu0 %v4178
        %v5556 = vpop.f32.mrf.mxu0
        %v5557 = vadd.f32 %v5396, %v5556
        %v5558 = vpop.f32.mrf.mxu0
        %v5559 = vpop.f32.mrf.mxu0
        %v5560 = vadd.f32 %v5399, %v5559
        %v5561 = vpop.f32.mrf.mxu0
        %5562 = vmatprep.mubr.bf16.mxu0 0
        %5563 = vmatmul.mubr.bf16.gmra.mxu0 %v4187
        %v5564 = vpop.f32.mrf.mxu0
        %v5565 = vadd.f32 %v5404, %v5564
        %v5566 = vpop.f32.mrf.mxu0
        %v5567 = vpop.f32.mrf.mxu0
        %v5568 = vadd.f32 %v5407, %v5567
        %v5569 = vpop.f32.mrf.mxu0
        %5570 = vmatprep.mubr.bf16.mxu0 0
        %5571 = vmatmul.mubr.bf16.gmra.mxu0 %v4196
        %v5572 = vpop.f32.mrf.mxu0
        %v5573 = vadd.f32 %v5412, %v5572
        %v5574 = vpop.f32.mrf.mxu0
        %v5575 = vpop.f32.mrf.mxu0
        %v5576 = vadd.f32 %v5415, %v5575
        %v5577 = vpop.f32.mrf.mxu0
        %5578 = vmatprep.mubr.bf16.mxu0 0
        %5579 = vmatmul.mubr.bf16.gmra.mxu0 %v4205
        %v5580 = vpop.f32.mrf.mxu0
        %v5581 = vadd.f32 %v5420, %v5580
        %v5582 = vpop.f32.mrf.mxu0
        %v5583 = vpop.f32.mrf.mxu0
        %v5584 = vadd.f32 %v5423, %v5583
        %v5585 = vpop.f32.mrf.mxu0
        %5586 = vdwg.mxu0
        %v5587 = vmax.f32 %v5461, 0.0
        %v5588 = vmax.f32 %v5464, 0.0
        %v5589 = vmax.f32 %v5469, 0.0
        %v5590 = vmax.f32 %v5472, 0.0
        %v5591 = vmax.f32 %v5477, 0.0
        %v5592 = vmax.f32 %v5480, 0.0
        %v5593 = vmax.f32 %v5485, 0.0
        %v5594 = vmax.f32 %v5488, 0.0
        %v5595 = vmax.f32 %v5493, 0.0
        %v5596 = vmax.f32 %v5496, 0.0
        %v5597 = vmax.f32 %v5501, 0.0
        %v5598 = vmax.f32 %v5504, 0.0
        %v5599 = vmax.f32 %v5509, 0.0
        %v5600 = vmax.f32 %v5512, 0.0
        %v5601 = vmax.f32 %v5517, 0.0
        %v5602 = vmax.f32 %v5520, 0.0
        %v5603 = vmax.f32 %v5525, 0.0
        %v5604 = vmax.f32 %v5528, 0.0
        %v5605 = vmax.f32 %v5533, 0.0
        %v5606 = vmax.f32 %v5536, 0.0
        %v5607 = vmax.f32 %v5541, 0.0
        %v5608 = vmax.f32 %v5544, 0.0
        %v5609 = vmax.f32 %v5549, 0.0
        %v5610 = vmax.f32 %v5552, 0.0
        %v5611 = vmax.f32 %v5557, 0.0
        %v5612 = vmax.f32 %v5560, 0.0
        %v5613 = vmax.f32 %v5565, 0.0
        %v5614 = vmax.f32 %v5568, 0.0
        %v5615 = vmax.f32 %v5573, 0.0
        %v5616 = vmax.f32 %v5576, 0.0
        %v5617 = vmax.f32 %v5581, 0.0
        %v5618 = vmax.f32 %v5584, 0.0
        %v5619 = vpack.c.bf16 %v5588, %v5587
        %v5620 = vpack.c.bf16 %v5590, %v5589
        %v5621 = vpack.c.bf16 %v5592, %v5591
        %v5622 = vpack.c.bf16 %v5594, %v5593
        %v5623 = vpack.c.bf16 %v5596, %v5595
        %v5624 = vpack.c.bf16 %v5598, %v5597
        %v5625 = vpack.c.bf16 %v5600, %v5599
        %v5626 = vpack.c.bf16 %v5602, %v5601
        %v5627 = vpack.c.bf16 %v5604, %v5603
        %v5628 = vpack.c.bf16 %v5606, %v5605
        %v5629 = vpack.c.bf16 %v5608, %v5607
        %v5630 = vpack.c.bf16 %v5610, %v5609
        %v5631 = vpack.c.bf16 %v5612, %v5611
        %v5632 = vpack.c.bf16 %v5614, %v5613
        %v5633 = vpack.c.bf16 %v5616, %v5615
        %v5634 = vpack.c.bf16 %v5618, %v5617
        %v5651 = vunpack.c.l.b16 %v5619
        %v5652 = vunpack.c.h.b16 %v5619
        %v5653 = vunpack.c.l.b16 %v5620
        %v5654 = vunpack.c.h.b16 %v5620
        %v5655 = vunpack.c.l.b16 %v5621
        %v5656 = vunpack.c.h.b16 %v5621
        %v5657 = vunpack.c.l.b16 %v5622
        %v5658 = vunpack.c.h.b16 %v5622
        %v5659 = vunpack.c.l.b16 %v5623
        %v5660 = vunpack.c.h.b16 %v5623
        %v5661 = vunpack.c.l.b16 %v5624
        %v5662 = vunpack.c.h.b16 %v5624
        %v5663 = vunpack.c.l.b16 %v5625
        %v5664 = vunpack.c.h.b16 %v5625
        %v5665 = vunpack.c.l.b16 %v5626
        %v5666 = vunpack.c.h.b16 %v5626
        %v5667 = vunpack.c.l.b16 %v5627
        %v5668 = vunpack.c.h.b16 %v5627
        %v5669 = vunpack.c.l.b16 %v5628
        %v5670 = vunpack.c.h.b16 %v5628
        %v5671 = vunpack.c.l.b16 %v5629
        %v5672 = vunpack.c.h.b16 %v5629
        %v5673 = vunpack.c.l.b16 %v5630
        %v5674 = vunpack.c.h.b16 %v5630
        %v5675 = vunpack.c.l.b16 %v5631
        %v5676 = vunpack.c.h.b16 %v5631
        %v5677 = vunpack.c.l.b16 %v5632
        %v5678 = vunpack.c.h.b16 %v5632
        %v5679 = vunpack.c.l.b16 %v5633
        %v5680 = vunpack.c.h.b16 %v5633
        %v5681 = vunpack.c.l.b16 %v5634
        %v5682 = vunpack.c.h.b16 %v5634
        %v5683 = vpack.c.b16 %v5651, %v5651
        %v5684 = vpack.c.b16 %v5652, %v5652
        %v5685 = vpack.c.b16 %v5653, %v5653
        %v5686 = vpack.c.b16 %v5654, %v5654
        %v5687 = vpack.c.b16 %v5655, %v5655
        %v5688 = vpack.c.b16 %v5656, %v5656
        %v5689 = vpack.c.b16 %v5657, %v5657
        %v5690 = vpack.c.b16 %v5658, %v5658
        %v5691 = vpack.c.b16 %v5659, %v5659
        %v5692 = vpack.c.b16 %v5660, %v5660
        %v5693 = vpack.c.b16 %v5661, %v5661
        %v5694 = vpack.c.b16 %v5662, %v5662
        %v5695 = vpack.c.b16 %v5663, %v5663
        %v5696 = vpack.c.b16 %v5664, %v5664
        %v5697 = vpack.c.b16 %v5665, %v5665
        %v5698 = vpack.c.b16 %v5666, %v5666
        %v5699 = vpack.c.b16 %v5667, %v5667
        %v5700 = vpack.c.b16 %v5668, %v5668
        %v5701 = vpack.c.b16 %v5669, %v5669
        %v5702 = vpack.c.b16 %v5670, %v5670
        %v5703 = vpack.c.b16 %v5671, %v5671
        %v5704 = vpack.c.b16 %v5672, %v5672
        %v5705 = vpack.c.b16 %v5673, %v5673
        %v5706 = vpack.c.b16 %v5674, %v5674
        %v5707 = vpack.c.b16 %v5675, %v5675
        %v5708 = vpack.c.b16 %v5676, %v5676
        %v5709 = vpack.c.b16 %v5677, %v5677
        %v5710 = vpack.c.b16 %v5678, %v5678
        %v5711 = vpack.c.b16 %v5679, %v5679
        %v5712 = vpack.c.b16 %v5680, %v5680
        %v5713 = vpack.c.b16 %v5681, %v5681
        %v5714 = vpack.c.b16 %v5682, %v5682
        %v5716 = vshrl.u32 %v5683, 16
        %v5718 = vrot.slane %v5716, 7
        %v5719 = vshll.u32 %v5683, 16
        %v5721 = vor.u32 %v5718, %v5719
        %v5722 = vrot.slane %v5718, 4
        %v5724 = vshrl.u32 %v5684, 16
        %v5726 = vrot.slane %v5724, 7
        %v5727 = vshll.u32 %v5684, 16
        %v5729 = vor.u32 %v5726, %v5727
        %v5730 = vsel %vm361, %v5722, %v5729
        %v5731 = vrot.slane %v5726, 4
        %v5733 = vshrl.u32 %v5685, 16
        %v5735 = vrot.slane %v5733, 7
        %v5736 = vshll.u32 %v5685, 16
        %v5738 = vor.u32 %v5735, %v5736
        %v5739 = vrot.slane %v5735, 4
        %v5741 = vshrl.u32 %v5686, 16
        %v5743 = vrot.slane %v5741, 7
        %v5744 = vshll.u32 %v5686, 16
        %v5746 = vor.u32 %v5743, %v5744
        %v5747 = vsel %vm361, %v5739, %v5746
        %v5748 = vrot.slane %v5743, 4
        %v5750 = vshrl.u32 %v5687, 16
        %v5752 = vrot.slane %v5750, 7
        %v5753 = vshll.u32 %v5687, 16
        %v5755 = vor.u32 %v5752, %v5753
        %v5756 = vrot.slane %v5752, 4
        %v5758 = vshrl.u32 %v5688, 16
        %v5760 = vrot.slane %v5758, 7
        %v5761 = vshll.u32 %v5688, 16
        %v5763 = vor.u32 %v5760, %v5761
        %v5764 = vsel %vm361, %v5756, %v5763
        %v5765 = vrot.slane %v5760, 4
        %v5767 = vshrl.u32 %v5689, 16
        %v5769 = vrot.slane %v5767, 7
        %v5770 = vshll.u32 %v5689, 16
        %v5772 = vor.u32 %v5769, %v5770
        %v5773 = vrot.slane %v5769, 4
        %v5775 = vshrl.u32 %v5690, 16
        %v5777 = vrot.slane %v5775, 7
        %v5778 = vshll.u32 %v5690, 16
        %v5780 = vor.u32 %v5777, %v5778
        %v5781 = vsel %vm361, %v5773, %v5780
        %v5782 = vrot.slane %v5777, 4
        %v5784 = vshrl.u32 %v5691, 16
        %v5786 = vrot.slane %v5784, 7
        %v5787 = vshll.u32 %v5691, 16
        %v5789 = vor.u32 %v5786, %v5787
        %v5790 = vrot.slane %v5786, 4
        %v5792 = vshrl.u32 %v5692, 16
        %v5794 = vrot.slane %v5792, 7
        %v5795 = vshll.u32 %v5692, 16
        %v5797 = vor.u32 %v5794, %v5795
        %v5798 = vsel %vm361, %v5790, %v5797
        %v5799 = vrot.slane %v5794, 4
        %v5801 = vshrl.u32 %v5693, 16
        %v5803 = vrot.slane %v5801, 7
        %v5804 = vshll.u32 %v5693, 16
        %v5806 = vor.u32 %v5803, %v5804
        %v5807 = vrot.slane %v5803, 4
        %v5809 = vshrl.u32 %v5694, 16
        %v5811 = vrot.slane %v5809, 7
        %v5812 = vshll.u32 %v5694, 16
        %v5814 = vor.u32 %v5811, %v5812
        %v5815 = vsel %vm361, %v5807, %v5814
        %v5816 = vrot.slane %v5811, 4
        %v5818 = vshrl.u32 %v5695, 16
        %v5820 = vrot.slane %v5818, 7
        %v5821 = vshll.u32 %v5695, 16
        %v5823 = vor.u32 %v5820, %v5821
        %v5824 = vrot.slane %v5820, 4
        %v5826 = vshrl.u32 %v5696, 16
        %v5828 = vrot.slane %v5826, 7
        %v5829 = vshll.u32 %v5696, 16
        %v5831 = vor.u32 %v5828, %v5829
        %v5832 = vsel %vm361, %v5824, %v5831
        %v5833 = vrot.slane %v5828, 4
        %v5835 = vshrl.u32 %v5697, 16
        %v5837 = vrot.slane %v5835, 7
        %v5838 = vshll.u32 %v5697, 16
        %v5840 = vor.u32 %v5837, %v5838
        %v5841 = vrot.slane %v5837, 4
        %v5843 = vshrl.u32 %v5698, 16
        %v5845 = vrot.slane %v5843, 7
        %v5846 = vshll.u32 %v5698, 16
        %v5848 = vor.u32 %v5845, %v5846
        %v5849 = vsel %vm361, %v5841, %v5848
        %v5850 = vrot.slane %v5845, 4
        %v5852 = vshrl.u32 %v5699, 16
        %v5854 = vrot.slane %v5852, 7
        %v5855 = vshll.u32 %v5699, 16
        %v5857 = vor.u32 %v5854, %v5855
        %v5858 = vrot.slane %v5854, 4
        %v5860 = vshrl.u32 %v5700, 16
        %v5862 = vrot.slane %v5860, 7
        %v5863 = vshll.u32 %v5700, 16
        %v5865 = vor.u32 %v5862, %v5863
        %v5866 = vsel %vm361, %v5858, %v5865
        %v5867 = vrot.slane %v5862, 4
        %v5869 = vshrl.u32 %v5701, 16
        %v5871 = vrot.slane %v5869, 7
        %v5872 = vshll.u32 %v5701, 16
        %v5874 = vor.u32 %v5871, %v5872
        %v5875 = vrot.slane %v5871, 4
        %v5877 = vshrl.u32 %v5702, 16
        %v5879 = vrot.slane %v5877, 7
        %v5880 = vshll.u32 %v5702, 16
        %v5882 = vor.u32 %v5879, %v5880
        %v5883 = vsel %vm361, %v5875, %v5882
        %v5884 = vrot.slane %v5879, 4
        %v5886 = vshrl.u32 %v5703, 16
        %v5888 = vrot.slane %v5886, 7
        %v5889 = vshll.u32 %v5703, 16
        %v5891 = vor.u32 %v5888, %v5889
        %v5892 = vrot.slane %v5888, 4
        %v5894 = vshrl.u32 %v5704, 16
        %v5896 = vrot.slane %v5894, 7
        %v5897 = vshll.u32 %v5704, 16
        %v5899 = vor.u32 %v5896, %v5897
        %v5900 = vsel %vm361, %v5892, %v5899
        %v5901 = vrot.slane %v5896, 4
        %v5903 = vshrl.u32 %v5705, 16
        %v5905 = vrot.slane %v5903, 7
        %v5906 = vshll.u32 %v5705, 16
        %v5908 = vor.u32 %v5905, %v5906
        %v5909 = vrot.slane %v5905, 4
        %v5911 = vshrl.u32 %v5706, 16
        %v5913 = vrot.slane %v5911, 7
        %v5914 = vshll.u32 %v5706, 16
        %v5916 = vor.u32 %v5913, %v5914
        %v5917 = vsel %vm361, %v5909, %v5916
        %v5918 = vrot.slane %v5913, 4
        %v5920 = vshrl.u32 %v5707, 16
        %v5922 = vrot.slane %v5920, 7
        %v5923 = vshll.u32 %v5707, 16
        %v5925 = vor.u32 %v5922, %v5923
        %v5926 = vrot.slane %v5922, 4
        %v5928 = vshrl.u32 %v5708, 16
        %v5930 = vrot.slane %v5928, 7
        %v5931 = vshll.u32 %v5708, 16
        %v5933 = vor.u32 %v5930, %v5931
        %v5934 = vsel %vm361, %v5926, %v5933
        %v5935 = vrot.slane %v5930, 4
        %v5937 = vshrl.u32 %v5709, 16
        %v5939 = vrot.slane %v5937, 7
        %v5940 = vshll.u32 %v5709, 16
        %v5942 = vor.u32 %v5939, %v5940
        %v5943 = vrot.slane %v5939, 4
        %v5945 = vshrl.u32 %v5710, 16
        %v5947 = vrot.slane %v5945, 7
        %v5948 = vshll.u32 %v5710, 16
        %v5950 = vor.u32 %v5947, %v5948
        %v5951 = vsel %vm361, %v5943, %v5950
        %v5952 = vrot.slane %v5947, 4
        %v5954 = vshrl.u32 %v5711, 16
        %v5956 = vrot.slane %v5954, 7
        %v5957 = vshll.u32 %v5711, 16
        %v5959 = vor.u32 %v5956, %v5957
        %v5960 = vrot.slane %v5956, 4
        %v5962 = vshrl.u32 %v5712, 16
        %v5964 = vrot.slane %v5962, 7
        %v5965 = vshll.u32 %v5712, 16
        %v5967 = vor.u32 %v5964, %v5965
        %v5968 = vsel %vm361, %v5960, %v5967
        %v5969 = vrot.slane %v5964, 4
        %v5971 = vshrl.u32 %v5713, 16
        %v5973 = vrot.slane %v5971, 7
        %v5974 = vshll.u32 %v5713, 16
        %v5976 = vor.u32 %v5973, %v5974
        %v5977 = vrot.slane %v5973, 4
        %v5979 = vshrl.u32 %v5714, 16
        %v5981 = vrot.slane %v5979, 7
        %v5982 = vshll.u32 %v5714, 16
        %v5984 = vor.u32 %v5981, %v5982
        %v5985 = vsel %vm361, %v5977, %v5984
        %v5986 = vrot.slane %v5981, 4
        %v6035 = vld [vmem:[%s682] sm:$0xf]
        %v6036 = vsel %vm685, %v5721, %v6035
        %6037 = vst [vmem:[%s682] sm:$0xf] %v6036
        %6038 = vst [vmem:[%s682 + $0x4] sm:$0xf] %v5730
        %v6039 = vld [vmem:[%s682 + $0x8] sm:$0x1]
        %v6040 = vsel %vm691, %v5731, %v6039
        %6041 = vst [vmem:[%s682 + $0x8] sm:$0x1] %v6040
        %v6042 = vld [vmem:[%s682 + $0xc] sm:$0xf]
        %v6043 = vsel %vm685, %v5738, %v6042
        %6044 = vst [vmem:[%s682 + $0xc] sm:$0xf] %v6043
        %6045 = vst [vmem:[%s682 + $0x10] sm:$0xf] %v5747
        %v6046 = vld [vmem:[%s682 + $0x14] sm:$0x1]
        %v6047 = vsel %vm691, %v5748, %v6046
        %6048 = vst [vmem:[%s682 + $0x14] sm:$0x1] %v6047
        %v6049 = vld [vmem:[%s682 + $0x18] sm:$0xf]
        %v6050 = vsel %vm685, %v5755, %v6049
        %6051 = vst [vmem:[%s682 + $0x18] sm:$0xf] %v6050
        %6052 = vst [vmem:[%s682 + $0x1c] sm:$0xf] %v5764
        %v6053 = vld [vmem:[%s682 + $0x20] sm:$0x1]
        %v6054 = vsel %vm691, %v5765, %v6053
        %6055 = vst [vmem:[%s682 + $0x20] sm:$0x1] %v6054
        %v6056 = vld [vmem:[%s682 + $0x24] sm:$0xf]
        %v6057 = vsel %vm685, %v5772, %v6056
        %6058 = vst [vmem:[%s682 + $0x24] sm:$0xf] %v6057
        %6059 = vst [vmem:[%s682 + $0x28] sm:$0xf] %v5781
        %v6060 = vld [vmem:[%s682 + $0x2c] sm:$0x1]
        %v6061 = vsel %vm691, %v5782, %v6060
        %6062 = vst [vmem:[%s682 + $0x2c] sm:$0x1] %v6061
        %v6063 = vld [vmem:[%s682 + $0x30] sm:$0xf]
        %v6064 = vsel %vm685, %v5789, %v6063
        %6065 = vst [vmem:[%s682 + $0x30] sm:$0xf] %v6064
        %6066 = vst [vmem:[%s682 + $0x34] sm:$0xf] %v5798
        %v6067 = vld [vmem:[%s682 + $0x38] sm:$0x1]
        %v6068 = vsel %vm691, %v5799, %v6067
        %6069 = vst [vmem:[%s682 + $0x38] sm:$0x1] %v6068
        %v6070 = vld [vmem:[%s682 + $0x3c] sm:$0xf]
        %v6071 = vsel %vm685, %v5806, %v6070
        %6072 = vst [vmem:[%s682 + $0x3c] sm:$0xf] %v6071
        %6073 = vst [vmem:[%s682 + $0x40] sm:$0xf] %v5815
        %v6074 = vld [vmem:[%s682 + $0x44] sm:$0x1]
        %v6075 = vsel %vm691, %v5816, %v6074
        %6076 = vst [vmem:[%s682 + $0x44] sm:$0x1] %v6075
        %v6077 = vld [vmem:[%s682 + $0x48] sm:$0xf]
        %v6078 = vsel %vm685, %v5823, %v6077
        %6079 = vst [vmem:[%s682 + $0x48] sm:$0xf] %v6078
        %6080 = vst [vmem:[%s682 + $0x4c] sm:$0xf] %v5832
        %v6081 = vld [vmem:[%s682 + $0x50] sm:$0x1]
        %v6082 = vsel %vm691, %v5833, %v6081
        %6083 = vst [vmem:[%s682 + $0x50] sm:$0x1] %v6082
        %v6084 = vld [vmem:[%s682 + $0x54] sm:$0xf]
        %v6085 = vsel %vm685, %v5840, %v6084
        %6086 = vst [vmem:[%s682 + $0x54] sm:$0xf] %v6085
        %6087 = vst [vmem:[%s682 + $0x58] sm:$0xf] %v5849
        %v6088 = vld [vmem:[%s682 + $0x5c] sm:$0x1]
        %v6089 = vsel %vm691, %v5850, %v6088
        %6090 = vst [vmem:[%s682 + $0x5c] sm:$0x1] %v6089
        %v6091 = vld [vmem:[%s682 + $0x60] sm:$0xf]
        %v6092 = vsel %vm685, %v5857, %v6091
        %6093 = vst [vmem:[%s682 + $0x60] sm:$0xf] %v6092
        %6094 = vst [vmem:[%s682 + $0x64] sm:$0xf] %v5866
        %v6095 = vld [vmem:[%s682 + $0x68] sm:$0x1]
        %v6096 = vsel %vm691, %v5867, %v6095
        %6097 = vst [vmem:[%s682 + $0x68] sm:$0x1] %v6096
        %v6098 = vld [vmem:[%s682 + $0x6c] sm:$0xf]
        %v6099 = vsel %vm685, %v5874, %v6098
        %6100 = vst [vmem:[%s682 + $0x6c] sm:$0xf] %v6099
        %6101 = vst [vmem:[%s682 + $0x70] sm:$0xf] %v5883
        %v6102 = vld [vmem:[%s682 + $0x74] sm:$0x1]
        %v6103 = vsel %vm691, %v5884, %v6102
        %6104 = vst [vmem:[%s682 + $0x74] sm:$0x1] %v6103
        %v6105 = vld [vmem:[%s682 + $0x78] sm:$0xf]
        %v6106 = vsel %vm685, %v5891, %v6105
        %6107 = vst [vmem:[%s682 + $0x78] sm:$0xf] %v6106
        %6108 = vst [vmem:[%s682 + $0x7c] sm:$0xf] %v5900
        %v6109 = vld [vmem:[%s682 + $0x80] sm:$0x1]
        %v6110 = vsel %vm691, %v5901, %v6109
        %6111 = vst [vmem:[%s682 + $0x80] sm:$0x1] %v6110
        %v6112 = vld [vmem:[%s682 + $0x84] sm:$0xf]
        %v6113 = vsel %vm685, %v5908, %v6112
        %6114 = vst [vmem:[%s682 + $0x84] sm:$0xf] %v6113
        %6115 = vst [vmem:[%s682 + $0x88] sm:$0xf] %v5917
        %v6116 = vld [vmem:[%s682 + $0x8c] sm:$0x1]
        %v6117 = vsel %vm691, %v5918, %v6116
        %6118 = vst [vmem:[%s682 + $0x8c] sm:$0x1] %v6117
        %v6119 = vld [vmem:[%s682 + $0x90] sm:$0xf]
        %v6120 = vsel %vm685, %v5925, %v6119
        %6121 = vst [vmem:[%s682 + $0x90] sm:$0xf] %v6120
        %6122 = vst [vmem:[%s682 + $0x94] sm:$0xf] %v5934
        %v6123 = vld [vmem:[%s682 + $0x98] sm:$0x1]
        %v6124 = vsel %vm691, %v5935, %v6123
        %6125 = vst [vmem:[%s682 + $0x98] sm:$0x1] %v6124
        %v6126 = vld [vmem:[%s682 + $0x9c] sm:$0xf]
        %v6127 = vsel %vm685, %v5942, %v6126
        %6128 = vst [vmem:[%s682 + $0x9c] sm:$0xf] %v6127
        %6129 = vst [vmem:[%s682 + $0xa0] sm:$0xf] %v5951
        %v6130 = vld [vmem:[%s682 + $0xa4] sm:$0x1]
        %v6131 = vsel %vm691, %v5952, %v6130
        %6132 = vst [vmem:[%s682 + $0xa4] sm:$0x1] %v6131
        %v6133 = vld [vmem:[%s682 + $0xa8] sm:$0xf]
        %v6134 = vsel %vm685, %v5959, %v6133
        %6135 = vst [vmem:[%s682 + $0xa8] sm:$0xf] %v6134
        %6136 = vst [vmem:[%s682 + $0xac] sm:$0xf] %v5968
        %v6137 = vld [vmem:[%s682 + $0xb0] sm:$0x1]
        %v6138 = vsel %vm691, %v5969, %v6137
        %6139 = vst [vmem:[%s682 + $0xb0] sm:$0x1] %v6138
        %v6140 = vld [vmem:[%s682 + $0xb4] sm:$0xf]
        %v6141 = vsel %vm685, %v5976, %v6140
        %6142 = vst [vmem:[%s682 + $0xb4] sm:$0xf] %v6141
        %6143 = vst [vmem:[%s682 + $0xb8] sm:$0xf] %v5985
        %v6144 = vld [vmem:[%s682 + $0xbc] sm:$0x1]
        %v6145 = vsel %vm691, %v5986, %v6144
        %6146 = vst [vmem:[%s682 + $0xbc] sm:$0x1] %v6145
        %v6147 = vld [vmem:[#allocation2] sm:$0xf]
        %v6148 = vld [vmem:[#allocation2 + $0x4] sm:$0xf]
        %v6149 = vld [vmem:[#allocation2 + $0xc] sm:$0xf]
        %v6150 = vld [vmem:[#allocation2 + $0x10] sm:$0xf]
        %v6151 = vld [vmem:[#allocation2 + $0x18] sm:$0xf]
        %v6152 = vld [vmem:[#allocation2 + $0x1c] sm:$0xf]
        %v6153 = vld [vmem:[#allocation2 + $0x24] sm:$0xf]
        %v6154 = vld [vmem:[#allocation2 + $0x28] sm:$0xf]
        %v6155 = vld [vmem:[#allocation2 + $0x30] sm:$0xf]
        %v6156 = vld [vmem:[#allocation2 + $0x34] sm:$0xf]
        %v6157 = vld [vmem:[#allocation2 + $0x3c] sm:$0xf]
        %v6158 = vld [vmem:[#allocation2 + $0x40] sm:$0xf]
        %v6159 = vld [vmem:[#allocation2 + $0x48] sm:$0xf]
        %v6160 = vld [vmem:[#allocation2 + $0x4c] sm:$0xf]
        %v6161 = vld [vmem:[#allocation2 + $0x54] sm:$0xf]
        %v6162 = vld [vmem:[#allocation2 + $0x58] sm:$0xf]
        %v6163 = vld [vmem:[#allocation2 + $0x60] sm:$0xf]
        %v6164 = vld [vmem:[#allocation2 + $0x64] sm:$0xf]
        %v6165 = vld [vmem:[#allocation2 + $0x6c] sm:$0xf]
        %v6166 = vld [vmem:[#allocation2 + $0x70] sm:$0xf]
        %v6167 = vld [vmem:[#allocation2 + $0x78] sm:$0xf]
        %v6168 = vld [vmem:[#allocation2 + $0x7c] sm:$0xf]
        %v6169 = vld [vmem:[#allocation2 + $0x84] sm:$0xf]
        %v6170 = vld [vmem:[#allocation2 + $0x88] sm:$0xf]
        %v6171 = vld [vmem:[#allocation2 + $0x90] sm:$0xf]
        %v6172 = vld [vmem:[#allocation2 + $0x94] sm:$0xf]
        %v6173 = vld [vmem:[#allocation2 + $0x9c] sm:$0xf]
        %v6174 = vld [vmem:[#allocation2 + $0xa0] sm:$0xf]
        %v6175 = vld [vmem:[#allocation2 + $0xa8] sm:$0xf]
        %v6176 = vld [vmem:[#allocation2 + $0xac] sm:$0xf]
        %v6177 = vld [vmem:[#allocation2 + $0xb4] sm:$0xf]
        %v6178 = vld [vmem:[#allocation2 + $0xb8] sm:$0xf]
        %6179 = vst [vmem:[#allocation3] sm:$0xf] %v6147
        %6180 = vst [vmem:[#allocation3 + $0x24] sm:$0xf] %v6148
        %6181 = vst [vmem:[#allocation3 + $0x48] sm:$0xf] %v6149
        %6182 = vst [vmem:[#allocation3 + $0x6c] sm:$0xf] %v6150
        %6183 = vst [vmem:[#allocation3 + $0x90] sm:$0xf] %v6151
        %6184 = vst [vmem:[#allocation3 + $0xb4] sm:$0xf] %v6152
        %6185 = vst [vmem:[#allocation3 + $0xd8] sm:$0xf] %v6153
        %6186 = vst [vmem:[#allocation3 + $0xfc] sm:$0xf] %v6154
        %6187 = vst [vmem:[#allocation3 + $0x120] sm:$0xf] %v6155
        %6188 = vst [vmem:[#allocation3 + $0x144] sm:$0xf] %v6156
        %6189 = vst [vmem:[#allocation3 + $0x168] sm:$0xf] %v6157
        %6190 = vst [vmem:[#allocation3 + $0x18c] sm:$0xf] %v6158
        %6191 = vst [vmem:[#allocation3 + $0x1b0] sm:$0xf] %v6159
        %6192 = vst [vmem:[#allocation3 + $0x1d4] sm:$0xf] %v6160
        %6193 = vst [vmem:[#allocation3 + $0x1f8] sm:$0xf] %v6161
        %6194 = vst [vmem:[#allocation3 + $0x21c] sm:$0xf] %v6162
        %6195 = vst [vmem:[#allocation3 + $0x240] sm:$0xf] %v6163
        %6196 = vst [vmem:[#allocation3 + $0x264] sm:$0xf] %v6164
        %6197 = vst [vmem:[#allocation3 + $0x288] sm:$0xf] %v6165
        %6198 = vst [vmem:[#allocation3 + $0x2ac] sm:$0xf] %v6166
        %6199 = vst [vmem:[#allocation3 + $0x2d0] sm:$0xf] %v6167
        %6200 = vst [vmem:[#allocation3 + $0x2f4] sm:$0xf] %v6168
        %6201 = vst [vmem:[#allocation3 + $0x318] sm:$0xf] %v6169
        %6202 = vst [vmem:[#allocation3 + $0x33c] sm:$0xf] %v6170
        %6203 = vst [vmem:[#allocation3 + $0x360] sm:$0xf] %v6171
        %6204 = vst [vmem:[#allocation3 + $0x384] sm:$0xf] %v6172
        %6205 = vst [vmem:[#allocation3 + $0x3a8] sm:$0xf] %v6173
        %6206 = vst [vmem:[#allocation3 + $0x3cc] sm:$0xf] %v6174
        %6207 = vst [vmem:[#allocation3 + $0x3f0] sm:$0xf] %v6175
        %6208 = vst [vmem:[#allocation3 + $0x414] sm:$0xf] %v6176
        %6209 = vst [vmem:[#allocation3 + $0x438] sm:$0xf] %v6177
        %6210 = vst [vmem:[#allocation3 + $0x45c] sm:$0xf] %v6178
        %v6211 = vld [vmem:[#allocation2] sm:$0xf]
        %v6212 = vld [vmem:[#allocation2 + $0x4] sm:$0xf]
        %v6213 = vld [vmem:[#allocation2 + $0x8] sm:$0x1]
        %v6214 = vld [vmem:[#allocation2 + $0xc] sm:$0xf]
        %v6215 = vld [vmem:[#allocation2 + $0x10] sm:$0xf]
        %v6216 = vld [vmem:[#allocation2 + $0x14] sm:$0x1]
        %v6217 = vld [vmem:[#allocation2 + $0x18] sm:$0xf]
        %v6218 = vld [vmem:[#allocation2 + $0x1c] sm:$0xf]
        %v6219 = vld [vmem:[#allocation2 + $0x20] sm:$0x1]
        %v6220 = vld [vmem:[#allocation2 + $0x24] sm:$0xf]
        %v6221 = vld [vmem:[#allocation2 + $0x28] sm:$0xf]
        %v6222 = vld [vmem:[#allocation2 + $0x2c] sm:$0x1]
        %v6223 = vld [vmem:[#allocation2 + $0x30] sm:$0xf]
        %v6224 = vld [vmem:[#allocation2 + $0x34] sm:$0xf]
        %v6225 = vld [vmem:[#allocation2 + $0x38] sm:$0x1]
        %v6226 = vld [vmem:[#allocation2 + $0x3c] sm:$0xf]
        %v6227 = vld [vmem:[#allocation2 + $0x40] sm:$0xf]
        %v6228 = vld [vmem:[#allocation2 + $0x44] sm:$0x1]
        %v6229 = vld [vmem:[#allocation2 + $0x48] sm:$0xf]
        %v6230 = vld [vmem:[#allocation2 + $0x4c] sm:$0xf]
        %v6231 = vld [vmem:[#allocation2 + $0x50] sm:$0x1]
        %v6232 = vld [vmem:[#allocation2 + $0x54] sm:$0xf]
        %v6233 = vld [vmem:[#allocation2 + $0x58] sm:$0xf]
        %v6234 = vld [vmem:[#allocation2 + $0x5c] sm:$0x1]
        %v6235 = vld [vmem:[#allocation2 + $0x60] sm:$0xf]
        %v6236 = vld [vmem:[#allocation2 + $0x64] sm:$0xf]
        %v6237 = vld [vmem:[#allocation2 + $0x68] sm:$0x1]
        %v6238 = vld [vmem:[#allocation2 + $0x6c] sm:$0xf]
        %v6239 = vld [vmem:[#allocation2 + $0x70] sm:$0xf]
        %v6240 = vld [vmem:[#allocation2 + $0x74] sm:$0x1]
        %v6241 = vld [vmem:[#allocation2 + $0x78] sm:$0xf]
        %v6242 = vld [vmem:[#allocation2 + $0x7c] sm:$0xf]
        %v6243 = vld [vmem:[#allocation2 + $0x80] sm:$0x1]
        %v6244 = vld [vmem:[#allocation2 + $0x84] sm:$0xf]
        %v6245 = vld [vmem:[#allocation2 + $0x88] sm:$0xf]
        %v6246 = vld [vmem:[#allocation2 + $0x8c] sm:$0x1]
        %v6247 = vld [vmem:[#allocation2 + $0x90] sm:$0xf]
        %v6248 = vld [vmem:[#allocation2 + $0x94] sm:$0xf]
        %v6249 = vld [vmem:[#allocation2 + $0x98] sm:$0x1]
        %v6250 = vld [vmem:[#allocation2 + $0x9c] sm:$0xf]
        %v6251 = vld [vmem:[#allocation2 + $0xa0] sm:$0xf]
        %v6252 = vld [vmem:[#allocation2 + $0xa4] sm:$0x1]
        %v6253 = vld [vmem:[#allocation2 + $0xa8] sm:$0xf]
        %v6254 = vld [vmem:[#allocation2 + $0xac] sm:$0xf]
        %v6255 = vld [vmem:[#allocation2 + $0xb0] sm:$0x1]
        %v6256 = vld [vmem:[#allocation2 + $0xb4] sm:$0xf]
        %v6257 = vld [vmem:[#allocation2 + $0xb8] sm:$0xf]
        %v6258 = vld [vmem:[#allocation2 + $0xbc] sm:$0x1]
        %v6260 = vshrl.u32 %v6211, 16
        %v6262 = vrot.slane %v6260, 4
        %v6263 = vshll.u32 %v6211, 16
        %v6265 = vrot.slane %v6263, 5
        %v6266 = vor.u32 %v6262, %v6265
        %v6267 = vrot.slane %v6266, 4
        %v6269 = vshll.u32 %v6212, 16
        %v6271 = vrot.slane %v6269, 5
        %v6272 = vsel %vm914, %v6267, %v6271
        %v6273 = vshrl.u32 %v6212, 16
        %v6275 = vrot.slane %v6273, 4
        %v6276 = vor.u32 %v6275, %v6271
        %v6277 = vrot.slane %v6276, 4
        %v6279 = vshll.u32 %v6213, 16
        %v6281 = vrot.slane %v6279, 5
        %v6282 = vsel %vm914, %v6277, %v6281
        %v6284 = vshrl.u32 %v6214, 16
        %v6286 = vrot.slane %v6284, 4
        %v6287 = vshll.u32 %v6214, 16
        %v6289 = vrot.slane %v6287, 5
        %v6290 = vor.u32 %v6286, %v6289
        %v6291 = vrot.slane %v6290, 4
        %v6293 = vshll.u32 %v6215, 16
        %v6295 = vrot.slane %v6293, 5
        %v6296 = vsel %vm914, %v6291, %v6295
        %v6297 = vshrl.u32 %v6215, 16
        %v6299 = vrot.slane %v6297, 4
        %v6300 = vor.u32 %v6299, %v6295
        %v6301 = vrot.slane %v6300, 4
        %v6303 = vshll.u32 %v6216, 16
        %v6305 = vrot.slane %v6303, 5
        %v6306 = vsel %vm914, %v6301, %v6305
        %v6308 = vshrl.u32 %v6217, 16
        %v6310 = vrot.slane %v6308, 4
        %v6311 = vshll.u32 %v6217, 16
        %v6313 = vrot.slane %v6311, 5
        %v6314 = vor.u32 %v6310, %v6313
        %v6315 = vrot.slane %v6314, 4
        %v6317 = vshll.u32 %v6218, 16
        %v6319 = vrot.slane %v6317, 5
        %v6320 = vsel %vm914, %v6315, %v6319
        %v6321 = vshrl.u32 %v6218, 16
        %v6323 = vrot.slane %v6321, 4
        %v6324 = vor.u32 %v6323, %v6319
        %v6325 = vrot.slane %v6324, 4
        %v6327 = vshll.u32 %v6219, 16
        %v6329 = vrot.slane %v6327, 5
        %v6330 = vsel %vm914, %v6325, %v6329
        %v6332 = vshrl.u32 %v6220, 16
        %v6334 = vrot.slane %v6332, 4
        %v6335 = vshll.u32 %v6220, 16
        %v6337 = vrot.slane %v6335, 5
        %v6338 = vor.u32 %v6334, %v6337
        %v6339 = vrot.slane %v6338, 4
        %v6341 = vshll.u32 %v6221, 16
        %v6343 = vrot.slane %v6341, 5
        %v6344 = vsel %vm914, %v6339, %v6343
        %v6345 = vshrl.u32 %v6221, 16
        %v6347 = vrot.slane %v6345, 4
        %v6348 = vor.u32 %v6347, %v6343
        %v6349 = vrot.slane %v6348, 4
        %v6351 = vshll.u32 %v6222, 16
        %v6353 = vrot.slane %v6351, 5
        %v6354 = vsel %vm914, %v6349, %v6353
        %v6356 = vshrl.u32 %v6223, 16
        %v6358 = vrot.slane %v6356, 4
        %v6359 = vshll.u32 %v6223, 16
        %v6361 = vrot.slane %v6359, 5
        %v6362 = vor.u32 %v6358, %v6361
        %v6363 = vrot.slane %v6362, 4
        %v6365 = vshll.u32 %v6224, 16
        %v6367 = vrot.slane %v6365, 5
        %v6368 = vsel %vm914, %v6363, %v6367
        %v6369 = vshrl.u32 %v6224, 16
        %v6371 = vrot.slane %v6369, 4
        %v6372 = vor.u32 %v6371, %v6367
        %v6373 = vrot.slane %v6372, 4
        %v6375 = vshll.u32 %v6225, 16
        %v6377 = vrot.slane %v6375, 5
        %v6378 = vsel %vm914, %v6373, %v6377
        %v6380 = vshrl.u32 %v6226, 16
        %v6382 = vrot.slane %v6380, 4
        %v6383 = vshll.u32 %v6226, 16
        %v6385 = vrot.slane %v6383, 5
        %v6386 = vor.u32 %v6382, %v6385
        %v6387 = vrot.slane %v6386, 4
        %v6389 = vshll.u32 %v6227, 16
        %v6391 = vrot.slane %v6389, 5
        %v6392 = vsel %vm914, %v6387, %v6391
        %v6393 = vshrl.u32 %v6227, 16
        %v6395 = vrot.slane %v6393, 4
        %v6396 = vor.u32 %v6395, %v6391
        %v6397 = vrot.slane %v6396, 4
        %v6399 = vshll.u32 %v6228, 16
        %v6401 = vrot.slane %v6399, 5
        %v6402 = vsel %vm914, %v6397, %v6401
        %v6404 = vshrl.u32 %v6229, 16
        %v6406 = vrot.slane %v6404, 4
        %v6407 = vshll.u32 %v6229, 16
        %v6409 = vrot.slane %v6407, 5
        %v6410 = vor.u32 %v6406, %v6409
        %v6411 = vrot.slane %v6410, 4
        %v6413 = vshll.u32 %v6230, 16
        %v6415 = vrot.slane %v6413, 5
        %v6416 = vsel %vm914, %v6411, %v6415
        %v6417 = vshrl.u32 %v6230, 16
        %v6419 = vrot.slane %v6417, 4
        %v6420 = vor.u32 %v6419, %v6415
        %v6421 = vrot.slane %v6420, 4
        %v6423 = vshll.u32 %v6231, 16
        %v6425 = vrot.slane %v6423, 5
        %v6426 = vsel %vm914, %v6421, %v6425
        %v6428 = vshrl.u32 %v6232, 16
        %v6430 = vrot.slane %v6428, 4
        %v6431 = vshll.u32 %v6232, 16
        %v6433 = vrot.slane %v6431, 5
        %v6434 = vor.u32 %v6430, %v6433
        %v6435 = vrot.slane %v6434, 4
        %v6437 = vshll.u32 %v6233, 16
        %v6439 = vrot.slane %v6437, 5
        %v6440 = vsel %vm914, %v6435, %v6439
        %v6441 = vshrl.u32 %v6233, 16
        %v6443 = vrot.slane %v6441, 4
        %v6444 = vor.u32 %v6443, %v6439
        %v6445 = vrot.slane %v6444, 4
        %v6447 = vshll.u32 %v6234, 16
        %v6449 = vrot.slane %v6447, 5
        %v6450 = vsel %vm914, %v6445, %v6449
        %v6452 = vshrl.u32 %v6235, 16
        %v6454 = vrot.slane %v6452, 4
        %v6455 = vshll.u32 %v6235, 16
        %v6457 = vrot.slane %v6455, 5
        %v6458 = vor.u32 %v6454, %v6457
        %v6459 = vrot.slane %v6458, 4
        %v6461 = vshll.u32 %v6236, 16
        %v6463 = vrot.slane %v6461, 5
        %v6464 = vsel %vm914, %v6459, %v6463
        %v6465 = vshrl.u32 %v6236, 16
        %v6467 = vrot.slane %v6465, 4
        %v6468 = vor.u32 %v6467, %v6463
        %v6469 = vrot.slane %v6468, 4
        %v6471 = vshll.u32 %v6237, 16
        %v6473 = vrot.slane %v6471, 5
        %v6474 = vsel %vm914, %v6469, %v6473
        %v6476 = vshrl.u32 %v6238, 16
        %v6478 = vrot.slane %v6476, 4
        %v6479 = vshll.u32 %v6238, 16
        %v6481 = vrot.slane %v6479, 5
        %v6482 = vor.u32 %v6478, %v6481
        %v6483 = vrot.slane %v6482, 4
        %v6485 = vshll.u32 %v6239, 16
        %v6487 = vrot.slane %v6485, 5
        %v6488 = vsel %vm914, %v6483, %v6487
        %v6489 = vshrl.u32 %v6239, 16
        %v6491 = vrot.slane %v6489, 4
        %v6492 = vor.u32 %v6491, %v6487
        %v6493 = vrot.slane %v6492, 4
        %v6495 = vshll.u32 %v6240, 16
        %v6497 = vrot.slane %v6495, 5
        %v6498 = vsel %vm914, %v6493, %v6497
        %v6500 = vshrl.u32 %v6241, 16
        %v6502 = vrot.slane %v6500, 4
        %v6503 = vshll.u32 %v6241, 16
        %v6505 = vrot.slane %v6503, 5
        %v6506 = vor.u32 %v6502, %v6505
        %v6507 = vrot.slane %v6506, 4
        %v6509 = vshll.u32 %v6242, 16
        %v6511 = vrot.slane %v6509, 5
        %v6512 = vsel %vm914, %v6507, %v6511
        %v6513 = vshrl.u32 %v6242, 16
        %v6515 = vrot.slane %v6513, 4
        %v6516 = vor.u32 %v6515, %v6511
        %v6517 = vrot.slane %v6516, 4
        %v6519 = vshll.u32 %v6243, 16
        %v6521 = vrot.slane %v6519, 5
        %v6522 = vsel %vm914, %v6517, %v6521
        %v6524 = vshrl.u32 %v6244, 16
        %v6526 = vrot.slane %v6524, 4
        %v6527 = vshll.u32 %v6244, 16
        %v6529 = vrot.slane %v6527, 5
        %v6530 = vor.u32 %v6526, %v6529
        %v6531 = vrot.slane %v6530, 4
        %v6533 = vshll.u32 %v6245, 16
        %v6535 = vrot.slane %v6533, 5
        %v6536 = vsel %vm914, %v6531, %v6535
        %v6537 = vshrl.u32 %v6245, 16
        %v6539 = vrot.slane %v6537, 4
        %v6540 = vor.u32 %v6539, %v6535
        %v6541 = vrot.slane %v6540, 4
        %v6543 = vshll.u32 %v6246, 16
        %v6545 = vrot.slane %v6543, 5
        %v6546 = vsel %vm914, %v6541, %v6545
        %v6548 = vshrl.u32 %v6247, 16
        %v6550 = vrot.slane %v6548, 4
        %v6551 = vshll.u32 %v6247, 16
        %v6553 = vrot.slane %v6551, 5
        %v6554 = vor.u32 %v6550, %v6553
        %v6555 = vrot.slane %v6554, 4
        %v6557 = vshll.u32 %v6248, 16
        %v6559 = vrot.slane %v6557, 5
        %v6560 = vsel %vm914, %v6555, %v6559
        %v6561 = vshrl.u32 %v6248, 16
        %v6563 = vrot.slane %v6561, 4
        %v6564 = vor.u32 %v6563, %v6559
        %v6565 = vrot.slane %v6564, 4
        %v6567 = vshll.u32 %v6249, 16
        %v6569 = vrot.slane %v6567, 5
        %v6570 = vsel %vm914, %v6565, %v6569
        %v6572 = vshrl.u32 %v6250, 16
        %v6574 = vrot.slane %v6572, 4
        %v6575 = vshll.u32 %v6250, 16
        %v6577 = vrot.slane %v6575, 5
        %v6578 = vor.u32 %v6574, %v6577
        %v6579 = vrot.slane %v6578, 4
        %v6581 = vshll.u32 %v6251, 16
        %v6583 = vrot.slane %v6581, 5
        %v6584 = vsel %vm914, %v6579, %v6583
        %v6585 = vshrl.u32 %v6251, 16
        %v6587 = vrot.slane %v6585, 4
        %v6588 = vor.u32 %v6587, %v6583
        %v6589 = vrot.slane %v6588, 4
        %v6591 = vshll.u32 %v6252, 16
        %v6593 = vrot.slane %v6591, 5
        %v6594 = vsel %vm914, %v6589, %v6593
        %v6596 = vshrl.u32 %v6253, 16
        %v6598 = vrot.slane %v6596, 4
        %v6599 = vshll.u32 %v6253, 16
        %v6601 = vrot.slane %v6599, 5
        %v6602 = vor.u32 %v6598, %v6601
        %v6603 = vrot.slane %v6602, 4
        %v6605 = vshll.u32 %v6254, 16
        %v6607 = vrot.slane %v6605, 5
        %v6608 = vsel %vm914, %v6603, %v6607
        %v6609 = vshrl.u32 %v6254, 16
        %v6611 = vrot.slane %v6609, 4
        %v6612 = vor.u32 %v6611, %v6607
        %v6613 = vrot.slane %v6612, 4
        %v6615 = vshll.u32 %v6255, 16
        %v6617 = vrot.slane %v6615, 5
        %v6618 = vsel %vm914, %v6613, %v6617
        %v6620 = vshrl.u32 %v6256, 16
        %v6622 = vrot.slane %v6620, 4
        %v6623 = vshll.u32 %v6256, 16
        %v6625 = vrot.slane %v6623, 5
        %v6626 = vor.u32 %v6622, %v6625
        %v6627 = vrot.slane %v6626, 4
        %v6629 = vshll.u32 %v6257, 16
        %v6631 = vrot.slane %v6629, 5
        %v6632 = vsel %vm914, %v6627, %v6631
        %v6633 = vshrl.u32 %v6257, 16
        %v6635 = vrot.slane %v6633, 4
        %v6636 = vor.u32 %v6635, %v6631
        %v6637 = vrot.slane %v6636, 4
        %v6639 = vshll.u32 %v6258, 16
        %v6641 = vrot.slane %v6639, 5
        %v6642 = vsel %vm914, %v6637, %v6641
        %6675 = vst [vmem:[#allocation3 + $0x4] sm:$0xf] %v6272
        %6676 = vst [vmem:[#allocation3 + $0x28] sm:$0xf] %v6282
        %6677 = vst [vmem:[#allocation3 + $0x4c] sm:$0xf] %v6296
        %6678 = vst [vmem:[#allocation3 + $0x70] sm:$0xf] %v6306
        %6679 = vst [vmem:[#allocation3 + $0x94] sm:$0xf] %v6320
        %6680 = vst [vmem:[#allocation3 + $0xb8] sm:$0xf] %v6330
        %6681 = vst [vmem:[#allocation3 + $0xdc] sm:$0xf] %v6344
        %6682 = vst [vmem:[#allocation3 + $0x100] sm:$0xf] %v6354
        %6683 = vst [vmem:[#allocation3 + $0x124] sm:$0xf] %v6368
        %6684 = vst [vmem:[#allocation3 + $0x148] sm:$0xf] %v6378
        %6685 = vst [vmem:[#allocation3 + $0x16c] sm:$0xf] %v6392
        %6686 = vst [vmem:[#allocation3 + $0x190] sm:$0xf] %v6402
        %6687 = vst [vmem:[#allocation3 + $0x1b4] sm:$0xf] %v6416
        %6688 = vst [vmem:[#allocation3 + $0x1d8] sm:$0xf] %v6426
        %6689 = vst [vmem:[#allocation3 + $0x1fc] sm:$0xf] %v6440
        %6690 = vst [vmem:[#allocation3 + $0x220] sm:$0xf] %v6450
        %6691 = vst [vmem:[#allocation3 + $0x244] sm:$0xf] %v6464
        %6692 = vst [vmem:[#allocation3 + $0x268] sm:$0xf] %v6474
        %6693 = vst [vmem:[#allocation3 + $0x28c] sm:$0xf] %v6488
        %6694 = vst [vmem:[#allocation3 + $0x2b0] sm:$0xf] %v6498
        %6695 = vst [vmem:[#allocation3 + $0x2d4] sm:$0xf] %v6512
        %6696 = vst [vmem:[#allocation3 + $0x2f8] sm:$0xf] %v6522
        %6697 = vst [vmem:[#allocation3 + $0x31c] sm:$0xf] %v6536
        %6698 = vst [vmem:[#allocation3 + $0x340] sm:$0xf] %v6546
        %6699 = vst [vmem:[#allocation3 + $0x364] sm:$0xf] %v6560
        %6700 = vst [vmem:[#allocation3 + $0x388] sm:$0xf] %v6570
        %6701 = vst [vmem:[#allocation3 + $0x3ac] sm:$0xf] %v6584
        %6702 = vst [vmem:[#allocation3 + $0x3d0] sm:$0xf] %v6594
        %6703 = vst [vmem:[#allocation3 + $0x3f4] sm:$0xf] %v6608
        %6704 = vst [vmem:[#allocation3 + $0x418] sm:$0xf] %v6618
        %6705 = vst [vmem:[#allocation3 + $0x43c] sm:$0xf] %v6632
        %6706 = vst [vmem:[#allocation3 + $0x460] sm:$0xf] %v6642
        %v6707 = vld [vmem:[#allocation2] sm:$0xe]
        %v6708 = vld [vmem:[#allocation2 + $0x4] sm:$0xf]
        %v6709 = vld [vmem:[#allocation2 + $0x8] sm:$0x1]
        %v6710 = vld [vmem:[#allocation2 + $0xc] sm:$0xe]
        %v6711 = vld [vmem:[#allocation2 + $0x10] sm:$0xf]
        %v6712 = vld [vmem:[#allocation2 + $0x14] sm:$0x1]
        %v6713 = vld [vmem:[#allocation2 + $0x18] sm:$0xe]
        %v6714 = vld [vmem:[#allocation2 + $0x1c] sm:$0xf]
        %v6715 = vld [vmem:[#allocation2 + $0x20] sm:$0x1]
        %v6716 = vld [vmem:[#allocation2 + $0x24] sm:$0xe]
        %v6717 = vld [vmem:[#allocation2 + $0x28] sm:$0xf]
        %v6718 = vld [vmem:[#allocation2 + $0x2c] sm:$0x1]
        %v6719 = vld [vmem:[#allocation2 + $0x30] sm:$0xe]
        %v6720 = vld [vmem:[#allocation2 + $0x34] sm:$0xf]
        %v6721 = vld [vmem:[#allocation2 + $0x38] sm:$0x1]
        %v6722 = vld [vmem:[#allocation2 + $0x3c] sm:$0xe]
        %v6723 = vld [vmem:[#allocation2 + $0x40] sm:$0xf]
        %v6724 = vld [vmem:[#allocation2 + $0x44] sm:$0x1]
        %v6725 = vld [vmem:[#allocation2 + $0x48] sm:$0xe]
        %v6726 = vld [vmem:[#allocation2 + $0x4c] sm:$0xf]
        %v6727 = vld [vmem:[#allocation2 + $0x50] sm:$0x1]
        %v6728 = vld [vmem:[#allocation2 + $0x54] sm:$0xe]
        %v6729 = vld [vmem:[#allocation2 + $0x58] sm:$0xf]
        %v6730 = vld [vmem:[#allocation2 + $0x5c] sm:$0x1]
        %v6731 = vld [vmem:[#allocation2 + $0x60] sm:$0xe]
        %v6732 = vld [vmem:[#allocation2 + $0x64] sm:$0xf]
        %v6733 = vld [vmem:[#allocation2 + $0x68] sm:$0x1]
        %v6734 = vld [vmem:[#allocation2 + $0x6c] sm:$0xe]
        %v6735 = vld [vmem:[#allocation2 + $0x70] sm:$0xf]
        %v6736 = vld [vmem:[#allocation2 + $0x74] sm:$0x1]
        %v6737 = vld [vmem:[#allocation2 + $0x78] sm:$0xe]
        %v6738 = vld [vmem:[#allocation2 + $0x7c] sm:$0xf]
        %v6739 = vld [vmem:[#allocation2 + $0x80] sm:$0x1]
        %v6740 = vld [vmem:[#allocation2 + $0x84] sm:$0xe]
        %v6741 = vld [vmem:[#allocation2 + $0x88] sm:$0xf]
        %v6742 = vld [vmem:[#allocation2 + $0x8c] sm:$0x1]
        %v6743 = vld [vmem:[#allocation2 + $0x90] sm:$0xe]
        %v6744 = vld [vmem:[#allocation2 + $0x94] sm:$0xf]
        %v6745 = vld [vmem:[#allocation2 + $0x98] sm:$0x1]
        %v6746 = vld [vmem:[#allocation2 + $0x9c] sm:$0xe]
        %v6747 = vld [vmem:[#allocation2 + $0xa0] sm:$0xf]
        %v6748 = vld [vmem:[#allocation2 + $0xa4] sm:$0x1]
        %v6749 = vld [vmem:[#allocation2 + $0xa8] sm:$0xe]
        %v6750 = vld [vmem:[#allocation2 + $0xac] sm:$0xf]
        %v6751 = vld [vmem:[#allocation2 + $0xb0] sm:$0x1]
        %v6752 = vld [vmem:[#allocation2 + $0xb4] sm:$0xe]
        %v6753 = vld [vmem:[#allocation2 + $0xb8] sm:$0xf]
        %v6754 = vld [vmem:[#allocation2 + $0xbc] sm:$0x1]
        %v6803 = vrot.slane %v6707, 5
        %v6804 = vrot.slane %v6803, 4
        %v6805 = vrot.slane %v6708, 5
        %v6806 = vsel %vm1461, %v6804, %v6805
        %v6807 = vrot.slane %v6805, 4
        %v6808 = vrot.slane %v6709, 5
        %v6809 = vsel %vm1461, %v6807, %v6808
        %v6810 = vrot.slane %v6710, 5
        %v6811 = vrot.slane %v6810, 4
        %v6812 = vrot.slane %v6711, 5
        %v6813 = vsel %vm1461, %v6811, %v6812
        %v6814 = vrot.slane %v6812, 4
        %v6815 = vrot.slane %v6712, 5
        %v6816 = vsel %vm1461, %v6814, %v6815
        %v6817 = vrot.slane %v6713, 5
        %v6818 = vrot.slane %v6817, 4
        %v6819 = vrot.slane %v6714, 5
        %v6820 = vsel %vm1461, %v6818, %v6819
        %v6821 = vrot.slane %v6819, 4
        %v6822 = vrot.slane %v6715, 5
        %v6823 = vsel %vm1461, %v6821, %v6822
        %v6824 = vrot.slane %v6716, 5
        %v6825 = vrot.slane %v6824, 4
        %v6826 = vrot.slane %v6717, 5
        %v6827 = vsel %vm1461, %v6825, %v6826
        %v6828 = vrot.slane %v6826, 4
        %v6829 = vrot.slane %v6718, 5
        %v6830 = vsel %vm1461, %v6828, %v6829
        %v6831 = vrot.slane %v6719, 5
        %v6832 = vrot.slane %v6831, 4
        %v6833 = vrot.slane %v6720, 5
        %v6834 = vsel %vm1461, %v6832, %v6833
        %v6835 = vrot.slane %v6833, 4
        %v6836 = vrot.slane %v6721, 5
        %v6837 = vsel %vm1461, %v6835, %v6836
        %v6838 = vrot.slane %v6722, 5
        %v6839 = vrot.slane %v6838, 4
        %v6840 = vrot.slane %v6723, 5
        %v6841 = vsel %vm1461, %v6839, %v6840
        %v6842 = vrot.slane %v6840, 4
        %v6843 = vrot.slane %v6724, 5
        %v6844 = vsel %vm1461, %v6842, %v6843
        %v6845 = vrot.slane %v6725, 5
        %v6846 = vrot.slane %v6845, 4
        %v6847 = vrot.slane %v6726, 5
        %v6848 = vsel %vm1461, %v6846, %v6847
        %v6849 = vrot.slane %v6847, 4
        %v6850 = vrot.slane %v6727, 5
        %v6851 = vsel %vm1461, %v6849, %v6850
        %v6852 = vrot.slane %v6728, 5
        %v6853 = vrot.slane %v6852, 4
        %v6854 = vrot.slane %v6729, 5
        %v6855 = vsel %vm1461, %v6853, %v6854
        %v6856 = vrot.slane %v6854, 4
        %v6857 = vrot.slane %v6730, 5
        %v6858 = vsel %vm1461, %v6856, %v6857
        %v6859 = vrot.slane %v6731, 5
        %v6860 = vrot.slane %v6859, 4
        %v6861 = vrot.slane %v6732, 5
        %v6862 = vsel %vm1461, %v6860, %v6861
        %v6863 = vrot.slane %v6861, 4
        %v6864 = vrot.slane %v6733, 5
        %v6865 = vsel %vm1461, %v6863, %v6864
        %v6866 = vrot.slane %v6734, 5
        %v6867 = vrot.slane %v6866, 4
        %v6868 = vrot.slane %v6735, 5
        %v6869 = vsel %vm1461, %v6867, %v6868
        %v6870 = vrot.slane %v6868, 4
        %v6871 = vrot.slane %v6736, 5
        %v6872 = vsel %vm1461, %v6870, %v6871
        %v6873 = vrot.slane %v6737, 5
        %v6874 = vrot.slane %v6873, 4
        %v6875 = vrot.slane %v6738, 5
        %v6876 = vsel %vm1461, %v6874, %v6875
        %v6877 = vrot.slane %v6875, 4
        %v6878 = vrot.slane %v6739, 5
        %v6879 = vsel %vm1461, %v6877, %v6878
        %v6880 = vrot.slane %v6740, 5
        %v6881 = vrot.slane %v6880, 4
        %v6882 = vrot.slane %v6741, 5
        %v6883 = vsel %vm1461, %v6881, %v6882
        %v6884 = vrot.slane %v6882, 4
        %v6885 = vrot.slane %v6742, 5
        %v6886 = vsel %vm1461, %v6884, %v6885
        %v6887 = vrot.slane %v6743, 5
        %v6888 = vrot.slane %v6887, 4
        %v6889 = vrot.slane %v6744, 5
        %v6890 = vsel %vm1461, %v6888, %v6889
        %v6891 = vrot.slane %v6889, 4
        %v6892 = vrot.slane %v6745, 5
        %v6893 = vsel %vm1461, %v6891, %v6892
        %v6894 = vrot.slane %v6746, 5
        %v6895 = vrot.slane %v6894, 4
        %v6896 = vrot.slane %v6747, 5
        %v6897 = vsel %vm1461, %v6895, %v6896
        %v6898 = vrot.slane %v6896, 4
        %v6899 = vrot.slane %v6748, 5
        %v6900 = vsel %vm1461, %v6898, %v6899
        %v6901 = vrot.slane %v6749, 5
        %v6902 = vrot.slane %v6901, 4
        %v6903 = vrot.slane %v6750, 5
        %v6904 = vsel %vm1461, %v6902, %v6903
        %v6905 = vrot.slane %v6903, 4
        %v6906 = vrot.slane %v6751, 5
        %v6907 = vsel %vm1461, %v6905, %v6906
        %v6908 = vrot.slane %v6752, 5
        %v6909 = vrot.slane %v6908, 4
        %v6910 = vrot.slane %v6753, 5
        %v6911 = vsel %vm1461, %v6909, %v6910
        %v6912 = vrot.slane %v6910, 4
        %v6913 = vrot.slane %v6754, 5
        %v6914 = vsel %vm1461, %v6912, %v6913
        %6947 = vst [vmem:[#allocation3 + $0x8] sm:$0xf] %v6806
        %6948 = vst [vmem:[#allocation3 + $0x2c] sm:$0xf] %v6809
        %6949 = vst [vmem:[#allocation3 + $0x50] sm:$0xf] %v6813
        %6950 = vst [vmem:[#allocation3 + $0x74] sm:$0xf] %v6816
        %6951 = vst [vmem:[#allocation3 + $0x98] sm:$0xf] %v6820
        %6952 = vst [vmem:[#allocation3 + $0xbc] sm:$0xf] %v6823
        %6953 = vst [vmem:[#allocation3 + $0xe0] sm:$0xf] %v6827
        %6954 = vst [vmem:[#allocation3 + $0x104] sm:$0xf] %v6830
        %6955 = vst [vmem:[#allocation3 + $0x128] sm:$0xf] %v6834
        %6956 = vst [vmem:[#allocation3 + $0x14c] sm:$0xf] %v6837
        %6957 = vst [vmem:[#allocation3 + $0x170] sm:$0xf] %v6841
        %6958 = vst [vmem:[#allocation3 + $0x194] sm:$0xf] %v6844
        %6959 = vst [vmem:[#allocation3 + $0x1b8] sm:$0xf] %v6848
        %6960 = vst [vmem:[#allocation3 + $0x1dc] sm:$0xf] %v6851
        %6961 = vst [vmem:[#allocation3 + $0x200] sm:$0xf] %v6855
        %6962 = vst [vmem:[#allocation3 + $0x224] sm:$0xf] %v6858
        %6963 = vst [vmem:[#allocation3 + $0x248] sm:$0xf] %v6862
        %6964 = vst [vmem:[#allocation3 + $0x26c] sm:$0xf] %v6865
        %6965 = vst [vmem:[#allocation3 + $0x290] sm:$0xf] %v6869
        %6966 = vst [vmem:[#allocation3 + $0x2b4] sm:$0xf] %v6872
        %6967 = vst [vmem:[#allocation3 + $0x2d8] sm:$0xf] %v6876
        %6968 = vst [vmem:[#allocation3 + $0x2fc] sm:$0xf] %v6879
        %6969 = vst [vmem:[#allocation3 + $0x320] sm:$0xf] %v6883
        %6970 = vst [vmem:[#allocation3 + $0x344] sm:$0xf] %v6886
        %6971 = vst [vmem:[#allocation3 + $0x368] sm:$0xf] %v6890
        %6972 = vst [vmem:[#allocation3 + $0x38c] sm:$0xf] %v6893
        %6973 = vst [vmem:[#allocation3 + $0x3b0] sm:$0xf] %v6897
        %6974 = vst [vmem:[#allocation3 + $0x3d4] sm:$0xf] %v6900
        %6975 = vst [vmem:[#allocation3 + $0x3f8] sm:$0xf] %v6904
        %6976 = vst [vmem:[#allocation3 + $0x41c] sm:$0xf] %v6907
        %6977 = vst [vmem:[#allocation3 + $0x440] sm:$0xf] %v6911
        %6978 = vst [vmem:[#allocation3 + $0x464] sm:$0xf] %v6914
        %v6979 = vld [vmem:[%s682] sm:$0xf]
        %v6980 = vld [vmem:[%s682 + $0x4] sm:$0xf]
        %v6981 = vld [vmem:[%s682 + $0xc] sm:$0xf]
        %v6982 = vld [vmem:[%s682 + $0x10] sm:$0xf]
        %v6983 = vld [vmem:[%s682 + $0x18] sm:$0xf]
        %v6984 = vld [vmem:[%s682 + $0x1c] sm:$0xf]
        %v6985 = vld [vmem:[%s682 + $0x24] sm:$0xf]
        %v6986 = vld [vmem:[%s682 + $0x28] sm:$0xf]
        %v6987 = vld [vmem:[%s682 + $0x30] sm:$0xf]
        %v6988 = vld [vmem:[%s682 + $0x34] sm:$0xf]
        %v6989 = vld [vmem:[%s682 + $0x3c] sm:$0xf]
        %v6990 = vld [vmem:[%s682 + $0x40] sm:$0xf]
        %v6991 = vld [vmem:[%s682 + $0x48] sm:$0xf]
        %v6992 = vld [vmem:[%s682 + $0x4c] sm:$0xf]
        %v6993 = vld [vmem:[%s682 + $0x54] sm:$0xf]
        %v6994 = vld [vmem:[%s682 + $0x58] sm:$0xf]
        %v6995 = vld [vmem:[%s682 + $0x60] sm:$0xf]
        %v6996 = vld [vmem:[%s682 + $0x64] sm:$0xf]
        %v6997 = vld [vmem:[%s682 + $0x6c] sm:$0xf]
        %v6998 = vld [vmem:[%s682 + $0x70] sm:$0xf]
        %v6999 = vld [vmem:[%s682 + $0x78] sm:$0xf]
        %v7000 = vld [vmem:[%s682 + $0x7c] sm:$0xf]
        %v7001 = vld [vmem:[%s682 + $0x84] sm:$0xf]
        %v7002 = vld [vmem:[%s682 + $0x88] sm:$0xf]
        %v7003 = vld [vmem:[%s682 + $0x90] sm:$0xf]
        %v7004 = vld [vmem:[%s682 + $0x94] sm:$0xf]
        %v7005 = vld [vmem:[%s682 + $0x9c] sm:$0xf]
        %v7006 = vld [vmem:[%s682 + $0xa0] sm:$0xf]
        %v7007 = vld [vmem:[%s682 + $0xa8] sm:$0xf]
        %v7008 = vld [vmem:[%s682 + $0xac] sm:$0xf]
        %v7009 = vld [vmem:[%s682 + $0xb4] sm:$0xf]
        %v7010 = vld [vmem:[%s682 + $0xb8] sm:$0xf]
        %7011 = vst [vmem:[#allocation3 + $0xc] sm:$0xf] %v6979
        %7012 = vst [vmem:[#allocation3 + $0x30] sm:$0xf] %v6980
        %7013 = vst [vmem:[#allocation3 + $0x54] sm:$0xf] %v6981
        %7014 = vst [vmem:[#allocation3 + $0x78] sm:$0xf] %v6982
        %7015 = vst [vmem:[#allocation3 + $0x9c] sm:$0xf] %v6983
        %7016 = vst [vmem:[#allocation3 + $0xc0] sm:$0xf] %v6984
        %7017 = vst [vmem:[#allocation3 + $0xe4] sm:$0xf] %v6985
        %7018 = vst [vmem:[#allocation3 + $0x108] sm:$0xf] %v6986
        %7019 = vst [vmem:[#allocation3 + $0x12c] sm:$0xf] %v6987
        %7020 = vst [vmem:[#allocation3 + $0x150] sm:$0xf] %v6988
        %7021 = vst [vmem:[#allocation3 + $0x174] sm:$0xf] %v6989
        %7022 = vst [vmem:[#allocation3 + $0x198] sm:$0xf] %v6990
        %7023 = vst [vmem:[#allocation3 + $0x1bc] sm:$0xf] %v6991
        %7024 = vst [vmem:[#allocation3 + $0x1e0] sm:$0xf] %v6992
        %7025 = vst [vmem:[#allocation3 + $0x204] sm:$0xf] %v6993
        %7026 = vst [vmem:[#allocation3 + $0x228] sm:$0xf] %v6994
        %7027 = vst [vmem:[#allocation3 + $0x24c] sm:$0xf] %v6995
        %7028 = vst [vmem:[#allocation3 + $0x270] sm:$0xf] %v6996
        %7029 = vst [vmem:[#allocation3 + $0x294] sm:$0xf] %v6997
        %7030 = vst [vmem:[#allocation3 + $0x2b8] sm:$0xf] %v6998
        %7031 = vst [vmem:[#allocation3 + $0x2dc] sm:$0xf] %v6999
        %7032 = vst [vmem:[#allocation3 + $0x300] sm:$0xf] %v7000
        %7033 = vst [vmem:[#allocation3 + $0x324] sm:$0xf] %v7001
        %7034 = vst [vmem:[#allocation3 + $0x348] sm:$0xf] %v7002
        %7035 = vst [vmem:[#allocation3 + $0x36c] sm:$0xf] %v7003
        %7036 = vst [vmem:[#allocation3 + $0x390] sm:$0xf] %v7004
        %7037 = vst [vmem:[#allocation3 + $0x3b4] sm:$0xf] %v7005
        %7038 = vst [vmem:[#allocation3 + $0x3d8] sm:$0xf] %v7006
        %7039 = vst [vmem:[#allocation3 + $0x3fc] sm:$0xf] %v7007
        %7040 = vst [vmem:[#allocation3 + $0x420] sm:$0xf] %v7008
        %7041 = vst [vmem:[#allocation3 + $0x444] sm:$0xf] %v7009
        %7042 = vst [vmem:[#allocation3 + $0x468] sm:$0xf] %v7010
        %v7043 = vld [vmem:[%s682] sm:$0xf]
        %v7044 = vld [vmem:[%s682 + $0x4] sm:$0xf]
        %v7045 = vld [vmem:[%s682 + $0x8] sm:$0x1]
        %v7046 = vld [vmem:[%s682 + $0xc] sm:$0xf]
        %v7047 = vld [vmem:[%s682 + $0x10] sm:$0xf]
        %v7048 = vld [vmem:[%s682 + $0x14] sm:$0x1]
        %v7049 = vld [vmem:[%s682 + $0x18] sm:$0xf]
        %v7050 = vld [vmem:[%s682 + $0x1c] sm:$0xf]
        %v7051 = vld [vmem:[%s682 + $0x20] sm:$0x1]
        %v7052 = vld [vmem:[%s682 + $0x24] sm:$0xf]
        %v7053 = vld [vmem:[%s682 + $0x28] sm:$0xf]
        %v7054 = vld [vmem:[%s682 + $0x2c] sm:$0x1]
        %v7055 = vld [vmem:[%s682 + $0x30] sm:$0xf]
        %v7056 = vld [vmem:[%s682 + $0x34] sm:$0xf]
        %v7057 = vld [vmem:[%s682 + $0x38] sm:$0x1]
        %v7058 = vld [vmem:[%s682 + $0x3c] sm:$0xf]
        %v7059 = vld [vmem:[%s682 + $0x40] sm:$0xf]
        %v7060 = vld [vmem:[%s682 + $0x44] sm:$0x1]
        %v7061 = vld [vmem:[%s682 + $0x48] sm:$0xf]
        %v7062 = vld [vmem:[%s682 + $0x4c] sm:$0xf]
        %v7063 = vld [vmem:[%s682 + $0x50] sm:$0x1]
        %v7064 = vld [vmem:[%s682 + $0x54] sm:$0xf]
        %v7065 = vld [vmem:[%s682 + $0x58] sm:$0xf]
        %v7066 = vld [vmem:[%s682 + $0x5c] sm:$0x1]
        %v7067 = vld [vmem:[%s682 + $0x60] sm:$0xf]
        %v7068 = vld [vmem:[%s682 + $0x64] sm:$0xf]
        %v7069 = vld [vmem:[%s682 + $0x68] sm:$0x1]
        %v7070 = vld [vmem:[%s682 + $0x6c] sm:$0xf]
        %v7071 = vld [vmem:[%s682 + $0x70] sm:$0xf]
        %v7072 = vld [vmem:[%s682 + $0x74] sm:$0x1]
        %v7073 = vld [vmem:[%s682 + $0x78] sm:$0xf]
        %v7074 = vld [vmem:[%s682 + $0x7c] sm:$0xf]
        %v7075 = vld [vmem:[%s682 + $0x80] sm:$0x1]
        %v7076 = vld [vmem:[%s682 + $0x84] sm:$0xf]
        %v7077 = vld [vmem:[%s682 + $0x88] sm:$0xf]
        %v7078 = vld [vmem:[%s682 + $0x8c] sm:$0x1]
        %v7079 = vld [vmem:[%s682 + $0x90] sm:$0xf]
        %v7080 = vld [vmem:[%s682 + $0x94] sm:$0xf]
        %v7081 = vld [vmem:[%s682 + $0x98] sm:$0x1]
        %v7082 = vld [vmem:[%s682 + $0x9c] sm:$0xf]
        %v7083 = vld [vmem:[%s682 + $0xa0] sm:$0xf]
        %v7084 = vld [vmem:[%s682 + $0xa4] sm:$0x1]
        %v7085 = vld [vmem:[%s682 + $0xa8] sm:$0xf]
        %v7086 = vld [vmem:[%s682 + $0xac] sm:$0xf]
        %v7087 = vld [vmem:[%s682 + $0xb0] sm:$0x1]
        %v7088 = vld [vmem:[%s682 + $0xb4] sm:$0xf]
        %v7089 = vld [vmem:[%s682 + $0xb8] sm:$0xf]
        %v7090 = vld [vmem:[%s682 + $0xbc] sm:$0x1]
        %v7092 = vshrl.u32 %v7043, 16
        %v7094 = vrot.slane %v7092, 4
        %v7095 = vshll.u32 %v7043, 16
        %v7097 = vrot.slane %v7095, 5
        %v7098 = vor.u32 %v7094, %v7097
        %v7099 = vrot.slane %v7098, 4
        %v7101 = vshll.u32 %v7044, 16
        %v7103 = vrot.slane %v7101, 5
        %v7104 = vsel %vm914, %v7099, %v7103
        %v7105 = vshrl.u32 %v7044, 16
        %v7107 = vrot.slane %v7105, 4
        %v7108 = vor.u32 %v7107, %v7103
        %v7109 = vrot.slane %v7108, 4
        %v7111 = vshll.u32 %v7045, 16
        %v7113 = vrot.slane %v7111, 5
        %v7114 = vsel %vm914, %v7109, %v7113
        %v7116 = vshrl.u32 %v7046, 16
        %v7118 = vrot.slane %v7116, 4
        %v7119 = vshll.u32 %v7046, 16
        %v7121 = vrot.slane %v7119, 5
        %v7122 = vor.u32 %v7118, %v7121
        %v7123 = vrot.slane %v7122, 4
        %v7125 = vshll.u32 %v7047, 16
        %v7127 = vrot.slane %v7125, 5
        %v7128 = vsel %vm914, %v7123, %v7127
        %v7129 = vshrl.u32 %v7047, 16
        %v7131 = vrot.slane %v7129, 4
        %v7132 = vor.u32 %v7131, %v7127
        %v7133 = vrot.slane %v7132, 4
        %v7135 = vshll.u32 %v7048, 16
        %v7137 = vrot.slane %v7135, 5
        %v7138 = vsel %vm914, %v7133, %v7137
        %v7140 = vshrl.u32 %v7049, 16
        %v7142 = vrot.slane %v7140, 4
        %v7143 = vshll.u32 %v7049, 16
        %v7145 = vrot.slane %v7143, 5
        %v7146 = vor.u32 %v7142, %v7145
        %v7147 = vrot.slane %v7146, 4
        %v7149 = vshll.u32 %v7050, 16
        %v7151 = vrot.slane %v7149, 5
        %v7152 = vsel %vm914, %v7147, %v7151
        %v7153 = vshrl.u32 %v7050, 16
        %v7155 = vrot.slane %v7153, 4
        %v7156 = vor.u32 %v7155, %v7151
        %v7157 = vrot.slane %v7156, 4
        %v7159 = vshll.u32 %v7051, 16
        %v7161 = vrot.slane %v7159, 5
        %v7162 = vsel %vm914, %v7157, %v7161
        %v7164 = vshrl.u32 %v7052, 16
        %v7166 = vrot.slane %v7164, 4
        %v7167 = vshll.u32 %v7052, 16
        %v7169 = vrot.slane %v7167, 5
        %v7170 = vor.u32 %v7166, %v7169
        %v7171 = vrot.slane %v7170, 4
        %v7173 = vshll.u32 %v7053, 16
        %v7175 = vrot.slane %v7173, 5
        %v7176 = vsel %vm914, %v7171, %v7175
        %v7177 = vshrl.u32 %v7053, 16
        %v7179 = vrot.slane %v7177, 4
        %v7180 = vor.u32 %v7179, %v7175
        %v7181 = vrot.slane %v7180, 4
        %v7183 = vshll.u32 %v7054, 16
        %v7185 = vrot.slane %v7183, 5
        %v7186 = vsel %vm914, %v7181, %v7185
        %v7188 = vshrl.u32 %v7055, 16
        %v7190 = vrot.slane %v7188, 4
        %v7191 = vshll.u32 %v7055, 16
        %v7193 = vrot.slane %v7191, 5
        %v7194 = vor.u32 %v7190, %v7193
        %v7195 = vrot.slane %v7194, 4
        %v7197 = vshll.u32 %v7056, 16
        %v7199 = vrot.slane %v7197, 5
        %v7200 = vsel %vm914, %v7195, %v7199
        %v7201 = vshrl.u32 %v7056, 16
        %v7203 = vrot.slane %v7201, 4
        %v7204 = vor.u32 %v7203, %v7199
        %v7205 = vrot.slane %v7204, 4
        %v7207 = vshll.u32 %v7057, 16
        %v7209 = vrot.slane %v7207, 5
        %v7210 = vsel %vm914, %v7205, %v7209
        %v7212 = vshrl.u32 %v7058, 16
        %v7214 = vrot.slane %v7212, 4
        %v7215 = vshll.u32 %v7058, 16
        %v7217 = vrot.slane %v7215, 5
        %v7218 = vor.u32 %v7214, %v7217
        %v7219 = vrot.slane %v7218, 4
        %v7221 = vshll.u32 %v7059, 16
        %v7223 = vrot.slane %v7221, 5
        %v7224 = vsel %vm914, %v7219, %v7223
        %v7225 = vshrl.u32 %v7059, 16
        %v7227 = vrot.slane %v7225, 4
        %v7228 = vor.u32 %v7227, %v7223
        %v7229 = vrot.slane %v7228, 4
        %v7231 = vshll.u32 %v7060, 16
        %v7233 = vrot.slane %v7231, 5
        %v7234 = vsel %vm914, %v7229, %v7233
        %v7236 = vshrl.u32 %v7061, 16
        %v7238 = vrot.slane %v7236, 4
        %v7239 = vshll.u32 %v7061, 16
        %v7241 = vrot.slane %v7239, 5
        %v7242 = vor.u32 %v7238, %v7241
        %v7243 = vrot.slane %v7242, 4
        %v7245 = vshll.u32 %v7062, 16
        %v7247 = vrot.slane %v7245, 5
        %v7248 = vsel %vm914, %v7243, %v7247
        %v7249 = vshrl.u32 %v7062, 16
        %v7251 = vrot.slane %v7249, 4
        %v7252 = vor.u32 %v7251, %v7247
        %v7253 = vrot.slane %v7252, 4
        %v7255 = vshll.u32 %v7063, 16
        %v7257 = vrot.slane %v7255, 5
        %v7258 = vsel %vm914, %v7253, %v7257
        %v7260 = vshrl.u32 %v7064, 16
        %v7262 = vrot.slane %v7260, 4
        %v7263 = vshll.u32 %v7064, 16
        %v7265 = vrot.slane %v7263, 5
        %v7266 = vor.u32 %v7262, %v7265
        %v7267 = vrot.slane %v7266, 4
        %v7269 = vshll.u32 %v7065, 16
        %v7271 = vrot.slane %v7269, 5
        %v7272 = vsel %vm914, %v7267, %v7271
        %v7273 = vshrl.u32 %v7065, 16
        %v7275 = vrot.slane %v7273, 4
        %v7276 = vor.u32 %v7275, %v7271
        %v7277 = vrot.slane %v7276, 4
        %v7279 = vshll.u32 %v7066, 16
        %v7281 = vrot.slane %v7279, 5
        %v7282 = vsel %vm914, %v7277, %v7281
        %v7284 = vshrl.u32 %v7067, 16
        %v7286 = vrot.slane %v7284, 4
        %v7287 = vshll.u32 %v7067, 16
        %v7289 = vrot.slane %v7287, 5
        %v7290 = vor.u32 %v7286, %v7289
        %v7291 = vrot.slane %v7290, 4
        %v7293 = vshll.u32 %v7068, 16
        %v7295 = vrot.slane %v7293, 5
        %v7296 = vsel %vm914, %v7291, %v7295
        %v7297 = vshrl.u32 %v7068, 16
        %v7299 = vrot.slane %v7297, 4
        %v7300 = vor.u32 %v7299, %v7295
        %v7301 = vrot.slane %v7300, 4
        %v7303 = vshll.u32 %v7069, 16
        %v7305 = vrot.slane %v7303, 5
        %v7306 = vsel %vm914, %v7301, %v7305
        %v7308 = vshrl.u32 %v7070, 16
        %v7310 = vrot.slane %v7308, 4
        %v7311 = vshll.u32 %v7070, 16
        %v7313 = vrot.slane %v7311, 5
        %v7314 = vor.u32 %v7310, %v7313
        %v7315 = vrot.slane %v7314, 4
        %v7317 = vshll.u32 %v7071, 16
        %v7319 = vrot.slane %v7317, 5
        %v7320 = vsel %vm914, %v7315, %v7319
        %v7321 = vshrl.u32 %v7071, 16
        %v7323 = vrot.slane %v7321, 4
        %v7324 = vor.u32 %v7323, %v7319
        %v7325 = vrot.slane %v7324, 4
        %v7327 = vshll.u32 %v7072, 16
        %v7329 = vrot.slane %v7327, 5
        %v7330 = vsel %vm914, %v7325, %v7329
        %v7332 = vshrl.u32 %v7073, 16
        %v7334 = vrot.slane %v7332, 4
        %v7335 = vshll.u32 %v7073, 16
        %v7337 = vrot.slane %v7335, 5
        %v7338 = vor.u32 %v7334, %v7337
        %v7339 = vrot.slane %v7338, 4
        %v7341 = vshll.u32 %v7074, 16
        %v7343 = vrot.slane %v7341, 5
        %v7344 = vsel %vm914, %v7339, %v7343
        %v7345 = vshrl.u32 %v7074, 16
        %v7347 = vrot.slane %v7345, 4
        %v7348 = vor.u32 %v7347, %v7343
        %v7349 = vrot.slane %v7348, 4
        %v7351 = vshll.u32 %v7075, 16
        %v7353 = vrot.slane %v7351, 5
        %v7354 = vsel %vm914, %v7349, %v7353
        %v7356 = vshrl.u32 %v7076, 16
        %v7358 = vrot.slane %v7356, 4
        %v7359 = vshll.u32 %v7076, 16
        %v7361 = vrot.slane %v7359, 5
        %v7362 = vor.u32 %v7358, %v7361
        %v7363 = vrot.slane %v7362, 4
        %v7365 = vshll.u32 %v7077, 16
        %v7367 = vrot.slane %v7365, 5
        %v7368 = vsel %vm914, %v7363, %v7367
        %v7369 = vshrl.u32 %v7077, 16
        %v7371 = vrot.slane %v7369, 4
        %v7372 = vor.u32 %v7371, %v7367
        %v7373 = vrot.slane %v7372, 4
        %v7375 = vshll.u32 %v7078, 16
        %v7377 = vrot.slane %v7375, 5
        %v7378 = vsel %vm914, %v7373, %v7377
        %v7380 = vshrl.u32 %v7079, 16
        %v7382 = vrot.slane %v7380, 4
        %v7383 = vshll.u32 %v7079, 16
        %v7385 = vrot.slane %v7383, 5
        %v7386 = vor.u32 %v7382, %v7385
        %v7387 = vrot.slane %v7386, 4
        %v7389 = vshll.u32 %v7080, 16
        %v7391 = vrot.slane %v7389, 5
        %v7392 = vsel %vm914, %v7387, %v7391
        %v7393 = vshrl.u32 %v7080, 16
        %v7395 = vrot.slane %v7393, 4
        %v7396 = vor.u32 %v7395, %v7391
        %v7397 = vrot.slane %v7396, 4
        %v7399 = vshll.u32 %v7081, 16
        %v7401 = vrot.slane %v7399, 5
        %v7402 = vsel %vm914, %v7397, %v7401
        %v7404 = vshrl.u32 %v7082, 16
        %v7406 = vrot.slane %v7404, 4
        %v7407 = vshll.u32 %v7082, 16
        %v7409 = vrot.slane %v7407, 5
        %v7410 = vor.u32 %v7406, %v7409
        %v7411 = vrot.slane %v7410, 4
        %v7413 = vshll.u32 %v7083, 16
        %v7415 = vrot.slane %v7413, 5
        %v7416 = vsel %vm914, %v7411, %v7415
        %v7417 = vshrl.u32 %v7083, 16
        %v7419 = vrot.slane %v7417, 4
        %v7420 = vor.u32 %v7419, %v7415
        %v7421 = vrot.slane %v7420, 4
        %v7423 = vshll.u32 %v7084, 16
        %v7425 = vrot.slane %v7423, 5
        %v7426 = vsel %vm914, %v7421, %v7425
        %v7428 = vshrl.u32 %v7085, 16
        %v7430 = vrot.slane %v7428, 4
        %v7431 = vshll.u32 %v7085, 16
        %v7433 = vrot.slane %v7431, 5
        %v7434 = vor.u32 %v7430, %v7433
        %v7435 = vrot.slane %v7434, 4
        %v7437 = vshll.u32 %v7086, 16
        %v7439 = vrot.slane %v7437, 5
        %v7440 = vsel %vm914, %v7435, %v7439
        %v7441 = vshrl.u32 %v7086, 16
        %v7443 = vrot.slane %v7441, 4
        %v7444 = vor.u32 %v7443, %v7439
        %v7445 = vrot.slane %v7444, 4
        %v7447 = vshll.u32 %v7087, 16
        %v7449 = vrot.slane %v7447, 5
        %v7450 = vsel %vm914, %v7445, %v7449
        %v7452 = vshrl.u32 %v7088, 16
        %v7454 = vrot.slane %v7452, 4
        %v7455 = vshll.u32 %v7088, 16
        %v7457 = vrot.slane %v7455, 5
        %v7458 = vor.u32 %v7454, %v7457
        %v7459 = vrot.slane %v7458, 4
        %v7461 = vshll.u32 %v7089, 16
        %v7463 = vrot.slane %v7461, 5
        %v7464 = vsel %vm914, %v7459, %v7463
        %v7465 = vshrl.u32 %v7089, 16
        %v7467 = vrot.slane %v7465, 4
        %v7468 = vor.u32 %v7467, %v7463
        %v7469 = vrot.slane %v7468, 4
        %v7471 = vshll.u32 %v7090, 16
        %v7473 = vrot.slane %v7471, 5
        %v7474 = vsel %vm914, %v7469, %v7473
        %7507 = vst [vmem:[#allocation3 + $0x10] sm:$0xf] %v7104
        %7508 = vst [vmem:[#allocation3 + $0x34] sm:$0xf] %v7114
        %7509 = vst [vmem:[#allocation3 + $0x58] sm:$0xf] %v7128
        %7510 = vst [vmem:[#allocation3 + $0x7c] sm:$0xf] %v7138
        %7511 = vst [vmem:[#allocation3 + $0xa0] sm:$0xf] %v7152
        %7512 = vst [vmem:[#allocation3 + $0xc4] sm:$0xf] %v7162
        %7513 = vst [vmem:[#allocation3 + $0xe8] sm:$0xf] %v7176
        %7514 = vst [vmem:[#allocation3 + $0x10c] sm:$0xf] %v7186
        %7515 = vst [vmem:[#allocation3 + $0x130] sm:$0xf] %v7200
        %7516 = vst [vmem:[#allocation3 + $0x154] sm:$0xf] %v7210
        %7517 = vst [vmem:[#allocation3 + $0x178] sm:$0xf] %v7224
        %7518 = vst [vmem:[#allocation3 + $0x19c] sm:$0xf] %v7234
        %7519 = vst [vmem:[#allocation3 + $0x1c0] sm:$0xf] %v7248
        %7520 = vst [vmem:[#allocation3 + $0x1e4] sm:$0xf] %v7258
        %7521 = vst [vmem:[#allocation3 + $0x208] sm:$0xf] %v7272
        %7522 = vst [vmem:[#allocation3 + $0x22c] sm:$0xf] %v7282
        %7523 = vst [vmem:[#allocation3 + $0x250] sm:$0xf] %v7296
        %7524 = vst [vmem:[#allocation3 + $0x274] sm:$0xf] %v7306
        %7525 = vst [vmem:[#allocation3 + $0x298] sm:$0xf] %v7320
        %7526 = vst [vmem:[#allocation3 + $0x2bc] sm:$0xf] %v7330
        %7527 = vst [vmem:[#allocation3 + $0x2e0] sm:$0xf] %v7344
        %7528 = vst [vmem:[#allocation3 + $0x304] sm:$0xf] %v7354
        %7529 = vst [vmem:[#allocation3 + $0x328] sm:$0xf] %v7368
        %7530 = vst [vmem:[#allocation3 + $0x34c] sm:$0xf] %v7378
        %7531 = vst [vmem:[#allocation3 + $0x370] sm:$0xf] %v7392
        %7532 = vst [vmem:[#allocation3 + $0x394] sm:$0xf] %v7402
        %7533 = vst [vmem:[#allocation3 + $0x3b8] sm:$0xf] %v7416
        %7534 = vst [vmem:[#allocation3 + $0x3dc] sm:$0xf] %v7426
        %7535 = vst [vmem:[#allocation3 + $0x400] sm:$0xf] %v7440
        %7536 = vst [vmem:[#allocation3 + $0x424] sm:$0xf] %v7450
        %7537 = vst [vmem:[#allocation3 + $0x448] sm:$0xf] %v7464
        %7538 = vst [vmem:[#allocation3 + $0x46c] sm:$0xf] %v7474
        %v7539 = vld [vmem:[%s682] sm:$0xe]
        %v7540 = vld [vmem:[%s682 + $0x4] sm:$0xf]
        %v7541 = vld [vmem:[%s682 + $0x8] sm:$0x1]
        %v7542 = vld [vmem:[%s682 + $0xc] sm:$0xe]
        %v7543 = vld [vmem:[%s682 + $0x10] sm:$0xf]
        %v7544 = vld [vmem:[%s682 + $0x14] sm:$0x1]
        %v7545 = vld [vmem:[%s682 + $0x18] sm:$0xe]
        %v7546 = vld [vmem:[%s682 + $0x1c] sm:$0xf]
        %v7547 = vld [vmem:[%s682 + $0x20] sm:$0x1]
        %v7548 = vld [vmem:[%s682 + $0x24] sm:$0xe]
        %v7549 = vld [vmem:[%s682 + $0x28] sm:$0xf]
        %v7550 = vld [vmem:[%s682 + $0x2c] sm:$0x1]
        %v7551 = vld [vmem:[%s682 + $0x30] sm:$0xe]
        %v7552 = vld [vmem:[%s682 + $0x34] sm:$0xf]
        %v7553 = vld [vmem:[%s682 + $0x38] sm:$0x1]
        %v7554 = vld [vmem:[%s682 + $0x3c] sm:$0xe]
        %v7555 = vld [vmem:[%s682 + $0x40] sm:$0xf]
        %v7556 = vld [vmem:[%s682 + $0x44] sm:$0x1]
        %v7557 = vld [vmem:[%s682 + $0x48] sm:$0xe]
        %v7558 = vld [vmem:[%s682 + $0x4c] sm:$0xf]
        %v7559 = vld [vmem:[%s682 + $0x50] sm:$0x1]
        %v7560 = vld [vmem:[%s682 + $0x54] sm:$0xe]
        %v7561 = vld [vmem:[%s682 + $0x58] sm:$0xf]
        %v7562 = vld [vmem:[%s682 + $0x5c] sm:$0x1]
        %v7563 = vld [vmem:[%s682 + $0x60] sm:$0xe]
        %v7564 = vld [vmem:[%s682 + $0x64] sm:$0xf]
        %v7565 = vld [vmem:[%s682 + $0x68] sm:$0x1]
        %v7566 = vld [vmem:[%s682 + $0x6c] sm:$0xe]
        %v7567 = vld [vmem:[%s682 + $0x70] sm:$0xf]
        %v7568 = vld [vmem:[%s682 + $0x74] sm:$0x1]
        %v7569 = vld [vmem:[%s682 + $0x78] sm:$0xe]
        %v7570 = vld [vmem:[%s682 + $0x7c] sm:$0xf]
        %v7571 = vld [vmem:[%s682 + $0x80] sm:$0x1]
        %v7572 = vld [vmem:[%s682 + $0x84] sm:$0xe]
        %v7573 = vld [vmem:[%s682 + $0x88] sm:$0xf]
        %v7574 = vld [vmem:[%s682 + $0x8c] sm:$0x1]
        %v7575 = vld [vmem:[%s682 + $0x90] sm:$0xe]
        %v7576 = vld [vmem:[%s682 + $0x94] sm:$0xf]
        %v7577 = vld [vmem:[%s682 + $0x98] sm:$0x1]
        %v7578 = vld [vmem:[%s682 + $0x9c] sm:$0xe]
        %v7579 = vld [vmem:[%s682 + $0xa0] sm:$0xf]
        %v7580 = vld [vmem:[%s682 + $0xa4] sm:$0x1]
        %v7581 = vld [vmem:[%s682 + $0xa8] sm:$0xe]
        %v7582 = vld [vmem:[%s682 + $0xac] sm:$0xf]
        %v7583 = vld [vmem:[%s682 + $0xb0] sm:$0x1]
        %v7584 = vld [vmem:[%s682 + $0xb4] sm:$0xe]
        %v7585 = vld [vmem:[%s682 + $0xb8] sm:$0xf]
        %v7586 = vld [vmem:[%s682 + $0xbc] sm:$0x1]
        %v7635 = vrot.slane %v7539, 5
        %v7636 = vrot.slane %v7635, 4
        %v7637 = vrot.slane %v7540, 5
        %v7638 = vsel %vm1461, %v7636, %v7637
        %v7639 = vrot.slane %v7637, 4
        %v7640 = vrot.slane %v7541, 5
        %v7641 = vsel %vm1461, %v7639, %v7640
        %v7642 = vrot.slane %v7542, 5
        %v7643 = vrot.slane %v7642, 4
        %v7644 = vrot.slane %v7543, 5
        %v7645 = vsel %vm1461, %v7643, %v7644
        %v7646 = vrot.slane %v7644, 4
        %v7647 = vrot.slane %v7544, 5
        %v7648 = vsel %vm1461, %v7646, %v7647
        %v7649 = vrot.slane %v7545, 5
        %v7650 = vrot.slane %v7649, 4
        %v7651 = vrot.slane %v7546, 5
        %v7652 = vsel %vm1461, %v7650, %v7651
        %v7653 = vrot.slane %v7651, 4
        %v7654 = vrot.slane %v7547, 5
        %v7655 = vsel %vm1461, %v7653, %v7654
        %v7656 = vrot.slane %v7548, 5
        %v7657 = vrot.slane %v7656, 4
        %v7658 = vrot.slane %v7549, 5
        %v7659 = vsel %vm1461, %v7657, %v7658
        %v7660 = vrot.slane %v7658, 4
        %v7661 = vrot.slane %v7550, 5
        %v7662 = vsel %vm1461, %v7660, %v7661
        %v7663 = vrot.slane %v7551, 5
        %v7664 = vrot.slane %v7663, 4
        %v7665 = vrot.slane %v7552, 5
        %v7666 = vsel %vm1461, %v7664, %v7665
        %v7667 = vrot.slane %v7665, 4
        %v7668 = vrot.slane %v7553, 5
        %v7669 = vsel %vm1461, %v7667, %v7668
        %v7670 = vrot.slane %v7554, 5
        %v7671 = vrot.slane %v7670, 4
        %v7672 = vrot.slane %v7555, 5
        %v7673 = vsel %vm1461, %v7671, %v7672
        %v7674 = vrot.slane %v7672, 4
        %v7675 = vrot.slane %v7556, 5
        %v7676 = vsel %vm1461, %v7674, %v7675
        %v7677 = vrot.slane %v7557, 5
        %v7678 = vrot.slane %v7677, 4
        %v7679 = vrot.slane %v7558, 5
        %v7680 = vsel %vm1461, %v7678, %v7679
        %v7681 = vrot.slane %v7679, 4
        %v7682 = vrot.slane %v7559, 5
        %v7683 = vsel %vm1461, %v7681, %v7682
        %v7684 = vrot.slane %v7560, 5
        %v7685 = vrot.slane %v7684, 4
        %v7686 = vrot.slane %v7561, 5
        %v7687 = vsel %vm1461, %v7685, %v7686
        %v7688 = vrot.slane %v7686, 4
        %v7689 = vrot.slane %v7562, 5
        %v7690 = vsel %vm1461, %v7688, %v7689
        %v7691 = vrot.slane %v7563, 5
        %v7692 = vrot.slane %v7691, 4
        %v7693 = vrot.slane %v7564, 5
        %v7694 = vsel %vm1461, %v7692, %v7693
        %v7695 = vrot.slane %v7693, 4
        %v7696 = vrot.slane %v7565, 5
        %v7697 = vsel %vm1461, %v7695, %v7696
        %v7698 = vrot.slane %v7566, 5
        %v7699 = vrot.slane %v7698, 4
        %v7700 = vrot.slane %v7567, 5
        %v7701 = vsel %vm1461, %v7699, %v7700
        %v7702 = vrot.slane %v7700, 4
        %v7703 = vrot.slane %v7568, 5
        %v7704 = vsel %vm1461, %v7702, %v7703
        %v7705 = vrot.slane %v7569, 5
        %v7706 = vrot.slane %v7705, 4
        %v7707 = vrot.slane %v7570, 5
        %v7708 = vsel %vm1461, %v7706, %v7707
        %v7709 = vrot.slane %v7707, 4
        %v7710 = vrot.slane %v7571, 5
        %v7711 = vsel %vm1461, %v7709, %v7710
        %v7712 = vrot.slane %v7572, 5
        %v7713 = vrot.slane %v7712, 4
        %v7714 = vrot.slane %v7573, 5
        %v7715 = vsel %vm1461, %v7713, %v7714
        %v7716 = vrot.slane %v7714, 4
        %v7717 = vrot.slane %v7574, 5
        %v7718 = vsel %vm1461, %v7716, %v7717
        %v7719 = vrot.slane %v7575, 5
        %v7720 = vrot.slane %v7719, 4
        %v7721 = vrot.slane %v7576, 5
        %v7722 = vsel %vm1461, %v7720, %v7721
        %v7723 = vrot.slane %v7721, 4
        %v7724 = vrot.slane %v7577, 5
        %v7725 = vsel %vm1461, %v7723, %v7724
        %v7726 = vrot.slane %v7578, 5
        %v7727 = vrot.slane %v7726, 4
        %v7728 = vrot.slane %v7579, 5
        %v7729 = vsel %vm1461, %v7727, %v7728
        %v7730 = vrot.slane %v7728, 4
        %v7731 = vrot.slane %v7580, 5
        %v7732 = vsel %vm1461, %v7730, %v7731
        %v7733 = vrot.slane %v7581, 5
        %v7734 = vrot.slane %v7733, 4
        %v7735 = vrot.slane %v7582, 5
        %v7736 = vsel %vm1461, %v7734, %v7735
        %v7737 = vrot.slane %v7735, 4
        %v7738 = vrot.slane %v7583, 5
        %v7739 = vsel %vm1461, %v7737, %v7738
        %v7740 = vrot.slane %v7584, 5
        %v7741 = vrot.slane %v7740, 4
        %v7742 = vrot.slane %v7585, 5
        %v7743 = vsel %vm1461, %v7741, %v7742
        %v7744 = vrot.slane %v7742, 4
        %v7745 = vrot.slane %v7586, 5
        %v7746 = vsel %vm1461, %v7744, %v7745
        %7779 = vst [vmem:[#allocation3 + $0x14] sm:$0xf] %v7638
        %7780 = vst [vmem:[#allocation3 + $0x38] sm:$0xf] %v7641
        %7781 = vst [vmem:[#allocation3 + $0x5c] sm:$0xf] %v7645
        %7782 = vst [vmem:[#allocation3 + $0x80] sm:$0xf] %v7648
        %7783 = vst [vmem:[#allocation3 + $0xa4] sm:$0xf] %v7652
        %7784 = vst [vmem:[#allocation3 + $0xc8] sm:$0xf] %v7655
        %7785 = vst [vmem:[#allocation3 + $0xec] sm:$0xf] %v7659
        %7786 = vst [vmem:[#allocation3 + $0x110] sm:$0xf] %v7662
        %7787 = vst [vmem:[#allocation3 + $0x134] sm:$0xf] %v7666
        %7788 = vst [vmem:[#allocation3 + $0x158] sm:$0xf] %v7669
        %7789 = vst [vmem:[#allocation3 + $0x17c] sm:$0xf] %v7673
        %7790 = vst [vmem:[#allocation3 + $0x1a0] sm:$0xf] %v7676
        %7791 = vst [vmem:[#allocation3 + $0x1c4] sm:$0xf] %v7680
        %7792 = vst [vmem:[#allocation3 + $0x1e8] sm:$0xf] %v7683
        %7793 = vst [vmem:[#allocation3 + $0x20c] sm:$0xf] %v7687
        %7794 = vst [vmem:[#allocation3 + $0x230] sm:$0xf] %v7690
        %7795 = vst [vmem:[#allocation3 + $0x254] sm:$0xf] %v7694
        %7796 = vst [vmem:[#allocation3 + $0x278] sm:$0xf] %v7697
        %7797 = vst [vmem:[#allocation3 + $0x29c] sm:$0xf] %v7701
        %7798 = vst [vmem:[#allocation3 + $0x2c0] sm:$0xf] %v7704
        %7799 = vst [vmem:[#allocation3 + $0x2e4] sm:$0xf] %v7708
        %7800 = vst [vmem:[#allocation3 + $0x308] sm:$0xf] %v7711
        %7801 = vst [vmem:[#allocation3 + $0x32c] sm:$0xf] %v7715
        %7802 = vst [vmem:[#allocation3 + $0x350] sm:$0xf] %v7718
        %7803 = vst [vmem:[#allocation3 + $0x374] sm:$0xf] %v7722
        %7804 = vst [vmem:[#allocation3 + $0x398] sm:$0xf] %v7725
        %7805 = vst [vmem:[#allocation3 + $0x3bc] sm:$0xf] %v7729
        %7806 = vst [vmem:[#allocation3 + $0x3e0] sm:$0xf] %v7732
        %7807 = vst [vmem:[#allocation3 + $0x404] sm:$0xf] %v7736
        %7808 = vst [vmem:[#allocation3 + $0x428] sm:$0xf] %v7739
        %7809 = vst [vmem:[#allocation3 + $0x44c] sm:$0xf] %v7743
        %7810 = vst [vmem:[#allocation3 + $0x470] sm:$0xf] %v7746
        %v7811 = vld [vmem:[%s2470] sm:$0xf]
        %v7812 = vld [vmem:[%s2470 + $0x4] sm:$0xf]
        %v7813 = vld [vmem:[%s2470 + $0xc] sm:$0xf]
        %v7814 = vld [vmem:[%s2470 + $0x10] sm:$0xf]
        %v7815 = vld [vmem:[%s2470 + $0x18] sm:$0xf]
        %v7816 = vld [vmem:[%s2470 + $0x1c] sm:$0xf]
        %v7817 = vld [vmem:[%s2470 + $0x24] sm:$0xf]
        %v7818 = vld [vmem:[%s2470 + $0x28] sm:$0xf]
        %v7819 = vld [vmem:[%s2470 + $0x30] sm:$0xf]
        %v7820 = vld [vmem:[%s2470 + $0x34] sm:$0xf]
        %v7821 = vld [vmem:[%s2470 + $0x3c] sm:$0xf]
        %v7822 = vld [vmem:[%s2470 + $0x40] sm:$0xf]
        %v7823 = vld [vmem:[%s2470 + $0x48] sm:$0xf]
        %v7824 = vld [vmem:[%s2470 + $0x4c] sm:$0xf]
        %v7825 = vld [vmem:[%s2470 + $0x54] sm:$0xf]
        %v7826 = vld [vmem:[%s2470 + $0x58] sm:$0xf]
        %v7827 = vld [vmem:[%s2470 + $0x60] sm:$0xf]
        %v7828 = vld [vmem:[%s2470 + $0x64] sm:$0xf]
        %v7829 = vld [vmem:[%s2470 + $0x6c] sm:$0xf]
        %v7830 = vld [vmem:[%s2470 + $0x70] sm:$0xf]
        %v7831 = vld [vmem:[%s2470 + $0x78] sm:$0xf]
        %v7832 = vld [vmem:[%s2470 + $0x7c] sm:$0xf]
        %v7833 = vld [vmem:[%s2470 + $0x84] sm:$0xf]
        %v7834 = vld [vmem:[%s2470 + $0x88] sm:$0xf]
        %v7835 = vld [vmem:[%s2470 + $0x90] sm:$0xf]
        %v7836 = vld [vmem:[%s2470 + $0x94] sm:$0xf]
        %v7837 = vld [vmem:[%s2470 + $0x9c] sm:$0xf]
        %v7838 = vld [vmem:[%s2470 + $0xa0] sm:$0xf]
        %v7839 = vld [vmem:[%s2470 + $0xa8] sm:$0xf]
        %v7840 = vld [vmem:[%s2470 + $0xac] sm:$0xf]
        %v7841 = vld [vmem:[%s2470 + $0xb4] sm:$0xf]
        %v7842 = vld [vmem:[%s2470 + $0xb8] sm:$0xf]
        %7843 = vst [vmem:[#allocation3 + $0x18] sm:$0xf] %v7811
        %7844 = vst [vmem:[#allocation3 + $0x3c] sm:$0xf] %v7812
        %7845 = vst [vmem:[#allocation3 + $0x60] sm:$0xf] %v7813
        %7846 = vst [vmem:[#allocation3 + $0x84] sm:$0xf] %v7814
        %7847 = vst [vmem:[#allocation3 + $0xa8] sm:$0xf] %v7815
        %7848 = vst [vmem:[#allocation3 + $0xcc] sm:$0xf] %v7816
        %7849 = vst [vmem:[#allocation3 + $0xf0] sm:$0xf] %v7817
        %7850 = vst [vmem:[#allocation3 + $0x114] sm:$0xf] %v7818
        %7851 = vst [vmem:[#allocation3 + $0x138] sm:$0xf] %v7819
        %7852 = vst [vmem:[#allocation3 + $0x15c] sm:$0xf] %v7820
        %7853 = vst [vmem:[#allocation3 + $0x180] sm:$0xf] %v7821
        %7854 = vst [vmem:[#allocation3 + $0x1a4] sm:$0xf] %v7822
        %7855 = vst [vmem:[#allocation3 + $0x1c8] sm:$0xf] %v7823
        %7856 = vst [vmem:[#allocation3 + $0x1ec] sm:$0xf] %v7824
        %7857 = vst [vmem:[#allocation3 + $0x210] sm:$0xf] %v7825
        %7858 = vst [vmem:[#allocation3 + $0x234] sm:$0xf] %v7826
        %7859 = vst [vmem:[#allocation3 + $0x258] sm:$0xf] %v7827
        %7860 = vst [vmem:[#allocation3 + $0x27c] sm:$0xf] %v7828
        %7861 = vst [vmem:[#allocation3 + $0x2a0] sm:$0xf] %v7829
        %7862 = vst [vmem:[#allocation3 + $0x2c4] sm:$0xf] %v7830
        %7863 = vst [vmem:[#allocation3 + $0x2e8] sm:$0xf] %v7831
        %7864 = vst [vmem:[#allocation3 + $0x30c] sm:$0xf] %v7832
        %7865 = vst [vmem:[#allocation3 + $0x330] sm:$0xf] %v7833
        %7866 = vst [vmem:[#allocation3 + $0x354] sm:$0xf] %v7834
        %7867 = vst [vmem:[#allocation3 + $0x378] sm:$0xf] %v7835
        %7868 = vst [vmem:[#allocation3 + $0x39c] sm:$0xf] %v7836
        %7869 = vst [vmem:[#allocation3 + $0x3c0] sm:$0xf] %v7837
        %7870 = vst [vmem:[#allocation3 + $0x3e4] sm:$0xf] %v7838
        %7871 = vst [vmem:[#allocation3 + $0x408] sm:$0xf] %v7839
        %7872 = vst [vmem:[#allocation3 + $0x42c] sm:$0xf] %v7840
        %7873 = vst [vmem:[#allocation3 + $0x450] sm:$0xf] %v7841
        %7874 = vst [vmem:[#allocation3 + $0x474] sm:$0xf] %v7842
        %v7875 = vld [vmem:[%s2470] sm:$0xf]
        %v7876 = vld [vmem:[%s2470 + $0x4] sm:$0xf]
        %v7877 = vld [vmem:[%s2470 + $0x8] sm:$0x1]
        %v7878 = vld [vmem:[%s2470 + $0xc] sm:$0xf]
        %v7879 = vld [vmem:[%s2470 + $0x10] sm:$0xf]
        %v7880 = vld [vmem:[%s2470 + $0x14] sm:$0x1]
        %v7881 = vld [vmem:[%s2470 + $0x18] sm:$0xf]
        %v7882 = vld [vmem:[%s2470 + $0x1c] sm:$0xf]
        %v7883 = vld [vmem:[%s2470 + $0x20] sm:$0x1]
        %v7884 = vld [vmem:[%s2470 + $0x24] sm:$0xf]
        %v7885 = vld [vmem:[%s2470 + $0x28] sm:$0xf]
        %v7886 = vld [vmem:[%s2470 + $0x2c] sm:$0x1]
        %v7887 = vld [vmem:[%s2470 + $0x30] sm:$0xf]
        %v7888 = vld [vmem:[%s2470 + $0x34] sm:$0xf]
        %v7889 = vld [vmem:[%s2470 + $0x38] sm:$0x1]
        %v7890 = vld [vmem:[%s2470 + $0x3c] sm:$0xf]
        %v7891 = vld [vmem:[%s2470 + $0x40] sm:$0xf]
        %v7892 = vld [vmem:[%s2470 + $0x44] sm:$0x1]
        %v7893 = vld [vmem:[%s2470 + $0x48] sm:$0xf]
        %v7894 = vld [vmem:[%s2470 + $0x4c] sm:$0xf]
        %v7895 = vld [vmem:[%s2470 + $0x50] sm:$0x1]
        %v7896 = vld [vmem:[%s2470 + $0x54] sm:$0xf]
        %v7897 = vld [vmem:[%s2470 + $0x58] sm:$0xf]
        %v7898 = vld [vmem:[%s2470 + $0x5c] sm:$0x1]
        %v7899 = vld [vmem:[%s2470 + $0x60] sm:$0xf]
        %v7900 = vld [vmem:[%s2470 + $0x64] sm:$0xf]
        %v7901 = vld [vmem:[%s2470 + $0x68] sm:$0x1]
        %v7902 = vld [vmem:[%s2470 + $0x6c] sm:$0xf]
        %v7903 = vld [vmem:[%s2470 + $0x70] sm:$0xf]
        %v7904 = vld [vmem:[%s2470 + $0x74] sm:$0x1]
        %v7905 = vld [vmem:[%s2470 + $0x78] sm:$0xf]
        %v7906 = vld [vmem:[%s2470 + $0x7c] sm:$0xf]
        %v7907 = vld [vmem:[%s2470 + $0x80] sm:$0x1]
        %v7908 = vld [vmem:[%s2470 + $0x84] sm:$0xf]
        %v7909 = vld [vmem:[%s2470 + $0x88] sm:$0xf]
        %v7910 = vld [vmem:[%s2470 + $0x8c] sm:$0x1]
        %v7911 = vld [vmem:[%s2470 + $0x90] sm:$0xf]
        %v7912 = vld [vmem:[%s2470 + $0x94] sm:$0xf]
        %v7913 = vld [vmem:[%s2470 + $0x98] sm:$0x1]
        %v7914 = vld [vmem:[%s2470 + $0x9c] sm:$0xf]
        %v7915 = vld [vmem:[%s2470 + $0xa0] sm:$0xf]
        %v7916 = vld [vmem:[%s2470 + $0xa4] sm:$0x1]
        %v7917 = vld [vmem:[%s2470 + $0xa8] sm:$0xf]
        %v7918 = vld [vmem:[%s2470 + $0xac] sm:$0xf]
        %v7919 = vld [vmem:[%s2470 + $0xb0] sm:$0x1]
        %v7920 = vld [vmem:[%s2470 + $0xb4] sm:$0xf]
        %v7921 = vld [vmem:[%s2470 + $0xb8] sm:$0xf]
        %v7922 = vld [vmem:[%s2470 + $0xbc] sm:$0x1]
        %v7924 = vshrl.u32 %v7875, 16
        %v7926 = vrot.slane %v7924, 4
        %v7927 = vshll.u32 %v7875, 16
        %v7929 = vrot.slane %v7927, 5
        %v7930 = vor.u32 %v7926, %v7929
        %v7931 = vrot.slane %v7930, 4
        %v7933 = vshll.u32 %v7876, 16
        %v7935 = vrot.slane %v7933, 5
        %v7936 = vsel %vm914, %v7931, %v7935
        %v7937 = vshrl.u32 %v7876, 16
        %v7939 = vrot.slane %v7937, 4
        %v7940 = vor.u32 %v7939, %v7935
        %v7941 = vrot.slane %v7940, 4
        %v7943 = vshll.u32 %v7877, 16
        %v7945 = vrot.slane %v7943, 5
        %v7946 = vsel %vm914, %v7941, %v7945
        %v7948 = vshrl.u32 %v7878, 16
        %v7950 = vrot.slane %v7948, 4
        %v7951 = vshll.u32 %v7878, 16
        %v7953 = vrot.slane %v7951, 5
        %v7954 = vor.u32 %v7950, %v7953
        %v7955 = vrot.slane %v7954, 4
        %v7957 = vshll.u32 %v7879, 16
        %v7959 = vrot.slane %v7957, 5
        %v7960 = vsel %vm914, %v7955, %v7959
        %v7961 = vshrl.u32 %v7879, 16
        %v7963 = vrot.slane %v7961, 4
        %v7964 = vor.u32 %v7963, %v7959
        %v7965 = vrot.slane %v7964, 4
        %v7967 = vshll.u32 %v7880, 16
        %v7969 = vrot.slane %v7967, 5
        %v7970 = vsel %vm914, %v7965, %v7969
        %v7972 = vshrl.u32 %v7881, 16
        %v7974 = vrot.slane %v7972, 4
        %v7975 = vshll.u32 %v7881, 16
        %v7977 = vrot.slane %v7975, 5
        %v7978 = vor.u32 %v7974, %v7977
        %v7979 = vrot.slane %v7978, 4
        %v7981 = vshll.u32 %v7882, 16
        %v7983 = vrot.slane %v7981, 5
        %v7984 = vsel %vm914, %v7979, %v7983
        %v7985 = vshrl.u32 %v7882, 16
        %v7987 = vrot.slane %v7985, 4
        %v7988 = vor.u32 %v7987, %v7983
        %v7989 = vrot.slane %v7988, 4
        %v7991 = vshll.u32 %v7883, 16
        %v7993 = vrot.slane %v7991, 5
        %v7994 = vsel %vm914, %v7989, %v7993
        %v7996 = vshrl.u32 %v7884, 16
        %v7998 = vrot.slane %v7996, 4
        %v7999 = vshll.u32 %v7884, 16
        %v8001 = vrot.slane %v7999, 5
        %v8002 = vor.u32 %v7998, %v8001
        %v8003 = vrot.slane %v8002, 4
        %v8005 = vshll.u32 %v7885, 16
        %v8007 = vrot.slane %v8005, 5
        %v8008 = vsel %vm914, %v8003, %v8007
        %v8009 = vshrl.u32 %v7885, 16
        %v8011 = vrot.slane %v8009, 4
        %v8012 = vor.u32 %v8011, %v8007
        %v8013 = vrot.slane %v8012, 4
        %v8015 = vshll.u32 %v7886, 16
        %v8017 = vrot.slane %v8015, 5
        %v8018 = vsel %vm914, %v8013, %v8017
        %v8020 = vshrl.u32 %v7887, 16
        %v8022 = vrot.slane %v8020, 4
        %v8023 = vshll.u32 %v7887, 16
        %v8025 = vrot.slane %v8023, 5
        %v8026 = vor.u32 %v8022, %v8025
        %v8027 = vrot.slane %v8026, 4
        %v8029 = vshll.u32 %v7888, 16
        %v8031 = vrot.slane %v8029, 5
        %v8032 = vsel %vm914, %v8027, %v8031
        %v8033 = vshrl.u32 %v7888, 16
        %v8035 = vrot.slane %v8033, 4
        %v8036 = vor.u32 %v8035, %v8031
        %v8037 = vrot.slane %v8036, 4
        %v8039 = vshll.u32 %v7889, 16
        %v8041 = vrot.slane %v8039, 5
        %v8042 = vsel %vm914, %v8037, %v8041
        %v8044 = vshrl.u32 %v7890, 16
        %v8046 = vrot.slane %v8044, 4
        %v8047 = vshll.u32 %v7890, 16
        %v8049 = vrot.slane %v8047, 5
        %v8050 = vor.u32 %v8046, %v8049
        %v8051 = vrot.slane %v8050, 4
        %v8053 = vshll.u32 %v7891, 16
        %v8055 = vrot.slane %v8053, 5
        %v8056 = vsel %vm914, %v8051, %v8055
        %v8057 = vshrl.u32 %v7891, 16
        %v8059 = vrot.slane %v8057, 4
        %v8060 = vor.u32 %v8059, %v8055
        %v8061 = vrot.slane %v8060, 4
        %v8063 = vshll.u32 %v7892, 16
        %v8065 = vrot.slane %v8063, 5
        %v8066 = vsel %vm914, %v8061, %v8065
        %v8068 = vshrl.u32 %v7893, 16
        %v8070 = vrot.slane %v8068, 4
        %v8071 = vshll.u32 %v7893, 16
        %v8073 = vrot.slane %v8071, 5
        %v8074 = vor.u32 %v8070, %v8073
        %v8075 = vrot.slane %v8074, 4
        %v8077 = vshll.u32 %v7894, 16
        %v8079 = vrot.slane %v8077, 5
        %v8080 = vsel %vm914, %v8075, %v8079
        %v8081 = vshrl.u32 %v7894, 16
        %v8083 = vrot.slane %v8081, 4
        %v8084 = vor.u32 %v8083, %v8079
        %v8085 = vrot.slane %v8084, 4
        %v8087 = vshll.u32 %v7895, 16
        %v8089 = vrot.slane %v8087, 5
        %v8090 = vsel %vm914, %v8085, %v8089
        %v8092 = vshrl.u32 %v7896, 16
        %v8094 = vrot.slane %v8092, 4
        %v8095 = vshll.u32 %v7896, 16
        %v8097 = vrot.slane %v8095, 5
        %v8098 = vor.u32 %v8094, %v8097
        %v8099 = vrot.slane %v8098, 4
        %v8101 = vshll.u32 %v7897, 16
        %v8103 = vrot.slane %v8101, 5
        %v8104 = vsel %vm914, %v8099, %v8103
        %v8105 = vshrl.u32 %v7897, 16
        %v8107 = vrot.slane %v8105, 4
        %v8108 = vor.u32 %v8107, %v8103
        %v8109 = vrot.slane %v8108, 4
        %v8111 = vshll.u32 %v7898, 16
        %v8113 = vrot.slane %v8111, 5
        %v8114 = vsel %vm914, %v8109, %v8113
        %v8116 = vshrl.u32 %v7899, 16
        %v8118 = vrot.slane %v8116, 4
        %v8119 = vshll.u32 %v7899, 16
        %v8121 = vrot.slane %v8119, 5
        %v8122 = vor.u32 %v8118, %v8121
        %v8123 = vrot.slane %v8122, 4
        %v8125 = vshll.u32 %v7900, 16
        %v8127 = vrot.slane %v8125, 5
        %v8128 = vsel %vm914, %v8123, %v8127
        %v8129 = vshrl.u32 %v7900, 16
        %v8131 = vrot.slane %v8129, 4
        %v8132 = vor.u32 %v8131, %v8127
        %v8133 = vrot.slane %v8132, 4
        %v8135 = vshll.u32 %v7901, 16
        %v8137 = vrot.slane %v8135, 5
        %v8138 = vsel %vm914, %v8133, %v8137
        %v8140 = vshrl.u32 %v7902, 16
        %v8142 = vrot.slane %v8140, 4
        %v8143 = vshll.u32 %v7902, 16
        %v8145 = vrot.slane %v8143, 5
        %v8146 = vor.u32 %v8142, %v8145
        %v8147 = vrot.slane %v8146, 4
        %v8149 = vshll.u32 %v7903, 16
        %v8151 = vrot.slane %v8149, 5
        %v8152 = vsel %vm914, %v8147, %v8151
        %v8153 = vshrl.u32 %v7903, 16
        %v8155 = vrot.slane %v8153, 4
        %v8156 = vor.u32 %v8155, %v8151
        %v8157 = vrot.slane %v8156, 4
        %v8159 = vshll.u32 %v7904, 16
        %v8161 = vrot.slane %v8159, 5
        %v8162 = vsel %vm914, %v8157, %v8161
        %v8164 = vshrl.u32 %v7905, 16
        %v8166 = vrot.slane %v8164, 4
        %v8167 = vshll.u32 %v7905, 16
        %v8169 = vrot.slane %v8167, 5
        %v8170 = vor.u32 %v8166, %v8169
        %v8171 = vrot.slane %v8170, 4
        %v8173 = vshll.u32 %v7906, 16
        %v8175 = vrot.slane %v8173, 5
        %v8176 = vsel %vm914, %v8171, %v8175
        %v8177 = vshrl.u32 %v7906, 16
        %v8179 = vrot.slane %v8177, 4
        %v8180 = vor.u32 %v8179, %v8175
        %v8181 = vrot.slane %v8180, 4
        %v8183 = vshll.u32 %v7907, 16
        %v8185 = vrot.slane %v8183, 5
        %v8186 = vsel %vm914, %v8181, %v8185
        %v8188 = vshrl.u32 %v7908, 16
        %v8190 = vrot.slane %v8188, 4
        %v8191 = vshll.u32 %v7908, 16
        %v8193 = vrot.slane %v8191, 5
        %v8194 = vor.u32 %v8190, %v8193
        %v8195 = vrot.slane %v8194, 4
        %v8197 = vshll.u32 %v7909, 16
        %v8199 = vrot.slane %v8197, 5
        %v8200 = vsel %vm914, %v8195, %v8199
        %v8201 = vshrl.u32 %v7909, 16
        %v8203 = vrot.slane %v8201, 4
        %v8204 = vor.u32 %v8203, %v8199
        %v8205 = vrot.slane %v8204, 4
        %v8207 = vshll.u32 %v7910, 16
        %v8209 = vrot.slane %v8207, 5
        %v8210 = vsel %vm914, %v8205, %v8209
        %v8212 = vshrl.u32 %v7911, 16
        %v8214 = vrot.slane %v8212, 4
        %v8215 = vshll.u32 %v7911, 16
        %v8217 = vrot.slane %v8215, 5
        %v8218 = vor.u32 %v8214, %v8217
        %v8219 = vrot.slane %v8218, 4
        %v8221 = vshll.u32 %v7912, 16
        %v8223 = vrot.slane %v8221, 5
        %v8224 = vsel %vm914, %v8219, %v8223
        %v8225 = vshrl.u32 %v7912, 16
        %v8227 = vrot.slane %v8225, 4
        %v8228 = vor.u32 %v8227, %v8223
        %v8229 = vrot.slane %v8228, 4
        %v8231 = vshll.u32 %v7913, 16
        %v8233 = vrot.slane %v8231, 5
        %v8234 = vsel %vm914, %v8229, %v8233
        %v8236 = vshrl.u32 %v7914, 16
        %v8238 = vrot.slane %v8236, 4
        %v8239 = vshll.u32 %v7914, 16
        %v8241 = vrot.slane %v8239, 5
        %v8242 = vor.u32 %v8238, %v8241
        %v8243 = vrot.slane %v8242, 4
        %v8245 = vshll.u32 %v7915, 16
        %v8247 = vrot.slane %v8245, 5
        %v8248 = vsel %vm914, %v8243, %v8247
        %v8249 = vshrl.u32 %v7915, 16
        %v8251 = vrot.slane %v8249, 4
        %v8252 = vor.u32 %v8251, %v8247
        %v8253 = vrot.slane %v8252, 4
        %v8255 = vshll.u32 %v7916, 16
        %v8257 = vrot.slane %v8255, 5
        %v8258 = vsel %vm914, %v8253, %v8257
        %v8260 = vshrl.u32 %v7917, 16
        %v8262 = vrot.slane %v8260, 4
        %v8263 = vshll.u32 %v7917, 16
        %v8265 = vrot.slane %v8263, 5
        %v8266 = vor.u32 %v8262, %v8265
        %v8267 = vrot.slane %v8266, 4
        %v8269 = vshll.u32 %v7918, 16
        %v8271 = vrot.slane %v8269, 5
        %v8272 = vsel %vm914, %v8267, %v8271
        %v8273 = vshrl.u32 %v7918, 16
        %v8275 = vrot.slane %v8273, 4
        %v8276 = vor.u32 %v8275, %v8271
        %v8277 = vrot.slane %v8276, 4
        %v8279 = vshll.u32 %v7919, 16
        %v8281 = vrot.slane %v8279, 5
        %v8282 = vsel %vm914, %v8277, %v8281
        %v8284 = vshrl.u32 %v7920, 16
        %v8286 = vrot.slane %v8284, 4
        %v8287 = vshll.u32 %v7920, 16
        %v8289 = vrot.slane %v8287, 5
        %v8290 = vor.u32 %v8286, %v8289
        %v8291 = vrot.slane %v8290, 4
        %v8293 = vshll.u32 %v7921, 16
        %v8295 = vrot.slane %v8293, 5
        %v8296 = vsel %vm914, %v8291, %v8295
        %v8297 = vshrl.u32 %v7921, 16
        %v8299 = vrot.slane %v8297, 4
        %v8300 = vor.u32 %v8299, %v8295
        %v8301 = vrot.slane %v8300, 4
        %v8303 = vshll.u32 %v7922, 16
        %v8305 = vrot.slane %v8303, 5
        %v8306 = vsel %vm914, %v8301, %v8305
        %8339 = vst [vmem:[#allocation3 + $0x1c] sm:$0xf] %v7936
        %8340 = vst [vmem:[#allocation3 + $0x40] sm:$0xf] %v7946
        %8341 = vst [vmem:[#allocation3 + $0x64] sm:$0xf] %v7960
        %8342 = vst [vmem:[#allocation3 + $0x88] sm:$0xf] %v7970
        %8343 = vst [vmem:[#allocation3 + $0xac] sm:$0xf] %v7984
        %8344 = vst [vmem:[#allocation3 + $0xd0] sm:$0xf] %v7994
        %8345 = vst [vmem:[#allocation3 + $0xf4] sm:$0xf] %v8008
        %8346 = vst [vmem:[#allocation3 + $0x118] sm:$0xf] %v8018
        %8347 = vst [vmem:[#allocation3 + $0x13c] sm:$0xf] %v8032
        %8348 = vst [vmem:[#allocation3 + $0x160] sm:$0xf] %v8042
        %8349 = vst [vmem:[#allocation3 + $0x184] sm:$0xf] %v8056
        %8350 = vst [vmem:[#allocation3 + $0x1a8] sm:$0xf] %v8066
        %8351 = vst [vmem:[#allocation3 + $0x1cc] sm:$0xf] %v8080
        %8352 = vst [vmem:[#allocation3 + $0x1f0] sm:$0xf] %v8090
        %8353 = vst [vmem:[#allocation3 + $0x214] sm:$0xf] %v8104
        %8354 = vst [vmem:[#allocation3 + $0x238] sm:$0xf] %v8114
        %8355 = vst [vmem:[#allocation3 + $0x25c] sm:$0xf] %v8128
        %8356 = vst [vmem:[#allocation3 + $0x280] sm:$0xf] %v8138
        %8357 = vst [vmem:[#allocation3 + $0x2a4] sm:$0xf] %v8152
        %8358 = vst [vmem:[#allocation3 + $0x2c8] sm:$0xf] %v8162
        %8359 = vst [vmem:[#allocation3 + $0x2ec] sm:$0xf] %v8176
        %8360 = vst [vmem:[#allocation3 + $0x310] sm:$0xf] %v8186
        %8361 = vst [vmem:[#allocation3 + $0x334] sm:$0xf] %v8200
        %8362 = vst [vmem:[#allocation3 + $0x358] sm:$0xf] %v8210
        %8363 = vst [vmem:[#allocation3 + $0x37c] sm:$0xf] %v8224
        %8364 = vst [vmem:[#allocation3 + $0x3a0] sm:$0xf] %v8234
        %8365 = vst [vmem:[#allocation3 + $0x3c4] sm:$0xf] %v8248
        %8366 = vst [vmem:[#allocation3 + $0x3e8] sm:$0xf] %v8258
        %8367 = vst [vmem:[#allocation3 + $0x40c] sm:$0xf] %v8272
        %8368 = vst [vmem:[#allocation3 + $0x430] sm:$0xf] %v8282
        %8369 = vst [vmem:[#allocation3 + $0x454] sm:$0xf] %v8296
        %8370 = vst [vmem:[#allocation3 + $0x478] sm:$0xf] %v8306
        %v8371 = vld [vmem:[%s2470] sm:$0xe]
        %v8372 = vld [vmem:[%s2470 + $0x4] sm:$0xf]
        %v8373 = vld [vmem:[%s2470 + $0x8] sm:$0x1]
        %v8374 = vld [vmem:[%s2470 + $0xc] sm:$0xe]
        %v8375 = vld [vmem:[%s2470 + $0x10] sm:$0xf]
        %v8376 = vld [vmem:[%s2470 + $0x14] sm:$0x1]
        %v8377 = vld [vmem:[%s2470 + $0x18] sm:$0xe]
        %v8378 = vld [vmem:[%s2470 + $0x1c] sm:$0xf]
        %v8379 = vld [vmem:[%s2470 + $0x20] sm:$0x1]
        %v8380 = vld [vmem:[%s2470 + $0x24] sm:$0xe]
        %v8381 = vld [vmem:[%s2470 + $0x28] sm:$0xf]
        %v8382 = vld [vmem:[%s2470 + $0x2c] sm:$0x1]
        %v8383 = vld [vmem:[%s2470 + $0x30] sm:$0xe]
        %v8384 = vld [vmem:[%s2470 + $0x34] sm:$0xf]
        %v8385 = vld [vmem:[%s2470 + $0x38] sm:$0x1]
        %v8386 = vld [vmem:[%s2470 + $0x3c] sm:$0xe]
        %v8387 = vld [vmem:[%s2470 + $0x40] sm:$0xf]
        %v8388 = vld [vmem:[%s2470 + $0x44] sm:$0x1]
        %v8389 = vld [vmem:[%s2470 + $0x48] sm:$0xe]
        %v8390 = vld [vmem:[%s2470 + $0x4c] sm:$0xf]
        %v8391 = vld [vmem:[%s2470 + $0x50] sm:$0x1]
        %v8392 = vld [vmem:[%s2470 + $0x54] sm:$0xe]
        %v8393 = vld [vmem:[%s2470 + $0x58] sm:$0xf]
        %v8394 = vld [vmem:[%s2470 + $0x5c] sm:$0x1]
        %v8395 = vld [vmem:[%s2470 + $0x60] sm:$0xe]
        %v8396 = vld [vmem:[%s2470 + $0x64] sm:$0xf]
        %v8397 = vld [vmem:[%s2470 + $0x68] sm:$0x1]
        %v8398 = vld [vmem:[%s2470 + $0x6c] sm:$0xe]
        %v8399 = vld [vmem:[%s2470 + $0x70] sm:$0xf]
        %v8400 = vld [vmem:[%s2470 + $0x74] sm:$0x1]
        %v8401 = vld [vmem:[%s2470 + $0x78] sm:$0xe]
        %v8402 = vld [vmem:[%s2470 + $0x7c] sm:$0xf]
        %v8403 = vld [vmem:[%s2470 + $0x80] sm:$0x1]
        %v8404 = vld [vmem:[%s2470 + $0x84] sm:$0xe]
        %v8405 = vld [vmem:[%s2470 + $0x88] sm:$0xf]
        %v8406 = vld [vmem:[%s2470 + $0x8c] sm:$0x1]
        %v8407 = vld [vmem:[%s2470 + $0x90] sm:$0xe]
        %v8408 = vld [vmem:[%s2470 + $0x94] sm:$0xf]
        %v8409 = vld [vmem:[%s2470 + $0x98] sm:$0x1]
        %v8410 = vld [vmem:[%s2470 + $0x9c] sm:$0xe]
        %v8411 = vld [vmem:[%s2470 + $0xa0] sm:$0xf]
        %v8412 = vld [vmem:[%s2470 + $0xa4] sm:$0x1]
        %v8413 = vld [vmem:[%s2470 + $0xa8] sm:$0xe]
        %v8414 = vld [vmem:[%s2470 + $0xac] sm:$0xf]
        %v8415 = vld [vmem:[%s2470 + $0xb0] sm:$0x1]
        %v8416 = vld [vmem:[%s2470 + $0xb4] sm:$0xe]
        %v8417 = vld [vmem:[%s2470 + $0xb8] sm:$0xf]
        %v8418 = vld [vmem:[%s2470 + $0xbc] sm:$0x1]
        %v8467 = vrot.slane %v8371, 5
        %v8468 = vrot.slane %v8467, 4
        %v8469 = vrot.slane %v8372, 5
        %v8470 = vsel %vm1461, %v8468, %v8469
        %v8471 = vrot.slane %v8469, 4
        %v8472 = vrot.slane %v8373, 5
        %v8473 = vsel %vm1461, %v8471, %v8472
        %v8474 = vrot.slane %v8374, 5
        %v8475 = vrot.slane %v8474, 4
        %v8476 = vrot.slane %v8375, 5
        %v8477 = vsel %vm1461, %v8475, %v8476
        %v8478 = vrot.slane %v8476, 4
        %v8479 = vrot.slane %v8376, 5
        %v8480 = vsel %vm1461, %v8478, %v8479
        %v8481 = vrot.slane %v8377, 5
        %v8482 = vrot.slane %v8481, 4
        %v8483 = vrot.slane %v8378, 5
        %v8484 = vsel %vm1461, %v8482, %v8483
        %v8485 = vrot.slane %v8483, 4
        %v8486 = vrot.slane %v8379, 5
        %v8487 = vsel %vm1461, %v8485, %v8486
        %v8488 = vrot.slane %v8380, 5
        %v8489 = vrot.slane %v8488, 4
        %v8490 = vrot.slane %v8381, 5
        %v8491 = vsel %vm1461, %v8489, %v8490
        %v8492 = vrot.slane %v8490, 4
        %v8493 = vrot.slane %v8382, 5
        %v8494 = vsel %vm1461, %v8492, %v8493
        %v8495 = vrot.slane %v8383, 5
        %v8496 = vrot.slane %v8495, 4
        %v8497 = vrot.slane %v8384, 5
        %v8498 = vsel %vm1461, %v8496, %v8497
        %v8499 = vrot.slane %v8497, 4
        %v8500 = vrot.slane %v8385, 5
        %v8501 = vsel %vm1461, %v8499, %v8500
        %v8502 = vrot.slane %v8386, 5
        %v8503 = vrot.slane %v8502, 4
        %v8504 = vrot.slane %v8387, 5
        %v8505 = vsel %vm1461, %v8503, %v8504
        %v8506 = vrot.slane %v8504, 4
        %v8507 = vrot.slane %v8388, 5
        %v8508 = vsel %vm1461, %v8506, %v8507
        %v8509 = vrot.slane %v8389, 5
        %v8510 = vrot.slane %v8509, 4
        %v8511 = vrot.slane %v8390, 5
        %v8512 = vsel %vm1461, %v8510, %v8511
        %v8513 = vrot.slane %v8511, 4
        %v8514 = vrot.slane %v8391, 5
        %v8515 = vsel %vm1461, %v8513, %v8514
        %v8516 = vrot.slane %v8392, 5
        %v8517 = vrot.slane %v8516, 4
        %v8518 = vrot.slane %v8393, 5
        %v8519 = vsel %vm1461, %v8517, %v8518
        %v8520 = vrot.slane %v8518, 4
        %v8521 = vrot.slane %v8394, 5
        %v8522 = vsel %vm1461, %v8520, %v8521
        %v8523 = vrot.slane %v8395, 5
        %v8524 = vrot.slane %v8523, 4
        %v8525 = vrot.slane %v8396, 5
        %v8526 = vsel %vm1461, %v8524, %v8525
        %v8527 = vrot.slane %v8525, 4
        %v8528 = vrot.slane %v8397, 5
        %v8529 = vsel %vm1461, %v8527, %v8528
        %v8530 = vrot.slane %v8398, 5
        %v8531 = vrot.slane %v8530, 4
        %v8532 = vrot.slane %v8399, 5
        %v8533 = vsel %vm1461, %v8531, %v8532
        %v8534 = vrot.slane %v8532, 4
        %v8535 = vrot.slane %v8400, 5
        %v8536 = vsel %vm1461, %v8534, %v8535
        %v8537 = vrot.slane %v8401, 5
        %v8538 = vrot.slane %v8537, 4
        %v8539 = vrot.slane %v8402, 5
        %v8540 = vsel %vm1461, %v8538, %v8539
        %v8541 = vrot.slane %v8539, 4
        %v8542 = vrot.slane %v8403, 5
        %v8543 = vsel %vm1461, %v8541, %v8542
        %v8544 = vrot.slane %v8404, 5
        %v8545 = vrot.slane %v8544, 4
        %v8546 = vrot.slane %v8405, 5
        %v8547 = vsel %vm1461, %v8545, %v8546
        %v8548 = vrot.slane %v8546, 4
        %v8549 = vrot.slane %v8406, 5
        %v8550 = vsel %vm1461, %v8548, %v8549
        %v8551 = vrot.slane %v8407, 5
        %v8552 = vrot.slane %v8551, 4
        %v8553 = vrot.slane %v8408, 5
        %v8554 = vsel %vm1461, %v8552, %v8553
        %v8555 = vrot.slane %v8553, 4
        %v8556 = vrot.slane %v8409, 5
        %v8557 = vsel %vm1461, %v8555, %v8556
        %v8558 = vrot.slane %v8410, 5
        %v8559 = vrot.slane %v8558, 4
        %v8560 = vrot.slane %v8411, 5
        %v8561 = vsel %vm1461, %v8559, %v8560
        %v8562 = vrot.slane %v8560, 4
        %v8563 = vrot.slane %v8412, 5
        %v8564 = vsel %vm1461, %v8562, %v8563
        %v8565 = vrot.slane %v8413, 5
        %v8566 = vrot.slane %v8565, 4
        %v8567 = vrot.slane %v8414, 5
        %v8568 = vsel %vm1461, %v8566, %v8567
        %v8569 = vrot.slane %v8567, 4
        %v8570 = vrot.slane %v8415, 5
        %v8571 = vsel %vm1461, %v8569, %v8570
        %v8572 = vrot.slane %v8416, 5
        %v8573 = vrot.slane %v8572, 4
        %v8574 = vrot.slane %v8417, 5
        %v8575 = vsel %vm1461, %v8573, %v8574
        %v8576 = vrot.slane %v8574, 4
        %v8577 = vrot.slane %v8418, 5
        %v8578 = vsel %vm1461, %v8576, %v8577
        %8611 = vst [vmem:[#allocation3 + $0x20] sm:$0xf] %v8470
        %8612 = vst [vmem:[#allocation3 + $0x44] sm:$0xf] %v8473
        %8613 = vst [vmem:[#allocation3 + $0x68] sm:$0xf] %v8477
        %8614 = vst [vmem:[#allocation3 + $0x8c] sm:$0xf] %v8480
        %8615 = vst [vmem:[#allocation3 + $0xb0] sm:$0xf] %v8484
        %8616 = vst [vmem:[#allocation3 + $0xd4] sm:$0xf] %v8487
        %8617 = vst [vmem:[#allocation3 + $0xf8] sm:$0xf] %v8491
        %8618 = vst [vmem:[#allocation3 + $0x11c] sm:$0xf] %v8494
        %8619 = vst [vmem:[#allocation3 + $0x140] sm:$0xf] %v8498
        %8620 = vst [vmem:[#allocation3 + $0x164] sm:$0xf] %v8501
        %8621 = vst [vmem:[#allocation3 + $0x188] sm:$0xf] %v8505
        %8622 = vst [vmem:[#allocation3 + $0x1ac] sm:$0xf] %v8508
        %8623 = vst [vmem:[#allocation3 + $0x1d0] sm:$0xf] %v8512
        %8624 = vst [vmem:[#allocation3 + $0x1f4] sm:$0xf] %v8515
        %8625 = vst [vmem:[#allocation3 + $0x218] sm:$0xf] %v8519
        %8626 = vst [vmem:[#allocation3 + $0x23c] sm:$0xf] %v8522
        %8627 = vst [vmem:[#allocation3 + $0x260] sm:$0xf] %v8526
        %8628 = vst [vmem:[#allocation3 + $0x284] sm:$0xf] %v8529
        %8629 = vst [vmem:[#allocation3 + $0x2a8] sm:$0xf] %v8533
        %8630 = vst [vmem:[#allocation3 + $0x2cc] sm:$0xf] %v8536
        %8631 = vst [vmem:[#allocation3 + $0x2f0] sm:$0xf] %v8540
        %8632 = vst [vmem:[#allocation3 + $0x314] sm:$0xf] %v8543
        %8633 = vst [vmem:[#allocation3 + $0x338] sm:$0xf] %v8547
        %8634 = vst [vmem:[#allocation3 + $0x35c] sm:$0xf] %v8550
        %8635 = vst [vmem:[#allocation3 + $0x380] sm:$0xf] %v8554
        %8636 = vst [vmem:[#allocation3 + $0x3a4] sm:$0xf] %v8557
        %8637 = vst [vmem:[#allocation3 + $0x3c8] sm:$0xf] %v8561
        %8638 = vst [vmem:[#allocation3 + $0x3ec] sm:$0xf] %v8564
        %8639 = vst [vmem:[#allocation3 + $0x410] sm:$0xf] %v8568
        %8640 = vst [vmem:[#allocation3 + $0x434] sm:$0xf] %v8571
        %8641 = vst [vmem:[#allocation3 + $0x458] sm:$0xf] %v8575
        %8642 = vst [vmem:[#allocation3 + $0x47c] sm:$0xf] %v8578
        %v8643 = vld [vmem:[#allocation3] sm:$0xff]
        %v8644 = vld [vmem:[#allocation3 + $0x8] sm:$0xff]
        %v8645 = vld [vmem:[#allocation3 + $0x10] sm:$0xff]
        %v8646 = vld [vmem:[#allocation3 + $0x18] sm:$0xff]
        %v8647 = vld [vmem:[#allocation3 + $0x20] sm:$0xf]
        %v8648 = vld [vmem:[#allocation3 + $0x24] sm:$0xff]
        %v8649 = vld [vmem:[#allocation3 + $0x2c] sm:$0xff]
        %v8650 = vld [vmem:[#allocation3 + $0x34] sm:$0xff]
        %v8651 = vld [vmem:[#allocation3 + $0x3c] sm:$0xff]
        %v8652 = vld [vmem:[#allocation3 + $0x44] sm:$0xf]
        %v8653 = vld [vmem:[#allocation3 + $0x48] sm:$0xff]
        %v8654 = vld [vmem:[#allocation3 + $0x50] sm:$0xff]
        %v8655 = vld [vmem:[#allocation3 + $0x58] sm:$0xff]
        %v8656 = vld [vmem:[#allocation3 + $0x60] sm:$0xff]
        %v8657 = vld [vmem:[#allocation3 + $0x68] sm:$0xf]
        %v8658 = vld [vmem:[#allocation3 + $0x6c] sm:$0xff]
        %v8659 = vld [vmem:[#allocation3 + $0x74] sm:$0xff]
        %v8660 = vld [vmem:[#allocation3 + $0x7c] sm:$0xff]
        %v8661 = vld [vmem:[#allocation3 + $0x84] sm:$0xff]
        %v8662 = vld [vmem:[#allocation3 + $0x8c] sm:$0xf]
        %v8663 = vld [vmem:[#allocation3 + $0x90] sm:$0xff]
        %v8664 = vld [vmem:[#allocation3 + $0x98] sm:$0xff]
        %v8665 = vld [vmem:[#allocation3 + $0xa0] sm:$0xff]
        %v8666 = vld [vmem:[#allocation3 + $0xa8] sm:$0xff]
        %v8667 = vld [vmem:[#allocation3 + $0xb0] sm:$0xf]
        %v8668 = vld [vmem:[#allocation3 + $0xb4] sm:$0xff]
        %v8669 = vld [vmem:[#allocation3 + $0xbc] sm:$0xff]
        %v8670 = vld [vmem:[#allocation3 + $0xc4] sm:$0xff]
        %v8671 = vld [vmem:[#allocation3 + $0xcc] sm:$0xff]
        %v8672 = vld [vmem:[#allocation3 + $0xd4] sm:$0xf]
        %v8673 = vld [vmem:[#allocation3 + $0xd8] sm:$0xff]
        %v8674 = vld [vmem:[#allocation3 + $0xe0] sm:$0xff]
        %v8675 = vld [vmem:[#allocation3 + $0xe8] sm:$0xff]
        %v8676 = vld [vmem:[#allocation3 + $0xf0] sm:$0xff]
        %v8677 = vld [vmem:[#allocation3 + $0xf8] sm:$0xf]
        %v8678 = vld [vmem:[#allocation3 + $0xfc] sm:$0xff]
        %v8679 = vld [vmem:[#allocation3 + $0x104] sm:$0xff]
        %v8680 = vld [vmem:[#allocation3 + $0x10c] sm:$0xff]
        %v8681 = vld [vmem:[#allocation3 + $0x114] sm:$0xff]
        %v8682 = vld [vmem:[#allocation3 + $0x11c] sm:$0xf]
        %v8683 = vld [vmem:[#allocation3 + $0x120] sm:$0xff]
        %v8684 = vld [vmem:[#allocation3 + $0x128] sm:$0xff]
        %v8685 = vld [vmem:[#allocation3 + $0x130] sm:$0xff]
        %v8686 = vld [vmem:[#allocation3 + $0x138] sm:$0xff]
        %v8687 = vld [vmem:[#allocation3 + $0x140] sm:$0xf]
        %v8688 = vld [vmem:[#allocation3 + $0x144] sm:$0xff]
        %v8689 = vld [vmem:[#allocation3 + $0x14c] sm:$0xff]
        %v8690 = vld [vmem:[#allocation3 + $0x154] sm:$0xff]
        %v8691 = vld [vmem:[#allocation3 + $0x15c] sm:$0xff]
        %v8692 = vld [vmem:[#allocation3 + $0x164] sm:$0xf]
        %v8693 = vld [vmem:[#allocation3 + $0x168] sm:$0xff]
        %v8694 = vld [vmem:[#allocation3 + $0x170] sm:$0xff]
        %v8695 = vld [vmem:[#allocation3 + $0x178] sm:$0xff]
        %v8696 = vld [vmem:[#allocation3 + $0x180] sm:$0xff]
        %v8697 = vld [vmem:[#allocation3 + $0x188] sm:$0xf]
        %v8698 = vld [vmem:[#allocation3 + $0x18c] sm:$0xff]
        %v8699 = vld [vmem:[#allocation3 + $0x194] sm:$0xff]
        %v8700 = vld [vmem:[#allocation3 + $0x19c] sm:$0xff]
        %v8701 = vld [vmem:[#allocation3 + $0x1a4] sm:$0xff]
        %v8702 = vld [vmem:[#allocation3 + $0x1ac] sm:$0xf]
        %v8703 = vld [vmem:[#allocation3 + $0x1b0] sm:$0xff]
        %v8704 = vld [vmem:[#allocation3 + $0x1b8] sm:$0xff]
        %v8705 = vld [vmem:[#allocation3 + $0x1c0] sm:$0xff]
        %v8706 = vld [vmem:[#allocation3 + $0x1c8] sm:$0xff]
        %v8707 = vld [vmem:[#allocation3 + $0x1d0] sm:$0xf]
        %v8708 = vld [vmem:[#allocation3 + $0x1d4] sm:$0xff]
        %v8709 = vld [vmem:[#allocation3 + $0x1dc] sm:$0xff]
        %v8710 = vld [vmem:[#allocation3 + $0x1e4] sm:$0xff]
        %v8711 = vld [vmem:[#allocation3 + $0x1ec] sm:$0xff]
        %v8712 = vld [vmem:[#allocation3 + $0x1f4] sm:$0xf]
        %v8713 = vld [vmem:[#allocation3 + $0x1f8] sm:$0xff]
        %v8714 = vld [vmem:[#allocation3 + $0x200] sm:$0xff]
        %v8715 = vld [vmem:[#allocation3 + $0x208] sm:$0xff]
        %v8716 = vld [vmem:[#allocation3 + $0x210] sm:$0xff]
        %v8717 = vld [vmem:[#allocation3 + $0x218] sm:$0xf]
        %v8718 = vld [vmem:[#allocation3 + $0x21c] sm:$0xff]
        %v8719 = vld [vmem:[#allocation3 + $0x224] sm:$0xff]
        %v8720 = vld [vmem:[#allocation3 + $0x22c] sm:$0xff]
        %v8721 = vld [vmem:[#allocation3 + $0x234] sm:$0xff]
        %v8722 = vld [vmem:[#allocation3 + $0x23c] sm:$0xf]
        %v8723 = vld [vmem:[#allocation3 + $0x240] sm:$0xff]
        %v8724 = vld [vmem:[#allocation3 + $0x248] sm:$0xff]
        %v8725 = vld [vmem:[#allocation3 + $0x250] sm:$0xff]
        %v8726 = vld [vmem:[#allocation3 + $0x258] sm:$0xff]
        %v8727 = vld [vmem:[#allocation3 + $0x260] sm:$0xf]
        %v8728 = vld [vmem:[#allocation3 + $0x264] sm:$0xff]
        %v8729 = vld [vmem:[#allocation3 + $0x26c] sm:$0xff]
        %v8730 = vld [vmem:[#allocation3 + $0x274] sm:$0xff]
        %v8731 = vld [vmem:[#allocation3 + $0x27c] sm:$0xff]
        %v8732 = vld [vmem:[#allocation3 + $0x284] sm:$0xf]
        %v8733 = vld [vmem:[#allocation3 + $0x288] sm:$0xff]
        %v8734 = vld [vmem:[#allocation3 + $0x290] sm:$0xff]
        %v8735 = vld [vmem:[#allocation3 + $0x298] sm:$0xff]
        %v8736 = vld [vmem:[#allocation3 + $0x2a0] sm:$0xff]
        %v8737 = vld [vmem:[#allocation3 + $0x2a8] sm:$0xf]
        %v8738 = vld [vmem:[#allocation3 + $0x2ac] sm:$0xff]
        %v8739 = vld [vmem:[#allocation3 + $0x2b4] sm:$0xff]
        %v8740 = vld [vmem:[#allocation3 + $0x2bc] sm:$0xff]
        %v8741 = vld [vmem:[#allocation3 + $0x2c4] sm:$0xff]
        %v8742 = vld [vmem:[#allocation3 + $0x2cc] sm:$0xf]
        %v8743 = vld [vmem:[#allocation3 + $0x2d0] sm:$0xff]
        %v8744 = vld [vmem:[#allocation3 + $0x2d8] sm:$0xff]
        %v8745 = vld [vmem:[#allocation3 + $0x2e0] sm:$0xff]
        %v8746 = vld [vmem:[#allocation3 + $0x2e8] sm:$0xff]
        %v8747 = vld [vmem:[#allocation3 + $0x2f0] sm:$0xf]
        %v8748 = vld [vmem:[#allocation3 + $0x2f4] sm:$0xff]
        %v8749 = vld [vmem:[#allocation3 + $0x2fc] sm:$0xff]
        %v8750 = vld [vmem:[#allocation3 + $0x304] sm:$0xff]
        %v8751 = vld [vmem:[#allocation3 + $0x30c] sm:$0xff]
        %v8752 = vld [vmem:[#allocation3 + $0x314] sm:$0xf]
        %v8753 = vld [vmem:[#allocation3 + $0x318] sm:$0xff]
        %v8754 = vld [vmem:[#allocation3 + $0x320] sm:$0xff]
        %v8755 = vld [vmem:[#allocation3 + $0x328] sm:$0xff]
        %v8756 = vld [vmem:[#allocation3 + $0x330] sm:$0xff]
        %v8757 = vld [vmem:[#allocation3 + $0x338] sm:$0xf]
        %v8758 = vld [vmem:[#allocation3 + $0x33c] sm:$0xff]
        %v8759 = vld [vmem:[#allocation3 + $0x344] sm:$0xff]
        %v8760 = vld [vmem:[#allocation3 + $0x34c] sm:$0xff]
        %v8761 = vld [vmem:[#allocation3 + $0x354] sm:$0xff]
        %v8762 = vld [vmem:[#allocation3 + $0x35c] sm:$0xf]
        %v8763 = vld [vmem:[#allocation3 + $0x360] sm:$0xff]
        %v8764 = vld [vmem:[#allocation3 + $0x368] sm:$0xff]
        %v8765 = vld [vmem:[#allocation3 + $0x370] sm:$0xff]
        %v8766 = vld [vmem:[#allocation3 + $0x378] sm:$0xff]
        %v8767 = vld [vmem:[#allocation3 + $0x380] sm:$0xf]
        %v8768 = vld [vmem:[#allocation3 + $0x384] sm:$0xff]
        %v8769 = vld [vmem:[#allocation3 + $0x38c] sm:$0xff]
        %v8770 = vld [vmem:[#allocation3 + $0x394] sm:$0xff]
        %v8771 = vld [vmem:[#allocation3 + $0x39c] sm:$0xff]
        %v8772 = vld [vmem:[#allocation3 + $0x3a4] sm:$0xf]
        %v8773 = vld [vmem:[#allocation3 + $0x3a8] sm:$0xff]
        %v8774 = vld [vmem:[#allocation3 + $0x3b0] sm:$0xff]
        %v8775 = vld [vmem:[#allocation3 + $0x3b8] sm:$0xff]
        %v8776 = vld [vmem:[#allocation3 + $0x3c0] sm:$0xff]
        %v8777 = vld [vmem:[#allocation3 + $0x3c8] sm:$0xf]
        %v8778 = vld [vmem:[#allocation3 + $0x3cc] sm:$0xff]
        %v8779 = vld [vmem:[#allocation3 + $0x3d4] sm:$0xff]
        %v8780 = vld [vmem:[#allocation3 + $0x3dc] sm:$0xff]
        %v8781 = vld [vmem:[#allocation3 + $0x3e4] sm:$0xff]
        %v8782 = vld [vmem:[#allocation3 + $0x3ec] sm:$0xf]
        %v8783 = vld [vmem:[#allocation3 + $0x3f0] sm:$0xff]
        %v8784 = vld [vmem:[#allocation3 + $0x3f8] sm:$0xff]
        %v8785 = vld [vmem:[#allocation3 + $0x400] sm:$0xff]
        %v8786 = vld [vmem:[#allocation3 + $0x408] sm:$0xff]
        %v8787 = vld [vmem:[#allocation3 + $0x410] sm:$0xf]
        %v8788 = vld [vmem:[#allocation3 + $0x414] sm:$0xff]
        %v8789 = vld [vmem:[#allocation3 + $0x41c] sm:$0xff]
        %v8790 = vld [vmem:[#allocation3 + $0x424] sm:$0xff]
        %v8791 = vld [vmem:[#allocation3 + $0x42c] sm:$0xff]
        %v8792 = vld [vmem:[#allocation3 + $0x434] sm:$0xf]
        %v8793 = vld [vmem:[#allocation3 + $0x438] sm:$0xff]
        %v8794 = vld [vmem:[#allocation3 + $0x440] sm:$0xff]
        %v8795 = vld [vmem:[#allocation3 + $0x448] sm:$0xff]
        %v8796 = vld [vmem:[#allocation3 + $0x450] sm:$0xff]
        %v8797 = vld [vmem:[#allocation3 + $0x458] sm:$0xf]
        %v8798 = vld [vmem:[#allocation3 + $0x45c] sm:$0xff]
        %v8799 = vld [vmem:[#allocation3 + $0x464] sm:$0xff]
        %v8800 = vld [vmem:[#allocation3 + $0x46c] sm:$0xff]
        %v8801 = vld [vmem:[#allocation3 + $0x474] sm:$0xff]
        %v8802 = vld [vmem:[#allocation3 + $0x47c] sm:$0xf]
        %v8803 = vld [vmem:[#allocation9] sm:$0xf]
        %v8804 = vld [vmem:[#allocation9 + $0x4] sm:$0xf]
        %v8805 = vld [vmem:[#allocation9 + $0x8] sm:$0xf]
        %v8806 = vld [vmem:[#allocation9 + $0xc] sm:$0xf]
        %v8807 = vld [vmem:[#allocation9 + $0x10] sm:$0xf]
        %v8808 = vld [vmem:[#allocation9 + $0x14] sm:$0xf]
        %v8809 = vld [vmem:[#allocation9 + $0x18] sm:$0xf]
        %v8810 = vld [vmem:[#allocation9 + $0x1c] sm:$0xf]
        %v8811 = vld [vmem:[#allocation9 + $0x20] sm:$0xf]
        %v8812 = vld [vmem:[#allocation9 + $0x24] sm:$0xf]
        %v8813 = vld [vmem:[#allocation9 + $0x28] sm:$0xf]
        %v8814 = vld [vmem:[#allocation9 + $0x2c] sm:$0xf]
        %v8815 = vld [vmem:[#allocation9 + $0x30] sm:$0xf]
        %v8816 = vld [vmem:[#allocation9 + $0x34] sm:$0xf]
        %v8817 = vld [vmem:[#allocation9 + $0x38] sm:$0xf]
        %v8818 = vld [vmem:[#allocation9 + $0x3c] sm:$0xf]
        %v8819 = vld [vmem:[#allocation9 + $0x40] sm:$0xf]
        %v8820 = vld [vmem:[#allocation9 + $0x44] sm:$0xf]
        %v8821 = vld [vmem:[#allocation9 + $0x48] sm:$0xf]
        %v8822 = vld [vmem:[#allocation9 + $0x4c] sm:$0xf]
        %v8823 = vld [vmem:[#allocation9 + $0x50] sm:$0xf]
        %v8824 = vld [vmem:[#allocation9 + $0x54] sm:$0xf]
        %v8825 = vld [vmem:[#allocation9 + $0x58] sm:$0xf]
        %v8826 = vld [vmem:[#allocation9 + $0x5c] sm:$0xf]
        %v8827 = vld [vmem:[#allocation9 + $0x60] sm:$0xf]
        %v8828 = vld [vmem:[#allocation9 + $0x64] sm:$0xf]
        %v8829 = vld [vmem:[#allocation9 + $0x68] sm:$0xf]
        %v8830 = vld [vmem:[#allocation9 + $0x6c] sm:$0xf]
        %v8831 = vld [vmem:[#allocation9 + $0x70] sm:$0xf]
        %v8832 = vld [vmem:[#allocation9 + $0x74] sm:$0xf]
        %v8833 = vld [vmem:[#allocation9 + $0x78] sm:$0xf]
        %v8834 = vld [vmem:[#allocation9 + $0x7c] sm:$0xf]
        %v8835 = vld [vmem:[#allocation9 + $0x80] sm:$0xf]
        %v8836 = vld [vmem:[#allocation9 + $0x84] sm:$0xf]
        %v8837 = vld [vmem:[#allocation9 + $0x88] sm:$0xf]
        %v8838 = vld [vmem:[#allocation9 + $0x8c] sm:$0xf]
        %v8839 = vld [vmem:[#allocation9 + $0x90] sm:$0xf]
        %v8840 = vld [vmem:[#allocation9 + $0x94] sm:$0xf]
        %v8841 = vld [vmem:[#allocation9 + $0x98] sm:$0xf]
        %v8842 = vld [vmem:[#allocation9 + $0x9c] sm:$0xf]
        %v8843 = vld [vmem:[#allocation9 + $0xa0] sm:$0xf]
        %v8844 = vld [vmem:[#allocation9 + $0xa4] sm:$0xf]
        %v8845 = vld [vmem:[#allocation9 + $0xa8] sm:$0xf]
        %v8846 = vld [vmem:[#allocation9 + $0xac] sm:$0xf]
        %v8847 = vld [vmem:[#allocation9 + $0xb0] sm:$0xf]
        %v8848 = vld [vmem:[#allocation9 + $0xb4] sm:$0xf]
        %v8849 = vld [vmem:[#allocation9 + $0xb8] sm:$0xf]
        %v8850 = vld [vmem:[#allocation9 + $0xbc] sm:$0xf]
        %v8851 = vld [vmem:[#allocation9 + $0xc0] sm:$0xf]
        %v8852 = vld [vmem:[#allocation9 + $0xc4] sm:$0xf]
        %v8853 = vld [vmem:[#allocation9 + $0xc8] sm:$0xf]
        %v8854 = vld [vmem:[#allocation9 + $0xcc] sm:$0xf]
        %v8855 = vld [vmem:[#allocation9 + $0xd0] sm:$0xf]
        %v8856 = vld [vmem:[#allocation9 + $0xd4] sm:$0xf]
        %v8857 = vld [vmem:[#allocation9 + $0xd8] sm:$0xf]
        %v8858 = vld [vmem:[#allocation9 + $0xdc] sm:$0xf]
        %v8859 = vld [vmem:[#allocation9 + $0xe0] sm:$0xf]
        %v8860 = vld [vmem:[#allocation9 + $0xe4] sm:$0xf]
        %v8861 = vld [vmem:[#allocation9 + $0xe8] sm:$0xf]
        %v8862 = vld [vmem:[#allocation9 + $0xec] sm:$0xf]
        %v8863 = vld [vmem:[#allocation9 + $0xf0] sm:$0xf]
        %v8864 = vld [vmem:[#allocation9 + $0xf4] sm:$0xf]
        %v8865 = vld [vmem:[#allocation9 + $0xf8] sm:$0xf]
        %v8866 = vld [vmem:[#allocation9 + $0xfc] sm:$0xf]
        %v8867 = vld [vmem:[#allocation9 + $0x100] sm:$0xf]
        %v8868 = vld [vmem:[#allocation9 + $0x104] sm:$0xf]
        %v8869 = vld [vmem:[#allocation9 + $0x108] sm:$0xf]
        %v8870 = vld [vmem:[#allocation9 + $0x10c] sm:$0xf]
        %v8871 = vld [vmem:[#allocation9 + $0x110] sm:$0xf]
        %v8872 = vld [vmem:[#allocation9 + $0x114] sm:$0xf]
        %v8873 = vld [vmem:[#allocation9 + $0x118] sm:$0xf]
        %v8874 = vld [vmem:[#allocation9 + $0x11c] sm:$0xf]
        %v8875 = vld [vmem:[#allocation9 + $0x120] sm:$0xf]
        %v8876 = vld [vmem:[#allocation9 + $0x124] sm:$0xf]
        %v8877 = vld [vmem:[#allocation9 + $0x128] sm:$0xf]
        %v8878 = vld [vmem:[#allocation9 + $0x12c] sm:$0xf]
        %v8879 = vld [vmem:[#allocation9 + $0x130] sm:$0xf]
        %v8880 = vld [vmem:[#allocation9 + $0x134] sm:$0xf]
        %v8881 = vld [vmem:[#allocation9 + $0x138] sm:$0xf]
        %v8882 = vld [vmem:[#allocation9 + $0x13c] sm:$0xf]
        %v8883 = vld [vmem:[#allocation9 + $0x140] sm:$0xf]
        %v8884 = vld [vmem:[#allocation9 + $0x144] sm:$0xf]
        %v8885 = vld [vmem:[#allocation9 + $0x148] sm:$0xf]
        %v8886 = vld [vmem:[#allocation9 + $0x14c] sm:$0xf]
        %v8887 = vld [vmem:[#allocation9 + $0x150] sm:$0xf]
        %v8888 = vld [vmem:[#allocation9 + $0x154] sm:$0xf]
        %v8889 = vld [vmem:[#allocation9 + $0x158] sm:$0xf]
        %v8890 = vld [vmem:[#allocation9 + $0x15c] sm:$0xf]
        %v8891 = vld [vmem:[#allocation9 + $0x160] sm:$0xf]
        %v8892 = vld [vmem:[#allocation9 + $0x164] sm:$0xf]
        %v8893 = vld [vmem:[#allocation9 + $0x168] sm:$0xf]
        %v8894 = vld [vmem:[#allocation9 + $0x16c] sm:$0xf]
        %v8895 = vld [vmem:[#allocation9 + $0x170] sm:$0xf]
        %v8896 = vld [vmem:[#allocation9 + $0x174] sm:$0xf]
        %v8897 = vld [vmem:[#allocation9 + $0x178] sm:$0xf]
        %v8898 = vld [vmem:[#allocation9 + $0x17c] sm:$0xf]
        %v8899 = vld [vmem:[#allocation9 + $0x180] sm:$0xf]
        %v8900 = vld [vmem:[#allocation9 + $0x184] sm:$0xf]
        %v8901 = vld [vmem:[#allocation9 + $0x188] sm:$0xf]
        %v8902 = vld [vmem:[#allocation9 + $0x18c] sm:$0xf]
        %v8903 = vld [vmem:[#allocation9 + $0x190] sm:$0xf]
        %v8904 = vld [vmem:[#allocation9 + $0x194] sm:$0xf]
        %v8905 = vld [vmem:[#allocation9 + $0x198] sm:$0xf]
        %v8906 = vld [vmem:[#allocation9 + $0x19c] sm:$0xf]
        %v8907 = vld [vmem:[#allocation9 + $0x1a0] sm:$0xf]
        %v8908 = vld [vmem:[#allocation9 + $0x1a4] sm:$0xf]
        %v8909 = vld [vmem:[#allocation9 + $0x1a8] sm:$0xf]
        %v8910 = vld [vmem:[#allocation9 + $0x1ac] sm:$0xf]
        %v8911 = vld [vmem:[#allocation9 + $0x1b0] sm:$0xf]
        %v8912 = vld [vmem:[#allocation9 + $0x1b4] sm:$0xf]
        %v8913 = vld [vmem:[#allocation9 + $0x1b8] sm:$0xf]
        %v8914 = vld [vmem:[#allocation9 + $0x1bc] sm:$0xf]
        %v8915 = vld [vmem:[#allocation9 + $0x1c0] sm:$0xf]
        %v8916 = vld [vmem:[#allocation9 + $0x1c4] sm:$0xf]
        %v8917 = vld [vmem:[#allocation9 + $0x1c8] sm:$0xf]
        %v8918 = vld [vmem:[#allocation9 + $0x1cc] sm:$0xf]
        %v8919 = vld [vmem:[#allocation9 + $0x1d0] sm:$0xf]
        %v8920 = vld [vmem:[#allocation9 + $0x1d4] sm:$0xf]
        %v8921 = vld [vmem:[#allocation9 + $0x1d8] sm:$0xf]
        %v8922 = vld [vmem:[#allocation9 + $0x1dc] sm:$0xf]
        %v8923 = vld [vmem:[#allocation9 + $0x1e0] sm:$0xf]
        %v8924 = vld [vmem:[#allocation9 + $0x1e4] sm:$0xf]
        %v8925 = vld [vmem:[#allocation9 + $0x1e8] sm:$0xf]
        %v8926 = vld [vmem:[#allocation9 + $0x1ec] sm:$0xf]
        %v8927 = vld [vmem:[#allocation9 + $0x1f0] sm:$0xf]
        %v8928 = vld [vmem:[#allocation9 + $0x1f4] sm:$0xf]
        %v8929 = vld [vmem:[#allocation9 + $0x1f8] sm:$0xf]
        %v8930 = vld [vmem:[#allocation9 + $0x1fc] sm:$0xf]
        %v8931 = vld [vmem:[#allocation9 + $0x200] sm:$0xf]
        %v8932 = vld [vmem:[#allocation9 + $0x204] sm:$0xf]
        %v8933 = vld [vmem:[#allocation9 + $0x208] sm:$0xf]
        %v8934 = vld [vmem:[#allocation9 + $0x20c] sm:$0xf]
        %v8935 = vld [vmem:[#allocation9 + $0x210] sm:$0xf]
        %v8936 = vld [vmem:[#allocation9 + $0x214] sm:$0xf]
        %v8937 = vld [vmem:[#allocation9 + $0x218] sm:$0xf]
        %v8938 = vld [vmem:[#allocation9 + $0x21c] sm:$0xf]
        %v8939 = vld [vmem:[#allocation9 + $0x220] sm:$0xf]
        %v8940 = vld [vmem:[#allocation9 + $0x224] sm:$0xf]
        %v8941 = vld [vmem:[#allocation9 + $0x228] sm:$0xf]
        %v8942 = vld [vmem:[#allocation9 + $0x22c] sm:$0xf]
        %v8943 = vld [vmem:[#allocation9 + $0x230] sm:$0xf]
        %v8944 = vld [vmem:[#allocation9 + $0x234] sm:$0xf]
        %v8945 = vld [vmem:[#allocation9 + $0x238] sm:$0xf]
        %v8946 = vld [vmem:[#allocation9 + $0x23c] sm:$0xf]
        %v8947 = vld [vmem:[%s4] sm:$0x1]
        %v8949 = vlaneseq
        %v8950 = vshrl.u32 %v8949, 7
        %v8951 = vsub.s32 0, %v8950
        %v8952 = vrot.slane %v8947, %v8951
        %v9114 = vunpack.c.l.b16 %v8643
        %v9115 = vunpack.c.h.b16 %v8643
        %v9116 = vunpack.c.l.b16 %v8644
        %v9117 = vunpack.c.h.b16 %v8644
        %v9118 = vunpack.c.l.b16 %v8645
        %v9119 = vunpack.c.h.b16 %v8645
        %v9120 = vunpack.c.l.b16 %v8646
        %v9121 = vunpack.c.h.b16 %v8646
        %v9122 = vunpack.c.l.b16 %v8647
        %v9123 = vunpack.c.l.b16 %v8648
        %v9124 = vunpack.c.h.b16 %v8648
        %v9125 = vunpack.c.l.b16 %v8649
        %v9126 = vunpack.c.h.b16 %v8649
        %v9127 = vunpack.c.l.b16 %v8650
        %v9128 = vunpack.c.h.b16 %v8650
        %v9129 = vunpack.c.l.b16 %v8651
        %v9130 = vunpack.c.h.b16 %v8651
        %v9131 = vunpack.c.l.b16 %v8652
        %v9132 = vunpack.c.l.b16 %v8653
        %v9133 = vunpack.c.h.b16 %v8653
        %v9134 = vunpack.c.l.b16 %v8654
        %v9135 = vunpack.c.h.b16 %v8654
        %v9136 = vunpack.c.l.b16 %v8655
        %v9137 = vunpack.c.h.b16 %v8655
        %v9138 = vunpack.c.l.b16 %v8656
        %v9139 = vunpack.c.h.b16 %v8656
        %v9140 = vunpack.c.l.b16 %v8657
        %v9141 = vunpack.c.l.b16 %v8658
        %v9142 = vunpack.c.h.b16 %v8658
        %v9143 = vunpack.c.l.b16 %v8659
        %v9144 = vunpack.c.h.b16 %v8659
        %v9145 = vunpack.c.l.b16 %v8660
        %v9146 = vunpack.c.h.b16 %v8660
        %v9147 = vunpack.c.l.b16 %v8661
        %v9148 = vunpack.c.h.b16 %v8661
        %v9149 = vunpack.c.l.b16 %v8662
        %v9150 = vunpack.c.l.b16 %v8663
        %v9151 = vunpack.c.h.b16 %v8663
        %v9152 = vunpack.c.l.b16 %v8664
        %v9153 = vunpack.c.h.b16 %v8664
        %v9154 = vunpack.c.l.b16 %v8665
        %v9155 = vunpack.c.h.b16 %v8665
        %v9156 = vunpack.c.l.b16 %v8666
        %v9157 = vunpack.c.h.b16 %v8666
        %v9158 = vunpack.c.l.b16 %v8667
        %v9159 = vunpack.c.l.b16 %v8668
        %v9160 = vunpack.c.h.b16 %v8668
        %v9161 = vunpack.c.l.b16 %v8669
        %v9162 = vunpack.c.h.b16 %v8669
        %v9163 = vunpack.c.l.b16 %v8670
        %v9164 = vunpack.c.h.b16 %v8670
        %v9165 = vunpack.c.l.b16 %v8671
        %v9166 = vunpack.c.h.b16 %v8671
        %v9167 = vunpack.c.l.b16 %v8672
        %v9168 = vunpack.c.l.b16 %v8673
        %v9169 = vunpack.c.h.b16 %v8673
        %v9170 = vunpack.c.l.b16 %v8674
        %v9171 = vunpack.c.h.b16 %v8674
        %v9172 = vunpack.c.l.b16 %v8675
        %v9173 = vunpack.c.h.b16 %v8675
        %v9174 = vunpack.c.l.b16 %v8676
        %v9175 = vunpack.c.h.b16 %v8676
        %v9176 = vunpack.c.l.b16 %v8677
        %v9177 = vunpack.c.l.b16 %v8678
        %v9178 = vunpack.c.h.b16 %v8678
        %v9179 = vunpack.c.l.b16 %v8679
        %v9180 = vunpack.c.h.b16 %v8679
        %v9181 = vunpack.c.l.b16 %v8680
        %v9182 = vunpack.c.h.b16 %v8680
        %v9183 = vunpack.c.l.b16 %v8681
        %v9184 = vunpack.c.h.b16 %v8681
        %v9185 = vunpack.c.l.b16 %v8682
        %v9186 = vunpack.c.l.b16 %v8683
        %v9187 = vunpack.c.h.b16 %v8683
        %v9188 = vunpack.c.l.b16 %v8684
        %v9189 = vunpack.c.h.b16 %v8684
        %v9190 = vunpack.c.l.b16 %v8685
        %v9191 = vunpack.c.h.b16 %v8685
        %v9192 = vunpack.c.l.b16 %v8686
        %v9193 = vunpack.c.h.b16 %v8686
        %v9194 = vunpack.c.l.b16 %v8687
        %v9195 = vunpack.c.l.b16 %v8688
        %v9196 = vunpack.c.h.b16 %v8688
        %v9197 = vunpack.c.l.b16 %v8689
        %v9198 = vunpack.c.h.b16 %v8689
        %v9199 = vunpack.c.l.b16 %v8690
        %v9200 = vunpack.c.h.b16 %v8690
        %v9201 = vunpack.c.l.b16 %v8691
        %v9202 = vunpack.c.h.b16 %v8691
        %v9203 = vunpack.c.l.b16 %v8692
        %v9204 = vunpack.c.l.b16 %v8693
        %v9205 = vunpack.c.h.b16 %v8693
        %v9206 = vunpack.c.l.b16 %v8694
        %v9207 = vunpack.c.h.b16 %v8694
        %v9208 = vunpack.c.l.b16 %v8695
        %v9209 = vunpack.c.h.b16 %v8695
        %v9210 = vunpack.c.l.b16 %v8696
        %v9211 = vunpack.c.h.b16 %v8696
        %v9212 = vunpack.c.l.b16 %v8697
        %v9213 = vunpack.c.l.b16 %v8698
        %v9214 = vunpack.c.h.b16 %v8698
        %v9215 = vunpack.c.l.b16 %v8699
        %v9216 = vunpack.c.h.b16 %v8699
        %v9217 = vunpack.c.l.b16 %v8700
        %v9218 = vunpack.c.h.b16 %v8700
        %v9219 = vunpack.c.l.b16 %v8701
        %v9220 = vunpack.c.h.b16 %v8701
        %v9221 = vunpack.c.l.b16 %v8702
        %v9222 = vunpack.c.l.b16 %v8703
        %v9223 = vunpack.c.h.b16 %v8703
        %v9224 = vunpack.c.l.b16 %v8704
        %v9225 = vunpack.c.h.b16 %v8704
        %v9226 = vunpack.c.l.b16 %v8705
        %v9227 = vunpack.c.h.b16 %v8705
        %v9228 = vunpack.c.l.b16 %v8706
        %v9229 = vunpack.c.h.b16 %v8706
        %v9230 = vunpack.c.l.b16 %v8707
        %v9231 = vunpack.c.l.b16 %v8708
        %v9232 = vunpack.c.h.b16 %v8708
        %v9233 = vunpack.c.l.b16 %v8709
        %v9234 = vunpack.c.h.b16 %v8709
        %v9235 = vunpack.c.l.b16 %v8710
        %v9236 = vunpack.c.h.b16 %v8710
        %v9237 = vunpack.c.l.b16 %v8711
        %v9238 = vunpack.c.h.b16 %v8711
        %v9239 = vunpack.c.l.b16 %v8712
        %v9240 = vunpack.c.l.b16 %v8713
        %v9241 = vunpack.c.h.b16 %v8713
        %v9242 = vunpack.c.l.b16 %v8714
        %v9243 = vunpack.c.h.b16 %v8714
        %v9244 = vunpack.c.l.b16 %v8715
        %v9245 = vunpack.c.h.b16 %v8715
        %v9246 = vunpack.c.l.b16 %v8716
        %v9247 = vunpack.c.h.b16 %v8716
        %v9248 = vunpack.c.l.b16 %v8717
        %v9249 = vunpack.c.l.b16 %v8718
        %v9250 = vunpack.c.h.b16 %v8718
        %v9251 = vunpack.c.l.b16 %v8719
        %v9252 = vunpack.c.h.b16 %v8719
        %v9253 = vunpack.c.l.b16 %v8720
        %v9254 = vunpack.c.h.b16 %v8720
        %v9255 = vunpack.c.l.b16 %v8721
        %v9256 = vunpack.c.h.b16 %v8721
        %v9257 = vunpack.c.l.b16 %v8722
        %v9258 = vunpack.c.l.b16 %v8723
        %v9259 = vunpack.c.h.b16 %v8723
        %v9260 = vunpack.c.l.b16 %v8724
        %v9261 = vunpack.c.h.b16 %v8724
        %v9262 = vunpack.c.l.b16 %v8725
        %v9263 = vunpack.c.h.b16 %v8725
        %v9264 = vunpack.c.l.b16 %v8726
        %v9265 = vunpack.c.h.b16 %v8726
        %v9266 = vunpack.c.l.b16 %v8727
        %v9267 = vunpack.c.l.b16 %v8728
        %v9268 = vunpack.c.h.b16 %v8728
        %v9269 = vunpack.c.l.b16 %v8729
        %v9270 = vunpack.c.h.b16 %v8729
        %v9271 = vunpack.c.l.b16 %v8730
        %v9272 = vunpack.c.h.b16 %v8730
        %v9273 = vunpack.c.l.b16 %v8731
        %v9274 = vunpack.c.h.b16 %v8731
        %v9275 = vunpack.c.l.b16 %v8732
        %v9276 = vunpack.c.l.b16 %v8733
        %v9277 = vunpack.c.h.b16 %v8733
        %v9278 = vunpack.c.l.b16 %v8734
        %v9279 = vunpack.c.h.b16 %v8734
        %v9280 = vunpack.c.l.b16 %v8735
        %v9281 = vunpack.c.h.b16 %v8735
        %v9282 = vunpack.c.l.b16 %v8736
        %v9283 = vunpack.c.h.b16 %v8736
        %v9284 = vunpack.c.l.b16 %v8737
        %v9285 = vunpack.c.l.b16 %v8738
        %v9286 = vunpack.c.h.b16 %v8738
        %v9287 = vunpack.c.l.b16 %v8739
        %v9288 = vunpack.c.h.b16 %v8739
        %v9289 = vunpack.c.l.b16 %v8740
        %v9290 = vunpack.c.h.b16 %v8740
        %v9291 = vunpack.c.l.b16 %v8741
        %v9292 = vunpack.c.h.b16 %v8741
        %v9293 = vunpack.c.l.b16 %v8742
        %v9294 = vunpack.c.l.b16 %v8743
        %v9295 = vunpack.c.h.b16 %v8743
        %v9296 = vunpack.c.l.b16 %v8744
        %v9297 = vunpack.c.h.b16 %v8744
        %v9298 = vunpack.c.l.b16 %v8745
        %v9299 = vunpack.c.h.b16 %v8745
        %v9300 = vunpack.c.l.b16 %v8746
        %v9301 = vunpack.c.h.b16 %v8746
        %v9302 = vunpack.c.l.b16 %v8747
        %v9303 = vunpack.c.l.b16 %v8748
        %v9304 = vunpack.c.h.b16 %v8748
        %v9305 = vunpack.c.l.b16 %v8749
        %v9306 = vunpack.c.h.b16 %v8749
        %v9307 = vunpack.c.l.b16 %v8750
        %v9308 = vunpack.c.h.b16 %v8750
        %v9309 = vunpack.c.l.b16 %v8751
        %v9310 = vunpack.c.h.b16 %v8751
        %v9311 = vunpack.c.l.b16 %v8752
        %v9312 = vunpack.c.l.b16 %v8753
        %v9313 = vunpack.c.h.b16 %v8753
        %v9314 = vunpack.c.l.b16 %v8754
        %v9315 = vunpack.c.h.b16 %v8754
        %v9316 = vunpack.c.l.b16 %v8755
        %v9317 = vunpack.c.h.b16 %v8755
        %v9318 = vunpack.c.l.b16 %v8756
        %v9319 = vunpack.c.h.b16 %v8756
        %v9320 = vunpack.c.l.b16 %v8757
        %v9321 = vunpack.c.l.b16 %v8758
        %v9322 = vunpack.c.h.b16 %v8758
        %v9323 = vunpack.c.l.b16 %v8759
        %v9324 = vunpack.c.h.b16 %v8759
        %v9325 = vunpack.c.l.b16 %v8760
        %v9326 = vunpack.c.h.b16 %v8760
        %v9327 = vunpack.c.l.b16 %v8761
        %v9328 = vunpack.c.h.b16 %v8761
        %v9329 = vunpack.c.l.b16 %v8762
        %v9330 = vunpack.c.l.b16 %v8763
        %v9331 = vunpack.c.h.b16 %v8763
        %v9332 = vunpack.c.l.b16 %v8764
        %v9333 = vunpack.c.h.b16 %v8764
        %v9334 = vunpack.c.l.b16 %v8765
        %v9335 = vunpack.c.h.b16 %v8765
        %v9336 = vunpack.c.l.b16 %v8766
        %v9337 = vunpack.c.h.b16 %v8766
        %v9338 = vunpack.c.l.b16 %v8767
        %v9339 = vunpack.c.l.b16 %v8768
        %v9340 = vunpack.c.h.b16 %v8768
        %v9341 = vunpack.c.l.b16 %v8769
        %v9342 = vunpack.c.h.b16 %v8769
        %v9343 = vunpack.c.l.b16 %v8770
        %v9344 = vunpack.c.h.b16 %v8770
        %v9345 = vunpack.c.l.b16 %v8771
        %v9346 = vunpack.c.h.b16 %v8771
        %v9347 = vunpack.c.l.b16 %v8772
        %v9348 = vunpack.c.l.b16 %v8773
        %v9349 = vunpack.c.h.b16 %v8773
        %v9350 = vunpack.c.l.b16 %v8774
        %v9351 = vunpack.c.h.b16 %v8774
        %v9352 = vunpack.c.l.b16 %v8775
        %v9353 = vunpack.c.h.b16 %v8775
        %v9354 = vunpack.c.l.b16 %v8776
        %v9355 = vunpack.c.h.b16 %v8776
        %v9356 = vunpack.c.l.b16 %v8777
        %v9357 = vunpack.c.l.b16 %v8778
        %v9358 = vunpack.c.h.b16 %v8778
        %v9359 = vunpack.c.l.b16 %v8779
        %v9360 = vunpack.c.h.b16 %v8779
        %v9361 = vunpack.c.l.b16 %v8780
        %v9362 = vunpack.c.h.b16 %v8780
        %v9363 = vunpack.c.l.b16 %v8781
        %v9364 = vunpack.c.h.b16 %v8781
        %v9365 = vunpack.c.l.b16 %v8782
        %v9366 = vunpack.c.l.b16 %v8783
        %v9367 = vunpack.c.h.b16 %v8783
        %v9368 = vunpack.c.l.b16 %v8784
        %v9369 = vunpack.c.h.b16 %v8784
        %v9370 = vunpack.c.l.b16 %v8785
        %v9371 = vunpack.c.h.b16 %v8785
        %v9372 = vunpack.c.l.b16 %v8786
        %v9373 = vunpack.c.h.b16 %v8786
        %v9374 = vunpack.c.l.b16 %v8787
        %v9375 = vunpack.c.l.b16 %v8788
        %v9376 = vunpack.c.h.b16 %v8788
        %v9377 = vunpack.c.l.b16 %v8789
        %v9378 = vunpack.c.h.b16 %v8789
        %v9379 = vunpack.c.l.b16 %v8790
        %v9380 = vunpack.c.h.b16 %v8790
        %v9381 = vunpack.c.l.b16 %v8791
        %v9382 = vunpack.c.h.b16 %v8791
        %v9383 = vunpack.c.l.b16 %v8792
        %v9384 = vunpack.c.l.b16 %v8793
        %v9385 = vunpack.c.h.b16 %v8793
        %v9386 = vunpack.c.l.b16 %v8794
        %v9387 = vunpack.c.h.b16 %v8794
        %v9388 = vunpack.c.l.b16 %v8795
        %v9389 = vunpack.c.h.b16 %v8795
        %v9390 = vunpack.c.l.b16 %v8796
        %v9391 = vunpack.c.h.b16 %v8796
        %v9392 = vunpack.c.l.b16 %v8797
        %v9393 = vunpack.c.l.b16 %v8798
        %v9394 = vunpack.c.h.b16 %v8798
        %v9395 = vunpack.c.l.b16 %v8799
        %v9396 = vunpack.c.h.b16 %v8799
        %v9397 = vunpack.c.l.b16 %v8800
        %v9398 = vunpack.c.h.b16 %v8800
        %v9399 = vunpack.c.l.b16 %v8801
        %v9400 = vunpack.c.h.b16 %v8801
        %v9401 = vunpack.c.l.b16 %v8802
        %v9402 = vpack.c.b16 %v9123, %v9114
        %v9403 = vpack.c.b16 %v9124, %v9115
        %v9404 = vpack.c.b16 %v9125, %v9116
        %v9405 = vpack.c.b16 %v9126, %v9117
        %v9406 = vpack.c.b16 %v9127, %v9118
        %v9407 = vpack.c.b16 %v9128, %v9119
        %v9408 = vpack.c.b16 %v9129, %v9120
        %v9409 = vpack.c.b16 %v9130, %v9121
        %v9410 = vpack.c.b16 %v9131, %v9122
        %v9411 = vpack.c.b16 %v9141, %v9132
        %v9412 = vpack.c.b16 %v9142, %v9133
        %v9413 = vpack.c.b16 %v9143, %v9134
        %v9414 = vpack.c.b16 %v9144, %v9135
        %v9415 = vpack.c.b16 %v9145, %v9136
        %v9416 = vpack.c.b16 %v9146, %v9137
        %v9417 = vpack.c.b16 %v9147, %v9138
        %v9418 = vpack.c.b16 %v9148, %v9139
        %v9419 = vpack.c.b16 %v9149, %v9140
        %v9420 = vpack.c.b16 %v9159, %v9150
        %v9421 = vpack.c.b16 %v9160, %v9151
        %v9422 = vpack.c.b16 %v9161, %v9152
        %v9423 = vpack.c.b16 %v9162, %v9153
        %v9424 = vpack.c.b16 %v9163, %v9154
        %v9425 = vpack.c.b16 %v9164, %v9155
        %v9426 = vpack.c.b16 %v9165, %v9156
        %v9427 = vpack.c.b16 %v9166, %v9157
        %v9428 = vpack.c.b16 %v9167, %v9158
        %v9429 = vpack.c.b16 %v9177, %v9168
        %v9430 = vpack.c.b16 %v9178, %v9169
        %v9431 = vpack.c.b16 %v9179, %v9170
        %v9432 = vpack.c.b16 %v9180, %v9171
        %v9433 = vpack.c.b16 %v9181, %v9172
        %v9434 = vpack.c.b16 %v9182, %v9173
        %v9435 = vpack.c.b16 %v9183, %v9174
        %v9436 = vpack.c.b16 %v9184, %v9175
        %v9437 = vpack.c.b16 %v9185, %v9176
        %v9438 = vpack.c.b16 %v9195, %v9186
        %v9439 = vpack.c.b16 %v9196, %v9187
        %v9440 = vpack.c.b16 %v9197, %v9188
        %v9441 = vpack.c.b16 %v9198, %v9189
        %v9442 = vpack.c.b16 %v9199, %v9190
        %v9443 = vpack.c.b16 %v9200, %v9191
        %v9444 = vpack.c.b16 %v9201, %v9192
        %v9445 = vpack.c.b16 %v9202, %v9193
        %v9446 = vpack.c.b16 %v9203, %v9194
        %v9447 = vpack.c.b16 %v9213, %v9204
        %v9448 = vpack.c.b16 %v9214, %v9205
        %v9449 = vpack.c.b16 %v9215, %v9206
        %v9450 = vpack.c.b16 %v9216, %v9207
        %v9451 = vpack.c.b16 %v9217, %v9208
        %v9452 = vpack.c.b16 %v9218, %v9209
        %v9453 = vpack.c.b16 %v9219, %v9210
        %v9454 = vpack.c.b16 %v9220, %v9211
        %v9455 = vpack.c.b16 %v9221, %v9212
        %v9456 = vpack.c.b16 %v9231, %v9222
        %v9457 = vpack.c.b16 %v9232, %v9223
        %v9458 = vpack.c.b16 %v9233, %v9224
        %v9459 = vpack.c.b16 %v9234, %v9225
        %v9460 = vpack.c.b16 %v9235, %v9226
        %v9461 = vpack.c.b16 %v9236, %v9227
        %v9462 = vpack.c.b16 %v9237, %v9228
        %v9463 = vpack.c.b16 %v9238, %v9229
        %v9464 = vpack.c.b16 %v9239, %v9230
        %v9465 = vpack.c.b16 %v9249, %v9240
        %v9466 = vpack.c.b16 %v9250, %v9241
        %v9467 = vpack.c.b16 %v9251, %v9242
        %v9468 = vpack.c.b16 %v9252, %v9243
        %v9469 = vpack.c.b16 %v9253, %v9244
        %v9470 = vpack.c.b16 %v9254, %v9245
        %v9471 = vpack.c.b16 %v9255, %v9246
        %v9472 = vpack.c.b16 %v9256, %v9247
        %v9473 = vpack.c.b16 %v9257, %v9248
        %v9474 = vpack.c.b16 %v9267, %v9258
        %v9475 = vpack.c.b16 %v9268, %v9259
        %v9476 = vpack.c.b16 %v9269, %v9260
        %v9477 = vpack.c.b16 %v9270, %v9261
        %v9478 = vpack.c.b16 %v9271, %v9262
        %v9479 = vpack.c.b16 %v9272, %v9263
        %v9480 = vpack.c.b16 %v9273, %v9264
        %v9481 = vpack.c.b16 %v9274, %v9265
        %v9482 = vpack.c.b16 %v9275, %v9266
        %v9483 = vpack.c.b16 %v9285, %v9276
        %v9484 = vpack.c.b16 %v9286, %v9277
        %v9485 = vpack.c.b16 %v9287, %v9278
        %v9486 = vpack.c.b16 %v9288, %v9279
        %v9487 = vpack.c.b16 %v9289, %v9280
        %v9488 = vpack.c.b16 %v9290, %v9281
        %v9489 = vpack.c.b16 %v9291, %v9282
        %v9490 = vpack.c.b16 %v9292, %v9283
        %v9491 = vpack.c.b16 %v9293, %v9284
        %v9492 = vpack.c.b16 %v9303, %v9294
        %v9493 = vpack.c.b16 %v9304, %v9295
        %v9494 = vpack.c.b16 %v9305, %v9296
        %v9495 = vpack.c.b16 %v9306, %v9297
        %v9496 = vpack.c.b16 %v9307, %v9298
        %v9497 = vpack.c.b16 %v9308, %v9299
        %v9498 = vpack.c.b16 %v9309, %v9300
        %v9499 = vpack.c.b16 %v9310, %v9301
        %v9500 = vpack.c.b16 %v9311, %v9302
        %v9501 = vpack.c.b16 %v9321, %v9312
        %v9502 = vpack.c.b16 %v9322, %v9313
        %v9503 = vpack.c.b16 %v9323, %v9314
        %v9504 = vpack.c.b16 %v9324, %v9315
        %v9505 = vpack.c.b16 %v9325, %v9316
        %v9506 = vpack.c.b16 %v9326, %v9317
        %v9507 = vpack.c.b16 %v9327, %v9318
        %v9508 = vpack.c.b16 %v9328, %v9319
        %v9509 = vpack.c.b16 %v9329, %v9320
        %v9510 = vpack.c.b16 %v9339, %v9330
        %v9511 = vpack.c.b16 %v9340, %v9331
        %v9512 = vpack.c.b16 %v9341, %v9332
        %v9513 = vpack.c.b16 %v9342, %v9333
        %v9514 = vpack.c.b16 %v9343, %v9334
        %v9515 = vpack.c.b16 %v9344, %v9335
        %v9516 = vpack.c.b16 %v9345, %v9336
        %v9517 = vpack.c.b16 %v9346, %v9337
        %v9518 = vpack.c.b16 %v9347, %v9338
        %v9519 = vpack.c.b16 %v9357, %v9348
        %v9520 = vpack.c.b16 %v9358, %v9349
        %v9521 = vpack.c.b16 %v9359, %v9350
        %v9522 = vpack.c.b16 %v9360, %v9351
        %v9523 = vpack.c.b16 %v9361, %v9352
        %v9524 = vpack.c.b16 %v9362, %v9353
        %v9525 = vpack.c.b16 %v9363, %v9354
        %v9526 = vpack.c.b16 %v9364, %v9355
        %v9527 = vpack.c.b16 %v9365, %v9356
        %v9528 = vpack.c.b16 %v9375, %v9366
        %v9529 = vpack.c.b16 %v9376, %v9367
        %v9530 = vpack.c.b16 %v9377, %v9368
        %v9531 = vpack.c.b16 %v9378, %v9369
        %v9532 = vpack.c.b16 %v9379, %v9370
        %v9533 = vpack.c.b16 %v9380, %v9371
        %v9534 = vpack.c.b16 %v9381, %v9372
        %v9535 = vpack.c.b16 %v9382, %v9373
        %v9536 = vpack.c.b16 %v9383, %v9374
        %v9537 = vpack.c.b16 %v9393, %v9384
        %v9538 = vpack.c.b16 %v9394, %v9385
        %v9539 = vpack.c.b16 %v9395, %v9386
        %v9540 = vpack.c.b16 %v9396, %v9387
        %v9541 = vpack.c.b16 %v9397, %v9388
        %v9542 = vpack.c.b16 %v9398, %v9389
        %v9543 = vpack.c.b16 %v9399, %v9390
        %v9544 = vpack.c.b16 %v9400, %v9391
        %v9545 = vpack.c.b16 %v9401, %v9392
        %v9834 = vunpack.c.l.b16 %v8803
        %v9835 = vunpack.c.l.b16 %v8804
        %v9836 = vunpack.c.l.b16 %v8805
        %v9837 = vunpack.c.l.b16 %v8806
        %v9838 = vunpack.c.l.b16 %v8807
        %v9839 = vunpack.c.l.b16 %v8808
        %v9840 = vunpack.c.l.b16 %v8809
        %v9841 = vunpack.c.l.b16 %v8810
        %v9842 = vunpack.c.l.b16 %v8811
        %v9843 = vunpack.c.l.b16 %v8812
        %v9844 = vunpack.c.l.b16 %v8813
        %v9845 = vunpack.c.l.b16 %v8814
        %v9846 = vunpack.c.l.b16 %v8815
        %v9847 = vunpack.c.l.b16 %v8816
        %v9848 = vunpack.c.l.b16 %v8817
        %v9849 = vunpack.c.l.b16 %v8818
        %v9850 = vunpack.c.l.b16 %v8819
        %v9851 = vunpack.c.l.b16 %v8820
        %v9852 = vunpack.c.l.b16 %v8821
        %v9853 = vunpack.c.l.b16 %v8822
        %v9854 = vunpack.c.l.b16 %v8823
        %v9855 = vunpack.c.l.b16 %v8824
        %v9856 = vunpack.c.l.b16 %v8825
        %v9857 = vunpack.c.l.b16 %v8826
        %v9858 = vunpack.c.l.b16 %v8827
        %v9859 = vunpack.c.l.b16 %v8828
        %v9860 = vunpack.c.l.b16 %v8829
        %v9861 = vunpack.c.l.b16 %v8830
        %v9862 = vunpack.c.l.b16 %v8831
        %v9863 = vunpack.c.l.b16 %v8832
        %v9864 = vunpack.c.l.b16 %v8833
        %v9865 = vunpack.c.l.b16 %v8834
        %v9866 = vunpack.c.l.b16 %v8835
        %v9867 = vunpack.c.l.b16 %v8836
        %v9868 = vunpack.c.l.b16 %v8837
        %v9869 = vunpack.c.l.b16 %v8838
        %v9870 = vunpack.c.l.b16 %v8839
        %v9871 = vunpack.c.l.b16 %v8840
        %v9872 = vunpack.c.l.b16 %v8841
        %v9873 = vunpack.c.l.b16 %v8842
        %v9874 = vunpack.c.l.b16 %v8843
        %v9875 = vunpack.c.l.b16 %v8844
        %v9876 = vunpack.c.l.b16 %v8845
        %v9877 = vunpack.c.l.b16 %v8846
        %v9878 = vunpack.c.l.b16 %v8847
        %v9879 = vunpack.c.l.b16 %v8848
        %v9880 = vunpack.c.l.b16 %v8849
        %v9881 = vunpack.c.l.b16 %v8850
        %v9882 = vunpack.c.l.b16 %v8851
        %v9883 = vunpack.c.l.b16 %v8852
        %v9884 = vunpack.c.l.b16 %v8853
        %v9885 = vunpack.c.l.b16 %v8854
        %v9886 = vunpack.c.l.b16 %v8855
        %v9887 = vunpack.c.l.b16 %v8856
        %v9888 = vunpack.c.l.b16 %v8857
        %v9889 = vunpack.c.l.b16 %v8858
        %v9890 = vunpack.c.l.b16 %v8859
        %v9891 = vunpack.c.l.b16 %v8860
        %v9892 = vunpack.c.l.b16 %v8861
        %v9893 = vunpack.c.l.b16 %v8862
        %v9894 = vunpack.c.l.b16 %v8863
        %v9895 = vunpack.c.l.b16 %v8864
        %v9896 = vunpack.c.l.b16 %v8865
        %v9897 = vunpack.c.l.b16 %v8866
        %v9898 = vunpack.c.l.b16 %v8867
        %v9899 = vunpack.c.l.b16 %v8868
        %v9900 = vunpack.c.l.b16 %v8869
        %v9901 = vunpack.c.l.b16 %v8870
        %v9902 = vunpack.c.l.b16 %v8871
        %v9903 = vunpack.c.l.b16 %v8872
        %v9904 = vunpack.c.l.b16 %v8873
        %v9905 = vunpack.c.l.b16 %v8874
        %v9906 = vunpack.c.l.b16 %v8875
        %v9907 = vunpack.c.l.b16 %v8876
        %v9908 = vunpack.c.l.b16 %v8877
        %v9909 = vunpack.c.l.b16 %v8878
        %v9910 = vunpack.c.l.b16 %v8879
        %v9911 = vunpack.c.l.b16 %v8880
        %v9912 = vunpack.c.l.b16 %v8881
        %v9913 = vunpack.c.l.b16 %v8882
        %v9914 = vunpack.c.l.b16 %v8883
        %v9915 = vunpack.c.l.b16 %v8884
        %v9916 = vunpack.c.l.b16 %v8885
        %v9917 = vunpack.c.l.b16 %v8886
        %v9918 = vunpack.c.l.b16 %v8887
        %v9919 = vunpack.c.l.b16 %v8888
        %v9920 = vunpack.c.l.b16 %v8889
        %v9921 = vunpack.c.l.b16 %v8890
        %v9922 = vunpack.c.l.b16 %v8891
        %v9923 = vunpack.c.l.b16 %v8892
        %v9924 = vunpack.c.l.b16 %v8893
        %v9925 = vunpack.c.l.b16 %v8894
        %v9926 = vunpack.c.l.b16 %v8895
        %v9927 = vunpack.c.l.b16 %v8896
        %v9928 = vunpack.c.l.b16 %v8897
        %v9929 = vunpack.c.l.b16 %v8898
        %v9930 = vunpack.c.l.b16 %v8899
        %v9931 = vunpack.c.l.b16 %v8900
        %v9932 = vunpack.c.l.b16 %v8901
        %v9933 = vunpack.c.l.b16 %v8902
        %v9934 = vunpack.c.l.b16 %v8903
        %v9935 = vunpack.c.l.b16 %v8904
        %v9936 = vunpack.c.l.b16 %v8905
        %v9937 = vunpack.c.l.b16 %v8906
        %v9938 = vunpack.c.l.b16 %v8907
        %v9939 = vunpack.c.l.b16 %v8908
        %v9940 = vunpack.c.l.b16 %v8909
        %v9941 = vunpack.c.l.b16 %v8910
        %v9942 = vunpack.c.l.b16 %v8911
        %v9943 = vunpack.c.l.b16 %v8912
        %v9944 = vunpack.c.l.b16 %v8913
        %v9945 = vunpack.c.l.b16 %v8914
        %v9946 = vunpack.c.l.b16 %v8915
        %v9947 = vunpack.c.l.b16 %v8916
        %v9948 = vunpack.c.l.b16 %v8917
        %v9949 = vunpack.c.l.b16 %v8918
        %v9950 = vunpack.c.l.b16 %v8919
        %v9951 = vunpack.c.l.b16 %v8920
        %v9952 = vunpack.c.l.b16 %v8921
        %v9953 = vunpack.c.l.b16 %v8922
        %v9954 = vunpack.c.l.b16 %v8923
        %v9955 = vunpack.c.l.b16 %v8924
        %v9956 = vunpack.c.l.b16 %v8925
        %v9957 = vunpack.c.l.b16 %v8926
        %v9958 = vunpack.c.l.b16 %v8927
        %v9959 = vunpack.c.l.b16 %v8928
        %v9960 = vunpack.c.l.b16 %v8929
        %v9961 = vunpack.c.l.b16 %v8930
        %v9962 = vunpack.c.l.b16 %v8931
        %v9963 = vunpack.c.l.b16 %v8932
        %v9964 = vunpack.c.l.b16 %v8933
        %v9965 = vunpack.c.l.b16 %v8934
        %v9966 = vunpack.c.l.b16 %v8935
        %v9967 = vunpack.c.l.b16 %v8936
        %v9968 = vunpack.c.l.b16 %v8937
        %v9969 = vunpack.c.l.b16 %v8938
        %v9970 = vunpack.c.l.b16 %v8939
        %v9971 = vunpack.c.l.b16 %v8940
        %v9972 = vunpack.c.l.b16 %v8941
        %v9973 = vunpack.c.l.b16 %v8942
        %v9974 = vunpack.c.l.b16 %v8943
        %v9975 = vunpack.c.l.b16 %v8944
        %v9976 = vunpack.c.l.b16 %v8945
        %v9977 = vunpack.c.l.b16 %v8946
        %v9978 = vpack.c.b16 %v9835, %v9834
        %v9979 = vpack.c.b16 %v9837, %v9836
        %v9980 = vpack.c.b16 %v9839, %v9838
        %v9981 = vpack.c.b16 %v9841, %v9840
        %v9982 = vpack.c.b16 %v9843, %v9842
        %v9983 = vpack.c.b16 %v9845, %v9844
        %v9984 = vpack.c.b16 %v9847, %v9846
        %v9985 = vpack.c.b16 %v9849, %v9848
        %v9986 = vpack.c.b16 %v9851, %v9850
        %v9987 = vpack.c.b16 %v9853, %v9852
        %v9988 = vpack.c.b16 %v9855, %v9854
        %v9989 = vpack.c.b16 %v9857, %v9856
        %v9990 = vpack.c.b16 %v9859, %v9858
        %v9991 = vpack.c.b16 %v9861, %v9860
        %v9992 = vpack.c.b16 %v9863, %v9862
        %v9993 = vpack.c.b16 %v9865, %v9864
        %v9994 = vpack.c.b16 %v9867, %v9866
        %v9995 = vpack.c.b16 %v9869, %v9868
        %v9996 = vpack.c.b16 %v9871, %v9870
        %v9997 = vpack.c.b16 %v9873, %v9872
        %v9998 = vpack.c.b16 %v9875, %v9874
        %v9999 = vpack.c.b16 %v9877, %v9876
        %v10000 = vpack.c.b16 %v9879, %v9878
        %v10001 = vpack.c.b16 %v9881, %v9880
        %v10002 = vpack.c.b16 %v9883, %v9882
        %v10003 = vpack.c.b16 %v9885, %v9884
        %v10004 = vpack.c.b16 %v9887, %v9886
        %v10005 = vpack.c.b16 %v9889, %v9888
        %v10006 = vpack.c.b16 %v9891, %v9890
        %v10007 = vpack.c.b16 %v9893, %v9892
        %v10008 = vpack.c.b16 %v9895, %v9894
        %v10009 = vpack.c.b16 %v9897, %v9896
        %v10010 = vpack.c.b16 %v9899, %v9898
        %v10011 = vpack.c.b16 %v9901, %v9900
        %v10012 = vpack.c.b16 %v9903, %v9902
        %v10013 = vpack.c.b16 %v9905, %v9904
        %v10014 = vpack.c.b16 %v9907, %v9906
        %v10015 = vpack.c.b16 %v9909, %v9908
        %v10016 = vpack.c.b16 %v9911, %v9910
        %v10017 = vpack.c.b16 %v9913, %v9912
        %v10018 = vpack.c.b16 %v9915, %v9914
        %v10019 = vpack.c.b16 %v9917, %v9916
        %v10020 = vpack.c.b16 %v9919, %v9918
        %v10021 = vpack.c.b16 %v9921, %v9920
        %v10022 = vpack.c.b16 %v9923, %v9922
        %v10023 = vpack.c.b16 %v9925, %v9924
        %v10024 = vpack.c.b16 %v9927, %v9926
        %v10025 = vpack.c.b16 %v9929, %v9928
        %v10026 = vpack.c.b16 %v9931, %v9930
        %v10027 = vpack.c.b16 %v9933, %v9932
        %v10028 = vpack.c.b16 %v9935, %v9934
        %v10029 = vpack.c.b16 %v9937, %v9936
        %v10030 = vpack.c.b16 %v9939, %v9938
        %v10031 = vpack.c.b16 %v9941, %v9940
        %v10032 = vpack.c.b16 %v9943, %v9942
        %v10033 = vpack.c.b16 %v9945, %v9944
        %v10034 = vpack.c.b16 %v9947, %v9946
        %v10035 = vpack.c.b16 %v9949, %v9948
        %v10036 = vpack.c.b16 %v9951, %v9950
        %v10037 = vpack.c.b16 %v9953, %v9952
        %v10038 = vpack.c.b16 %v9955, %v9954
        %v10039 = vpack.c.b16 %v9957, %v9956
        %v10040 = vpack.c.b16 %v9959, %v9958
        %v10041 = vpack.c.b16 %v9961, %v9960
        %v10042 = vpack.c.b16 %v9963, %v9962
        %v10043 = vpack.c.b16 %v9965, %v9964
        %v10044 = vpack.c.b16 %v9967, %v9966
        %v10045 = vpack.c.b16 %v9969, %v9968
        %v10046 = vpack.c.b16 %v9971, %v9970
        %v10047 = vpack.c.b16 %v9973, %v9972
        %v10048 = vpack.c.b16 %v9975, %v9974
        %v10049 = vpack.c.b16 %v9977, %v9976
        %10122 = vmatprep.subr.bf16.mxu0 0
        %10123 = vmatpush1.bf16.msra.mxu0 %v9985
        %10124 = vmatprep.subr.bf16.mxu0 0
        %10125 = vmatpush1.bf16.msra.mxu0 %v9984
        %10126 = vmatprep.subr.bf16.mxu0 0
        %10127 = vmatpush1.bf16.msra.mxu0 %v9983
        %10128 = vmatprep.subr.bf16.mxu0 0
        %10129 = vmatpush1.bf16.msra.mxu0 %v9982
        %10130 = vmatprep.subr.bf16.mxu0 0
        %10131 = vmatpush1.bf16.msra.mxu0 %v9981
        %10132 = vmatprep.subr.bf16.mxu0 0
        %10133 = vmatpush1.bf16.msra.mxu0 %v9980
        %10134 = vmatprep.subr.bf16.mxu0 0
        %10135 = vmatpush1.bf16.msra.mxu0 %v9979
        %10136 = vmatprep.subr.bf16.mxu0 0
        %10137 = vmatpush1.bf16.msra.mxu0 %v9978
        %10138 = vmatprep.subr.bf16.mxu0 0
        %10139 = vmatpush2.bf16.msra.mxu0 %v9993
        %10140 = vmatprep.subr.bf16.mxu0 0
        %10141 = vmatpush2.bf16.msra.mxu0 %v9992
        %10142 = vmatprep.subr.bf16.mxu0 0
        %10143 = vmatpush2.bf16.msra.mxu0 %v9991
        %10144 = vmatprep.subr.bf16.mxu0 0
        %10145 = vmatpush2.bf16.msra.mxu0 %v9990
        %10146 = vmatprep.subr.bf16.mxu0 0
        %10147 = vmatpush2.bf16.msra.mxu0 %v9989
        %10148 = vmatprep.subr.bf16.mxu0 0
        %10149 = vmatpush2.bf16.msra.mxu0 %v9988
        %10150 = vmatprep.subr.bf16.mxu0 0
        %10151 = vmatpush2.bf16.msra.mxu0 %v9987
        %10152 = vmatprep.subr.bf16.mxu0 0
        %10153 = vmatpush2.bf16.msra.mxu0 %v9986
        %10154 = vmatprep.mubr.bf16.mxu0 %v9403
        %10155 = vmatmul.mubr.bf16.gmra.mxu0 %v9402
        %v10156 = vpop.f32.mrf.mxu0
        %v10157 = vadd.f32 %v8952, %v10156
        %v10158 = vpop.f32.mrf.mxu0
        %v10159 = vpop.f32.mrf.mxu0
        %v10160 = vadd.f32 %v8952, %v10159
        %v10161 = vpop.f32.mrf.mxu0
        %10162 = vmatprep.mubr.bf16.mxu0 %v9412
        %10163 = vmatmul.mubr.bf16.gmra.mxu0 %v9411
        %v10164 = vpop.f32.mrf.mxu0
        %v10165 = vadd.f32 %v8952, %v10164
        %v10166 = vpop.f32.mrf.mxu0
        %v10167 = vpop.f32.mrf.mxu0
        %v10168 = vadd.f32 %v8952, %v10167
        %v10169 = vpop.f32.mrf.mxu0
        %10170 = vmatprep.mubr.bf16.mxu0 %v9421
        %10171 = vmatmul.mubr.bf16.gmra.mxu0 %v9420
        %v10172 = vpop.f32.mrf.mxu0
        %v10173 = vadd.f32 %v8952, %v10172
        %v10174 = vpop.f32.mrf.mxu0
        %v10175 = vpop.f32.mrf.mxu0
        %v10176 = vadd.f32 %v8952, %v10175
        %v10177 = vpop.f32.mrf.mxu0
        %10178 = vmatprep.mubr.bf16.mxu0 %v9430
        %10179 = vmatmul.mubr.bf16.gmra.mxu0 %v9429
        %v10180 = vpop.f32.mrf.mxu0
        %v10181 = vadd.f32 %v8952, %v10180
        %v10182 = vpop.f32.mrf.mxu0
        %v10183 = vpop.f32.mrf.mxu0
        %v10184 = vadd.f32 %v8952, %v10183
        %v10185 = vpop.f32.mrf.mxu0
        %10186 = vmatprep.mubr.bf16.mxu0 %v9439
        %10187 = vmatmul.mubr.bf16.gmra.mxu0 %v9438
        %v10188 = vpop.f32.mrf.mxu0
        %v10189 = vadd.f32 %v8952, %v10188
        %v10190 = vpop.f32.mrf.mxu0
        %v10191 = vpop.f32.mrf.mxu0
        %v10192 = vadd.f32 %v8952, %v10191
        %v10193 = vpop.f32.mrf.mxu0
        %10194 = vmatprep.mubr.bf16.mxu0 %v9448
        %10195 = vmatmul.mubr.bf16.gmra.mxu0 %v9447
        %v10196 = vpop.f32.mrf.mxu0
        %v10197 = vadd.f32 %v8952, %v10196
        %v10198 = vpop.f32.mrf.mxu0
        %v10199 = vpop.f32.mrf.mxu0
        %v10200 = vadd.f32 %v8952, %v10199
        %v10201 = vpop.f32.mrf.mxu0
        %10202 = vmatprep.mubr.bf16.mxu0 %v9457
        %10203 = vmatmul.mubr.bf16.gmra.mxu0 %v9456
        %v10204 = vpop.f32.mrf.mxu0
        %v10205 = vadd.f32 %v8952, %v10204
        %v10206 = vpop.f32.mrf.mxu0
        %v10207 = vpop.f32.mrf.mxu0
        %v10208 = vadd.f32 %v8952, %v10207
        %v10209 = vpop.f32.mrf.mxu0
        %10210 = vmatprep.mubr.bf16.mxu0 %v9466
        %10211 = vmatmul.mubr.bf16.gmra.mxu0 %v9465
        %v10212 = vpop.f32.mrf.mxu0
        %v10213 = vadd.f32 %v8952, %v10212
        %v10214 = vpop.f32.mrf.mxu0
        %v10215 = vpop.f32.mrf.mxu0
        %v10216 = vadd.f32 %v8952, %v10215
        %v10217 = vpop.f32.mrf.mxu0
        %10218 = vmatprep.mubr.bf16.mxu0 %v9475
        %10219 = vmatmul.mubr.bf16.gmra.mxu0 %v9474
        %v10220 = vpop.f32.mrf.mxu0
        %v10221 = vadd.f32 %v8952, %v10220
        %v10222 = vpop.f32.mrf.mxu0
        %v10223 = vpop.f32.mrf.mxu0
        %v10224 = vadd.f32 %v8952, %v10223
        %v10225 = vpop.f32.mrf.mxu0
        %10226 = vmatprep.mubr.bf16.mxu0 %v9484
        %10227 = vmatmul.mubr.bf16.gmra.mxu0 %v9483
        %v10228 = vpop.f32.mrf.mxu0
        %v10229 = vadd.f32 %v8952, %v10228
        %v10230 = vpop.f32.mrf.mxu0
        %v10231 = vpop.f32.mrf.mxu0
        %v10232 = vadd.f32 %v8952, %v10231
        %v10233 = vpop.f32.mrf.mxu0
        %10234 = vmatprep.mubr.bf16.mxu0 %v9493
        %10235 = vmatmul.mubr.bf16.gmra.mxu0 %v9492
        %v10236 = vpop.f32.mrf.mxu0
        %v10237 = vadd.f32 %v8952, %v10236
        %v10238 = vpop.f32.mrf.mxu0
        %v10239 = vpop.f32.mrf.mxu0
        %v10240 = vadd.f32 %v8952, %v10239
        %v10241 = vpop.f32.mrf.mxu0
        %10242 = vmatprep.mubr.bf16.mxu0 %v9502
        %10243 = vmatmul.mubr.bf16.gmra.mxu0 %v9501
        %v10244 = vpop.f32.mrf.mxu0
        %v10245 = vadd.f32 %v8952, %v10244
        %v10246 = vpop.f32.mrf.mxu0
        %v10247 = vpop.f32.mrf.mxu0
        %v10248 = vadd.f32 %v8952, %v10247
        %v10249 = vpop.f32.mrf.mxu0
        %10250 = vmatprep.mubr.bf16.mxu0 %v9511
        %10251 = vmatmul.mubr.bf16.gmra.mxu0 %v9510
        %v10252 = vpop.f32.mrf.mxu0
        %v10253 = vadd.f32 %v8952, %v10252
        %v10254 = vpop.f32.mrf.mxu0
        %v10255 = vpop.f32.mrf.mxu0
        %v10256 = vadd.f32 %v8952, %v10255
        %v10257 = vpop.f32.mrf.mxu0
        %10258 = vmatprep.mubr.bf16.mxu0 %v9520
        %10259 = vmatmul.mubr.bf16.gmra.mxu0 %v9519
        %v10260 = vpop.f32.mrf.mxu0
        %v10261 = vadd.f32 %v8952, %v10260
        %v10262 = vpop.f32.mrf.mxu0
        %v10263 = vpop.f32.mrf.mxu0
        %v10264 = vadd.f32 %v8952, %v10263
        %v10265 = vpop.f32.mrf.mxu0
        %10266 = vmatprep.mubr.bf16.mxu0 %v9529
        %10267 = vmatmul.mubr.bf16.gmra.mxu0 %v9528
        %v10268 = vpop.f32.mrf.mxu0
        %v10269 = vadd.f32 %v8952, %v10268
        %v10270 = vpop.f32.mrf.mxu0
        %v10271 = vpop.f32.mrf.mxu0
        %v10272 = vadd.f32 %v8952, %v10271
        %v10273 = vpop.f32.mrf.mxu0
        %10274 = vmatprep.mubr.bf16.mxu0 %v9538
        %10275 = vmatmul.mubr.bf16.gmra.mxu0 %v9537
        %v10276 = vpop.f32.mrf.mxu0
        %v10277 = vadd.f32 %v8952, %v10276
        %v10278 = vpop.f32.mrf.mxu0
        %v10279 = vpop.f32.mrf.mxu0
        %v10280 = vadd.f32 %v8952, %v10279
        %v10281 = vpop.f32.mrf.mxu0
        %10282 = vdwg.mxu0
        %10283 = vmatprep.subr.bf16.mxu0 0
        %10284 = vmatpush1.bf16.msra.mxu0 %v10001
        %10285 = vmatprep.subr.bf16.mxu0 0
        %10286 = vmatpush1.bf16.msra.mxu0 %v10000
        %10287 = vmatprep.subr.bf16.mxu0 0
        %10288 = vmatpush1.bf16.msra.mxu0 %v9999
        %10289 = vmatprep.subr.bf16.mxu0 0
        %10290 = vmatpush1.bf16.msra.mxu0 %v9998
        %10291 = vmatprep.subr.bf16.mxu0 0
        %10292 = vmatpush1.bf16.msra.mxu0 %v9997
        %10293 = vmatprep.subr.bf16.mxu0 0
        %10294 = vmatpush1.bf16.msra.mxu0 %v9996
        %10295 = vmatprep.subr.bf16.mxu0 0
        %10296 = vmatpush1.bf16.msra.mxu0 %v9995
        %10297 = vmatprep.subr.bf16.mxu0 0
        %10298 = vmatpush1.bf16.msra.mxu0 %v9994
        %10299 = vmatprep.subr.bf16.mxu0 0
        %10300 = vmatpush2.bf16.msra.mxu0 %v10009
        %10301 = vmatprep.subr.bf16.mxu0 0
        %10302 = vmatpush2.bf16.msra.mxu0 %v10008
        %10303 = vmatprep.subr.bf16.mxu0 0
        %10304 = vmatpush2.bf16.msra.mxu0 %v10007
        %10305 = vmatprep.subr.bf16.mxu0 0
        %10306 = vmatpush2.bf16.msra.mxu0 %v10006
        %10307 = vmatprep.subr.bf16.mxu0 0
        %10308 = vmatpush2.bf16.msra.mxu0 %v10005
        %10309 = vmatprep.subr.bf16.mxu0 0
        %10310 = vmatpush2.bf16.msra.mxu0 %v10004
        %10311 = vmatprep.subr.bf16.mxu0 0
        %10312 = vmatpush2.bf16.msra.mxu0 %v10003
        %10313 = vmatprep.subr.bf16.mxu0 0
        %10314 = vmatpush2.bf16.msra.mxu0 %v10002
        %10315 = vmatprep.mubr.bf16.mxu0 %v9405
        %10316 = vmatmul.mubr.bf16.gmra.mxu0 %v9404
        %v10317 = vpop.f32.mrf.mxu0
        %v10318 = vadd.f32 %v10157, %v10317
        %v10319 = vpop.f32.mrf.mxu0
        %v10320 = vpop.f32.mrf.mxu0
        %v10321 = vadd.f32 %v10160, %v10320
        %v10322 = vpop.f32.mrf.mxu0
        %10323 = vmatprep.mubr.bf16.mxu0 %v9414
        %10324 = vmatmul.mubr.bf16.gmra.mxu0 %v9413
        %v10325 = vpop.f32.mrf.mxu0
        %v10326 = vadd.f32 %v10165, %v10325
        %v10327 = vpop.f32.mrf.mxu0
        %v10328 = vpop.f32.mrf.mxu0
        %v10329 = vadd.f32 %v10168, %v10328
        %v10330 = vpop.f32.mrf.mxu0
        %10331 = vmatprep.mubr.bf16.mxu0 %v9423
        %10332 = vmatmul.mubr.bf16.gmra.mxu0 %v9422
        %v10333 = vpop.f32.mrf.mxu0
        %v10334 = vadd.f32 %v10173, %v10333
        %v10335 = vpop.f32.mrf.mxu0
        %v10336 = vpop.f32.mrf.mxu0
        %v10337 = vadd.f32 %v10176, %v10336
        %v10338 = vpop.f32.mrf.mxu0
        %10339 = vmatprep.mubr.bf16.mxu0 %v9432
        %10340 = vmatmul.mubr.bf16.gmra.mxu0 %v9431
        %v10341 = vpop.f32.mrf.mxu0
        %v10342 = vadd.f32 %v10181, %v10341
        %v10343 = vpop.f32.mrf.mxu0
        %v10344 = vpop.f32.mrf.mxu0
        %v10345 = vadd.f32 %v10184, %v10344
        %v10346 = vpop.f32.mrf.mxu0
        %10347 = vmatprep.mubr.bf16.mxu0 %v9441
        %10348 = vmatmul.mubr.bf16.gmra.mxu0 %v9440
        %v10349 = vpop.f32.mrf.mxu0
        %v10350 = vadd.f32 %v10189, %v10349
        %v10351 = vpop.f32.mrf.mxu0
        %v10352 = vpop.f32.mrf.mxu0
        %v10353 = vadd.f32 %v10192, %v10352
        %v10354 = vpop.f32.mrf.mxu0
        %10355 = vmatprep.mubr.bf16.mxu0 %v9450
        %10356 = vmatmul.mubr.bf16.gmra.mxu0 %v9449
        %v10357 = vpop.f32.mrf.mxu0
        %v10358 = vadd.f32 %v10197, %v10357
        %v10359 = vpop.f32.mrf.mxu0
        %v10360 = vpop.f32.mrf.mxu0
        %v10361 = vadd.f32 %v10200, %v10360
        %v10362 = vpop.f32.mrf.mxu0
        %10363 = vmatprep.mubr.bf16.mxu0 %v9459
        %10364 = vmatmul.mubr.bf16.gmra.mxu0 %v9458
        %v10365 = vpop.f32.mrf.mxu0
        %v10366 = vadd.f32 %v10205, %v10365
        %v10367 = vpop.f32.mrf.mxu0
        %v10368 = vpop.f32.mrf.mxu0
        %v10369 = vadd.f32 %v10208, %v10368
        %v10370 = vpop.f32.mrf.mxu0
        %10371 = vmatprep.mubr.bf16.mxu0 %v9468
        %10372 = vmatmul.mubr.bf16.gmra.mxu0 %v9467
        %v10373 = vpop.f32.mrf.mxu0
        %v10374 = vadd.f32 %v10213, %v10373
        %v10375 = vpop.f32.mrf.mxu0
        %v10376 = vpop.f32.mrf.mxu0
        %v10377 = vadd.f32 %v10216, %v10376
        %v10378 = vpop.f32.mrf.mxu0
        %10379 = vmatprep.mubr.bf16.mxu0 %v9477
        %10380 = vmatmul.mubr.bf16.gmra.mxu0 %v9476
        %v10381 = vpop.f32.mrf.mxu0
        %v10382 = vadd.f32 %v10221, %v10381
        %v10383 = vpop.f32.mrf.mxu0
        %v10384 = vpop.f32.mrf.mxu0
        %v10385 = vadd.f32 %v10224, %v10384
        %v10386 = vpop.f32.mrf.mxu0
        %10387 = vmatprep.mubr.bf16.mxu0 %v9486
        %10388 = vmatmul.mubr.bf16.gmra.mxu0 %v9485
        %v10389 = vpop.f32.mrf.mxu0
        %v10390 = vadd.f32 %v10229, %v10389
        %v10391 = vpop.f32.mrf.mxu0
        %v10392 = vpop.f32.mrf.mxu0
        %v10393 = vadd.f32 %v10232, %v10392
        %v10394 = vpop.f32.mrf.mxu0
        %10395 = vmatprep.mubr.bf16.mxu0 %v9495
        %10396 = vmatmul.mubr.bf16.gmra.mxu0 %v9494
        %v10397 = vpop.f32.mrf.mxu0
        %v10398 = vadd.f32 %v10237, %v10397
        %v10399 = vpop.f32.mrf.mxu0
        %v10400 = vpop.f32.mrf.mxu0
        %v10401 = vadd.f32 %v10240, %v10400
        %v10402 = vpop.f32.mrf.mxu0
        %10403 = vmatprep.mubr.bf16.mxu0 %v9504
        %10404 = vmatmul.mubr.bf16.gmra.mxu0 %v9503
        %v10405 = vpop.f32.mrf.mxu0
        %v10406 = vadd.f32 %v10245, %v10405
        %v10407 = vpop.f32.mrf.mxu0
        %v10408 = vpop.f32.mrf.mxu0
        %v10409 = vadd.f32 %v10248, %v10408
        %v10410 = vpop.f32.mrf.mxu0
        %10411 = vmatprep.mubr.bf16.mxu0 %v9513
        %10412 = vmatmul.mubr.bf16.gmra.mxu0 %v9512
        %v10413 = vpop.f32.mrf.mxu0
        %v10414 = vadd.f32 %v10253, %v10413
        %v10415 = vpop.f32.mrf.mxu0
        %v10416 = vpop.f32.mrf.mxu0
        %v10417 = vadd.f32 %v10256, %v10416
        %v10418 = vpop.f32.mrf.mxu0
        %10419 = vmatprep.mubr.bf16.mxu0 %v9522
        %10420 = vmatmul.mubr.bf16.gmra.mxu0 %v9521
        %v10421 = vpop.f32.mrf.mxu0
        %v10422 = vadd.f32 %v10261, %v10421
        %v10423 = vpop.f32.mrf.mxu0
        %v10424 = vpop.f32.mrf.mxu0
        %v10425 = vadd.f32 %v10264, %v10424
        %v10426 = vpop.f32.mrf.mxu0
        %10427 = vmatprep.mubr.bf16.mxu0 %v9531
        %10428 = vmatmul.mubr.bf16.gmra.mxu0 %v9530
        %v10429 = vpop.f32.mrf.mxu0
        %v10430 = vadd.f32 %v10269, %v10429
        %v10431 = vpop.f32.mrf.mxu0
        %v10432 = vpop.f32.mrf.mxu0
        %v10433 = vadd.f32 %v10272, %v10432
        %v10434 = vpop.f32.mrf.mxu0
        %10435 = vmatprep.mubr.bf16.mxu0 %v9540
        %10436 = vmatmul.mubr.bf16.gmra.mxu0 %v9539
        %v10437 = vpop.f32.mrf.mxu0
        %v10438 = vadd.f32 %v10277, %v10437
        %v10439 = vpop.f32.mrf.mxu0
        %v10440 = vpop.f32.mrf.mxu0
        %v10441 = vadd.f32 %v10280, %v10440
        %v10442 = vpop.f32.mrf.mxu0
        %10443 = vdwg.mxu0
        %10444 = vmatprep.subr.bf16.mxu0 0
        %10445 = vmatpush1.bf16.msra.mxu0 %v10017
        %10446 = vmatprep.subr.bf16.mxu0 0
        %10447 = vmatpush1.bf16.msra.mxu0 %v10016
        %10448 = vmatprep.subr.bf16.mxu0 0
        %10449 = vmatpush1.bf16.msra.mxu0 %v10015
        %10450 = vmatprep.subr.bf16.mxu0 0
        %10451 = vmatpush1.bf16.msra.mxu0 %v10014
        %10452 = vmatprep.subr.bf16.mxu0 0
        %10453 = vmatpush1.bf16.msra.mxu0 %v10013
        %10454 = vmatprep.subr.bf16.mxu0 0
        %10455 = vmatpush1.bf16.msra.mxu0 %v10012
        %10456 = vmatprep.subr.bf16.mxu0 0
        %10457 = vmatpush1.bf16.msra.mxu0 %v10011
        %10458 = vmatprep.subr.bf16.mxu0 0
        %10459 = vmatpush1.bf16.msra.mxu0 %v10010
        %10460 = vmatprep.subr.bf16.mxu0 0
        %10461 = vmatpush2.bf16.msra.mxu0 %v10025
        %10462 = vmatprep.subr.bf16.mxu0 0
        %10463 = vmatpush2.bf16.msra.mxu0 %v10024
        %10464 = vmatprep.subr.bf16.mxu0 0
        %10465 = vmatpush2.bf16.msra.mxu0 %v10023
        %10466 = vmatprep.subr.bf16.mxu0 0
        %10467 = vmatpush2.bf16.msra.mxu0 %v10022
        %10468 = vmatprep.subr.bf16.mxu0 0
        %10469 = vmatpush2.bf16.msra.mxu0 %v10021
        %10470 = vmatprep.subr.bf16.mxu0 0
        %10471 = vmatpush2.bf16.msra.mxu0 %v10020
        %10472 = vmatprep.subr.bf16.mxu0 0
        %10473 = vmatpush2.bf16.msra.mxu0 %v10019
        %10474 = vmatprep.subr.bf16.mxu0 0
        %10475 = vmatpush2.bf16.msra.mxu0 %v10018
        %10476 = vmatprep.mubr.bf16.mxu0 %v9407
        %10477 = vmatmul.mubr.bf16.gmra.mxu0 %v9406
        %v10478 = vpop.f32.mrf.mxu0
        %v10479 = vadd.f32 %v10318, %v10478
        %v10480 = vpop.f32.mrf.mxu0
        %v10481 = vpop.f32.mrf.mxu0
        %v10482 = vadd.f32 %v10321, %v10481
        %v10483 = vpop.f32.mrf.mxu0
        %10484 = vmatprep.mubr.bf16.mxu0 %v9416
        %10485 = vmatmul.mubr.bf16.gmra.mxu0 %v9415
        %v10486 = vpop.f32.mrf.mxu0
        %v10487 = vadd.f32 %v10326, %v10486
        %v10488 = vpop.f32.mrf.mxu0
        %v10489 = vpop.f32.mrf.mxu0
        %v10490 = vadd.f32 %v10329, %v10489
        %v10491 = vpop.f32.mrf.mxu0
        %10492 = vmatprep.mubr.bf16.mxu0 %v9425
        %10493 = vmatmul.mubr.bf16.gmra.mxu0 %v9424
        %v10494 = vpop.f32.mrf.mxu0
        %v10495 = vadd.f32 %v10334, %v10494
        %v10496 = vpop.f32.mrf.mxu0
        %v10497 = vpop.f32.mrf.mxu0
        %v10498 = vadd.f32 %v10337, %v10497
        %v10499 = vpop.f32.mrf.mxu0
        %10500 = vmatprep.mubr.bf16.mxu0 %v9434
        %10501 = vmatmul.mubr.bf16.gmra.mxu0 %v9433
        %v10502 = vpop.f32.mrf.mxu0
        %v10503 = vadd.f32 %v10342, %v10502
        %v10504 = vpop.f32.mrf.mxu0
        %v10505 = vpop.f32.mrf.mxu0
        %v10506 = vadd.f32 %v10345, %v10505
        %v10507 = vpop.f32.mrf.mxu0
        %10508 = vmatprep.mubr.bf16.mxu0 %v9443
        %10509 = vmatmul.mubr.bf16.gmra.mxu0 %v9442
        %v10510 = vpop.f32.mrf.mxu0
        %v10511 = vadd.f32 %v10350, %v10510
        %v10512 = vpop.f32.mrf.mxu0
        %v10513 = vpop.f32.mrf.mxu0
        %v10514 = vadd.f32 %v10353, %v10513
        %v10515 = vpop.f32.mrf.mxu0
        %10516 = vmatprep.mubr.bf16.mxu0 %v9452
        %10517 = vmatmul.mubr.bf16.gmra.mxu0 %v9451
        %v10518 = vpop.f32.mrf.mxu0
        %v10519 = vadd.f32 %v10358, %v10518
        %v10520 = vpop.f32.mrf.mxu0
        %v10521 = vpop.f32.mrf.mxu0
        %v10522 = vadd.f32 %v10361, %v10521
        %v10523 = vpop.f32.mrf.mxu0
        %10524 = vmatprep.mubr.bf16.mxu0 %v9461
        %10525 = vmatmul.mubr.bf16.gmra.mxu0 %v9460
        %v10526 = vpop.f32.mrf.mxu0
        %v10527 = vadd.f32 %v10366, %v10526
        %v10528 = vpop.f32.mrf.mxu0
        %v10529 = vpop.f32.mrf.mxu0
        %v10530 = vadd.f32 %v10369, %v10529
        %v10531 = vpop.f32.mrf.mxu0
        %10532 = vmatprep.mubr.bf16.mxu0 %v9470
        %10533 = vmatmul.mubr.bf16.gmra.mxu0 %v9469
        %v10534 = vpop.f32.mrf.mxu0
        %v10535 = vadd.f32 %v10374, %v10534
        %v10536 = vpop.f32.mrf.mxu0
        %v10537 = vpop.f32.mrf.mxu0
        %v10538 = vadd.f32 %v10377, %v10537
        %v10539 = vpop.f32.mrf.mxu0
        %10540 = vmatprep.mubr.bf16.mxu0 %v9479
        %10541 = vmatmul.mubr.bf16.gmra.mxu0 %v9478
        %v10542 = vpop.f32.mrf.mxu0
        %v10543 = vadd.f32 %v10382, %v10542
        %v10544 = vpop.f32.mrf.mxu0
        %v10545 = vpop.f32.mrf.mxu0
        %v10546 = vadd.f32 %v10385, %v10545
        %v10547 = vpop.f32.mrf.mxu0
        %10548 = vmatprep.mubr.bf16.mxu0 %v9488
        %10549 = vmatmul.mubr.bf16.gmra.mxu0 %v9487
        %v10550 = vpop.f32.mrf.mxu0
        %v10551 = vadd.f32 %v10390, %v10550
        %v10552 = vpop.f32.mrf.mxu0
        %v10553 = vpop.f32.mrf.mxu0
        %v10554 = vadd.f32 %v10393, %v10553
        %v10555 = vpop.f32.mrf.mxu0
        %10556 = vmatprep.mubr.bf16.mxu0 %v9497
        %10557 = vmatmul.mubr.bf16.gmra.mxu0 %v9496
        %v10558 = vpop.f32.mrf.mxu0
        %v10559 = vadd.f32 %v10398, %v10558
        %v10560 = vpop.f32.mrf.mxu0
        %v10561 = vpop.f32.mrf.mxu0
        %v10562 = vadd.f32 %v10401, %v10561
        %v10563 = vpop.f32.mrf.mxu0
        %10564 = vmatprep.mubr.bf16.mxu0 %v9506
        %10565 = vmatmul.mubr.bf16.gmra.mxu0 %v9505
        %v10566 = vpop.f32.mrf.mxu0
        %v10567 = vadd.f32 %v10406, %v10566
        %v10568 = vpop.f32.mrf.mxu0
        %v10569 = vpop.f32.mrf.mxu0
        %v10570 = vadd.f32 %v10409, %v10569
        %v10571 = vpop.f32.mrf.mxu0
        %10572 = vmatprep.mubr.bf16.mxu0 %v9515
        %10573 = vmatmul.mubr.bf16.gmra.mxu0 %v9514
        %v10574 = vpop.f32.mrf.mxu0
        %v10575 = vadd.f32 %v10414, %v10574
        %v10576 = vpop.f32.mrf.mxu0
        %v10577 = vpop.f32.mrf.mxu0
        %v10578 = vadd.f32 %v10417, %v10577
        %v10579 = vpop.f32.mrf.mxu0
        %10580 = vmatprep.mubr.bf16.mxu0 %v9524
        %10581 = vmatmul.mubr.bf16.gmra.mxu0 %v9523
        %v10582 = vpop.f32.mrf.mxu0
        %v10583 = vadd.f32 %v10422, %v10582
        %v10584 = vpop.f32.mrf.mxu0
        %v10585 = vpop.f32.mrf.mxu0
        %v10586 = vadd.f32 %v10425, %v10585
        %v10587 = vpop.f32.mrf.mxu0
        %10588 = vmatprep.mubr.bf16.mxu0 %v9533
        %10589 = vmatmul.mubr.bf16.gmra.mxu0 %v9532
        %v10590 = vpop.f32.mrf.mxu0
        %v10591 = vadd.f32 %v10430, %v10590
        %v10592 = vpop.f32.mrf.mxu0
        %v10593 = vpop.f32.mrf.mxu0
        %v10594 = vadd.f32 %v10433, %v10593
        %v10595 = vpop.f32.mrf.mxu0
        %10596 = vmatprep.mubr.bf16.mxu0 %v9542
        %10597 = vmatmul.mubr.bf16.gmra.mxu0 %v9541
        %v10598 = vpop.f32.mrf.mxu0
        %v10599 = vadd.f32 %v10438, %v10598
        %v10600 = vpop.f32.mrf.mxu0
        %v10601 = vpop.f32.mrf.mxu0
        %v10602 = vadd.f32 %v10441, %v10601
        %v10603 = vpop.f32.mrf.mxu0
        %10604 = vdwg.mxu0
        %10605 = vmatprep.subr.bf16.mxu0 0
        %10606 = vmatpush1.bf16.msra.mxu0 %v10033
        %10607 = vmatprep.subr.bf16.mxu0 0
        %10608 = vmatpush1.bf16.msra.mxu0 %v10032
        %10609 = vmatprep.subr.bf16.mxu0 0
        %10610 = vmatpush1.bf16.msra.mxu0 %v10031
        %10611 = vmatprep.subr.bf16.mxu0 0
        %10612 = vmatpush1.bf16.msra.mxu0 %v10030
        %10613 = vmatprep.subr.bf16.mxu0 0
        %10614 = vmatpush1.bf16.msra.mxu0 %v10029
        %10615 = vmatprep.subr.bf16.mxu0 0
        %10616 = vmatpush1.bf16.msra.mxu0 %v10028
        %10617 = vmatprep.subr.bf16.mxu0 0
        %10618 = vmatpush1.bf16.msra.mxu0 %v10027
        %10619 = vmatprep.subr.bf16.mxu0 0
        %10620 = vmatpush1.bf16.msra.mxu0 %v10026
        %10621 = vmatprep.subr.bf16.mxu0 0
        %10622 = vmatpush2.bf16.msra.mxu0 %v10041
        %10623 = vmatprep.subr.bf16.mxu0 0
        %10624 = vmatpush2.bf16.msra.mxu0 %v10040
        %10625 = vmatprep.subr.bf16.mxu0 0
        %10626 = vmatpush2.bf16.msra.mxu0 %v10039
        %10627 = vmatprep.subr.bf16.mxu0 0
        %10628 = vmatpush2.bf16.msra.mxu0 %v10038
        %10629 = vmatprep.subr.bf16.mxu0 0
        %10630 = vmatpush2.bf16.msra.mxu0 %v10037
        %10631 = vmatprep.subr.bf16.mxu0 0
        %10632 = vmatpush2.bf16.msra.mxu0 %v10036
        %10633 = vmatprep.subr.bf16.mxu0 0
        %10634 = vmatpush2.bf16.msra.mxu0 %v10035
        %10635 = vmatprep.subr.bf16.mxu0 0
        %10636 = vmatpush2.bf16.msra.mxu0 %v10034
        %10637 = vmatprep.mubr.bf16.mxu0 %v9409
        %10638 = vmatmul.mubr.bf16.gmra.mxu0 %v9408
        %v10639 = vpop.f32.mrf.mxu0
        %v10640 = vadd.f32 %v10479, %v10639
        %v10641 = vpop.f32.mrf.mxu0
        %v10642 = vpop.f32.mrf.mxu0
        %v10643 = vadd.f32 %v10482, %v10642
        %v10644 = vpop.f32.mrf.mxu0
        %10645 = vmatprep.mubr.bf16.mxu0 %v9418
        %10646 = vmatmul.mubr.bf16.gmra.mxu0 %v9417
        %v10647 = vpop.f32.mrf.mxu0
        %v10648 = vadd.f32 %v10487, %v10647
        %v10649 = vpop.f32.mrf.mxu0
        %v10650 = vpop.f32.mrf.mxu0
        %v10651 = vadd.f32 %v10490, %v10650
        %v10652 = vpop.f32.mrf.mxu0
        %10653 = vmatprep.mubr.bf16.mxu0 %v9427
        %10654 = vmatmul.mubr.bf16.gmra.mxu0 %v9426
        %v10655 = vpop.f32.mrf.mxu0
        %v10656 = vadd.f32 %v10495, %v10655
        %v10657 = vpop.f32.mrf.mxu0
        %v10658 = vpop.f32.mrf.mxu0
        %v10659 = vadd.f32 %v10498, %v10658
        %v10660 = vpop.f32.mrf.mxu0
        %10661 = vmatprep.mubr.bf16.mxu0 %v9436
        %10662 = vmatmul.mubr.bf16.gmra.mxu0 %v9435
        %v10663 = vpop.f32.mrf.mxu0
        %v10664 = vadd.f32 %v10503, %v10663
        %v10665 = vpop.f32.mrf.mxu0
        %v10666 = vpop.f32.mrf.mxu0
        %v10667 = vadd.f32 %v10506, %v10666
        %v10668 = vpop.f32.mrf.mxu0
        %10669 = vmatprep.mubr.bf16.mxu0 %v9445
        %10670 = vmatmul.mubr.bf16.gmra.mxu0 %v9444
        %v10671 = vpop.f32.mrf.mxu0
        %v10672 = vadd.f32 %v10511, %v10671
        %v10673 = vpop.f32.mrf.mxu0
        %v10674 = vpop.f32.mrf.mxu0
        %v10675 = vadd.f32 %v10514, %v10674
        %v10676 = vpop.f32.mrf.mxu0
        %10677 = vmatprep.mubr.bf16.mxu0 %v9454
        %10678 = vmatmul.mubr.bf16.gmra.mxu0 %v9453
        %v10679 = vpop.f32.mrf.mxu0
        %v10680 = vadd.f32 %v10519, %v10679
        %v10681 = vpop.f32.mrf.mxu0
        %v10682 = vpop.f32.mrf.mxu0
        %v10683 = vadd.f32 %v10522, %v10682
        %v10684 = vpop.f32.mrf.mxu0
        %10685 = vmatprep.mubr.bf16.mxu0 %v9463
        %10686 = vmatmul.mubr.bf16.gmra.mxu0 %v9462
        %v10687 = vpop.f32.mrf.mxu0
        %v10688 = vadd.f32 %v10527, %v10687
        %v10689 = vpop.f32.mrf.mxu0
        %v10690 = vpop.f32.mrf.mxu0
        %v10691 = vadd.f32 %v10530, %v10690
        %v10692 = vpop.f32.mrf.mxu0
        %10693 = vmatprep.mubr.bf16.mxu0 %v9472
        %10694 = vmatmul.mubr.bf16.gmra.mxu0 %v9471
        %v10695 = vpop.f32.mrf.mxu0
        %v10696 = vadd.f32 %v10535, %v10695
        %v10697 = vpop.f32.mrf.mxu0
        %v10698 = vpop.f32.mrf.mxu0
        %v10699 = vadd.f32 %v10538, %v10698
        %v10700 = vpop.f32.mrf.mxu0
        %10701 = vmatprep.mubr.bf16.mxu0 %v9481
        %10702 = vmatmul.mubr.bf16.gmra.mxu0 %v9480
        %v10703 = vpop.f32.mrf.mxu0
        %v10704 = vadd.f32 %v10543, %v10703
        %v10705 = vpop.f32.mrf.mxu0
        %v10706 = vpop.f32.mrf.mxu0
        %v10707 = vadd.f32 %v10546, %v10706
        %v10708 = vpop.f32.mrf.mxu0
        %10709 = vmatprep.mubr.bf16.mxu0 %v9490
        %10710 = vmatmul.mubr.bf16.gmra.mxu0 %v9489
        %v10711 = vpop.f32.mrf.mxu0
        %v10712 = vadd.f32 %v10551, %v10711
        %v10713 = vpop.f32.mrf.mxu0
        %v10714 = vpop.f32.mrf.mxu0
        %v10715 = vadd.f32 %v10554, %v10714
        %v10716 = vpop.f32.mrf.mxu0
        %10717 = vmatprep.mubr.bf16.mxu0 %v9499
        %10718 = vmatmul.mubr.bf16.gmra.mxu0 %v9498
        %v10719 = vpop.f32.mrf.mxu0
        %v10720 = vadd.f32 %v10559, %v10719
        %v10721 = vpop.f32.mrf.mxu0
        %v10722 = vpop.f32.mrf.mxu0
        %v10723 = vadd.f32 %v10562, %v10722
        %v10724 = vpop.f32.mrf.mxu0
        %10725 = vmatprep.mubr.bf16.mxu0 %v9508
        %10726 = vmatmul.mubr.bf16.gmra.mxu0 %v9507
        %v10727 = vpop.f32.mrf.mxu0
        %v10728 = vadd.f32 %v10567, %v10727
        %v10729 = vpop.f32.mrf.mxu0
        %v10730 = vpop.f32.mrf.mxu0
        %v10731 = vadd.f32 %v10570, %v10730
        %v10732 = vpop.f32.mrf.mxu0
        %10733 = vmatprep.mubr.bf16.mxu0 %v9517
        %10734 = vmatmul.mubr.bf16.gmra.mxu0 %v9516
        %v10735 = vpop.f32.mrf.mxu0
        %v10736 = vadd.f32 %v10575, %v10735
        %v10737 = vpop.f32.mrf.mxu0
        %v10738 = vpop.f32.mrf.mxu0
        %v10739 = vadd.f32 %v10578, %v10738
        %v10740 = vpop.f32.mrf.mxu0
        %10741 = vmatprep.mubr.bf16.mxu0 %v9526
        %10742 = vmatmul.mubr.bf16.gmra.mxu0 %v9525
        %v10743 = vpop.f32.mrf.mxu0
        %v10744 = vadd.f32 %v10583, %v10743
        %v10745 = vpop.f32.mrf.mxu0
        %v10746 = vpop.f32.mrf.mxu0
        %v10747 = vadd.f32 %v10586, %v10746
        %v10748 = vpop.f32.mrf.mxu0
        %10749 = vmatprep.mubr.bf16.mxu0 %v9535
        %10750 = vmatmul.mubr.bf16.gmra.mxu0 %v9534
        %v10751 = vpop.f32.mrf.mxu0
        %v10752 = vadd.f32 %v10591, %v10751
        %v10753 = vpop.f32.mrf.mxu0
        %v10754 = vpop.f32.mrf.mxu0
        %v10755 = vadd.f32 %v10594, %v10754
        %v10756 = vpop.f32.mrf.mxu0
        %10757 = vmatprep.mubr.bf16.mxu0 %v9544
        %10758 = vmatmul.mubr.bf16.gmra.mxu0 %v9543
        %v10759 = vpop.f32.mrf.mxu0
        %v10760 = vadd.f32 %v10599, %v10759
        %v10761 = vpop.f32.mrf.mxu0
        %v10762 = vpop.f32.mrf.mxu0
        %v10763 = vadd.f32 %v10602, %v10762
        %v10764 = vpop.f32.mrf.mxu0
        %10765 = vdwg.mxu0
        %10766 = vmatprep.subr.bf16.mxu0 0
        %10767 = vmatpush1.bf16.msra.mxu0 %v10049
        %10768 = vmatprep.subr.bf16.mxu0 0
        %10769 = vmatpush1.bf16.msra.mxu0 %v10048
        %10770 = vmatprep.subr.bf16.mxu0 0
        %10771 = vmatpush1.bf16.msra.mxu0 %v10047
        %10772 = vmatprep.subr.bf16.mxu0 0
        %10773 = vmatpush1.bf16.msra.mxu0 %v10046
        %10774 = vmatprep.subr.bf16.mxu0 0
        %10775 = vmatpush1.bf16.msra.mxu0 %v10045
        %10776 = vmatprep.subr.bf16.mxu0 0
        %10777 = vmatpush1.bf16.msra.mxu0 %v10044
        %10778 = vmatprep.subr.bf16.mxu0 0
        %10779 = vmatpush1.bf16.msra.mxu0 %v10043
        %10780 = vmatprep.subr.bf16.mxu0 0
        %10781 = vmatpush1.bf16.msra.mxu0 %v10042
        %10782 = vmatprep.subr.bf16.mxu0 0
        %10783 = vmatpush2.bf16.msra.mxu0 0
        %10784 = vmatprep.subr.bf16.mxu0 0
        %10785 = vmatpush2.bf16.msra.mxu0 0
        %10786 = vmatprep.subr.bf16.mxu0 0
        %10787 = vmatpush2.bf16.msra.mxu0 0
        %10788 = vmatprep.subr.bf16.mxu0 0
        %10789 = vmatpush2.bf16.msra.mxu0 0
        %10790 = vmatprep.subr.bf16.mxu0 0
        %10791 = vmatpush2.bf16.msra.mxu0 0
        %10792 = vmatprep.subr.bf16.mxu0 0
        %10793 = vmatpush2.bf16.msra.mxu0 0
        %10794 = vmatprep.subr.bf16.mxu0 0
        %10795 = vmatpush2.bf16.msra.mxu0 0
        %10796 = vmatprep.subr.bf16.mxu0 0
        %10797 = vmatpush2.bf16.msra.mxu0 0
        %10798 = vmatprep.mubr.bf16.mxu0 0
        %10799 = vmatmul.mubr.bf16.gmra.mxu0 %v9410
        %v10800 = vpop.f32.mrf.mxu0
        %v10801 = vadd.f32 %v10640, %v10800
        %v10802 = vpop.f32.mrf.mxu0
        %v10803 = vpop.f32.mrf.mxu0
        %v10804 = vadd.f32 %v10643, %v10803
        %v10805 = vpop.f32.mrf.mxu0
        %10806 = vmatprep.mubr.bf16.mxu0 0
        %10807 = vmatmul.mubr.bf16.gmra.mxu0 %v9419
        %v10808 = vpop.f32.mrf.mxu0
        %v10809 = vadd.f32 %v10648, %v10808
        %v10810 = vpop.f32.mrf.mxu0
        %v10811 = vpop.f32.mrf.mxu0
        %v10812 = vadd.f32 %v10651, %v10811
        %v10813 = vpop.f32.mrf.mxu0
        %10814 = vmatprep.mubr.bf16.mxu0 0
        %10815 = vmatmul.mubr.bf16.gmra.mxu0 %v9428
        %v10816 = vpop.f32.mrf.mxu0
        %v10817 = vadd.f32 %v10656, %v10816
        %v10818 = vpop.f32.mrf.mxu0
        %v10819 = vpop.f32.mrf.mxu0
        %v10820 = vadd.f32 %v10659, %v10819
        %v10821 = vpop.f32.mrf.mxu0
        %10822 = vmatprep.mubr.bf16.mxu0 0
        %10823 = vmatmul.mubr.bf16.gmra.mxu0 %v9437
        %v10824 = vpop.f32.mrf.mxu0
        %v10825 = vadd.f32 %v10664, %v10824
        %v10826 = vpop.f32.mrf.mxu0
        %v10827 = vpop.f32.mrf.mxu0
        %v10828 = vadd.f32 %v10667, %v10827
        %v10829 = vpop.f32.mrf.mxu0
        %10830 = vmatprep.mubr.bf16.mxu0 0
        %10831 = vmatmul.mubr.bf16.gmra.mxu0 %v9446
        %v10832 = vpop.f32.mrf.mxu0
        %v10833 = vadd.f32 %v10672, %v10832
        %v10834 = vpop.f32.mrf.mxu0
        %v10835 = vpop.f32.mrf.mxu0
        %v10836 = vadd.f32 %v10675, %v10835
        %v10837 = vpop.f32.mrf.mxu0
        %10838 = vmatprep.mubr.bf16.mxu0 0
        %10839 = vmatmul.mubr.bf16.gmra.mxu0 %v9455
        %v10840 = vpop.f32.mrf.mxu0
        %v10841 = vadd.f32 %v10680, %v10840
        %v10842 = vpop.f32.mrf.mxu0
        %v10843 = vpop.f32.mrf.mxu0
        %v10844 = vadd.f32 %v10683, %v10843
        %v10845 = vpop.f32.mrf.mxu0
        %10846 = vmatprep.mubr.bf16.mxu0 0
        %10847 = vmatmul.mubr.bf16.gmra.mxu0 %v9464
        %v10848 = vpop.f32.mrf.mxu0
        %v10849 = vadd.f32 %v10688, %v10848
        %v10850 = vpop.f32.mrf.mxu0
        %v10851 = vpop.f32.mrf.mxu0
        %v10852 = vadd.f32 %v10691, %v10851
        %v10853 = vpop.f32.mrf.mxu0
        %10854 = vmatprep.mubr.bf16.mxu0 0
        %10855 = vmatmul.mubr.bf16.gmra.mxu0 %v9473
        %v10856 = vpop.f32.mrf.mxu0
        %v10857 = vadd.f32 %v10696, %v10856
        %v10858 = vpop.f32.mrf.mxu0
        %v10859 = vpop.f32.mrf.mxu0
        %v10860 = vadd.f32 %v10699, %v10859
        %v10861 = vpop.f32.mrf.mxu0
        %10862 = vmatprep.mubr.bf16.mxu0 0
        %10863 = vmatmul.mubr.bf16.gmra.mxu0 %v9482
        %v10864 = vpop.f32.mrf.mxu0
        %v10865 = vadd.f32 %v10704, %v10864
        %v10866 = vpop.f32.mrf.mxu0
        %v10867 = vpop.f32.mrf.mxu0
        %v10868 = vadd.f32 %v10707, %v10867
        %v10869 = vpop.f32.mrf.mxu0
        %10870 = vmatprep.mubr.bf16.mxu0 0
        %10871 = vmatmul.mubr.bf16.gmra.mxu0 %v9491
        %v10872 = vpop.f32.mrf.mxu0
        %v10873 = vadd.f32 %v10712, %v10872
        %v10874 = vpop.f32.mrf.mxu0
        %v10875 = vpop.f32.mrf.mxu0
        %v10876 = vadd.f32 %v10715, %v10875
        %v10877 = vpop.f32.mrf.mxu0
        %10878 = vmatprep.mubr.bf16.mxu0 0
        %10879 = vmatmul.mubr.bf16.gmra.mxu0 %v9500
        %v10880 = vpop.f32.mrf.mxu0
        %v10881 = vadd.f32 %v10720, %v10880
        %v10882 = vpop.f32.mrf.mxu0
        %v10883 = vpop.f32.mrf.mxu0
        %v10884 = vadd.f32 %v10723, %v10883
        %v10885 = vpop.f32.mrf.mxu0
        %10886 = vmatprep.mubr.bf16.mxu0 0
        %10887 = vmatmul.mubr.bf16.gmra.mxu0 %v9509
        %v10888 = vpop.f32.mrf.mxu0
        %v10889 = vadd.f32 %v10728, %v10888
        %v10890 = vpop.f32.mrf.mxu0
        %v10891 = vpop.f32.mrf.mxu0
        %v10892 = vadd.f32 %v10731, %v10891
        %v10893 = vpop.f32.mrf.mxu0
        %10894 = vmatprep.mubr.bf16.mxu0 0
        %10895 = vmatmul.mubr.bf16.gmra.mxu0 %v9518
        %v10896 = vpop.f32.mrf.mxu0
        %v10897 = vadd.f32 %v10736, %v10896
        %v10898 = vpop.f32.mrf.mxu0
        %v10899 = vpop.f32.mrf.mxu0
        %v10900 = vadd.f32 %v10739, %v10899
        %v10901 = vpop.f32.mrf.mxu0
        %10902 = vmatprep.mubr.bf16.mxu0 0
        %10903 = vmatmul.mubr.bf16.gmra.mxu0 %v9527
        %v10904 = vpop.f32.mrf.mxu0
        %v10905 = vadd.f32 %v10744, %v10904
        %v10906 = vpop.f32.mrf.mxu0
        %v10907 = vpop.f32.mrf.mxu0
        %v10908 = vadd.f32 %v10747, %v10907
        %v10909 = vpop.f32.mrf.mxu0
        %10910 = vmatprep.mubr.bf16.mxu0 0
        %10911 = vmatmul.mubr.bf16.gmra.mxu0 %v9536
        %v10912 = vpop.f32.mrf.mxu0
        %v10913 = vadd.f32 %v10752, %v10912
        %v10914 = vpop.f32.mrf.mxu0
        %v10915 = vpop.f32.mrf.mxu0
        %v10916 = vadd.f32 %v10755, %v10915
        %v10917 = vpop.f32.mrf.mxu0
        %10918 = vmatprep.mubr.bf16.mxu0 0
        %10919 = vmatmul.mubr.bf16.gmra.mxu0 %v9545
        %v10920 = vpop.f32.mrf.mxu0
        %v10921 = vadd.f32 %v10760, %v10920
        %v10922 = vpop.f32.mrf.mxu0
        %v10923 = vpop.f32.mrf.mxu0
        %v10924 = vadd.f32 %v10763, %v10923
        %v10925 = vpop.f32.mrf.mxu0
        %10926 = vdwg.mxu0
        %v10927 = vld [vmem:[%s237] sm:$0xf]
        %v10928 = vld [vmem:[%s237 + $0x4] sm:$0xf]
        %v10929 = vld [vmem:[%s237 + $0x8] sm:$0xf]
        %v10930 = vld [vmem:[%s237 + $0xc] sm:$0xf]
        %v10931 = vld [vmem:[%s237 + $0x10] sm:$0xf]
        %v10932 = vld [vmem:[%s237 + $0x14] sm:$0xf]
        %v10933 = vld [vmem:[%s237 + $0x18] sm:$0xf]
        %v10934 = vld [vmem:[%s237 + $0x1c] sm:$0xf]
        %v10935 = vld [vmem:[%s237 + $0x20] sm:$0xf]
        %v10936 = vld [vmem:[%s237 + $0x24] sm:$0xf]
        %v10937 = vld [vmem:[%s237 + $0x28] sm:$0xf]
        %v10938 = vld [vmem:[%s237 + $0x2c] sm:$0xf]
        %v10939 = vld [vmem:[%s237 + $0x30] sm:$0xf]
        %v10940 = vld [vmem:[%s237 + $0x34] sm:$0xf]
        %v10941 = vld [vmem:[%s237 + $0x38] sm:$0xf]
        %v10942 = vld [vmem:[%s237 + $0x3c] sm:$0xf]
        %v10943 = vld [vmem:[%s237 + $0x40] sm:$0xf]
        %v10944 = vld [vmem:[%s237 + $0x44] sm:$0xf]
        %v10945 = vld [vmem:[%s237 + $0x48] sm:$0xf]
        %v10946 = vld [vmem:[%s237 + $0x4c] sm:$0xf]
        %v10947 = vld [vmem:[%s237 + $0x50] sm:$0xf]
        %v10948 = vld [vmem:[%s237 + $0x54] sm:$0xf]
        %v10949 = vld [vmem:[%s237 + $0x58] sm:$0xf]
        %v10950 = vld [vmem:[%s237 + $0x5c] sm:$0xf]
        %v10951 = vld [vmem:[%s237 + $0x60] sm:$0xf]
        %v10952 = vld [vmem:[%s237 + $0x64] sm:$0xf]
        %v10953 = vld [vmem:[%s237 + $0x68] sm:$0xf]
        %v10954 = vld [vmem:[%s237 + $0x6c] sm:$0xf]
        %v10955 = vld [vmem:[%s237 + $0x70] sm:$0xf]
        %v10956 = vld [vmem:[%s237 + $0x74] sm:$0xf]
        %v10957 = vld [vmem:[%s237 + $0x78] sm:$0xf]
        %v10958 = vld [vmem:[%s237 + $0x7c] sm:$0xf]
        %v10959 = vunpack.c.l.bf16 %v10927
        %v10960 = vunpack.c.l.bf16 %v10928
        %v10961 = vunpack.c.l.bf16 %v10929
        %v10962 = vunpack.c.l.bf16 %v10930
        %v10963 = vunpack.c.l.bf16 %v10931
        %v10964 = vunpack.c.l.bf16 %v10932
        %v10965 = vunpack.c.l.bf16 %v10933
        %v10966 = vunpack.c.l.bf16 %v10934
        %v10967 = vunpack.c.l.bf16 %v10935
        %v10968 = vunpack.c.l.bf16 %v10936
        %v10969 = vunpack.c.l.bf16 %v10937
        %v10970 = vunpack.c.l.bf16 %v10938
        %v10971 = vunpack.c.l.bf16 %v10939
        %v10972 = vunpack.c.l.bf16 %v10940
        %v10973 = vunpack.c.l.bf16 %v10941
        %v10974 = vunpack.c.l.bf16 %v10942
        %v10975 = vunpack.c.l.bf16 %v10943
        %v10976 = vunpack.c.l.bf16 %v10944
        %v10977 = vunpack.c.l.bf16 %v10945
        %v10978 = vunpack.c.l.bf16 %v10946
        %v10979 = vunpack.c.l.bf16 %v10947
        %v10980 = vunpack.c.l.bf16 %v10948
        %v10981 = vunpack.c.l.bf16 %v10949
        %v10982 = vunpack.c.l.bf16 %v10950
        %v10983 = vunpack.c.l.bf16 %v10951
        %v10984 = vunpack.c.l.bf16 %v10952
        %v10985 = vunpack.c.l.bf16 %v10953
        %v10986 = vunpack.c.l.bf16 %v10954
        %v10987 = vunpack.c.l.bf16 %v10955
        %v10988 = vunpack.c.l.bf16 %v10956
        %v10989 = vunpack.c.l.bf16 %v10957
        %v10990 = vunpack.c.l.bf16 %v10958
        %v10991 = vadd.f32 %v10801, %v10959
        %v10992 = vadd.f32 %v10804, %v10960
        %v10993 = vadd.f32 %v10809, %v10961
        %v10994 = vadd.f32 %v10812, %v10962
        %v10995 = vadd.f32 %v10817, %v10963
        %v10996 = vadd.f32 %v10820, %v10964
        %v10997 = vadd.f32 %v10825, %v10965
        %v10998 = vadd.f32 %v10828, %v10966
        %v10999 = vadd.f32 %v10833, %v10967
        %v11000 = vadd.f32 %v10836, %v10968
        %v11001 = vadd.f32 %v10841, %v10969
        %v11002 = vadd.f32 %v10844, %v10970
        %v11003 = vadd.f32 %v10849, %v10971
        %v11004 = vadd.f32 %v10852, %v10972
        %v11005 = vadd.f32 %v10857, %v10973
        %v11006 = vadd.f32 %v10860, %v10974
        %v11007 = vadd.f32 %v10865, %v10975
        %v11008 = vadd.f32 %v10868, %v10976
        %v11009 = vadd.f32 %v10873, %v10977
        %v11010 = vadd.f32 %v10876, %v10978
        %v11011 = vadd.f32 %v10881, %v10979
        %v11012 = vadd.f32 %v10884, %v10980
        %v11013 = vadd.f32 %v10889, %v10981
        %v11014 = vadd.f32 %v10892, %v10982
        %v11015 = vadd.f32 %v10897, %v10983
        %v11016 = vadd.f32 %v10900, %v10984
        %v11017 = vadd.f32 %v10905, %v10985
        %v11018 = vadd.f32 %v10908, %v10986
        %v11019 = vadd.f32 %v10913, %v10987
        %v11020 = vadd.f32 %v10916, %v10988
        %v11021 = vadd.f32 %v10921, %v10989
        %v11022 = vadd.f32 %v10924, %v10990
        %v11023 = vmax.f32 %v10991, 0.0
        %v11024 = vmax.f32 %v10992, 0.0
        %v11025 = vmax.f32 %v10993, 0.0
        %v11026 = vmax.f32 %v10994, 0.0
        %v11027 = vmax.f32 %v10995, 0.0
        %v11028 = vmax.f32 %v10996, 0.0
        %v11029 = vmax.f32 %v10997, 0.0
        %v11030 = vmax.f32 %v10998, 0.0
        %v11031 = vmax.f32 %v10999, 0.0
        %v11032 = vmax.f32 %v11000, 0.0
        %v11033 = vmax.f32 %v11001, 0.0
        %v11034 = vmax.f32 %v11002, 0.0
        %v11035 = vmax.f32 %v11003, 0.0
        %v11036 = vmax.f32 %v11004, 0.0
        %v11037 = vmax.f32 %v11005, 0.0
        %v11038 = vmax.f32 %v11006, 0.0
        %v11039 = vmax.f32 %v11007, 0.0
        %v11040 = vmax.f32 %v11008, 0.0
        %v11041 = vmax.f32 %v11009, 0.0
        %v11042 = vmax.f32 %v11010, 0.0
        %v11043 = vmax.f32 %v11011, 0.0
        %v11044 = vmax.f32 %v11012, 0.0
        %v11045 = vmax.f32 %v11013, 0.0
        %v11046 = vmax.f32 %v11014, 0.0
        %v11047 = vmax.f32 %v11015, 0.0
        %v11048 = vmax.f32 %v11016, 0.0
        %v11049 = vmax.f32 %v11017, 0.0
        %v11050 = vmax.f32 %v11018, 0.0
        %v11051 = vmax.f32 %v11019, 0.0
        %v11052 = vmax.f32 %v11020, 0.0
        %v11053 = vmax.f32 %v11021, 0.0
        %v11054 = vmax.f32 %v11022, 0.0
        %11055 = vst [vmem:[%s271] sm:$0xff] %v11023
        %11056 = vst [vmem:[%s271 + $0x8] sm:$0xff] %v11024
        %11057 = vst [vmem:[%s271 + $0x10] sm:$0xff] %v11025
        %11058 = vst [vmem:[%s271 + $0x18] sm:$0xff] %v11026
        %11059 = vst [vmem:[%s271 + $0x20] sm:$0xff] %v11027
        %11060 = vst [vmem:[%s271 + $0x28] sm:$0xff] %v11028
        %11061 = vst [vmem:[%s271 + $0x30] sm:$0xff] %v11029
        %11062 = vst [vmem:[%s271 + $0x38] sm:$0xff] %v11030
        %11063 = vst [vmem:[%s271 + $0x40] sm:$0xff] %v11031
        %11064 = vst [vmem:[%s271 + $0x48] sm:$0xff] %v11032
        %11065 = vst [vmem:[%s271 + $0x50] sm:$0xff] %v11033
        %11066 = vst [vmem:[%s271 + $0x58] sm:$0xff] %v11034
        %11067 = vst [vmem:[%s271 + $0x60] sm:$0xff] %v11035
        %11068 = vst [vmem:[%s271 + $0x68] sm:$0xff] %v11036
        %11069 = vst [vmem:[%s271 + $0x70] sm:$0xff] %v11037
        %11070 = vst [vmem:[%s271 + $0x78] sm:$0xff] %v11038
        %11071 = vst [vmem:[%s271 + $0x80] sm:$0xff] %v11039
        %11072 = vst [vmem:[%s271 + $0x88] sm:$0xff] %v11040
        %11073 = vst [vmem:[%s271 + $0x90] sm:$0xff] %v11041
        %11074 = vst [vmem:[%s271 + $0x98] sm:$0xff] %v11042
        %11075 = vst [vmem:[%s271 + $0xa0] sm:$0xff] %v11043
        %11076 = vst [vmem:[%s271 + $0xa8] sm:$0xff] %v11044
        %11077 = vst [vmem:[%s271 + $0xb0] sm:$0xff] %v11045
        %11078 = vst [vmem:[%s271 + $0xb8] sm:$0xff] %v11046
        %11079 = vst [vmem:[%s271 + $0xc0] sm:$0xff] %v11047
        %11080 = vst [vmem:[%s271 + $0xc8] sm:$0xff] %v11048
        %11081 = vst [vmem:[%s271 + $0xd0] sm:$0xff] %v11049
        %11082 = vst [vmem:[%s271 + $0xd8] sm:$0xff] %v11050
        %11083 = vst [vmem:[%s271 + $0xe0] sm:$0xff] %v11051
        %11084 = vst [vmem:[%s271 + $0xe8] sm:$0xff] %v11052
        %11085 = vst [vmem:[%s271 + $0xf0] sm:$0xff] %v11053
        %11086 = vst [vmem:[%s271 + $0xf8] sm:$0xff] %v11054
        %s11087 = sand.u32 %s141, 1
        %s11088 = scalar_lea.sflag [#allocation6], %s11087
        %s11089 = sand.u32 %s141, 1
        %s11090 = smul.addr %s11089, 256
        %s11091 = scalar_lea.vmem [#allocation10], %s11090
        // Predicated region
        $region53: #{tpu_custom_call.1} parent=39 // pred_check
          %p11092 = pneg %p151
        $region54: #{tpu_custom_call.1} parent=39 // pred_check_branch
          %11094 = sbr.rel (%p11092) target = $region56
        $region55: #{tpu_custom_call.1} parent=39 // pred_region
          %s11096 = ssub.s32 4096, 4096
          %11097 = vsyncadd %s11088, %s11096
          %s11098 = smul.addr %s23, 32
          %s11099 = smul.addr %s11098, 128
          %s11100 = scalar_lea.hbm %s5, %s11099
          %s11101 = sshll.u32 %s11091, 4
          %s11102 = int_to_ptr.vmem [resolvable:$true] %s11101
          %11107 = dma.vmem_to_hbm [thread:$0]  %s11102, 4096, %s11100, %s11088, 128, 128, 8
        $region56: #{tpu_custom_call.1} parent=39 // pred_fallthru
          _
      $region40: #{tpu_custom_call.1} parent=5 // pred_fallthru
        _
      %p11108 = scmp.le.s32.totalorder 2, %s18
      // Predicated region
      $region57: #{tpu_custom_call.1} parent=5 // pred_check
        %p11109 = pneg %p11108
      $region58: #{tpu_custom_call.1} parent=5 // pred_check_branch
        %11111 = sbr.rel (%p11109) target = $region60
      $region59: #{tpu_custom_call.1} parent=5 // pred_region
        %s11112 = ssub.s32 %s18, 2
        // Predicated region
        $region61: #{tpu_custom_call.1} parent=59 // pred_check
          %p11113 = pneg %p157
        $region62: #{tpu_custom_call.1} parent=59 // pred_check_branch
          %11115 = sbr.rel (%p11113) target = $region64
        $region63: #{tpu_custom_call.1} parent=59 // pred_region
          %s11116 = sand.u32 %s142, 1
          %s11117 = scalar_lea.sflag [#allocation6], %s11116
          %s11118 = sand.u32 %s142, 1
          %s11119 = smul.addr %s11118, 256
          %s11120 = scalar_lea.vmem [#allocation10], %s11119
          %11121 = dma.done %s11117, 4096
        $region64: #{tpu_custom_call.1} parent=59 // pred_fallthru
          _
      $region60: #{tpu_custom_call.1} parent=5 // pred_fallthru
        _
    $region6: #{tpu_custom_call.1} parent=1 // loop_footer
      %s22 = sadd.s32 1, %s18
    $region7: #{tpu_custom_call.1} parent=1 // loop_footer_branch
      %17 = sbr.rel target = $region3
    $region8: #{tpu_custom_call.1} parent=1 // loop_exit
      _
    %11122 = vsyncpa [#allocation5], 1
    %s11123 = scalar_lea.sflag [#allocation5], 1
    %11124 = vsyncpa %s11123, 1
    %11125 = vsyncpa [#allocation8], 1
    %11126 = vsyncpa [#allocation6], 1
    %s11127 = scalar_lea.sflag [#allocation6], 1
    %11128 = vsyncpa %s11127, 1

</llo_original>
